<compile_context>
chip_gen: v7x
topology: tpu7x:2x2x1
jax: 0.10.0
libtpu: 0.0.40
codegen_flags: <defaults>
</compile_context>

<pallas_src>
import functools

import jax
import jax.numpy as jnp
from jax.experimental import pallas as pl
from jax.experimental.pallas import tpu as pltpu

BN_EPS = 1e-3
TM_TARGET = 256            # M-tile for the conv matmuls / FC kernel
POOL_BATCH_TILE = 8        # samples per grid step in the avg-pool kernel
VMEM_LIMIT_BYTES = 32 * 1024 * 1024


def _round_up(x, m):
    return (x + m - 1) // m * m


def _channel_tile(c):
    for tc in (384, 256, 128):
        if c % tc == 0:
            return tc
    return c


# ---------------------------------------------------------------------------
# Kernels
# ---------------------------------------------------------------------------
def _avgpool_kernel(x_ref, o_ref, *, ksize, stride, hout, wout):
    """avg_pool2d(k, s) on a (TB, H, W, C) block: window sums + one 1/k^2 scale."""
    x = x_ref[...].astype(jnp.float32)                       # (TB, H, W, C)
    rows = [jnp.sum(x[:, oh * stride:oh * stride + ksize], axis=1, keepdims=True)
            for oh in range(hout)]
    t = jnp.concatenate(rows, axis=1)                        # (TB, Ho, W, C)
    cols = [jnp.sum(t[:, :, ow * stride:ow * stride + ksize, :], axis=2,
                    keepdims=True) for ow in range(wout)]
    out = jnp.concatenate(cols, axis=2) * (1.0 / float(ksize * ksize))
    o_ref[...] = out.astype(o_ref.dtype)                     # (TB, Ho, Wo, C) bf16


def _matmul_stats_kernel(x_ref, w_ref, y_ref, s_ref):
    """BN pass 1: y = x @ w (bf16 in, f32 acc) + per-tile channel sum / sumsq."""
    y = jnp.dot(x_ref[...], w_ref[...], preferred_element_type=jnp.float32)
    y_ref[...] = y.astype(y_ref.dtype)                       # bf16 activation
    s0 = jnp.sum(y, axis=0, keepdims=True)                   # (1, tc)
    s1 = jnp.sum(y * y, axis=0, keepdims=True)               # (1, tc)
    pad = jnp.zeros((6, y.shape[1]), jnp.float32)
    s_ref[0] = jnp.concatenate([s0, s1, pad], axis=0)        # rows 0/1 used


def _bn_matmul_stats_kernel(x_ref, scale_ref, shift_ref, w_ref, y_ref, s_ref,
                            *, tm, m_valid):
    """Previous layer's BN-apply + ReLU fused into this conv's pass-1 matmul.

    scale/shift are the precomputed per-channel BN factors tiled over the K
    (im2col) axis.  Rows past the true M are zeroed so zero-padded tiles do not
    pollute this layer's BN partial sums.
    """
    z = x_ref[...].astype(jnp.float32) * scale_ref[...] + shift_ref[...]
    z = jnp.maximum(z, 0.0)
    row = pl.program_id(0) * tm + jax.lax.broadcasted_iota(jnp.int32, (tm, 1), 0)
    z = jnp.where(row < m_valid, z, 0.0)
    y = jnp.dot(z.astype(jnp.bfloat16), w_ref[...],
                preferred_element_type=jnp.float32)
    y_ref[...] = y.astype(y_ref.dtype)
    s0 = jnp.sum(y, axis=0, keepdims=True)
    s1 = jnp.sum(y * y, axis=0, keepdims=True)
    pad = jnp.zeros((6, y.shape[1]), jnp.float32)
    s_ref[0] = jnp.concatenate([s0, s1, pad], axis=0)


def _bn_pool_fc_kernel(x_ref, scale_ref, shift_ref, w_ref, b_ref, o_ref):
    """BN-apply + ReLU + adaptive_avg_pool2d((1,1)) + Linear, fused."""
    z = x_ref[...].astype(jnp.float32) * scale_ref[...] + shift_ref[...]
    z = jnp.maximum(z, 0.0)                                  # (tn, HW, C)
    pooled = jnp.mean(z, axis=1)                             # (tn, C)
    o_ref[...] = jnp.dot(pooled.astype(jnp.bfloat16), w_ref[...],
                         preferred_element_type=jnp.float32) + b_ref[...]


# ---------------------------------------------------------------------------
# Wrappers
# ---------------------------------------------------------------------------
def avg_pool2d_5x5_s3(x_nhwc_bf16):
    """F.avg_pool2d(kernel_size=5, stride=3) on NHWC bf16, batch-tiled."""
    n, h, w, c = x_nhwc_bf16.shape
    hout = (h - 5) // 3 + 1
    wout = (w - 5) // 3 + 1
    tb = min(POOL_BATCH_TILE, n)
    n_pad = _round_up(n, tb)
    if n_pad != n:
        x_nhwc_bf16 = jnp.pad(x_nhwc_bf16, ((0, n_pad - n), (0, 0), (0, 0), (0, 0)))
    kern = functools.partial(_avgpool_kernel, ksize=5, stride=3,
                             hout=hout, wout=wout)
    out = pl.pallas_call(
        kern,
        out_shape=jax.ShapeDtypeStruct((n_pad, hout, wout, c), jnp.bfloat16),
        grid=(n_pad // tb,),
        in_specs=[pl.BlockSpec((tb, h, w, c), lambda i: (i, 0, 0, 0))],
        out_specs=pl.BlockSpec((tb, hout, wout, c), lambda i: (i, 0, 0, 0)),
        compiler_params=pltpu.CompilerParams(
            dimension_semantics=("parallel",),
            vmem_limit_bytes=VMEM_LIMIT_BYTES),
    )(x_nhwc_bf16)
    return out[:n]


def _conv_matmul_stats(x_bf, w_bf):
    """Conv pass 1 as (M,K)@(K,C): returns bf16 y[:M] and (grid_m, 8, C) partials."""
    m, k = x_bf.shape
    c = w_bf.shape[1]
    tm = min(TM_TARGET, _round_up(m, 8))
    m_pad = _round_up(m, tm)
    if m_pad != m:
        x_bf = jnp.pad(x_bf, ((0, m_pad - m), (0, 0)))       # zero rows: 0 to stats
    grid_m = m_pad // tm
    tc = _channel_tile(c)
    grid_c = c // tc

    y, stats = pl.pallas_call(
        _matmul_stats_kernel,
        out_shape=(jax.ShapeDtypeStruct((m_pad, c), jnp.bfloat16),
                   jax.ShapeDtypeStruct((grid_m, 8, c), jnp.float32)),
        grid=(grid_m, grid_c),
        in_specs=[pl.BlockSpec((tm, k), lambda i, j: (i, 0)),
                  pl.BlockSpec((k, tc), lambda i, j: (0, j))],
        out_specs=(pl.BlockSpec((tm, tc), lambda i, j: (i, j)),
                   pl.BlockSpec((1, 8, tc), lambda i, j: (i, 0, j))),
        compiler_params=pltpu.CompilerParams(
            dimension_semantics=("parallel", "parallel"),
            vmem_limit_bytes=VMEM_LIMIT_BYTES),
        cost_estimate=pl.CostEstimate(
            flops=2 * m_pad * k * c, transcendentals=0,
            bytes_accessed=2 * (m_pad * k + grid_m * k * c + m_pad * c)),
    )(x_bf, w_bf)
    return y[:m], stats


def _bn_matmul_stats(x_bf, scale_k, shift_k, w_bf):
    """Fused: previous BN-apply + ReLU on (M,K), then (M,K)@(K,C) + BN partials."""
    m, k = x_bf.shape
    c = w_bf.shape[1]
    tm = min(TM_TARGET, _round_up(m, 8))
    m_pad = _round_up(m, tm)
    if m_pad != m:
        x_bf = jnp.pad(x_bf, ((0, m_pad - m), (0, 0)))
    grid_m = m_pad // tm
    tc = _channel_tile(c)
    grid_c = c // tc
    scale2 = scale_k.reshape(1, k).astype(jnp.float32)
    shift2 = shift_k.reshape(1, k).astype(jnp.float32)

    kern = functools.partial(_bn_matmul_stats_kernel, tm=tm, m_valid=m)
    y, stats = pl.pallas_call(
        kern,
        out_shape=(jax.ShapeDtypeStruct((m_pad, c), jnp.bfloat16),
                   jax.ShapeDtypeStruct((grid_m, 8, c), jnp.float32)),
        grid=(grid_m, grid_c),
        in_specs=[pl.BlockSpec((tm, k), lambda i, j: (i, 0)),
                  pl.BlockSpec((1, k), lambda i, j: (0, 0)),
                  pl.BlockSpec((1, k), lambda i, j: (0, 0)),
                  pl.BlockSpec((k, tc), lambda i, j: (0, j))],
        out_specs=(pl.BlockSpec((tm, tc), lambda i, j: (i, j)),
                   pl.BlockSpec((1, 8, tc), lambda i, j: (i, 0, j))),
        compiler_params=pltpu.CompilerParams(
            dimension_semantics=("parallel", "parallel"),
            vmem_limit_bytes=VMEM_LIMIT_BYTES),
        cost_estimate=pl.CostEstimate(
            flops=2 * m_pad * k * c, transcendentals=0,
            bytes_accessed=2 * (m_pad * k + grid_m * k * c + m_pad * c)),
    )(x_bf, scale2, shift2, w_bf)
    return y[:m], stats


def _fold_bn_stats(stats, gamma, beta, count):
    """Fold per-tile sum/sumsq partials into per-channel BN scale & shift (f32)."""
    s = jnp.sum(stats.astype(jnp.float32), axis=0)           # (8, C); rows 0/1 used
    inv = 1.0 / float(count)
    mean = s[0] * inv
    var = jnp.maximum(s[1] * inv - mean * mean, 0.0)
    # TODO(synk): E[y^2]-E[y]^2 in f32; a centered second pass would be more
    # robust when conv outputs have mean >> std.
    scale = gamma.astype(jnp.float32) * jax.lax.rsqrt(var + BN_EPS)
    shift = beta.astype(jnp.float32) - mean * scale
    return scale, shift


def _bn_pool_fc(x3_bf, scale, shift, w_fc, b_fc):
    """BN-apply + ReLU + adaptive_avg_pool2d((1,1)) + flatten + Linear."""
    n, hw, c = x3_bf.shape
    cout = w_fc.shape[1]
    cpad = _round_up(cout, 128)                  # lane-dense FC output; slice after
    w_p = jnp.pad(w_fc.astype(jnp.bfloat16), ((0, 0), (0, cpad - cout)))
    b_p = jnp.pad(b_fc.astype(jnp.float32), (0, cpad - cout)).reshape(1, cpad)
    tn = min(TM_TARGET, _round_up(n, 8))
    n_pad = _round_up(n, tn)
    if n_pad != n:
        x3_bf = jnp.pad(x3_bf, ((0, n_pad - n), (0, 0), (0, 0)))
    scale3 = scale.reshape(1, 1, c).astype(jnp.float32)
    shift3 = shift.reshape(1, 1, c).astype(jnp.float32)

    out = pl.pallas_call(
        _bn_pool_fc_kernel,
        out_shape=jax.ShapeDtypeStruct((n_pad, cpad), jnp.float32),
        grid=(n_pad // tn,),
        in_specs=[pl.BlockSpec((tn, hw, c), lambda i: (i, 0, 0)),
                  pl.BlockSpec((1, 1, c), lambda i: (0, 0, 0)),
                  pl.BlockSpec((1, 1, c), lambda i: (0, 0, 0)),
                  pl.BlockSpec((c, cpad), lambda i: (0, 0)),
                  pl.BlockSpec((1, cpad), lambda i: (0, 0))],
        out_specs=pl.BlockSpec((tn, cpad), lambda i: (i, 0)),
        compiler_params=pltpu.CompilerParams(
            dimension_semantics=("parallel",),
            vmem_limit_bytes=VMEM_LIMIT_BYTES),
    )(x3_bf, scale3, shift3, w_p, b_p)
    return out[:n, :cout]


# ---------------------------------------------------------------------------
# InceptionAux
# ---------------------------------------------------------------------------
def _init_basic_conv(key, cin, cout, kh, kw):
    k1, k2, k3 = jax.random.split(key, 3)
    fan_in = cin * kh * kw
    w = jax.random.normal(k1, (cout, cin, kh, kw), jnp.float32) * (2.0 / fan_in) ** 0.5
    gamma = 1.0 + 0.1 * jax.random.normal(k2, (cout,), jnp.float32)
    beta = 0.1 * jax.random.normal(k3, (cout,), jnp.float32)
    return (w, gamma, beta)


def init_inception_aux(key, in_channels, num_classes):
    k0, k1, k2, k3 = jax.random.split(key, 4)
    return {
        "conv0": _init_basic_conv(k0, in_channels, 128, 1, 1),
        "conv1": _init_basic_conv(k1, 128, 768, 5, 5),
        "fc_w": 0.001 * jax.random.normal(k2, (768, num_classes), jnp.float32),
        "fc_b": 0.01 * jax.random.normal(k3, (num_classes,), jnp.float32),
    }


@jax.jit
def inception_aux(x_nchw, params):
    x = jnp.transpose(x_nchw, (0, 2, 3, 1)).astype(jnp.bfloat16)   # NCHW -> NHWC
    if x.shape[2] == 17:                 # mirrors torch `x.size()[-1] == 17` (width)
        x = avg_pool2d_5x5_s3(x)         # 17x17 -> 5x5
    n, h, w, cin = x.shape

    # conv0: 1x1 conv (matmul pass 1); its BN-apply is deferred into conv1's kernel.
    w0, g0, b0 = params["conv0"]
    w0_mat = jnp.transpose(w0, (2, 3, 1, 0)).reshape(cin, 128).astype(jnp.bfloat16)
    m0 = n * h * w
    y0, stats0 = _conv_matmul_stats(x.reshape(m0, cin), w0_mat)     # (m0,128) bf16
    scale0, shift0 = _fold_bn_stats(stats0, g0, b0, m0)             # (128,)

    # conv1: 5x5 valid conv; input is BN0(ReLU) applied in-kernel on raw y0.
    w1, g1, b1 = params["conv1"]
    kh = kw = 5
    h1, w1o = h - kh + 1, w - kw + 1
    w1_mat = jnp.transpose(w1, (2, 3, 1, 0)).reshape(kh * kw * 128, 768)
    w1_mat = w1_mat.astype(jnp.bfloat16)
    if (h, w) == (kh, kw):
        lhs1 = y0.reshape(n, kh * kw * 128)        # canonical path: free reshape
    else:
        # TODO(synk): general path materializes the 5x5 tap stack in HBM.
        y0_nhwc = y0.reshape(n, h, w, 128)
        taps = [y0_nhwc[:, i:i + h1, j:j + w1o, :]
                for i in range(kh) for j in range(kw)]
        lhs1 = jnp.stack(taps, axis=3).reshape(n * h1 * w1o, kh * kw * 128)
    scale0_k = jnp.tile(scale0, kh * kw)           # per-channel -> per-K-column
    shift0_k = jnp.tile(shift0, kh * kw)
    m1 = lhs1.shape[0]
    y1, stats1 = _bn_matmul_stats(lhs1, scale0_k, shift0_k, w1_mat)  # (m1,768) bf16
    scale1, shift1 = _fold_bn_stats(stats1, g1, b1, m1)

    # conv1's BN-apply + ReLU + adaptive_avg_pool2d((1,1)) + Linear, fused.
    y1_3 = y1.reshape(n, h1 * w1o, 768)            # free reshape
    return _bn_pool_fc(y1_3, scale1, shift1, params["fc_w"], params["fc_b"])


if __name__ == "__main__":
    key = jax.random.PRNGKey(0)
    k_param, k_x = jax.random.split(key)

    in_channels, num_classes = 4, 10
    x = jax.random.normal(k_x, (2, in_channels, 17, 17), jnp.float32)
    params = init_inception_aux(k_param, in_channels, num_classes)

    out = jax.block_until_ready(inception_aux(x, params))

    assert out.shape == (2, num_classes), out.shape
    assert bool(jnp.isfinite(out).all())
    print("KERNEL_OK")
</pallas_src>

<mosaic_0001>
module attributes {stable_mosaic.version = 11 : i64} {
  func.func @_avgpool_kernel(%arg0: i32, %arg1: memref<2x17x17x4xbf16, #tpu.memory_space<vmem>>, %arg2: memref<2x5x5x4xbf16, #tpu.memory_space<vmem>>) attributes {dimension_semantics = [#tpu.dimension_semantics<parallel>], iteration_bounds = array<i64: 1>, scalar_prefetch = 0 : i64, scratch_operands = 0 : i64, tpu.core_type = #tpu.core_type<tc>, window_params = [{transform_indices = @transform_0, window_bounds = array<i64: 2, 17, 17, 4>}, {transform_indices = @transform_1, window_bounds = array<i64: 2, 5, 5, 4>}]} {
    %c0 = arith.constant 0 : index
    %c0_0 = arith.constant 0 : index
    %c0_1 = arith.constant 0 : index
    %c0_2 = arith.constant 0 : index
    %0 = vector.load %arg1[%c0, %c0_0, %c0_1, %c0_2] : memref<2x17x17x4xbf16, #tpu.memory_space<vmem>>, vector<2x17x17x4xbf16>
    %1 = arith.extf %0 : vector<2x17x17x4xbf16> to vector<2x17x17x4xf32>
    %2 = vector.extract_strided_slice %1 {offsets = [0, 0, 0, 0], sizes = [2, 5, 17, 4], strides = [1, 1, 1, 1]} : vector<2x17x17x4xf32> to vector<2x5x17x4xf32>
    %cst = arith.constant dense<0.000000e+00> : vector<2x17x4xf32>
    %3 = vector.multi_reduction <add>, %2, %cst [1] : vector<2x5x17x4xf32> to vector<2x17x4xf32>
    %4 = vector.shape_cast %3 : vector<2x17x4xf32> to vector<2x1x17x4xf32>
    %5 = vector.extract_strided_slice %1 {offsets = [0, 3, 0, 0], sizes = [2, 5, 17, 4], strides = [1, 1, 1, 1]} : vector<2x17x17x4xf32> to vector<2x5x17x4xf32>
    %cst_3 = arith.constant dense<0.000000e+00> : vector<2x17x4xf32>
    %6 = vector.multi_reduction <add>, %5, %cst_3 [1] : vector<2x5x17x4xf32> to vector<2x17x4xf32>
    %7 = vector.shape_cast %6 : vector<2x17x4xf32> to vector<2x1x17x4xf32>
    %8 = vector.extract_strided_slice %1 {offsets = [0, 6, 0, 0], sizes = [2, 5, 17, 4], strides = [1, 1, 1, 1]} : vector<2x17x17x4xf32> to vector<2x5x17x4xf32>
    %cst_4 = arith.constant dense<0.000000e+00> : vector<2x17x4xf32>
    %9 = vector.multi_reduction <add>, %8, %cst_4 [1] : vector<2x5x17x4xf32> to vector<2x17x4xf32>
    %10 = vector.shape_cast %9 : vector<2x17x4xf32> to vector<2x1x17x4xf32>
    %11 = vector.extract_strided_slice %1 {offsets = [0, 9, 0, 0], sizes = [2, 5, 17, 4], strides = [1, 1, 1, 1]} : vector<2x17x17x4xf32> to vector<2x5x17x4xf32>
    %cst_5 = arith.constant dense<0.000000e+00> : vector<2x17x4xf32>
    %12 = vector.multi_reduction <add>, %11, %cst_5 [1] : vector<2x5x17x4xf32> to vector<2x17x4xf32>
    %13 = vector.shape_cast %12 : vector<2x17x4xf32> to vector<2x1x17x4xf32>
    %14 = vector.extract_strided_slice %1 {offsets = [0, 12, 0, 0], sizes = [2, 5, 17, 4], strides = [1, 1, 1, 1]} : vector<2x17x17x4xf32> to vector<2x5x17x4xf32>
    %cst_6 = arith.constant dense<0.000000e+00> : vector<2x17x4xf32>
    %15 = vector.multi_reduction <add>, %14, %cst_6 [1] : vector<2x5x17x4xf32> to vector<2x17x4xf32>
    %16 = vector.shape_cast %15 : vector<2x17x4xf32> to vector<2x1x17x4xf32>
    %17 = tpu.concatenate %4, %7, %10, %13, %16 in 1 : vector<2x1x17x4xf32>, vector<2x1x17x4xf32>, vector<2x1x17x4xf32>, vector<2x1x17x4xf32>, vector<2x1x17x4xf32> -> vector<2x5x17x4xf32>
    %18 = vector.extract_strided_slice %17 {offsets = [0, 0, 0, 0], sizes = [2, 5, 5, 4], strides = [1, 1, 1, 1]} : vector<2x5x17x4xf32> to vector<2x5x5x4xf32>
    %cst_7 = arith.constant dense<0.000000e+00> : vector<2x5x4xf32>
    %19 = vector.multi_reduction <add>, %18, %cst_7 [2] : vector<2x5x5x4xf32> to vector<2x5x4xf32>
    %20 = vector.shape_cast %19 : vector<2x5x4xf32> to vector<2x5x1x4xf32>
    %21 = vector.extract_strided_slice %17 {offsets = [0, 0, 3, 0], sizes = [2, 5, 5, 4], strides = [1, 1, 1, 1]} : vector<2x5x17x4xf32> to vector<2x5x5x4xf32>
    %cst_8 = arith.constant dense<0.000000e+00> : vector<2x5x4xf32>
    %22 = vector.multi_reduction <add>, %21, %cst_8 [2] : vector<2x5x5x4xf32> to vector<2x5x4xf32>
    %23 = vector.shape_cast %22 : vector<2x5x4xf32> to vector<2x5x1x4xf32>
    %24 = vector.extract_strided_slice %17 {offsets = [0, 0, 6, 0], sizes = [2, 5, 5, 4], strides = [1, 1, 1, 1]} : vector<2x5x17x4xf32> to vector<2x5x5x4xf32>
    %cst_9 = arith.constant dense<0.000000e+00> : vector<2x5x4xf32>
    %25 = vector.multi_reduction <add>, %24, %cst_9 [2] : vector<2x5x5x4xf32> to vector<2x5x4xf32>
    %26 = vector.shape_cast %25 : vector<2x5x4xf32> to vector<2x5x1x4xf32>
    %27 = vector.extract_strided_slice %17 {offsets = [0, 0, 9, 0], sizes = [2, 5, 5, 4], strides = [1, 1, 1, 1]} : vector<2x5x17x4xf32> to vector<2x5x5x4xf32>
    %cst_10 = arith.constant dense<0.000000e+00> : vector<2x5x4xf32>
    %28 = vector.multi_reduction <add>, %27, %cst_10 [2] : vector<2x5x5x4xf32> to vector<2x5x4xf32>
    %29 = vector.shape_cast %28 : vector<2x5x4xf32> to vector<2x5x1x4xf32>
    %30 = vector.extract_strided_slice %17 {offsets = [0, 0, 12, 0], sizes = [2, 5, 5, 4], strides = [1, 1, 1, 1]} : vector<2x5x17x4xf32> to vector<2x5x5x4xf32>
    %cst_11 = arith.constant dense<0.000000e+00> : vector<2x5x4xf32>
    %31 = vector.multi_reduction <add>, %30, %cst_11 [2] : vector<2x5x5x4xf32> to vector<2x5x4xf32>
    %32 = vector.shape_cast %31 : vector<2x5x4xf32> to vector<2x5x1x4xf32>
    %33 = tpu.concatenate %20, %23, %26, %29, %32 in 2 : vector<2x5x1x4xf32>, vector<2x5x1x4xf32>, vector<2x5x1x4xf32>, vector<2x5x1x4xf32>, vector<2x5x1x4xf32> -> vector<2x5x5x4xf32>
    %cst_12 = arith.constant 4.000000e-02 : f32
    %34 = vector.broadcast %cst_12 : f32 to vector<2x5x5x4xf32>
    %35 = arith.mulf %33, %34 : vector<2x5x5x4xf32>
    %36 = arith.truncf %35 : vector<2x5x5x4xf32> to vector<2x5x5x4xbf16>
    %c0_13 = arith.constant 0 : index
    %c0_14 = arith.constant 0 : index
    %c0_15 = arith.constant 0 : index
    %c0_16 = arith.constant 0 : index
    %37 = vector.load %arg2[%c0_13, %c0_14, %c0_15, %c0_16] : memref<2x5x5x4xbf16, #tpu.memory_space<vmem>>, vector<2x5x5x4xbf16>
    tpu.vector_store %arg2[%c0_13, %c0_14, %c0_15, %c0_16], %36 {strides = array<i32>} : memref<2x5x5x4xbf16, #tpu.memory_space<vmem>>, vector<2x5x5x4xbf16>,
    return
  }
  func.func @transform_0(%arg0: i32) -> (i32, i32, i32, i32) {
    %c0_i32 = arith.constant 0 : i32
    %c0_i32_0 = arith.constant 0 : i32
    %c0_i32_1 = arith.constant 0 : i32
    %c0_i32_2 = arith.constant 0 : i32
    return %arg0, %c0_i32, %c0_i32_0, %c0_i32_1 : i32, i32, i32, i32
  }
  func.func @transform_1(%arg0: i32) -> (i32, i32, i32, i32) {
    %c0_i32 = arith.constant 0 : i32
    %c0_i32_0 = arith.constant 0 : i32
    %c0_i32_1 = arith.constant 0 : i32
    %c0_i32_2 = arith.constant 0 : i32
    return %arg0, %c0_i32, %c0_i32_0, %c0_i32_1 : i32, i32, i32, i32
  }
}

module attributes {stable_mosaic.version = 11 : i64} {
  func.func @_matmul_stats_kernel(%arg0: i32, %arg1: i32, %arg2: memref<56x4xbf16, #tpu.memory_space<vmem>>, %arg3: memref<4x128xbf16, #tpu.memory_space<vmem>>, %arg4: memref<56x128xbf16, #tpu.memory_space<vmem>>, %arg5: memref<1x8x128xf32, #tpu.memory_space<vmem>>) attributes {dimension_semantics = [#tpu.dimension_semantics<parallel>, #tpu.dimension_semantics<parallel>], iteration_bounds = array<i64: 1, 1>, scalar_prefetch = 0 : i64, scratch_operands = 0 : i64, tpu.core_type = #tpu.core_type<tc>, window_params = [{transform_indices = @transform_0, window_bounds = array<i64: 56, 4>}, {transform_indices = @transform_1, window_bounds = array<i64: 4, 128>}, {transform_indices = @transform_2, window_bounds = array<i64: 56, 128>}, {transform_indices = @transform_3, window_bounds = array<i64: 1, 8, 128>}]} {
    %c0 = arith.constant 0 : index
    %c0_0 = arith.constant 0 : index
    %0 = vector.load %arg2[%c0, %c0_0] : memref<56x4xbf16, #tpu.memory_space<vmem>>, vector<56x4xbf16>
    %c0_1 = arith.constant 0 : index
    %c0_2 = arith.constant 0 : index
    %1 = vector.load %arg3[%c0_1, %c0_2] : memref<4x128xbf16, #tpu.memory_space<vmem>>, vector<4x128xbf16>
    %cst = arith.constant dense<0.000000e+00> : vector<56x128xf32>
    %2 = tpu.matmul %0, %1, %cst {dimension_numbers = #tpu.dot_dimension_numbers<[1], [0], [0], [1], [0, 0, 1, 1], [], []>} : vector<56x4xbf16>, vector<4x128xbf16>, vector<56x128xf32> -> vector<56x128xf32>
    %3 = arith.truncf %2 : vector<56x128xf32> to vector<56x128xbf16>
    %c0_3 = arith.constant 0 : index
    %c0_4 = arith.constant 0 : index
    %4 = vector.load %arg4[%c0_3, %c0_4] : memref<56x128xbf16, #tpu.memory_space<vmem>>, vector<56x128xbf16>
    tpu.vector_store %arg4[%c0_3, %c0_4], %3 {strides = array<i32>} : memref<56x128xbf16, #tpu.memory_space<vmem>>, vector<56x128xbf16>,
    %cst_5 = arith.constant dense<0.000000e+00> : vector<128xf32>
    %5 = vector.multi_reduction <add>, %2, %cst_5 [0] : vector<56x128xf32> to vector<128xf32>
    %6 = vector.shape_cast %5 : vector<128xf32> to vector<1x128xf32>
    %7 = arith.mulf %2, %2 : vector<56x128xf32>
    %cst_6 = arith.constant dense<0.000000e+00> : vector<128xf32>
    %8 = vector.multi_reduction <add>, %7, %cst_6 [0] : vector<56x128xf32> to vector<128xf32>
    %9 = vector.shape_cast %8 : vector<128xf32> to vector<1x128xf32>
    %cst_7 = arith.constant 0.000000e+00 : f32
    %10 = vector.broadcast %cst_7 : f32 to vector<6x128xf32>
    %11 = tpu.concatenate %6, %9, %10 in 0 : vector<1x128xf32>, vector<1x128xf32>, vector<6x128xf32> -> vector<8x128xf32>
    %c0_8 = arith.constant 0 : index
    %c0_9 = arith.constant 0 : index
    %c0_10 = arith.constant 0 : index
    %12 = vector.load %arg5[%c0_8, %c0_9, %c0_10] : memref<1x8x128xf32, #tpu.memory_space<vmem>>, vector<1x8x128xf32>
    %13 = vector.shape_cast %12 : vector<1x8x128xf32> to vector<8x128xf32>
    %14 = vector.shape_cast %11 : vector<8x128xf32> to vector<1x8x128xf32>
    tpu.vector_store %arg5[%c0_8, %c0_9, %c0_10], %14 {strides = array<i32>} : memref<1x8x128xf32, #tpu.memory_space<vmem>>, vector<1x8x128xf32>,
    return
  }
  func.func @transform_0(%arg0: i32, %arg1: i32) -> (i32, i32) {
    %c0_i32 = arith.constant 0 : i32
    %c0_i32_0 = arith.constant 0 : i32
    return %arg0, %c0_i32 : i32, i32
  }
  func.func @transform_1(%arg0: i32, %arg1: i32) -> (i32, i32) {
    %c0_i32 = arith.constant 0 : i32
    %c0_i32_0 = arith.constant 0 : i32
    return %c0_i32, %arg1 : i32, i32
  }
  func.func @transform_2(%arg0: i32, %arg1: i32) -> (i32, i32) {
    %c0_i32 = arith.constant 0 : i32
    return %arg0, %arg1 : i32, i32
  }
  func.func @transform_3(%arg0: i32, %arg1: i32) -> (i32, i32, i32) {
    %c0_i32 = arith.constant 0 : i32
    %c0_i32_0 = arith.constant 0 : i32
    return %arg0, %c0_i32, %arg1 : i32, i32, i32
  }
}

module attributes {stable_mosaic.version = 11 : i64} {
  func.func @_bn_matmul_stats_kernel(%arg0: i32, %arg1: i32, %arg2: memref<8x3200xbf16, #tpu.memory_space<vmem>>, %arg3: memref<1x3200xf32, #tpu.memory_space<vmem>>, %arg4: memref<1x3200xf32, #tpu.memory_space<vmem>>, %arg5: memref<3200x384xbf16, #tpu.memory_space<vmem>>, %arg6: memref<8x384xbf16, #tpu.memory_space<vmem>>, %arg7: memref<1x8x384xf32, #tpu.memory_space<vmem>>) attributes {dimension_semantics = [#tpu.dimension_semantics<parallel>, #tpu.dimension_semantics<parallel>], iteration_bounds = array<i64: 1, 2>, scalar_prefetch = 0 : i64, scratch_operands = 0 : i64, tpu.core_type = #tpu.core_type<tc>, window_params = [{transform_indices = @transform_0, window_bounds = array<i64: 8, 3200>}, {pipeline_mode = #tpu.pipeline_mode<synchronous>, transform_indices = @transform_1, window_bounds = array<i64: 1, 3200>}, {pipeline_mode = #tpu.pipeline_mode<synchronous>, transform_indices = @transform_2, window_bounds = array<i64: 1, 3200>}, {transform_indices = @transform_3, window_bounds = array<i64: 3200, 384>}, {transform_indices = @transform_4, window_bounds = array<i64: 8, 384>}, {transform_indices = @transform_5, window_bounds = array<i64: 1, 8, 384>}]} {
    %c0 = arith.constant 0 : index
    %c0_0 = arith.constant 0 : index
    %0 = vector.load %arg2[%c0, %c0_0] : memref<8x3200xbf16, #tpu.memory_space<vmem>>, vector<8x3200xbf16>
    %1 = arith.extf %0 : vector<8x3200xbf16> to vector<8x3200xf32>
    %c0_1 = arith.constant 0 : index
    %c0_2 = arith.constant 0 : index
    %2 = vector.load %arg3[%c0_1, %c0_2] : memref<1x3200xf32, #tpu.memory_space<vmem>>, vector<1x3200xf32>
    %3 = vector.broadcast %2 : vector<1x3200xf32> to vector<8x3200xf32>
    %4 = arith.mulf %1, %3 : vector<8x3200xf32>
    %c0_3 = arith.constant 0 : index
    %c0_4 = arith.constant 0 : index
    %5 = vector.load %arg4[%c0_3, %c0_4] : memref<1x3200xf32, #tpu.memory_space<vmem>>, vector<1x3200xf32>
    %6 = vector.broadcast %5 : vector<1x3200xf32> to vector<8x3200xf32>
    %7 = arith.addf %4, %6 : vector<8x3200xf32>
    %cst = arith.constant 0.000000e+00 : f32
    %8 = vector.broadcast %cst : f32 to vector<8x3200xf32>
    %9 = arith.maximumf %7, %8 : vector<8x3200xf32>
    %c8_i32 = arith.constant 8 : i32
    %10 = arith.muli %arg0, %c8_i32 : i32
    %11 = tpu.iota {dimensions = array<i32: 0>} : vector<8x1xi32>
    %12 = vector.broadcast %10 : i32 to vector<8x1xi32>
    %13 = arith.addi %12, %11 : vector<8x1xi32>
    %c2_i32 = arith.constant 2 : i32
    %14 = vector.broadcast %c2_i32 : i32 to vector<8x1xi32>
    %15 = arith.cmpi slt, %13, %14 : vector<8x1xi32>
    %cst_5 = arith.constant 0.000000e+00 : f32
    %16 = vector.shape_cast %15 : vector<8x1xi1> to vector<8x1xi1>
    %17 = vector.broadcast %16 : vector<8x1xi1> to vector<8x3200xi1>
    %18 = vector.broadcast %cst_5 : f32 to vector<8x3200xf32>
    %19 = arith.select %17, %9, %18 : vector<8x3200xi1>, vector<8x3200xf32>
    %20 = arith.truncf %19 : vector<8x3200xf32> to vector<8x3200xbf16>
    %c0_6 = arith.constant 0 : index
    %c0_7 = arith.constant 0 : index
    %21 = vector.load %arg5[%c0_6, %c0_7] : memref<3200x384xbf16, #tpu.memory_space<vmem>>, vector<3200x384xbf16>
    %cst_8 = arith.constant dense<0.000000e+00> : vector<8x384xf32>
    %22 = tpu.matmul %20, %21, %cst_8 {dimension_numbers = #tpu.dot_dimension_numbers<[1], [0], [0], [1], [0, 0, 1, 1], [], []>} : vector<8x3200xbf16>, vector<3200x384xbf16>, vector<8x384xf32> -> vector<8x384xf32>
    %23 = arith.truncf %22 : vector<8x384xf32> to vector<8x384xbf16>
    %c0_9 = arith.constant 0 : index
    %c0_10 = arith.constant 0 : index
    %24 = vector.load %arg6[%c0_9, %c0_10] : memref<8x384xbf16, #tpu.memory_space<vmem>>, vector<8x384xbf16>
    tpu.vector_store %arg6[%c0_9, %c0_10], %23 {strides = array<i32>} : memref<8x384xbf16, #tpu.memory_space<vmem>>, vector<8x384xbf16>,
    %cst_11 = arith.constant dense<0.000000e+00> : vector<384xf32>
    %25 = vector.multi_reduction <add>, %22, %cst_11 [0] : vector<8x384xf32> to vector<384xf32>
    %26 = vector.shape_cast %25 : vector<384xf32> to vector<1x384xf32>
    %27 = arith.mulf %22, %22 : vector<8x384xf32>
    %cst_12 = arith.constant dense<0.000000e+00> : vector<384xf32>
    %28 = vector.multi_reduction <add>, %27, %cst_12 [0] : vector<8x384xf32> to vector<384xf32>
    %29 = vector.shape_cast %28 : vector<384xf32> to vector<1x384xf32>
    %cst_13 = arith.constant 0.000000e+00 : f32
    %30 = vector.broadcast %cst_13 : f32 to vector<6x384xf32>
    %31 = tpu.concatenate %26, %29, %30 in 0 : vector<1x384xf32>, vector<1x384xf32>, vector<6x384xf32> -> vector<8x384xf32>
    %c0_14 = arith.constant 0 : index
    %c0_15 = arith.constant 0 : index
    %c0_16 = arith.constant 0 : index
    %32 = vector.load %arg7[%c0_14, %c0_15, %c0_16] : memref<1x8x384xf32, #tpu.memory_space<vmem>>, vector<1x8x384xf32>
    %33 = vector.shape_cast %32 : vector<1x8x384xf32> to vector<8x384xf32>
    %34 = vector.shape_cast %31 : vector<8x384xf32> to vector<1x8x384xf32>
    tpu.vector_store %arg7[%c0_14, %c0_15, %c0_16], %34 {strides = array<i32>} : memref<1x8x384xf32, #tpu.memory_space<vmem>>, vector<1x8x384xf32>,
    return
  }
  func.func @transform_0(%arg0: i32, %arg1: i32) -> (i32, i32) {
    %c0_i32 = arith.constant 0 : i32
    %c0_i32_0 = arith.constant 0 : i32
    return %arg0, %c0_i32 : i32, i32
  }
  func.func @transform_1(%arg0: i32, %arg1: i32) -> (i32, i32) {
    %c0_i32 = arith.constant 0 : i32
    %c0_i32_0 = arith.constant 0 : i32
    %c0_i32_1 = arith.constant 0 : i32
    return %c0_i32, %c0_i32_0 : i32, i32
  }
  func.func @transform_2(%arg0: i32, %arg1: i32) -> (i32, i32) {
    %c0_i32 = arith.constant 0 : i32
    %c0_i32_0 = arith.constant 0 : i32
    %c0_i32_1 = arith.constant 0 : i32
    return %c0_i32, %c0_i32_0 : i32, i32
  }
  func.func @transform_3(%arg0: i32, %arg1: i32) -> (i32, i32) {
    %c0_i32 = arith.constant 0 : i32
    %c0_i32_0 = arith.constant 0 : i32
    return %c0_i32, %arg1 : i32, i32
  }
  func.func @transform_4(%arg0: i32, %arg1: i32) -> (i32, i32) {
    %c0_i32 = arith.constant 0 : i32
    return %arg0, %arg1 : i32, i32
  }
  func.func @transform_5(%arg0: i32, %arg1: i32) -> (i32, i32, i32) {
    %c0_i32 = arith.constant 0 : i32
    %c0_i32_0 = arith.constant 0 : i32
    return %arg0, %c0_i32, %arg1 : i32, i32, i32
  }
}

module attributes {stable_mosaic.version = 11 : i64} {
  func.func @_bn_pool_fc_kernel(%arg0: i32, %arg1: memref<8x1x768xbf16, #tpu.memory_space<vmem>>, %arg2: memref<1x1x768xf32, #tpu.memory_space<vmem>>, %arg3: memref<1x1x768xf32, #tpu.memory_space<vmem>>, %arg4: memref<768x128xbf16, #tpu.memory_space<vmem>>, %arg5: memref<1x128xf32, #tpu.memory_space<vmem>>, %arg6: memref<8x128xf32, #tpu.memory_space<vmem>>) attributes {dimension_semantics = [#tpu.dimension_semantics<parallel>], iteration_bounds = array<i64: 1>, scalar_prefetch = 0 : i64, scratch_operands = 0 : i64, tpu.core_type = #tpu.core_type<tc>, window_params = [{transform_indices = @transform_0, window_bounds = array<i64: 8, 1, 768>}, {pipeline_mode = #tpu.pipeline_mode<synchronous>, transform_indices = @transform_1, window_bounds = array<i64: 1, 1, 768>}, {pipeline_mode = #tpu.pipeline_mode<synchronous>, transform_indices = @transform_2, window_bounds = array<i64: 1, 1, 768>}, {pipeline_mode = #tpu.pipeline_mode<synchronous>, transform_indices = @transform_3, window_bounds = array<i64: 768, 128>}, {pipeline_mode = #tpu.pipeline_mode<synchronous>, transform_indices = @transform_4, window_bounds = array<i64: 1, 128>}, {transform_indices = @transform_5, window_bounds = array<i64: 8, 128>}]} {
    %c0 = arith.constant 0 : index
    %c0_0 = arith.constant 0 : index
    %c0_1 = arith.constant 0 : index
    %0 = vector.load %arg1[%c0, %c0_0, %c0_1] : memref<8x1x768xbf16, #tpu.memory_space<vmem>>, vector<8x1x768xbf16>
    %1 = arith.extf %0 : vector<8x1x768xbf16> to vector<8x1x768xf32>
    %c0_2 = arith.constant 0 : index
    %c0_3 = arith.constant 0 : index
    %c0_4 = arith.constant 0 : index
    %2 = vector.load %arg2[%c0_2, %c0_3, %c0_4] : memref<1x1x768xf32, #tpu.memory_space<vmem>>, vector<1x1x768xf32>
    %3 = vector.broadcast %2 : vector<1x1x768xf32> to vector<8x1x768xf32>
    %4 = arith.mulf %1, %3 : vector<8x1x768xf32>
    %c0_5 = arith.constant 0 : index
    %c0_6 = arith.constant 0 : index
    %c0_7 = arith.constant 0 : index
    %5 = vector.load %arg3[%c0_5, %c0_6, %c0_7] : memref<1x1x768xf32, #tpu.memory_space<vmem>>, vector<1x1x768xf32>
    %6 = vector.broadcast %5 : vector<1x1x768xf32> to vector<8x1x768xf32>
    %7 = arith.addf %4, %6 : vector<8x1x768xf32>
    %cst = arith.constant 0.000000e+00 : f32
    %8 = vector.broadcast %cst : f32 to vector<8x1x768xf32>
    %9 = arith.maximumf %7, %8 : vector<8x1x768xf32>
    %cst_8 = arith.constant dense<0.000000e+00> : vector<8x768xf32>
    %10 = vector.multi_reduction <add>, %9, %cst_8 [1] : vector<8x1x768xf32> to vector<8x768xf32>
    %cst_9 = arith.constant 1.000000e+00 : f32
    %11 = vector.broadcast %cst_9 : f32 to vector<8x768xf32>
    %12 = arith.divf %10, %11 : vector<8x768xf32>
    %13 = arith.truncf %12 : vector<8x768xf32> to vector<8x768xbf16>
    %c0_10 = arith.constant 0 : index
    %c0_11 = arith.constant 0 : index
    %14 = vector.load %arg4[%c0_10, %c0_11] : memref<768x128xbf16, #tpu.memory_space<vmem>>, vector<768x128xbf16>
    %cst_12 = arith.constant dense<0.000000e+00> : vector<8x128xf32>
    %15 = tpu.matmul %13, %14, %cst_12 {dimension_numbers = #tpu.dot_dimension_numbers<[1], [0], [0], [1], [0, 0, 1, 1], [], []>} : vector<8x768xbf16>, vector<768x128xbf16>, vector<8x128xf32> -> vector<8x128xf32>
    %c0_13 = arith.constant 0 : index
    %c0_14 = arith.constant 0 : index
    %16 = vector.load %arg5[%c0_13, %c0_14] : memref<1x128xf32, #tpu.memory_space<vmem>>, vector<1x128xf32>
    %17 = vector.broadcast %16 : vector<1x128xf32> to vector<8x128xf32>
    %18 = arith.addf %15, %17 : vector<8x128xf32>
    %c0_15 = arith.constant 0 : index
    %c0_16 = arith.constant 0 : index
    %19 = vector.load %arg6[%c0_15, %c0_16] : memref<8x128xf32, #tpu.memory_space<vmem>>, vector<8x128xf32>
    tpu.vector_store %arg6[%c0_15, %c0_16], %18 {strides = array<i32>} : memref<8x128xf32, #tpu.memory_space<vmem>>, vector<8x128xf32>,
    return
  }
  func.func @transform_0(%arg0: i32) -> (i32, i32, i32) {
    %c0_i32 = arith.constant 0 : i32
    %c0_i32_0 = arith.constant 0 : i32
    %c0_i32_1 = arith.constant 0 : i32
    return %arg0, %c0_i32, %c0_i32_0 : i32, i32, i32
  }
  func.func @transform_1(%arg0: i32) -> (i32, i32, i32) {
    %c0_i32 = arith.constant 0 : i32
    %c0_i32_0 = arith.constant 0 : i32
    %c0_i32_1 = arith.constant 0 : i32
    %c0_i32_2 = arith.constant 0 : i32
    return %c0_i32, %c0_i32_0, %c0_i32_1 : i32, i32, i32
  }
  func.func @transform_2(%arg0: i32) -> (i32, i32, i32) {
    %c0_i32 = arith.constant 0 : i32
    %c0_i32_0 = arith.constant 0 : i32
    %c0_i32_1 = arith.constant 0 : i32
    %c0_i32_2 = arith.constant 0 : i32
    return %c0_i32, %c0_i32_0, %c0_i32_1 : i32, i32, i32
  }
  func.func @transform_3(%arg0: i32) -> (i32, i32) {
    %c0_i32 = arith.constant 0 : i32
    %c0_i32_0 = arith.constant 0 : i32
    %c0_i32_1 = arith.constant 0 : i32
    return %c0_i32, %c0_i32_0 : i32, i32
  }
  func.func @transform_4(%arg0: i32) -> (i32, i32) {
    %c0_i32 = arith.constant 0 : i32
    %c0_i32_0 = arith.constant 0 : i32
    %c0_i32_1 = arith.constant 0 : i32
    return %c0_i32, %c0_i32_0 : i32, i32
  }
  func.func @transform_5(%arg0: i32) -> (i32, i32) {
    %c0_i32 = arith.constant 0 : i32
    %c0_i32_0 = arith.constant 0 : i32
    return %arg0, %c0_i32 : i32, i32
  }
}

</mosaic_0001>

<llo_original>
// kernel: inception_aux.5
$region0: #{inception_aux.5}
  #allocation0 [shape = 'u32[]', space=smem, size = 0x4, offset = 0x4, fixed_abs, tag = 'smem constant byte address 0x4 - core index']
  #allocation1 [shape = 'u32[144,128]{1,0:T(1,128)}', space=vmem, size = 0x12000, scoped, tag = 'internal scratch']
  %s0 = inlined_call_operand.vmem [shape: bf16[56,4], index: 0, kind: input, shape index: {}]
  %s1 = inlined_call_operand.vmem [shape: bf16[4,128], index: 1, kind: input, shape index: {}]
  %s2 = inlined_call_operand.vmem [shape: bf16[56,128], index: 2, kind: output, shape index: {0}]
  %s3 = inlined_call_operand.vmem [shape: f32[1,8,128], index: 3, kind: output, shape index: {1}]
  %4 = xla_tuple %s2, %s3
  %s5 = sld [smem:[#allocation0]]
  $region26: #{inception_aux.5} parent=0
    _
  %s7 = ssub.s32 1, %s5
  %s8 = scalar_select 0, %s7, %s5
  // Predicated region
  $region2: #{inception_aux.5} parent=0 // pred_check
    _
  $region3: #{inception_aux.5} parent=0 // pred_check_branch
    %10 = sbr.rel (0) target = $region5
  $region4: #{inception_aux.5} parent=0 // pred_region
    _
  $region5: #{inception_aux.5} parent=0 // pred_fallthru
    _
  // Predicated region
  $region6: #{inception_aux.5} parent=0 // pred_check
    _
  $region7: #{inception_aux.5} parent=0 // pred_check_branch
    %12 = sbr.rel (0) target = $region9
  $region8: #{inception_aux.5} parent=0 // pred_region
    _
  $region9: #{inception_aux.5} parent=0 // pred_fallthru
    _
  %v14 = vld [vmem:[%s0] sm:$0xf]
  %v15 = vld [vmem:[%s0 + $0x4] sm:$0xf]
  %v16 = vld [vmem:[%s0 + $0x8] sm:$0xf]
  %v17 = vld [vmem:[%s0 + $0xc] sm:$0xf]
  %v18 = vld [vmem:[%s0 + $0x10] sm:$0xf]
  %v19 = vld [vmem:[%s0 + $0x14] sm:$0xf]
  %v20 = vld [vmem:[%s0 + $0x18] sm:$0xf]
  %v21 = vld [vmem:[%s1] sm:$0x3]
  %v29 = vunpack.c.l.b16 %v14
  %v30 = vunpack.c.l.b16 %v15
  %v31 = vunpack.c.l.b16 %v16
  %v32 = vunpack.c.l.b16 %v17
  %v33 = vunpack.c.l.b16 %v18
  %v34 = vunpack.c.l.b16 %v19
  %v35 = vunpack.c.l.b16 %v20
  %v36 = vpack.c.b16 %v30, %v29
  %v37 = vpack.c.b16 %v32, %v31
  %v38 = vpack.c.b16 %v34, %v33
  %v39 = vpack.c.b16 %v35, %v35
  %vm40 = vcmask 31744
  %v42 = vsel %vm40, %v36, 0
  %v45 = vsel %vm40, %v37, 0
  %v48 = vsel %vm40, %v38, 0
  %v51 = vsel %vm40, %v39, 0
  %vm53 = vcmask 1041408
  %v55 = vsel %vm53, %v21, 0
  %57 = vmatprep.subr.bf16.mxu0 0
  %58 = vmatpush1.bf16.msra.mxu0 %v55
  %59 = vmatprep.subr.bf16.mxu0 0
  %60 = vmatpush1.bf16.msra.mxu0 0
  %61 = vmatprep.subr.bf16.mxu0 0
  %62 = vmatpush1.bf16.msra.mxu0 0
  %63 = vmatprep.subr.bf16.mxu0 0
  %64 = vmatpush1.bf16.msra.mxu0 0
  %65 = vmatprep.subr.bf16.mxu0 0
  %66 = vmatpush1.bf16.msra.mxu0 0
  %67 = vmatprep.subr.bf16.mxu0 0
  %68 = vmatpush1.bf16.msra.mxu0 0
  %69 = vmatprep.subr.bf16.mxu0 0
  %70 = vmatpush1.bf16.msra.mxu0 0
  %71 = vmatprep.subr.bf16.mxu0 0
  %72 = vmatpush1.bf16.msra.mxu0 0
  %73 = vmatprep.subr.bf16.mxu0 0
  %74 = vmatpush1.bf16.msra.mxu0 0
  %75 = vmatprep.subr.bf16.mxu0 0
  %76 = vmatpush1.bf16.msra.mxu0 0
  %77 = vmatprep.subr.bf16.mxu0 0
  %78 = vmatpush1.bf16.msra.mxu0 0
  %79 = vmatprep.subr.bf16.mxu0 0
  %80 = vmatpush1.bf16.msra.mxu0 0
  %81 = vmatprep.subr.bf16.mxu0 0
  %82 = vmatpush1.bf16.msra.mxu0 0
  %83 = vmatprep.subr.bf16.mxu0 0
  %84 = vmatpush1.bf16.msra.mxu0 0
  %85 = vmatprep.subr.bf16.mxu0 0
  %86 = vmatpush1.bf16.msra.mxu0 0
  %87 = vmatprep.subr.bf16.mxu0 0
  %88 = vmatpush1.bf16.msra.mxu0 0
  %89 = vmatprep.mubr.bf16.mxu0 0
  %90 = vmatmul.mubr.bf16.gmra.mrb[0].mxu0 %v42
  %v91 = vpop.f32.mrb[0].mxu0
  %v92 = vadd.f32 0.0, %v91
  %v93 = vpop.f32.mrb[0].mxu0
  %v94 = vpop.f32.mrb[0].mxu0
  %v95 = vadd.f32 0.0, %v94
  %v96 = vpop.f32.mrb[0].mxu0
  %97 = vmatprep.mubr.bf16.mxu0 0
  %98 = vmatmul.mubr.bf16.gmra.mrb[0].mxu0 %v45
  %v99 = vpop.f32.mrb[0].mxu0
  %v100 = vadd.f32 0.0, %v99
  %v101 = vpop.f32.mrb[0].mxu0
  %v102 = vpop.f32.mrb[0].mxu0
  %v103 = vadd.f32 0.0, %v102
  %v104 = vpop.f32.mrb[0].mxu0
  %105 = vmatprep.mubr.bf16.mxu0 0
  %106 = vmatmul.mubr.bf16.gmra.mrb[0].mxu0 %v48
  %v107 = vpop.f32.mrb[0].mxu0
  %v108 = vadd.f32 0.0, %v107
  %v109 = vpop.f32.mrb[0].mxu0
  %v110 = vpop.f32.mrb[0].mxu0
  %v111 = vadd.f32 0.0, %v110
  %v112 = vpop.f32.mrb[0].mxu0
  %113 = vmatprep.mubr.bf16.mxu0 0
  %114 = vmatmul.mubr.bf16.gmra.mrb[0].mxu0 %v51
  %v115 = vpop.f32.mrb[0].mxu0
  %v116 = vadd.f32 0.0, %v115
  %v117 = vpop.f32.mrb[0].mxu0
  %v118 = vpop.f32.mrb[0].mxu0
  %v119 = vpop.f32.mrb[0].mxu0
  %120 = vdwg.mxu0
  %v121 = vpack.c.bf16 %v95, %v92
  %v122 = vpack.c.bf16 %v103, %v100
  %v123 = vpack.c.bf16 %v111, %v108
  %v124 = vpack.c.bf16 %v116, %v116
  %v129 = vunpack.c.l.b16 %v121
  %v130 = vunpack.c.h.b16 %v121
  %v131 = vunpack.c.l.b16 %v122
  %v132 = vunpack.c.h.b16 %v122
  %v133 = vunpack.c.l.b16 %v123
  %v134 = vunpack.c.h.b16 %v123
  %v135 = vunpack.c.l.b16 %v124
  %v136 = vpack.c.b16 %v129, %v129
  %v137 = vpack.c.b16 %v130, %v130
  %v138 = vpack.c.b16 %v131, %v131
  %v139 = vpack.c.b16 %v132, %v132
  %v140 = vpack.c.b16 %v133, %v133
  %v141 = vpack.c.b16 %v134, %v134
  %v142 = vpack.c.b16 %v135, %v135
  %150 = vst [vmem:[%s2] sm:$0xf] %v136
  %151 = vst [vmem:[%s2 + $0x4] sm:$0xf] %v137
  %152 = vst [vmem:[%s2 + $0x8] sm:$0xf] %v138
  %153 = vst [vmem:[%s2 + $0xc] sm:$0xf] %v139
  %154 = vst [vmem:[%s2 + $0x10] sm:$0xf] %v140
  %155 = vst [vmem:[%s2 + $0x14] sm:$0xf] %v141
  %156 = vst [vmem:[%s2 + $0x18] sm:$0xf] %v142
  %v157 = vadd.f32 %v92, %v95
  %v158 = vadd.f32 %v157, %v100
  %v159 = vadd.f32 %v158, %v103
  %v160 = vadd.f32 %v159, %v108
  %v161 = vadd.f32 %v160, %v111
  %v162 = vadd.f32 %v161, %v116
  %v163 = vrot.slane %v162, 4
  %v164 = vadd.f32 %v162, %v163
  %v165 = vrot.slane %v164, 2
  %v166 = vadd.f32 %v164, %v165
  %v167 = vrot.slane %v166, 1
  %v168 = vadd.f32 %v166, %v167
  %v169 = vmul.f32 %v92, %v92
  %v170 = vmul.f32 %v95, %v95
  %v171 = vmul.f32 %v100, %v100
  %v172 = vmul.f32 %v103, %v103
  %v173 = vmul.f32 %v108, %v108
  %v174 = vmul.f32 %v111, %v111
  %v175 = vmul.f32 %v116, %v116
  %v176 = vadd.f32 %v169, %v170
  %v177 = vadd.f32 %v176, %v171
  %v178 = vadd.f32 %v177, %v172
  %v179 = vadd.f32 %v178, %v173
  %v180 = vadd.f32 %v179, %v174
  %v181 = vadd.f32 %v180, %v175
  %v182 = vrot.slane %v181, 4
  %v183 = vadd.f32 %v181, %v182
  %v184 = vrot.slane %v183, 2
  %v185 = vadd.f32 %v183, %v184
  %v186 = vrot.slane %v185, 1
  %v187 = vadd.f32 %v185, %v186
  %vm188 = vcmask 1040384
  %v189 = vsel %vm188, %v168, %v187
  %v190 = vsel %vm53, %v189, 0.0
  %191 = vst [vmem:[%s3] sm:$0xff] %v190
  // Predicated region
  $region10: #{inception_aux.5} parent=0 // pred_check
    _
  $region11: #{inception_aux.5} parent=0 // pred_check_branch
    %193 = sbr.rel (0) target = $region13
  $region12: #{inception_aux.5} parent=0 // pred_region
    _
  $region13: #{inception_aux.5} parent=0 // pred_fallthru
    _
  // Predicated region
  $region14: #{inception_aux.5} parent=0 // pred_check
    _
  $region15: #{inception_aux.5} parent=0 // pred_check_branch
    %195 = sbr.rel (0) target = $region17
  $region16: #{inception_aux.5} parent=0 // pred_region
    _
  $region17: #{inception_aux.5} parent=0 // pred_fallthru
    _
  // Predicated region
  $region18: #{inception_aux.5} parent=0 // pred_check
    _
  $region19: #{inception_aux.5} parent=0 // pred_check_branch
    %197 = sbr.rel (0) target = $region21
  $region20: #{inception_aux.5} parent=0 // pred_region
    _
  $region21: #{inception_aux.5} parent=0 // pred_fallthru
    _
  // Predicated region
  $region22: #{inception_aux.5} parent=0 // pred_check
    _
  $region23: #{inception_aux.5} parent=0 // pred_check_branch
    %199 = sbr.rel (0) target = $region25
  $region24: #{inception_aux.5} parent=0 // pred_region
    _
  $region25: #{inception_aux.5} parent=0 // pred_fallthru
    _

// kernel: inception_aux.4
$region0: #{inception_aux.4}
  #allocation0 [shape = 'u32[]', space=smem, size = 0x4, offset = 0x4, fixed_abs, tag = 'smem constant byte address 0x4 - core index']
  #allocation1 [shape = 'u32[144,128]{1,0:T(1,128)}', space=vmem, size = 0x12000, scoped, tag = 'internal scratch']
  %s0 = inlined_call_operand.vmem [shape: bf16[2,17,17,4], index: 0, kind: input, shape index: {}]
  %s1 = inlined_call_operand.vmem [shape: bf16[2,5,5,4], index: 1, kind: output, shape index: {}]
  %s2 = sld [smem:[#allocation0]]
  $region14: #{inception_aux.4} parent=0
    _
  %s4 = ssub.s32 1, %s2
  %s5 = scalar_select 0, %s4, %s2
  // Predicated region
  $region2: #{inception_aux.4} parent=0 // pred_check
    _
  $region3: #{inception_aux.4} parent=0 // pred_check_branch
    %7 = sbr.rel (0) target = $region5
  $region4: #{inception_aux.4} parent=0 // pred_region
    _
  $region5: #{inception_aux.4} parent=0 // pred_fallthru
    _
  %v8 = vld [vmem:[%s0] sm:$0xf]
  %v9 = vld [vmem:[%s0 + $0x4] sm:$0xf]
  %v10 = vld [vmem:[%s0 + $0x8] sm:$0x1]
  %v11 = vld [vmem:[%s0 + $0xc] sm:$0xf]
  %v12 = vld [vmem:[%s0 + $0x10] sm:$0xf]
  %v13 = vld [vmem:[%s0 + $0x14] sm:$0x1]
  %v14 = vld [vmem:[%s0 + $0x18] sm:$0xf]
  %v15 = vld [vmem:[%s0 + $0x1c] sm:$0xf]
  %v16 = vld [vmem:[%s0 + $0x20] sm:$0x1]
  %v17 = vld [vmem:[%s0 + $0x24] sm:$0xf]
  %v18 = vld [vmem:[%s0 + $0x28] sm:$0xf]
  %v19 = vld [vmem:[%s0 + $0x2c] sm:$0x1]
  %v20 = vld [vmem:[%s0 + $0x30] sm:$0xf]
  %v21 = vld [vmem:[%s0 + $0x34] sm:$0xf]
  %v22 = vld [vmem:[%s0 + $0x38] sm:$0x1]
  %v23 = vld [vmem:[%s0 + $0x3c] sm:$0xf]
  %v24 = vld [vmem:[%s0 + $0x40] sm:$0xf]
  %v25 = vld [vmem:[%s0 + $0x44] sm:$0x1]
  %v26 = vld [vmem:[%s0 + $0x48] sm:$0xf]
  %v27 = vld [vmem:[%s0 + $0x4c] sm:$0xf]
  %v28 = vld [vmem:[%s0 + $0x50] sm:$0x1]
  %v29 = vld [vmem:[%s0 + $0x54] sm:$0xf]
  %v30 = vld [vmem:[%s0 + $0x58] sm:$0xf]
  %v31 = vld [vmem:[%s0 + $0x5c] sm:$0x1]
  %v32 = vld [vmem:[%s0 + $0x60] sm:$0xf]
  %v33 = vld [vmem:[%s0 + $0x64] sm:$0xf]
  %v34 = vld [vmem:[%s0 + $0x68] sm:$0x1]
  %v35 = vld [vmem:[%s0 + $0x6c] sm:$0xf]
  %v36 = vld [vmem:[%s0 + $0x70] sm:$0xf]
  %v37 = vld [vmem:[%s0 + $0x74] sm:$0x1]
  %v38 = vld [vmem:[%s0 + $0x78] sm:$0xf]
  %v39 = vld [vmem:[%s0 + $0x7c] sm:$0xf]
  %v40 = vld [vmem:[%s0 + $0x80] sm:$0x1]
  %v41 = vld [vmem:[%s0 + $0x84] sm:$0xf]
  %v42 = vld [vmem:[%s0 + $0x88] sm:$0xf]
  %v43 = vld [vmem:[%s0 + $0x8c] sm:$0x1]
  %v44 = vld [vmem:[%s0 + $0x90] sm:$0xf]
  %v45 = vld [vmem:[%s0 + $0x94] sm:$0xf]
  %v46 = vld [vmem:[%s0 + $0x98] sm:$0x1]
  %v47 = vld [vmem:[%s0 + $0x9c] sm:$0xf]
  %v48 = vld [vmem:[%s0 + $0xa0] sm:$0xf]
  %v49 = vld [vmem:[%s0 + $0xa4] sm:$0x1]
  %v50 = vld [vmem:[%s0 + $0xa8] sm:$0xf]
  %v51 = vld [vmem:[%s0 + $0xac] sm:$0xf]
  %v52 = vld [vmem:[%s0 + $0xb0] sm:$0x1]
  %v53 = vld [vmem:[%s0 + $0xb4] sm:$0xf]
  %v54 = vld [vmem:[%s0 + $0xb8] sm:$0xf]
  %v55 = vld [vmem:[%s0 + $0xbc] sm:$0x1]
  %v56 = vld [vmem:[%s0 + $0xc0] sm:$0xf]
  %v57 = vld [vmem:[%s0 + $0xc4] sm:$0xf]
  %v58 = vld [vmem:[%s0 + $0xc8] sm:$0x1]
  %v59 = vld [vmem:[%s0 + $0xcc] sm:$0xf]
  %v60 = vld [vmem:[%s0 + $0xd0] sm:$0xf]
  %v61 = vld [vmem:[%s0 + $0xd4] sm:$0x1]
  %v62 = vld [vmem:[%s0 + $0xd8] sm:$0xf]
  %v63 = vld [vmem:[%s0 + $0xdc] sm:$0xf]
  %v64 = vld [vmem:[%s0 + $0xe0] sm:$0x1]
  %v65 = vld [vmem:[%s0 + $0xe4] sm:$0xf]
  %v66 = vld [vmem:[%s0 + $0xe8] sm:$0xf]
  %v67 = vld [vmem:[%s0 + $0xec] sm:$0x1]
  %v68 = vld [vmem:[%s0 + $0xf0] sm:$0xf]
  %v69 = vld [vmem:[%s0 + $0xf4] sm:$0xf]
  %v70 = vld [vmem:[%s0 + $0xf8] sm:$0x1]
  %v71 = vld [vmem:[%s0 + $0xfc] sm:$0xf]
  %v72 = vld [vmem:[%s0 + $0x100] sm:$0xf]
  %v73 = vld [vmem:[%s0 + $0x104] sm:$0x1]
  %v74 = vld [vmem:[%s0 + $0x108] sm:$0xf]
  %v75 = vld [vmem:[%s0 + $0x10c] sm:$0xf]
  %v76 = vld [vmem:[%s0 + $0x110] sm:$0x1]
  %v77 = vld [vmem:[%s0 + $0x114] sm:$0xf]
  %v78 = vld [vmem:[%s0 + $0x118] sm:$0xf]
  %v79 = vld [vmem:[%s0 + $0x11c] sm:$0x1]
  %v80 = vld [vmem:[%s0 + $0x120] sm:$0xf]
  %v81 = vld [vmem:[%s0 + $0x124] sm:$0xf]
  %v82 = vld [vmem:[%s0 + $0x128] sm:$0x1]
  %v83 = vld [vmem:[%s0 + $0x12c] sm:$0xf]
  %v84 = vld [vmem:[%s0 + $0x130] sm:$0xf]
  %v85 = vld [vmem:[%s0 + $0x134] sm:$0x1]
  %v86 = vld [vmem:[%s0 + $0x138] sm:$0xf]
  %v87 = vld [vmem:[%s0 + $0x13c] sm:$0xf]
  %v88 = vld [vmem:[%s0 + $0x140] sm:$0x1]
  %v89 = vld [vmem:[%s0 + $0x144] sm:$0xf]
  %v90 = vld [vmem:[%s0 + $0x148] sm:$0xf]
  %v91 = vld [vmem:[%s0 + $0x14c] sm:$0x1]
  %v92 = vld [vmem:[%s0 + $0x150] sm:$0xf]
  %v93 = vld [vmem:[%s0 + $0x154] sm:$0xf]
  %v94 = vld [vmem:[%s0 + $0x158] sm:$0x1]
  %v95 = vld [vmem:[%s0 + $0x15c] sm:$0xf]
  %v96 = vld [vmem:[%s0 + $0x160] sm:$0xf]
  %v97 = vld [vmem:[%s0 + $0x164] sm:$0x1]
  %v98 = vld [vmem:[%s0 + $0x168] sm:$0xf]
  %v99 = vld [vmem:[%s0 + $0x16c] sm:$0xf]
  %v100 = vld [vmem:[%s0 + $0x170] sm:$0x1]
  %v101 = vld [vmem:[%s0 + $0x174] sm:$0xf]
  %v102 = vld [vmem:[%s0 + $0x178] sm:$0xf]
  %v103 = vld [vmem:[%s0 + $0x17c] sm:$0x1]
  %v104 = vld [vmem:[%s0 + $0x180] sm:$0xf]
  %v105 = vld [vmem:[%s0 + $0x184] sm:$0xf]
  %v106 = vld [vmem:[%s0 + $0x188] sm:$0x1]
  %v107 = vld [vmem:[%s0 + $0x18c] sm:$0xf]
  %v108 = vld [vmem:[%s0 + $0x190] sm:$0xf]
  %v109 = vld [vmem:[%s0 + $0x194] sm:$0x1]
  %v110 = vunpack.c.l.bf16 %v8
  %v111 = vunpack.c.l.bf16 %v9
  %v112 = vunpack.c.l.bf16 %v10
  %v113 = vunpack.c.l.bf16 %v11
  %v114 = vunpack.c.l.bf16 %v12
  %v115 = vunpack.c.l.bf16 %v13
  %v116 = vunpack.c.l.bf16 %v14
  %v117 = vunpack.c.l.bf16 %v15
  %v118 = vunpack.c.l.bf16 %v16
  %v119 = vunpack.c.l.bf16 %v17
  %v120 = vunpack.c.l.bf16 %v18
  %v121 = vunpack.c.l.bf16 %v19
  %v122 = vunpack.c.l.bf16 %v20
  %v123 = vunpack.c.l.bf16 %v21
  %v124 = vunpack.c.l.bf16 %v22
  %v125 = vunpack.c.l.bf16 %v23
  %v126 = vunpack.c.l.bf16 %v24
  %v127 = vunpack.c.l.bf16 %v25
  %v128 = vunpack.c.l.bf16 %v26
  %v129 = vunpack.c.l.bf16 %v27
  %v130 = vunpack.c.l.bf16 %v28
  %v131 = vunpack.c.l.bf16 %v29
  %v132 = vunpack.c.l.bf16 %v30
  %v133 = vunpack.c.l.bf16 %v31
  %v134 = vunpack.c.l.bf16 %v32
  %v135 = vunpack.c.l.bf16 %v33
  %v136 = vunpack.c.l.bf16 %v34
  %v137 = vunpack.c.l.bf16 %v35
  %v138 = vunpack.c.l.bf16 %v36
  %v139 = vunpack.c.l.bf16 %v37
  %v140 = vunpack.c.l.bf16 %v38
  %v141 = vunpack.c.l.bf16 %v39
  %v142 = vunpack.c.l.bf16 %v40
  %v143 = vunpack.c.l.bf16 %v41
  %v144 = vunpack.c.l.bf16 %v42
  %v145 = vunpack.c.l.bf16 %v43
  %v146 = vunpack.c.l.bf16 %v44
  %v147 = vunpack.c.l.bf16 %v45
  %v148 = vunpack.c.l.bf16 %v46
  %v149 = vunpack.c.l.bf16 %v47
  %v150 = vunpack.c.l.bf16 %v48
  %v151 = vunpack.c.l.bf16 %v49
  %v152 = vunpack.c.l.bf16 %v50
  %v153 = vunpack.c.l.bf16 %v51
  %v154 = vunpack.c.l.bf16 %v52
  %v155 = vunpack.c.l.bf16 %v53
  %v156 = vunpack.c.l.bf16 %v54
  %v157 = vunpack.c.l.bf16 %v55
  %v158 = vunpack.c.l.bf16 %v56
  %v159 = vunpack.c.l.bf16 %v57
  %v160 = vunpack.c.l.bf16 %v58
  %v161 = vunpack.c.l.bf16 %v59
  %v162 = vunpack.c.l.bf16 %v60
  %v163 = vunpack.c.l.bf16 %v61
  %v164 = vunpack.c.l.bf16 %v62
  %v165 = vunpack.c.l.bf16 %v63
  %v166 = vunpack.c.l.bf16 %v64
  %v167 = vunpack.c.l.bf16 %v65
  %v168 = vunpack.c.l.bf16 %v66
  %v169 = vunpack.c.l.bf16 %v67
  %v170 = vunpack.c.l.bf16 %v68
  %v171 = vunpack.c.l.bf16 %v69
  %v172 = vunpack.c.l.bf16 %v70
  %v173 = vunpack.c.l.bf16 %v71
  %v174 = vunpack.c.l.bf16 %v72
  %v175 = vunpack.c.l.bf16 %v73
  %v176 = vunpack.c.l.bf16 %v74
  %v177 = vunpack.c.l.bf16 %v75
  %v178 = vunpack.c.l.bf16 %v76
  %v179 = vunpack.c.l.bf16 %v77
  %v180 = vunpack.c.l.bf16 %v78
  %v181 = vunpack.c.l.bf16 %v79
  %v182 = vunpack.c.l.bf16 %v80
  %v183 = vunpack.c.l.bf16 %v81
  %v184 = vunpack.c.l.bf16 %v82
  %v185 = vunpack.c.l.bf16 %v83
  %v186 = vunpack.c.l.bf16 %v84
  %v187 = vunpack.c.l.bf16 %v85
  %v188 = vunpack.c.l.bf16 %v86
  %v189 = vunpack.c.l.bf16 %v87
  %v190 = vunpack.c.l.bf16 %v88
  %v191 = vunpack.c.l.bf16 %v89
  %v192 = vunpack.c.l.bf16 %v90
  %v193 = vunpack.c.l.bf16 %v91
  %v194 = vunpack.c.l.bf16 %v92
  %v195 = vunpack.c.l.bf16 %v93
  %v196 = vunpack.c.l.bf16 %v94
  %v197 = vunpack.c.l.bf16 %v95
  %v198 = vunpack.c.l.bf16 %v96
  %v199 = vunpack.c.l.bf16 %v97
  %v200 = vunpack.c.l.bf16 %v98
  %v201 = vunpack.c.l.bf16 %v99
  %v202 = vunpack.c.l.bf16 %v100
  %v203 = vunpack.c.l.bf16 %v101
  %v204 = vunpack.c.l.bf16 %v102
  %v205 = vunpack.c.l.bf16 %v103
  %v206 = vunpack.c.l.bf16 %v104
  %v207 = vunpack.c.l.bf16 %v105
  %v208 = vunpack.c.l.bf16 %v106
  %v209 = vunpack.c.l.bf16 %v107
  %v210 = vunpack.c.l.bf16 %v108
  %v211 = vunpack.c.l.bf16 %v109
  %vm212 = vcmask 31744
  %v213 = vsel %vm212, %v110, 0.0
  %v214 = vsel %vm212, %v113, 0.0
  %v215 = vadd.f32 %v213, %v214
  %v216 = vsel %vm212, %v116, 0.0
  %v217 = vadd.f32 %v215, %v216
  %v218 = vsel %vm212, %v119, 0.0
  %v219 = vadd.f32 %v217, %v218
  %v220 = vsel %vm212, %v122, 0.0
  %v221 = vadd.f32 %v219, %v220
  %v222 = vsel %vm212, %v111, 0.0
  %v223 = vsel %vm212, %v114, 0.0
  %v224 = vadd.f32 %v222, %v223
  %v225 = vsel %vm212, %v117, 0.0
  %v226 = vadd.f32 %v224, %v225
  %v227 = vsel %vm212, %v120, 0.0
  %v228 = vadd.f32 %v226, %v227
  %v229 = vsel %vm212, %v123, 0.0
  %v230 = vadd.f32 %v228, %v229
  %vm231 = vcmask 24576
  %v232 = vsel %vm231, %v112, 0.0
  %v233 = vsel %vm231, %v115, 0.0
  %v234 = vadd.f32 %v232, %v233
  %v235 = vsel %vm231, %v118, 0.0
  %v236 = vadd.f32 %v234, %v235
  %v237 = vsel %vm231, %v121, 0.0
  %v238 = vadd.f32 %v236, %v237
  %v239 = vsel %vm231, %v124, 0.0
  %v240 = vadd.f32 %v238, %v239
  %v241 = vsel %vm212, %v161, 0.0
  %v242 = vsel %vm212, %v164, 0.0
  %v243 = vadd.f32 %v241, %v242
  %v244 = vsel %vm212, %v167, 0.0
  %v245 = vadd.f32 %v243, %v244
  %v246 = vsel %vm212, %v170, 0.0
  %v247 = vadd.f32 %v245, %v246
  %v248 = vsel %vm212, %v173, 0.0
  %v249 = vadd.f32 %v247, %v248
  %v250 = vsel %vm212, %v162, 0.0
  %v251 = vsel %vm212, %v165, 0.0
  %v252 = vadd.f32 %v250, %v251
  %v253 = vsel %vm212, %v168, 0.0
  %v254 = vadd.f32 %v252, %v253
  %v255 = vsel %vm212, %v171, 0.0
  %v256 = vadd.f32 %v254, %v255
  %v257 = vsel %vm212, %v174, 0.0
  %v258 = vadd.f32 %v256, %v257
  %v259 = vsel %vm231, %v163, 0.0
  %v260 = vsel %vm231, %v166, 0.0
  %v261 = vadd.f32 %v259, %v260
  %v262 = vsel %vm231, %v169, 0.0
  %v263 = vadd.f32 %v261, %v262
  %v264 = vsel %vm231, %v172, 0.0
  %v265 = vadd.f32 %v263, %v264
  %v266 = vsel %vm231, %v175, 0.0
  %v267 = vadd.f32 %v265, %v266
  %v268 = vadd.f32 %v218, %v220
  %v269 = vsel %vm212, %v125, 0.0
  %v270 = vadd.f32 %v268, %v269
  %v271 = vsel %vm212, %v128, 0.0
  %v272 = vadd.f32 %v270, %v271
  %v273 = vsel %vm212, %v131, 0.0
  %v274 = vadd.f32 %v272, %v273
  %v275 = vadd.f32 %v227, %v229
  %v276 = vsel %vm212, %v126, 0.0
  %v277 = vadd.f32 %v275, %v276
  %v278 = vsel %vm212, %v129, 0.0
  %v279 = vadd.f32 %v277, %v278
  %v280 = vsel %vm212, %v132, 0.0
  %v281 = vadd.f32 %v279, %v280
  %v282 = vadd.f32 %v237, %v239
  %v283 = vsel %vm231, %v127, 0.0
  %v284 = vadd.f32 %v282, %v283
  %v285 = vsel %vm231, %v130, 0.0
  %v286 = vadd.f32 %v284, %v285
  %v287 = vsel %vm231, %v133, 0.0
  %v288 = vadd.f32 %v286, %v287
  %v289 = vadd.f32 %v246, %v248
  %v290 = vsel %vm212, %v176, 0.0
  %v291 = vadd.f32 %v289, %v290
  %v292 = vsel %vm212, %v179, 0.0
  %v293 = vadd.f32 %v291, %v292
  %v294 = vsel %vm212, %v182, 0.0
  %v295 = vadd.f32 %v293, %v294
  %v296 = vadd.f32 %v255, %v257
  %v297 = vsel %vm212, %v177, 0.0
  %v298 = vadd.f32 %v296, %v297
  %v299 = vsel %vm212, %v180, 0.0
  %v300 = vadd.f32 %v298, %v299
  %v301 = vsel %vm212, %v183, 0.0
  %v302 = vadd.f32 %v300, %v301
  %v303 = vadd.f32 %v264, %v266
  %v304 = vsel %vm231, %v178, 0.0
  %v305 = vadd.f32 %v303, %v304
  %v306 = vsel %vm231, %v181, 0.0
  %v307 = vadd.f32 %v305, %v306
  %v308 = vsel %vm231, %v184, 0.0
  %v309 = vadd.f32 %v307, %v308
  %v310 = vadd.f32 %v271, %v273
  %v311 = vsel %vm212, %v134, 0.0
  %v312 = vadd.f32 %v310, %v311
  %v313 = vsel %vm212, %v137, 0.0
  %v314 = vadd.f32 %v312, %v313
  %v315 = vsel %vm212, %v140, 0.0
  %v316 = vadd.f32 %v314, %v315
  %v317 = vadd.f32 %v278, %v280
  %v318 = vsel %vm212, %v135, 0.0
  %v319 = vadd.f32 %v317, %v318
  %v320 = vsel %vm212, %v138, 0.0
  %v321 = vadd.f32 %v319, %v320
  %v322 = vsel %vm212, %v141, 0.0
  %v323 = vadd.f32 %v321, %v322
  %v324 = vadd.f32 %v285, %v287
  %v325 = vsel %vm231, %v136, 0.0
  %v326 = vadd.f32 %v324, %v325
  %v327 = vsel %vm231, %v139, 0.0
  %v328 = vadd.f32 %v326, %v327
  %v329 = vsel %vm231, %v142, 0.0
  %v330 = vadd.f32 %v328, %v329
  %v331 = vadd.f32 %v292, %v294
  %v332 = vsel %vm212, %v185, 0.0
  %v333 = vadd.f32 %v331, %v332
  %v334 = vsel %vm212, %v188, 0.0
  %v335 = vadd.f32 %v333, %v334
  %v336 = vsel %vm212, %v191, 0.0
  %v337 = vadd.f32 %v335, %v336
  %v338 = vadd.f32 %v299, %v301
  %v339 = vsel %vm212, %v186, 0.0
  %v340 = vadd.f32 %v338, %v339
  %v341 = vsel %vm212, %v189, 0.0
  %v342 = vadd.f32 %v340, %v341
  %v343 = vsel %vm212, %v192, 0.0
  %v344 = vadd.f32 %v342, %v343
  %v345 = vadd.f32 %v306, %v308
  %v346 = vsel %vm231, %v187, 0.0
  %v347 = vadd.f32 %v345, %v346
  %v348 = vsel %vm231, %v190, 0.0
  %v349 = vadd.f32 %v347, %v348
  %v350 = vsel %vm231, %v193, 0.0
  %v351 = vadd.f32 %v349, %v350
  %v352 = vadd.f32 %v313, %v315
  %v353 = vsel %vm212, %v143, 0.0
  %v354 = vadd.f32 %v352, %v353
  %v355 = vsel %vm212, %v146, 0.0
  %v356 = vadd.f32 %v354, %v355
  %v357 = vsel %vm212, %v149, 0.0
  %v358 = vadd.f32 %v356, %v357
  %v359 = vadd.f32 %v320, %v322
  %v360 = vsel %vm212, %v144, 0.0
  %v361 = vadd.f32 %v359, %v360
  %v362 = vsel %vm212, %v147, 0.0
  %v363 = vadd.f32 %v361, %v362
  %v364 = vsel %vm212, %v150, 0.0
  %v365 = vadd.f32 %v363, %v364
  %v366 = vadd.f32 %v327, %v329
  %v367 = vsel %vm231, %v145, 0.0
  %v368 = vadd.f32 %v366, %v367
  %v369 = vsel %vm231, %v148, 0.0
  %v370 = vadd.f32 %v368, %v369
  %v371 = vsel %vm231, %v151, 0.0
  %v372 = vadd.f32 %v370, %v371
  %v373 = vadd.f32 %v334, %v336
  %v374 = vsel %vm212, %v194, 0.0
  %v375 = vadd.f32 %v373, %v374
  %v376 = vsel %vm212, %v197, 0.0
  %v377 = vadd.f32 %v375, %v376
  %v378 = vsel %vm212, %v200, 0.0
  %v379 = vadd.f32 %v377, %v378
  %v380 = vadd.f32 %v341, %v343
  %v381 = vsel %vm212, %v195, 0.0
  %v382 = vadd.f32 %v380, %v381
  %v383 = vsel %vm212, %v198, 0.0
  %v384 = vadd.f32 %v382, %v383
  %v385 = vsel %vm212, %v201, 0.0
  %v386 = vadd.f32 %v384, %v385
  %v387 = vadd.f32 %v348, %v350
  %v388 = vsel %vm231, %v196, 0.0
  %v389 = vadd.f32 %v387, %v388
  %v390 = vsel %vm231, %v199, 0.0
  %v391 = vadd.f32 %v389, %v390
  %v392 = vsel %vm231, %v202, 0.0
  %v393 = vadd.f32 %v391, %v392
  %v394 = vadd.f32 %v355, %v357
  %v395 = vsel %vm212, %v152, 0.0
  %v396 = vadd.f32 %v394, %v395
  %v397 = vsel %vm212, %v155, 0.0
  %v398 = vadd.f32 %v396, %v397
  %v399 = vsel %vm212, %v158, 0.0
  %v400 = vadd.f32 %v398, %v399
  %v401 = vadd.f32 %v362, %v364
  %v402 = vsel %vm212, %v153, 0.0
  %v403 = vadd.f32 %v401, %v402
  %v404 = vsel %vm212, %v156, 0.0
  %v405 = vadd.f32 %v403, %v404
  %v406 = vsel %vm212, %v159, 0.0
  %v407 = vadd.f32 %v405, %v406
  %v408 = vadd.f32 %v369, %v371
  %v409 = vsel %vm231, %v154, 0.0
  %v410 = vadd.f32 %v408, %v409
  %v411 = vsel %vm231, %v157, 0.0
  %v412 = vadd.f32 %v410, %v411
  %v413 = vsel %vm231, %v160, 0.0
  %v414 = vadd.f32 %v412, %v413
  %v415 = vadd.f32 %v376, %v378
  %v416 = vsel %vm212, %v203, 0.0
  %v417 = vadd.f32 %v415, %v416
  %v418 = vsel %vm212, %v206, 0.0
  %v419 = vadd.f32 %v417, %v418
  %v420 = vsel %vm212, %v209, 0.0
  %v421 = vadd.f32 %v419, %v420
  %v422 = vadd.f32 %v383, %v385
  %v423 = vsel %vm212, %v204, 0.0
  %v424 = vadd.f32 %v422, %v423
  %v425 = vsel %vm212, %v207, 0.0
  %v426 = vadd.f32 %v424, %v425
  %v427 = vsel %vm212, %v210, 0.0
  %v428 = vadd.f32 %v426, %v427
  %v429 = vadd.f32 %v390, %v392
  %v430 = vsel %vm231, %v205, 0.0
  %v431 = vadd.f32 %v429, %v430
  %v432 = vsel %vm231, %v208, 0.0
  %v433 = vadd.f32 %v431, %v432
  %v434 = vsel %vm231, %v211, 0.0
  %v435 = vadd.f32 %v433, %v434
  %vm436 = vcmask 28672
  %v437 = vsel %vm436, %v221, 0.0
  %v438 = vrot.slane %v437, 4
  %v439 = vadd.f32 %v437, %v438
  %v440 = vrot.slane %v439, 2
  %v441 = vadd.f32 %v439, %v440
  %v442 = vrot.slane %v441, 1
  %v443 = vadd.f32 %v441, %v442
  %v444 = vsel %vm436, %v274, 0.0
  %v445 = vrot.slane %v444, 4
  %v446 = vadd.f32 %v444, %v445
  %v447 = vrot.slane %v446, 2
  %v448 = vadd.f32 %v446, %v447
  %v449 = vrot.slane %v448, 1
  %v450 = vadd.f32 %v448, %v449
  %v451 = vsel %vm436, %v316, 0.0
  %v452 = vrot.slane %v451, 4
  %v453 = vadd.f32 %v451, %v452
  %v454 = vrot.slane %v453, 2
  %v455 = vadd.f32 %v453, %v454
  %v456 = vrot.slane %v455, 1
  %v457 = vadd.f32 %v455, %v456
  %v458 = vsel %vm436, %v358, 0.0
  %v459 = vrot.slane %v458, 4
  %v460 = vadd.f32 %v458, %v459
  %v461 = vrot.slane %v460, 2
  %v462 = vadd.f32 %v460, %v461
  %v463 = vrot.slane %v462, 1
  %v464 = vadd.f32 %v462, %v463
  %v465 = vsel %vm436, %v400, 0.0
  %v466 = vrot.slane %v465, 4
  %v467 = vadd.f32 %v465, %v466
  %v468 = vrot.slane %v467, 2
  %v469 = vadd.f32 %v467, %v468
  %v470 = vrot.slane %v469, 1
  %v471 = vadd.f32 %v469, %v470
  %v472 = vsel %vm436, %v249, 0.0
  %v473 = vrot.slane %v472, 4
  %v474 = vadd.f32 %v472, %v473
  %v475 = vrot.slane %v474, 2
  %v476 = vadd.f32 %v474, %v475
  %v477 = vrot.slane %v476, 1
  %v478 = vadd.f32 %v476, %v477
  %v479 = vsel %vm436, %v295, 0.0
  %v480 = vrot.slane %v479, 4
  %v481 = vadd.f32 %v479, %v480
  %v482 = vrot.slane %v481, 2
  %v483 = vadd.f32 %v481, %v482
  %v484 = vrot.slane %v483, 1
  %v485 = vadd.f32 %v483, %v484
  %v486 = vsel %vm436, %v337, 0.0
  %v487 = vrot.slane %v486, 4
  %v488 = vadd.f32 %v486, %v487
  %v489 = vrot.slane %v488, 2
  %v490 = vadd.f32 %v488, %v489
  %v491 = vrot.slane %v490, 1
  %v492 = vadd.f32 %v490, %v491
  %v493 = vsel %vm436, %v379, 0.0
  %v494 = vrot.slane %v493, 4
  %v495 = vadd.f32 %v493, %v494
  %v496 = vrot.slane %v495, 2
  %v497 = vadd.f32 %v495, %v496
  %v498 = vrot.slane %v497, 1
  %v499 = vadd.f32 %v497, %v498
  %v500 = vsel %vm436, %v421, 0.0
  %v501 = vrot.slane %v500, 4
  %v502 = vadd.f32 %v500, %v501
  %v503 = vrot.slane %v502, 2
  %v504 = vadd.f32 %v502, %v503
  %v505 = vrot.slane %v504, 1
  %v506 = vadd.f32 %v504, %v505
  %v517 = vrot.slane %v221, 3
  %v518 = vrot.slane %v274, 3
  %v519 = vrot.slane %v316, 3
  %v520 = vrot.slane %v358, 3
  %v521 = vrot.slane %v400, 3
  %v522 = vrot.slane %v249, 3
  %v523 = vrot.slane %v295, 3
  %v524 = vrot.slane %v337, 3
  %v525 = vrot.slane %v379, 3
  %v526 = vrot.slane %v421, 3
  %v537 = vsel %vm436, %v517, 0.0
  %v538 = vrot.slane %v537, 4
  %v539 = vadd.f32 %v537, %v538
  %v540 = vrot.slane %v539, 2
  %v541 = vadd.f32 %v539, %v540
  %v542 = vrot.slane %v541, 1
  %v543 = vadd.f32 %v541, %v542
  %v544 = vsel %vm436, %v518, 0.0
  %v545 = vrot.slane %v544, 4
  %v546 = vadd.f32 %v544, %v545
  %v547 = vrot.slane %v546, 2
  %v548 = vadd.f32 %v546, %v547
  %v549 = vrot.slane %v548, 1
  %v550 = vadd.f32 %v548, %v549
  %v551 = vsel %vm436, %v519, 0.0
  %v552 = vrot.slane %v551, 4
  %v553 = vadd.f32 %v551, %v552
  %v554 = vrot.slane %v553, 2
  %v555 = vadd.f32 %v553, %v554
  %v556 = vrot.slane %v555, 1
  %v557 = vadd.f32 %v555, %v556
  %v558 = vsel %vm436, %v520, 0.0
  %v559 = vrot.slane %v558, 4
  %v560 = vadd.f32 %v558, %v559
  %v561 = vrot.slane %v560, 2
  %v562 = vadd.f32 %v560, %v561
  %v563 = vrot.slane %v562, 1
  %v564 = vadd.f32 %v562, %v563
  %v565 = vsel %vm436, %v521, 0.0
  %v566 = vrot.slane %v565, 4
  %v567 = vadd.f32 %v565, %v566
  %v568 = vrot.slane %v567, 2
  %v569 = vadd.f32 %v567, %v568
  %v570 = vrot.slane %v569, 1
  %v571 = vadd.f32 %v569, %v570
  %v572 = vsel %vm436, %v522, 0.0
  %v573 = vrot.slane %v572, 4
  %v574 = vadd.f32 %v572, %v573
  %v575 = vrot.slane %v574, 2
  %v576 = vadd.f32 %v574, %v575
  %v577 = vrot.slane %v576, 1
  %v578 = vadd.f32 %v576, %v577
  %v579 = vsel %vm436, %v523, 0.0
  %v580 = vrot.slane %v579, 4
  %v581 = vadd.f32 %v579, %v580
  %v582 = vrot.slane %v581, 2
  %v583 = vadd.f32 %v581, %v582
  %v584 = vrot.slane %v583, 1
  %v585 = vadd.f32 %v583, %v584
  %v586 = vsel %vm436, %v524, 0.0
  %v587 = vrot.slane %v586, 4
  %v588 = vadd.f32 %v586, %v587
  %v589 = vrot.slane %v588, 2
  %v590 = vadd.f32 %v588, %v589
  %v591 = vrot.slane %v590, 1
  %v592 = vadd.f32 %v590, %v591
  %v593 = vsel %vm436, %v525, 0.0
  %v594 = vrot.slane %v593, 4
  %v595 = vadd.f32 %v593, %v594
  %v596 = vrot.slane %v595, 2
  %v597 = vadd.f32 %v595, %v596
  %v598 = vrot.slane %v597, 1
  %v599 = vadd.f32 %v597, %v598
  %v600 = vsel %vm436, %v526, 0.0
  %v601 = vrot.slane %v600, 4
  %v602 = vadd.f32 %v600, %v601
  %v603 = vrot.slane %v602, 2
  %v604 = vadd.f32 %v602, %v603
  %v605 = vrot.slane %v604, 1
  %v606 = vadd.f32 %v604, %v605
  %vm617 = vcmask 1041408
  %v618 = vrot.slane %v221, 6
  %v619 = vrot.slane %v230, 6
  %v620 = vsel %vm617, %v618, %v619
  %v621 = vrot.slane %v274, 6
  %v622 = vrot.slane %v281, 6
  %v623 = vsel %vm617, %v621, %v622
  %v624 = vrot.slane %v316, 6
  %v625 = vrot.slane %v323, 6
  %v626 = vsel %vm617, %v624, %v625
  %v627 = vrot.slane %v358, 6
  %v628 = vrot.slane %v365, 6
  %v629 = vsel %vm617, %v627, %v628
  %v630 = vrot.slane %v400, 6
  %v631 = vrot.slane %v407, 6
  %v632 = vsel %vm617, %v630, %v631
  %v633 = vrot.slane %v249, 6
  %v634 = vrot.slane %v258, 6
  %v635 = vsel %vm617, %v633, %v634
  %v636 = vrot.slane %v295, 6
  %v637 = vrot.slane %v302, 6
  %v638 = vsel %vm617, %v636, %v637
  %v639 = vrot.slane %v337, 6
  %v640 = vrot.slane %v344, 6
  %v641 = vsel %vm617, %v639, %v640
  %v642 = vrot.slane %v379, 6
  %v643 = vrot.slane %v386, 6
  %v644 = vsel %vm617, %v642, %v643
  %v645 = vrot.slane %v421, 6
  %v646 = vrot.slane %v428, 6
  %v647 = vsel %vm617, %v645, %v646
  %v658 = vsel %vm436, %v620, 0.0
  %v659 = vrot.slane %v658, 4
  %v660 = vadd.f32 %v658, %v659
  %v661 = vrot.slane %v660, 2
  %v662 = vadd.f32 %v660, %v661
  %v663 = vrot.slane %v662, 1
  %v664 = vadd.f32 %v662, %v663
  %v665 = vsel %vm436, %v623, 0.0
  %v666 = vrot.slane %v665, 4
  %v667 = vadd.f32 %v665, %v666
  %v668 = vrot.slane %v667, 2
  %v669 = vadd.f32 %v667, %v668
  %v670 = vrot.slane %v669, 1
  %v671 = vadd.f32 %v669, %v670
  %v672 = vsel %vm436, %v626, 0.0
  %v673 = vrot.slane %v672, 4
  %v674 = vadd.f32 %v672, %v673
  %v675 = vrot.slane %v674, 2
  %v676 = vadd.f32 %v674, %v675
  %v677 = vrot.slane %v676, 1
  %v678 = vadd.f32 %v676, %v677
  %v679 = vsel %vm436, %v629, 0.0
  %v680 = vrot.slane %v679, 4
  %v681 = vadd.f32 %v679, %v680
  %v682 = vrot.slane %v681, 2
  %v683 = vadd.f32 %v681, %v682
  %v684 = vrot.slane %v683, 1
  %v685 = vadd.f32 %v683, %v684
  %v686 = vsel %vm436, %v632, 0.0
  %v687 = vrot.slane %v686, 4
  %v688 = vadd.f32 %v686, %v687
  %v689 = vrot.slane %v688, 2
  %v690 = vadd.f32 %v688, %v689
  %v691 = vrot.slane %v690, 1
  %v692 = vadd.f32 %v690, %v691
  %v693 = vsel %vm436, %v635, 0.0
  %v694 = vrot.slane %v693, 4
  %v695 = vadd.f32 %v693, %v694
  %v696 = vrot.slane %v695, 2
  %v697 = vadd.f32 %v695, %v696
  %v698 = vrot.slane %v697, 1
  %v699 = vadd.f32 %v697, %v698
  %v700 = vsel %vm436, %v638, 0.0
  %v701 = vrot.slane %v700, 4
  %v702 = vadd.f32 %v700, %v701
  %v703 = vrot.slane %v702, 2
  %v704 = vadd.f32 %v702, %v703
  %v705 = vrot.slane %v704, 1
  %v706 = vadd.f32 %v704, %v705
  %v707 = vsel %vm436, %v641, 0.0
  %v708 = vrot.slane %v707, 4
  %v709 = vadd.f32 %v707, %v708
  %v710 = vrot.slane %v709, 2
  %v711 = vadd.f32 %v709, %v710
  %v712 = vrot.slane %v711, 1
  %v713 = vadd.f32 %v711, %v712
  %v714 = vsel %vm436, %v644, 0.0
  %v715 = vrot.slane %v714, 4
  %v716 = vadd.f32 %v714, %v715
  %v717 = vrot.slane %v716, 2
  %v718 = vadd.f32 %v716, %v717
  %v719 = vrot.slane %v718, 1
  %v720 = vadd.f32 %v718, %v719
  %v721 = vsel %vm436, %v647, 0.0
  %v722 = vrot.slane %v721, 4
  %v723 = vadd.f32 %v721, %v722
  %v724 = vrot.slane %v723, 2
  %v725 = vadd.f32 %v723, %v724
  %v726 = vrot.slane %v725, 1
  %v727 = vadd.f32 %v725, %v726
  %v728 = vrot.slane %v230, 1
  %v729 = vrot.slane %v281, 1
  %v730 = vrot.slane %v323, 1
  %v731 = vrot.slane %v365, 1
  %v732 = vrot.slane %v407, 1
  %v733 = vrot.slane %v258, 1
  %v734 = vrot.slane %v302, 1
  %v735 = vrot.slane %v344, 1
  %v736 = vrot.slane %v386, 1
  %v737 = vrot.slane %v428, 1
  %v748 = vsel %vm436, %v728, 0.0
  %v749 = vrot.slane %v748, 4
  %v750 = vadd.f32 %v748, %v749
  %v751 = vrot.slane %v750, 2
  %v752 = vadd.f32 %v750, %v751
  %v753 = vrot.slane %v752, 1
  %v754 = vadd.f32 %v752, %v753
  %v755 = vsel %vm436, %v729, 0.0
  %v756 = vrot.slane %v755, 4
  %v757 = vadd.f32 %v755, %v756
  %v758 = vrot.slane %v757, 2
  %v759 = vadd.f32 %v757, %v758
  %v760 = vrot.slane %v759, 1
  %v761 = vadd.f32 %v759, %v760
  %v762 = vsel %vm436, %v730, 0.0
  %v763 = vrot.slane %v762, 4
  %v764 = vadd.f32 %v762, %v763
  %v765 = vrot.slane %v764, 2
  %v766 = vadd.f32 %v764, %v765
  %v767 = vrot.slane %v766, 1
  %v768 = vadd.f32 %v766, %v767
  %v769 = vsel %vm436, %v731, 0.0
  %v770 = vrot.slane %v769, 4
  %v771 = vadd.f32 %v769, %v770
  %v772 = vrot.slane %v771, 2
  %v773 = vadd.f32 %v771, %v772
  %v774 = vrot.slane %v773, 1
  %v775 = vadd.f32 %v773, %v774
  %v776 = vsel %vm436, %v732, 0.0
  %v777 = vrot.slane %v776, 4
  %v778 = vadd.f32 %v776, %v777
  %v779 = vrot.slane %v778, 2
  %v780 = vadd.f32 %v778, %v779
  %v781 = vrot.slane %v780, 1
  %v782 = vadd.f32 %v780, %v781
  %v783 = vsel %vm436, %v733, 0.0
  %v784 = vrot.slane %v783, 4
  %v785 = vadd.f32 %v783, %v784
  %v786 = vrot.slane %v785, 2
  %v787 = vadd.f32 %v785, %v786
  %v788 = vrot.slane %v787, 1
  %v789 = vadd.f32 %v787, %v788
  %v790 = vsel %vm436, %v734, 0.0
  %v791 = vrot.slane %v790, 4
  %v792 = vadd.f32 %v790, %v791
  %v793 = vrot.slane %v792, 2
  %v794 = vadd.f32 %v792, %v793
  %v795 = vrot.slane %v794, 1
  %v796 = vadd.f32 %v794, %v795
  %v797 = vsel %vm436, %v735, 0.0
  %v798 = vrot.slane %v797, 4
  %v799 = vadd.f32 %v797, %v798
  %v800 = vrot.slane %v799, 2
  %v801 = vadd.f32 %v799, %v800
  %v802 = vrot.slane %v801, 1
  %v803 = vadd.f32 %v801, %v802
  %v804 = vsel %vm436, %v736, 0.0
  %v805 = vrot.slane %v804, 4
  %v806 = vadd.f32 %v804, %v805
  %v807 = vrot.slane %v806, 2
  %v808 = vadd.f32 %v806, %v807
  %v809 = vrot.slane %v808, 1
  %v810 = vadd.f32 %v808, %v809
  %v811 = vsel %vm436, %v737, 0.0
  %v812 = vrot.slane %v811, 4
  %v813 = vadd.f32 %v811, %v812
  %v814 = vrot.slane %v813, 2
  %v815 = vadd.f32 %v813, %v814
  %v816 = vrot.slane %v815, 1
  %v817 = vadd.f32 %v815, %v816
  %vm828 = vcmask 1043456
  %v829 = vrot.slane %v230, 4
  %v830 = vrot.slane %v240, 4
  %v831 = vsel %vm828, %v829, %v830
  %v832 = vrot.slane %v281, 4
  %v833 = vrot.slane %v288, 4
  %v834 = vsel %vm828, %v832, %v833
  %v835 = vrot.slane %v323, 4
  %v836 = vrot.slane %v330, 4
  %v837 = vsel %vm828, %v835, %v836
  %v838 = vrot.slane %v365, 4
  %v839 = vrot.slane %v372, 4
  %v840 = vsel %vm828, %v838, %v839
  %v841 = vrot.slane %v407, 4
  %v842 = vrot.slane %v414, 4
  %v843 = vsel %vm828, %v841, %v842
  %v844 = vrot.slane %v258, 4
  %v845 = vrot.slane %v267, 4
  %v846 = vsel %vm828, %v844, %v845
  %v847 = vrot.slane %v302, 4
  %v848 = vrot.slane %v309, 4
  %v849 = vsel %vm828, %v847, %v848
  %v850 = vrot.slane %v344, 4
  %v851 = vrot.slane %v351, 4
  %v852 = vsel %vm828, %v850, %v851
  %v853 = vrot.slane %v386, 4
  %v854 = vrot.slane %v393, 4
  %v855 = vsel %vm828, %v853, %v854
  %v856 = vrot.slane %v428, 4
  %v857 = vrot.slane %v435, 4
  %v858 = vsel %vm828, %v856, %v857
  %v869 = vsel %vm436, %v831, 0.0
  %v870 = vrot.slane %v869, 4
  %v871 = vadd.f32 %v869, %v870
  %v872 = vrot.slane %v871, 2
  %v873 = vadd.f32 %v871, %v872
  %v874 = vrot.slane %v873, 1
  %v875 = vadd.f32 %v873, %v874
  %v876 = vsel %vm436, %v834, 0.0
  %v877 = vrot.slane %v876, 4
  %v878 = vadd.f32 %v876, %v877
  %v879 = vrot.slane %v878, 2
  %v880 = vadd.f32 %v878, %v879
  %v881 = vrot.slane %v880, 1
  %v882 = vadd.f32 %v880, %v881
  %v883 = vsel %vm436, %v837, 0.0
  %v884 = vrot.slane %v883, 4
  %v885 = vadd.f32 %v883, %v884
  %v886 = vrot.slane %v885, 2
  %v887 = vadd.f32 %v885, %v886
  %v888 = vrot.slane %v887, 1
  %v889 = vadd.f32 %v887, %v888
  %v890 = vsel %vm436, %v840, 0.0
  %v891 = vrot.slane %v890, 4
  %v892 = vadd.f32 %v890, %v891
  %v893 = vrot.slane %v892, 2
  %v894 = vadd.f32 %v892, %v893
  %v895 = vrot.slane %v894, 1
  %v896 = vadd.f32 %v894, %v895
  %v897 = vsel %vm436, %v843, 0.0
  %v898 = vrot.slane %v897, 4
  %v899 = vadd.f32 %v897, %v898
  %v900 = vrot.slane %v899, 2
  %v901 = vadd.f32 %v899, %v900
  %v902 = vrot.slane %v901, 1
  %v903 = vadd.f32 %v901, %v902
  %v904 = vsel %vm436, %v846, 0.0
  %v905 = vrot.slane %v904, 4
  %v906 = vadd.f32 %v904, %v905
  %v907 = vrot.slane %v906, 2
  %v908 = vadd.f32 %v906, %v907
  %v909 = vrot.slane %v908, 1
  %v910 = vadd.f32 %v908, %v909
  %v911 = vsel %vm436, %v849, 0.0
  %v912 = vrot.slane %v911, 4
  %v913 = vadd.f32 %v911, %v912
  %v914 = vrot.slane %v913, 2
  %v915 = vadd.f32 %v913, %v914
  %v916 = vrot.slane %v915, 1
  %v917 = vadd.f32 %v915, %v916
  %v918 = vsel %vm436, %v852, 0.0
  %v919 = vrot.slane %v918, 4
  %v920 = vadd.f32 %v918, %v919
  %v921 = vrot.slane %v920, 2
  %v922 = vadd.f32 %v920, %v921
  %v923 = vrot.slane %v922, 1
  %v924 = vadd.f32 %v922, %v923
  %v925 = vsel %vm436, %v855, 0.0
  %v926 = vrot.slane %v925, 4
  %v927 = vadd.f32 %v925, %v926
  %v928 = vrot.slane %v927, 2
  %v929 = vadd.f32 %v927, %v928
  %v930 = vrot.slane %v929, 1
  %v931 = vadd.f32 %v929, %v930
  %v932 = vsel %vm436, %v858, 0.0
  %v933 = vrot.slane %v932, 4
  %v934 = vadd.f32 %v932, %v933
  %v935 = vrot.slane %v934, 2
  %v936 = vadd.f32 %v934, %v935
  %v937 = vrot.slane %v936, 1
  %v938 = vadd.f32 %v936, %v937
  %vm939 = vcmask 1040384
  %v940 = vsel %vm939, %v443, %v543
  %v941 = vsel %vm939, %v450, %v550
  %v942 = vsel %vm939, %v457, %v557
  %v943 = vsel %vm939, %v464, %v564
  %v944 = vsel %vm939, %v471, %v571
  %v945 = vsel %vm939, %v478, %v578
  %v946 = vsel %vm939, %v485, %v585
  %v947 = vsel %vm939, %v492, %v592
  %v948 = vsel %vm939, %v499, %v599
  %v949 = vsel %vm939, %v506, %v606
  %v950 = vsel %vm617, %v940, %v664
  %v951 = vsel %vm617, %v941, %v671
  %v952 = vsel %vm617, %v942, %v678
  %v953 = vsel %vm617, %v943, %v685
  %v954 = vsel %vm617, %v944, %v692
  %v955 = vsel %vm617, %v945, %v699
  %v956 = vsel %vm617, %v946, %v706
  %v957 = vsel %vm617, %v947, %v713
  %v958 = vsel %vm617, %v948, %v720
  %v959 = vsel %vm617, %v949, %v727
  %vm960 = vcmask 1042432
  %v961 = vsel %vm960, %v950, %v754
  %v962 = vsel %vm960, %v951, %v761
  %v963 = vsel %vm960, %v952, %v768
  %v964 = vsel %vm960, %v953, %v775
  %v965 = vsel %vm960, %v954, %v782
  %v966 = vsel %vm960, %v955, %v789
  %v967 = vsel %vm960, %v956, %v796
  %v968 = vsel %vm960, %v957, %v803
  %v969 = vsel %vm960, %v958, %v810
  %v970 = vsel %vm960, %v959, %v817
  %v971 = vsel %vm828, %v961, %v875
  %v972 = vsel %vm828, %v962, %v882
  %v973 = vsel %vm828, %v963, %v889
  %v974 = vsel %vm828, %v964, %v896
  %v975 = vsel %vm828, %v965, %v903
  %v976 = vsel %vm828, %v966, %v910
  %v977 = vsel %vm828, %v967, %v917
  %v978 = vsel %vm828, %v968, %v924
  %v979 = vsel %vm828, %v969, %v931
  %v980 = vsel %vm828, %v970, %v938
  %v981 = vmul.f32 %v971, 0.04
  %v982 = vmul.f32 %v972, 0.04
  %v983 = vmul.f32 %v973, 0.04
  %v984 = vmul.f32 %v974, 0.04
  %v985 = vmul.f32 %v975, 0.04
  %v986 = vmul.f32 %v976, 0.04
  %v987 = vmul.f32 %v977, 0.04
  %v988 = vmul.f32 %v978, 0.04
  %v989 = vmul.f32 %v979, 0.04
  %v990 = vmul.f32 %v980, 0.04
  %v991 = vpack.c.bf16 %v981, %v981
  %v992 = vpack.c.bf16 %v982, %v982
  %v993 = vpack.c.bf16 %v983, %v983
  %v994 = vpack.c.bf16 %v984, %v984
  %v995 = vpack.c.bf16 %v985, %v985
  %v996 = vpack.c.bf16 %v986, %v986
  %v997 = vpack.c.bf16 %v987, %v987
  %v998 = vpack.c.bf16 %v988, %v988
  %v999 = vpack.c.bf16 %v989, %v989
  %v1000 = vpack.c.bf16 %v990, %v990
  %vm1001 = vcmask 26624
  %vm1002 = vsmask.f32 2304
  %vm1003 = vmand %vm1001, %vm1002
  %v1004 = vld [vmem:[%s1] sm:$0x7]
  %v1005 = vsel %vm1003, %v991, %v1004
  %1006 = vst [vmem:[%s1] sm:$0x7] %v1005
  %v1007 = vld [vmem:[%s1 + $0x4] sm:$0x7]
  %v1008 = vsel %vm1003, %v992, %v1007
  %1009 = vst [vmem:[%s1 + $0x4] sm:$0x7] %v1008
  %v1010 = vld [vmem:[%s1 + $0x8] sm:$0x7]
  %v1011 = vsel %vm1003, %v993, %v1010
  %1012 = vst [vmem:[%s1 + $0x8] sm:$0x7] %v1011
  %v1013 = vld [vmem:[%s1 + $0xc] sm:$0x7]
  %v1014 = vsel %vm1003, %v994, %v1013
  %1015 = vst [vmem:[%s1 + $0xc] sm:$0x7] %v1014
  %v1016 = vld [vmem:[%s1 + $0x10] sm:$0x7]
  %v1017 = vsel %vm1003, %v995, %v1016
  %1018 = vst [vmem:[%s1 + $0x10] sm:$0x7] %v1017
  %v1019 = vld [vmem:[%s1 + $0x14] sm:$0x7]
  %v1020 = vsel %vm1003, %v996, %v1019
  %1021 = vst [vmem:[%s1 + $0x14] sm:$0x7] %v1020
  %v1022 = vld [vmem:[%s1 + $0x18] sm:$0x7]
  %v1023 = vsel %vm1003, %v997, %v1022
  %1024 = vst [vmem:[%s1 + $0x18] sm:$0x7] %v1023
  %v1025 = vld [vmem:[%s1 + $0x1c] sm:$0x7]
  %v1026 = vsel %vm1003, %v998, %v1025
  %1027 = vst [vmem:[%s1 + $0x1c] sm:$0x7] %v1026
  %v1028 = vld [vmem:[%s1 + $0x20] sm:$0x7]
  %v1029 = vsel %vm1003, %v999, %v1028
  %1030 = vst [vmem:[%s1 + $0x20] sm:$0x7] %v1029
  %v1031 = vld [vmem:[%s1 + $0x24] sm:$0x7]
  %v1032 = vsel %vm1003, %v1000, %v1031
  %1033 = vst [vmem:[%s1 + $0x24] sm:$0x7] %v1032
  // Predicated region
  $region6: #{inception_aux.4} parent=0 // pred_check
    _
  $region7: #{inception_aux.4} parent=0 // pred_check_branch
    %1035 = sbr.rel (0) target = $region9
  $region8: #{inception_aux.4} parent=0 // pred_region
    _
  $region9: #{inception_aux.4} parent=0 // pred_fallthru
    _
  // Predicated region
  $region10: #{inception_aux.4} parent=0 // pred_check
    _
  $region11: #{inception_aux.4} parent=0 // pred_check_branch
    %1037 = sbr.rel (0) target = $region13
  $region12: #{inception_aux.4} parent=0 // pred_region
    _
  $region13: #{inception_aux.4} parent=0 // pred_fallthru
    _

// kernel: inception_aux.7
$region0: #{inception_aux.7}
  #allocation0 [shape = 'u32[]', space=smem, size = 0x4, offset = 0x4, fixed_abs, tag = 'smem constant byte address 0x4 - core index']
  #allocation1 [shape = 'u32[144,128]{1,0:T(1,128)}', space=vmem, size = 0x12000, scoped, tag = 'internal scratch']
  %s0 = inlined_call_operand.vmem [shape: bf16[8,1,768], index: 0, kind: input, shape index: {}]
  %s1 = inlined_call_operand.vmem [shape: f32[1,1,768], index: 1, kind: input, shape index: {}]
  %s2 = inlined_call_operand.vmem [shape: f32[1,1,768], index: 2, kind: input, shape index: {}]
  %s3 = inlined_call_operand.vmem [shape: bf16[768,128], index: 3, kind: input, shape index: {}]
  %s4 = inlined_call_operand.vmem [shape: f32[1,128], index: 4, kind: input, shape index: {}]
  %s5 = inlined_call_operand.vmem [shape: f32[8,128], index: 5, kind: output, shape index: {}]
  %s6 = sld [smem:[#allocation0]]
  $region30: #{inception_aux.7} parent=0
    _
  %s8 = ssub.s32 1, %s6
  %s9 = scalar_select 0, %s8, %s6
  // Predicated region
  $region2: #{inception_aux.7} parent=0 // pred_check
    _
  $region3: #{inception_aux.7} parent=0 // pred_check_branch
    %11 = sbr.rel (0) target = $region5
  $region4: #{inception_aux.7} parent=0 // pred_region
    _
  $region5: #{inception_aux.7} parent=0 // pred_fallthru
    _
  // Predicated region
  $region6: #{inception_aux.7} parent=0 // pred_check
    _
  $region7: #{inception_aux.7} parent=0 // pred_check_branch
    %13 = sbr.rel (0) target = $region9
  $region8: #{inception_aux.7} parent=0 // pred_region
    _
  $region9: #{inception_aux.7} parent=0 // pred_fallthru
    _
  // Predicated region
  $region10: #{inception_aux.7} parent=0 // pred_check
    _
  $region11: #{inception_aux.7} parent=0 // pred_check_branch
    %15 = sbr.rel (0) target = $region13
  $region12: #{inception_aux.7} parent=0 // pred_region
    _
  $region13: #{inception_aux.7} parent=0 // pred_fallthru
    _
  // Predicated region
  $region14: #{inception_aux.7} parent=0 // pred_check
    _
  $region15: #{inception_aux.7} parent=0 // pred_check_branch
    %17 = sbr.rel (0) target = $region17
  $region16: #{inception_aux.7} parent=0 // pred_region
    _
  $region17: #{inception_aux.7} parent=0 // pred_fallthru
    _
  // Predicated region
  $region18: #{inception_aux.7} parent=0 // pred_check
    _
  $region19: #{inception_aux.7} parent=0 // pred_check_branch
    %19 = sbr.rel (0) target = $region21
  $region20: #{inception_aux.7} parent=0 // pred_region
    _
  $region21: #{inception_aux.7} parent=0 // pred_fallthru
    _
  %v21 = vld [vmem:[%s0] sm:$0x3f]
  %v22 = vld [vmem:[%s0 + $0x6] sm:$0x3f]
  %v23 = vld [vmem:[%s0 + $0xc] sm:$0x3f]
  %v24 = vld [vmem:[%s0 + $0x12] sm:$0x3f]
  %v25 = vld [vmem:[%s0 + $0x18] sm:$0x3f]
  %v26 = vld [vmem:[%s0 + $0x1e] sm:$0x3f]
  %v27 = vld [vmem:[%s0 + $0x24] sm:$0x3f]
  %v28 = vld [vmem:[%s0 + $0x2a] sm:$0x3f]
  %v29 = vunpack.c.l.bf16 %v21
  %v30 = vunpack.c.h.bf16 %v21
  %v31 = vunpack.c.l.bf16 %v22
  %v32 = vunpack.c.h.bf16 %v22
  %v33 = vunpack.c.l.bf16 %v23
  %v34 = vunpack.c.h.bf16 %v23
  %v35 = vunpack.c.l.bf16 %v24
  %v36 = vunpack.c.h.bf16 %v24
  %v37 = vunpack.c.l.bf16 %v25
  %v38 = vunpack.c.h.bf16 %v25
  %v39 = vunpack.c.l.bf16 %v26
  %v40 = vunpack.c.h.bf16 %v26
  %v41 = vunpack.c.l.bf16 %v27
  %v42 = vunpack.c.h.bf16 %v27
  %v43 = vunpack.c.l.bf16 %v28
  %v44 = vunpack.c.h.bf16 %v28
  %v45 = vld [vmem:[%s1] sm:$0x3f]
  %v48 = vunpack.c.l.s4 857870592
  %v49 = vunpack.c.0.s8 %v48
  %v50 = vlaneseq
  %v51 = vshrl.u32 %v50, 7
  %v52 = vsub.s32 %v49, %v51
  %v53 = vrot.slane %v45, %v52
  %v55 = vunpack.c.l.s4 2003195204
  %v56 = vunpack.c.0.s8 %v55
  %v57 = vlaneseq
  %v58 = vshrl.u32 %v57, 7
  %v59 = vsub.s32 %v56, %v58
  %v60 = vrot.slane %v45, %v59
  %v63 = vmul.f32 %v29, %v53
  %v64 = vmul.f32 %v30, %v60
  %v65 = vmul.f32 %v31, %v53
  %v66 = vmul.f32 %v32, %v60
  %v67 = vmul.f32 %v33, %v53
  %v68 = vmul.f32 %v34, %v60
  %v69 = vmul.f32 %v35, %v53
  %v70 = vmul.f32 %v36, %v60
  %v71 = vmul.f32 %v37, %v53
  %v72 = vmul.f32 %v38, %v60
  %v73 = vmul.f32 %v39, %v53
  %v74 = vmul.f32 %v40, %v60
  %v75 = vmul.f32 %v41, %v53
  %v76 = vmul.f32 %v42, %v60
  %v77 = vmul.f32 %v43, %v53
  %v78 = vmul.f32 %v44, %v60
  %v79 = vld [vmem:[%s2] sm:$0x3f]
  %v82 = vunpack.c.l.s4 857870592
  %v83 = vunpack.c.0.s8 %v82
  %v84 = vlaneseq
  %v85 = vshrl.u32 %v84, 7
  %v86 = vsub.s32 %v83, %v85
  %v87 = vrot.slane %v79, %v86
  %v89 = vunpack.c.l.s4 2003195204
  %v90 = vunpack.c.0.s8 %v89
  %v91 = vlaneseq
  %v92 = vshrl.u32 %v91, 7
  %v93 = vsub.s32 %v90, %v92
  %v94 = vrot.slane %v79, %v93
  %v97 = vadd.f32 %v63, %v87
  %v98 = vadd.f32 %v64, %v94
  %v99 = vadd.f32 %v65, %v87
  %v100 = vadd.f32 %v66, %v94
  %v101 = vadd.f32 %v67, %v87
  %v102 = vadd.f32 %v68, %v94
  %v103 = vadd.f32 %v69, %v87
  %v104 = vadd.f32 %v70, %v94
  %v105 = vadd.f32 %v71, %v87
  %v106 = vadd.f32 %v72, %v94
  %v107 = vadd.f32 %v73, %v87
  %v108 = vadd.f32 %v74, %v94
  %v109 = vadd.f32 %v75, %v87
  %v110 = vadd.f32 %v76, %v94
  %v111 = vadd.f32 %v77, %v87
  %v112 = vadd.f32 %v78, %v94
  %v113 = vmax.f32 %v97, 0.0
  %v114 = vmax.f32 %v98, 0.0
  %v115 = vmax.f32 %v99, 0.0
  %v116 = vmax.f32 %v100, 0.0
  %v117 = vmax.f32 %v101, 0.0
  %v118 = vmax.f32 %v102, 0.0
  %v119 = vmax.f32 %v103, 0.0
  %v120 = vmax.f32 %v104, 0.0
  %v121 = vmax.f32 %v105, 0.0
  %v122 = vmax.f32 %v106, 0.0
  %v123 = vmax.f32 %v107, 0.0
  %v124 = vmax.f32 %v108, 0.0
  %v125 = vmax.f32 %v109, 0.0
  %v126 = vmax.f32 %v110, 0.0
  %v127 = vmax.f32 %v111, 0.0
  %v128 = vmax.f32 %v112, 0.0
  %v129 = vadd.f32 %v113, 0.0
  %v130 = vadd.f32 %v114, 0.0
  %v131 = vadd.f32 %v115, 0.0
  %v132 = vadd.f32 %v116, 0.0
  %v133 = vadd.f32 %v117, 0.0
  %v134 = vadd.f32 %v118, 0.0
  %v135 = vadd.f32 %v119, 0.0
  %v136 = vadd.f32 %v120, 0.0
  %v137 = vadd.f32 %v121, 0.0
  %v138 = vadd.f32 %v122, 0.0
  %v139 = vadd.f32 %v123, 0.0
  %v140 = vadd.f32 %v124, 0.0
  %v141 = vadd.f32 %v125, 0.0
  %v142 = vadd.f32 %v126, 0.0
  %v143 = vadd.f32 %v127, 0.0
  %v144 = vadd.f32 %v128, 0.0
  %v161 = vlaneseq
  %v162 = vshrl.u32 %v161, 7
  %v163 = vsub.s32 0, %v162
  %v164 = vrot.slane %v129, %v163
  %v165 = vlaneseq
  %v166 = vshrl.u32 %v165, 7
  %v167 = vsub.s32 2, %v166
  %v168 = vrot.slane %v129, %v167
  %v169 = vlaneseq
  %v170 = vshrl.u32 %v169, 7
  %v171 = vsub.s32 4, %v170
  %v172 = vrot.slane %v129, %v171
  %v173 = vlaneseq
  %v174 = vshrl.u32 %v173, 7
  %v175 = vsub.s32 6, %v174
  %v176 = vrot.slane %v129, %v175
  %v177 = vlaneseq
  %v178 = vshrl.u32 %v177, 7
  %v179 = vsub.s32 0, %v178
  %v180 = vrot.slane %v130, %v179
  %v181 = vlaneseq
  %v182 = vshrl.u32 %v181, 7
  %v183 = vsub.s32 2, %v182
  %v184 = vrot.slane %v130, %v183
  %v185 = vlaneseq
  %v186 = vshrl.u32 %v185, 7
  %v187 = vsub.s32 0, %v186
  %v188 = vrot.slane %v131, %v187
  %v189 = vlaneseq
  %v190 = vshrl.u32 %v189, 7
  %v191 = vsub.s32 2, %v190
  %v192 = vrot.slane %v131, %v191
  %v193 = vlaneseq
  %v194 = vshrl.u32 %v193, 7
  %v195 = vsub.s32 4, %v194
  %v196 = vrot.slane %v131, %v195
  %v197 = vlaneseq
  %v198 = vshrl.u32 %v197, 7
  %v199 = vsub.s32 6, %v198
  %v200 = vrot.slane %v131, %v199
  %v201 = vlaneseq
  %v202 = vshrl.u32 %v201, 7
  %v203 = vsub.s32 0, %v202
  %v204 = vrot.slane %v132, %v203
  %v205 = vlaneseq
  %v206 = vshrl.u32 %v205, 7
  %v207 = vsub.s32 2, %v206
  %v208 = vrot.slane %v132, %v207
  %v209 = vlaneseq
  %v210 = vshrl.u32 %v209, 7
  %v211 = vsub.s32 0, %v210
  %v212 = vrot.slane %v133, %v211
  %v213 = vlaneseq
  %v214 = vshrl.u32 %v213, 7
  %v215 = vsub.s32 2, %v214
  %v216 = vrot.slane %v133, %v215
  %v217 = vlaneseq
  %v218 = vshrl.u32 %v217, 7
  %v219 = vsub.s32 4, %v218
  %v220 = vrot.slane %v133, %v219
  %v221 = vlaneseq
  %v222 = vshrl.u32 %v221, 7
  %v223 = vsub.s32 6, %v222
  %v224 = vrot.slane %v133, %v223
  %v225 = vlaneseq
  %v226 = vshrl.u32 %v225, 7
  %v227 = vsub.s32 0, %v226
  %v228 = vrot.slane %v134, %v227
  %v229 = vlaneseq
  %v230 = vshrl.u32 %v229, 7
  %v231 = vsub.s32 2, %v230
  %v232 = vrot.slane %v134, %v231
  %v233 = vlaneseq
  %v234 = vshrl.u32 %v233, 7
  %v235 = vsub.s32 0, %v234
  %v236 = vrot.slane %v135, %v235
  %v237 = vlaneseq
  %v238 = vshrl.u32 %v237, 7
  %v239 = vsub.s32 2, %v238
  %v240 = vrot.slane %v135, %v239
  %v241 = vlaneseq
  %v242 = vshrl.u32 %v241, 7
  %v243 = vsub.s32 4, %v242
  %v244 = vrot.slane %v135, %v243
  %v245 = vlaneseq
  %v246 = vshrl.u32 %v245, 7
  %v247 = vsub.s32 6, %v246
  %v248 = vrot.slane %v135, %v247
  %v249 = vlaneseq
  %v250 = vshrl.u32 %v249, 7
  %v251 = vsub.s32 0, %v250
  %v252 = vrot.slane %v136, %v251
  %v253 = vlaneseq
  %v254 = vshrl.u32 %v253, 7
  %v255 = vsub.s32 2, %v254
  %v256 = vrot.slane %v136, %v255
  %v257 = vlaneseq
  %v258 = vshrl.u32 %v257, 7
  %v259 = vsub.s32 0, %v258
  %v260 = vrot.slane %v137, %v259
  %v261 = vlaneseq
  %v262 = vshrl.u32 %v261, 7
  %v263 = vsub.s32 2, %v262
  %v264 = vrot.slane %v137, %v263
  %v265 = vlaneseq
  %v266 = vshrl.u32 %v265, 7
  %v267 = vsub.s32 4, %v266
  %v268 = vrot.slane %v137, %v267
  %v269 = vlaneseq
  %v270 = vshrl.u32 %v269, 7
  %v271 = vsub.s32 6, %v270
  %v272 = vrot.slane %v137, %v271
  %v273 = vlaneseq
  %v274 = vshrl.u32 %v273, 7
  %v275 = vsub.s32 0, %v274
  %v276 = vrot.slane %v138, %v275
  %v277 = vlaneseq
  %v278 = vshrl.u32 %v277, 7
  %v279 = vsub.s32 2, %v278
  %v280 = vrot.slane %v138, %v279
  %v281 = vlaneseq
  %v282 = vshrl.u32 %v281, 7
  %v283 = vsub.s32 0, %v282
  %v284 = vrot.slane %v139, %v283
  %v285 = vlaneseq
  %v286 = vshrl.u32 %v285, 7
  %v287 = vsub.s32 2, %v286
  %v288 = vrot.slane %v139, %v287
  %v289 = vlaneseq
  %v290 = vshrl.u32 %v289, 7
  %v291 = vsub.s32 4, %v290
  %v292 = vrot.slane %v139, %v291
  %v293 = vlaneseq
  %v294 = vshrl.u32 %v293, 7
  %v295 = vsub.s32 6, %v294
  %v296 = vrot.slane %v139, %v295
  %v297 = vlaneseq
  %v298 = vshrl.u32 %v297, 7
  %v299 = vsub.s32 0, %v298
  %v300 = vrot.slane %v140, %v299
  %v301 = vlaneseq
  %v302 = vshrl.u32 %v301, 7
  %v303 = vsub.s32 2, %v302
  %v304 = vrot.slane %v140, %v303
  %v305 = vlaneseq
  %v306 = vshrl.u32 %v305, 7
  %v307 = vsub.s32 0, %v306
  %v308 = vrot.slane %v141, %v307
  %v309 = vlaneseq
  %v310 = vshrl.u32 %v309, 7
  %v311 = vsub.s32 2, %v310
  %v312 = vrot.slane %v141, %v311
  %v313 = vlaneseq
  %v314 = vshrl.u32 %v313, 7
  %v315 = vsub.s32 4, %v314
  %v316 = vrot.slane %v141, %v315
  %v317 = vlaneseq
  %v318 = vshrl.u32 %v317, 7
  %v319 = vsub.s32 6, %v318
  %v320 = vrot.slane %v141, %v319
  %v321 = vlaneseq
  %v322 = vshrl.u32 %v321, 7
  %v323 = vsub.s32 0, %v322
  %v324 = vrot.slane %v142, %v323
  %v325 = vlaneseq
  %v326 = vshrl.u32 %v325, 7
  %v327 = vsub.s32 2, %v326
  %v328 = vrot.slane %v142, %v327
  %v329 = vlaneseq
  %v330 = vshrl.u32 %v329, 7
  %v331 = vsub.s32 0, %v330
  %v332 = vrot.slane %v143, %v331
  %v333 = vlaneseq
  %v334 = vshrl.u32 %v333, 7
  %v335 = vsub.s32 2, %v334
  %v336 = vrot.slane %v143, %v335
  %v337 = vlaneseq
  %v338 = vshrl.u32 %v337, 7
  %v339 = vsub.s32 4, %v338
  %v340 = vrot.slane %v143, %v339
  %v341 = vlaneseq
  %v342 = vshrl.u32 %v341, 7
  %v343 = vsub.s32 6, %v342
  %v344 = vrot.slane %v143, %v343
  %v345 = vlaneseq
  %v346 = vshrl.u32 %v345, 7
  %v347 = vsub.s32 0, %v346
  %v348 = vrot.slane %v144, %v347
  %v349 = vlaneseq
  %v350 = vshrl.u32 %v349, 7
  %v351 = vsub.s32 2, %v350
  %v352 = vrot.slane %v144, %v351
  %v401 = vpack.c.bf16 %v164, %v164
  %v402 = vpack.c.bf16 %v168, %v168
  %v403 = vpack.c.bf16 %v172, %v172
  %v404 = vpack.c.bf16 %v176, %v176
  %v405 = vpack.c.bf16 %v180, %v180
  %v406 = vpack.c.bf16 %v184, %v184
  %v407 = vpack.c.bf16 %v188, %v188
  %v408 = vpack.c.bf16 %v192, %v192
  %v409 = vpack.c.bf16 %v196, %v196
  %v410 = vpack.c.bf16 %v200, %v200
  %v411 = vpack.c.bf16 %v204, %v204
  %v412 = vpack.c.bf16 %v208, %v208
  %v413 = vpack.c.bf16 %v212, %v212
  %v414 = vpack.c.bf16 %v216, %v216
  %v415 = vpack.c.bf16 %v220, %v220
  %v416 = vpack.c.bf16 %v224, %v224
  %v417 = vpack.c.bf16 %v228, %v228
  %v418 = vpack.c.bf16 %v232, %v232
  %v419 = vpack.c.bf16 %v236, %v236
  %v420 = vpack.c.bf16 %v240, %v240
  %v421 = vpack.c.bf16 %v244, %v244
  %v422 = vpack.c.bf16 %v248, %v248
  %v423 = vpack.c.bf16 %v252, %v252
  %v424 = vpack.c.bf16 %v256, %v256
  %v425 = vpack.c.bf16 %v260, %v260
  %v426 = vpack.c.bf16 %v264, %v264
  %v427 = vpack.c.bf16 %v268, %v268
  %v428 = vpack.c.bf16 %v272, %v272
  %v429 = vpack.c.bf16 %v276, %v276
  %v430 = vpack.c.bf16 %v280, %v280
  %v431 = vpack.c.bf16 %v284, %v284
  %v432 = vpack.c.bf16 %v288, %v288
  %v433 = vpack.c.bf16 %v292, %v292
  %v434 = vpack.c.bf16 %v296, %v296
  %v435 = vpack.c.bf16 %v300, %v300
  %v436 = vpack.c.bf16 %v304, %v304
  %v437 = vpack.c.bf16 %v308, %v308
  %v438 = vpack.c.bf16 %v312, %v312
  %v439 = vpack.c.bf16 %v316, %v316
  %v440 = vpack.c.bf16 %v320, %v320
  %v441 = vpack.c.bf16 %v324, %v324
  %v442 = vpack.c.bf16 %v328, %v328
  %v443 = vpack.c.bf16 %v332, %v332
  %v444 = vpack.c.bf16 %v336, %v336
  %v445 = vpack.c.bf16 %v340, %v340
  %v446 = vpack.c.bf16 %v344, %v344
  %v447 = vpack.c.bf16 %v348, %v348
  %v448 = vpack.c.bf16 %v352, %v352
  %v449 = vld [vmem:[%s3] sm:$0xf]
  %v450 = vld [vmem:[%s3 + $0x4] sm:$0xf]
  %v451 = vld [vmem:[%s3 + $0x8] sm:$0xf]
  %v452 = vld [vmem:[%s3 + $0xc] sm:$0xf]
  %v453 = vld [vmem:[%s3 + $0x10] sm:$0xf]
  %v454 = vld [vmem:[%s3 + $0x14] sm:$0xf]
  %v455 = vld [vmem:[%s3 + $0x18] sm:$0xf]
  %v456 = vld [vmem:[%s3 + $0x1c] sm:$0xf]
  %v457 = vld [vmem:[%s3 + $0x20] sm:$0xf]
  %v458 = vld [vmem:[%s3 + $0x24] sm:$0xf]
  %v459 = vld [vmem:[%s3 + $0x28] sm:$0xf]
  %v460 = vld [vmem:[%s3 + $0x2c] sm:$0xf]
  %v461 = vld [vmem:[%s3 + $0x30] sm:$0xf]
  %v462 = vld [vmem:[%s3 + $0x34] sm:$0xf]
  %v463 = vld [vmem:[%s3 + $0x38] sm:$0xf]
  %v464 = vld [vmem:[%s3 + $0x3c] sm:$0xf]
  %v465 = vld [vmem:[%s3 + $0x40] sm:$0xf]
  %v466 = vld [vmem:[%s3 + $0x44] sm:$0xf]
  %v467 = vld [vmem:[%s3 + $0x48] sm:$0xf]
  %v468 = vld [vmem:[%s3 + $0x4c] sm:$0xf]
  %v469 = vld [vmem:[%s3 + $0x50] sm:$0xf]
  %v470 = vld [vmem:[%s3 + $0x54] sm:$0xf]
  %v471 = vld [vmem:[%s3 + $0x58] sm:$0xf]
  %v472 = vld [vmem:[%s3 + $0x5c] sm:$0xf]
  %v473 = vld [vmem:[%s3 + $0x60] sm:$0xf]
  %v474 = vld [vmem:[%s3 + $0x64] sm:$0xf]
  %v475 = vld [vmem:[%s3 + $0x68] sm:$0xf]
  %v476 = vld [vmem:[%s3 + $0x6c] sm:$0xf]
  %v477 = vld [vmem:[%s3 + $0x70] sm:$0xf]
  %v478 = vld [vmem:[%s3 + $0x74] sm:$0xf]
  %v479 = vld [vmem:[%s3 + $0x78] sm:$0xf]
  %v480 = vld [vmem:[%s3 + $0x7c] sm:$0xf]
  %v481 = vld [vmem:[%s3 + $0x80] sm:$0xf]
  %v482 = vld [vmem:[%s3 + $0x84] sm:$0xf]
  %v483 = vld [vmem:[%s3 + $0x88] sm:$0xf]
  %v484 = vld [vmem:[%s3 + $0x8c] sm:$0xf]
  %v485 = vld [vmem:[%s3 + $0x90] sm:$0xf]
  %v486 = vld [vmem:[%s3 + $0x94] sm:$0xf]
  %v487 = vld [vmem:[%s3 + $0x98] sm:$0xf]
  %v488 = vld [vmem:[%s3 + $0x9c] sm:$0xf]
  %v489 = vld [vmem:[%s3 + $0xa0] sm:$0xf]
  %v490 = vld [vmem:[%s3 + $0xa4] sm:$0xf]
  %v491 = vld [vmem:[%s3 + $0xa8] sm:$0xf]
  %v492 = vld [vmem:[%s3 + $0xac] sm:$0xf]
  %v493 = vld [vmem:[%s3 + $0xb0] sm:$0xf]
  %v494 = vld [vmem:[%s3 + $0xb4] sm:$0xf]
  %v495 = vld [vmem:[%s3 + $0xb8] sm:$0xf]
  %v496 = vld [vmem:[%s3 + $0xbc] sm:$0xf]
  %v497 = vld [vmem:[%s3 + $0xc0] sm:$0xf]
  %v498 = vld [vmem:[%s3 + $0xc4] sm:$0xf]
  %v499 = vld [vmem:[%s3 + $0xc8] sm:$0xf]
  %v500 = vld [vmem:[%s3 + $0xcc] sm:$0xf]
  %v501 = vld [vmem:[%s3 + $0xd0] sm:$0xf]
  %v502 = vld [vmem:[%s3 + $0xd4] sm:$0xf]
  %v503 = vld [vmem:[%s3 + $0xd8] sm:$0xf]
  %v504 = vld [vmem:[%s3 + $0xdc] sm:$0xf]
  %v505 = vld [vmem:[%s3 + $0xe0] sm:$0xf]
  %v506 = vld [vmem:[%s3 + $0xe4] sm:$0xf]
  %v507 = vld [vmem:[%s3 + $0xe8] sm:$0xf]
  %v508 = vld [vmem:[%s3 + $0xec] sm:$0xf]
  %v509 = vld [vmem:[%s3 + $0xf0] sm:$0xf]
  %v510 = vld [vmem:[%s3 + $0xf4] sm:$0xf]
  %v511 = vld [vmem:[%s3 + $0xf8] sm:$0xf]
  %v512 = vld [vmem:[%s3 + $0xfc] sm:$0xf]
  %v513 = vld [vmem:[%s3 + $0x100] sm:$0xf]
  %v514 = vld [vmem:[%s3 + $0x104] sm:$0xf]
  %v515 = vld [vmem:[%s3 + $0x108] sm:$0xf]
  %v516 = vld [vmem:[%s3 + $0x10c] sm:$0xf]
  %v517 = vld [vmem:[%s3 + $0x110] sm:$0xf]
  %v518 = vld [vmem:[%s3 + $0x114] sm:$0xf]
  %v519 = vld [vmem:[%s3 + $0x118] sm:$0xf]
  %v520 = vld [vmem:[%s3 + $0x11c] sm:$0xf]
  %v521 = vld [vmem:[%s3 + $0x120] sm:$0xf]
  %v522 = vld [vmem:[%s3 + $0x124] sm:$0xf]
  %v523 = vld [vmem:[%s3 + $0x128] sm:$0xf]
  %v524 = vld [vmem:[%s3 + $0x12c] sm:$0xf]
  %v525 = vld [vmem:[%s3 + $0x130] sm:$0xf]
  %v526 = vld [vmem:[%s3 + $0x134] sm:$0xf]
  %v527 = vld [vmem:[%s3 + $0x138] sm:$0xf]
  %v528 = vld [vmem:[%s3 + $0x13c] sm:$0xf]
  %v529 = vld [vmem:[%s3 + $0x140] sm:$0xf]
  %v530 = vld [vmem:[%s3 + $0x144] sm:$0xf]
  %v531 = vld [vmem:[%s3 + $0x148] sm:$0xf]
  %v532 = vld [vmem:[%s3 + $0x14c] sm:$0xf]
  %v533 = vld [vmem:[%s3 + $0x150] sm:$0xf]
  %v534 = vld [vmem:[%s3 + $0x154] sm:$0xf]
  %v535 = vld [vmem:[%s3 + $0x158] sm:$0xf]
  %v536 = vld [vmem:[%s3 + $0x15c] sm:$0xf]
  %v537 = vld [vmem:[%s3 + $0x160] sm:$0xf]
  %v538 = vld [vmem:[%s3 + $0x164] sm:$0xf]
  %v539 = vld [vmem:[%s3 + $0x168] sm:$0xf]
  %v540 = vld [vmem:[%s3 + $0x16c] sm:$0xf]
  %v541 = vld [vmem:[%s3 + $0x170] sm:$0xf]
  %v542 = vld [vmem:[%s3 + $0x174] sm:$0xf]
  %v543 = vld [vmem:[%s3 + $0x178] sm:$0xf]
  %v544 = vld [vmem:[%s3 + $0x17c] sm:$0xf]
  %v545 = vld [vmem:[%s4] sm:$0x1]
  %v547 = vlaneseq
  %v548 = vshrl.u32 %v547, 7
  %v549 = vsub.s32 0, %v548
  %v550 = vrot.slane %v545, %v549
  %v600 = vunpack.c.l.b16 %v401
  %v601 = vunpack.c.l.b16 %v402
  %v602 = vunpack.c.l.b16 %v403
  %v603 = vunpack.c.l.b16 %v404
  %v604 = vunpack.c.l.b16 %v405
  %v605 = vunpack.c.l.b16 %v406
  %v606 = vunpack.c.l.b16 %v407
  %v607 = vunpack.c.l.b16 %v408
  %v608 = vunpack.c.l.b16 %v409
  %v609 = vunpack.c.l.b16 %v410
  %v610 = vunpack.c.l.b16 %v411
  %v611 = vunpack.c.l.b16 %v412
  %v612 = vunpack.c.l.b16 %v413
  %v613 = vunpack.c.l.b16 %v414
  %v614 = vunpack.c.l.b16 %v415
  %v615 = vunpack.c.l.b16 %v416
  %v616 = vunpack.c.l.b16 %v417
  %v617 = vunpack.c.l.b16 %v418
  %v618 = vunpack.c.l.b16 %v419
  %v619 = vunpack.c.l.b16 %v420
  %v620 = vunpack.c.l.b16 %v421
  %v621 = vunpack.c.l.b16 %v422
  %v622 = vunpack.c.l.b16 %v423
  %v623 = vunpack.c.l.b16 %v424
  %v624 = vunpack.c.l.b16 %v425
  %v625 = vunpack.c.l.b16 %v426
  %v626 = vunpack.c.l.b16 %v427
  %v627 = vunpack.c.l.b16 %v428
  %v628 = vunpack.c.l.b16 %v429
  %v629 = vunpack.c.l.b16 %v430
  %v630 = vunpack.c.l.b16 %v431
  %v631 = vunpack.c.l.b16 %v432
  %v632 = vunpack.c.l.b16 %v433
  %v633 = vunpack.c.l.b16 %v434
  %v634 = vunpack.c.l.b16 %v435
  %v635 = vunpack.c.l.b16 %v436
  %v636 = vunpack.c.l.b16 %v437
  %v637 = vunpack.c.l.b16 %v438
  %v638 = vunpack.c.l.b16 %v439
  %v639 = vunpack.c.l.b16 %v440
  %v640 = vunpack.c.l.b16 %v441
  %v641 = vunpack.c.l.b16 %v442
  %v642 = vunpack.c.l.b16 %v443
  %v643 = vunpack.c.l.b16 %v444
  %v644 = vunpack.c.l.b16 %v445
  %v645 = vunpack.c.l.b16 %v446
  %v646 = vunpack.c.l.b16 %v447
  %v647 = vunpack.c.l.b16 %v448
  %v648 = vrot.slane %v606, 7
  %vm649 = vcmask 1041409
  %v650 = vsel %vm649, %v648, %v600
  %v651 = vrot.slane %v612, 6
  %vm652 = vcmask 1042434
  %v653 = vsel %vm652, %v651, %v650
  %v654 = vrot.slane %v618, 5
  %vm655 = vcmask 1043459
  %v656 = vsel %vm655, %v654, %v653
  %v657 = vrot.slane %v624, 4
  %vm658 = vcmask 1044484
  %v659 = vsel %vm658, %v657, %v656
  %v660 = vrot.slane %v630, 3
  %vm661 = vcmask 1045509
  %v662 = vsel %vm661, %v660, %v659
  %v663 = vrot.slane %v636, 2
  %vm664 = vcmask 1046534
  %v665 = vsel %vm664, %v663, %v662
  %v666 = vrot.slane %v642, 1
  %vm667 = vcmask 1047559
  %v668 = vsel %vm667, %v666, %v665
  %v669 = vrot.slane %v607, 7
  %v670 = vsel %vm649, %v669, %v601
  %v671 = vrot.slane %v613, 6
  %v672 = vsel %vm652, %v671, %v670
  %v673 = vrot.slane %v619, 5
  %v674 = vsel %vm655, %v673, %v672
  %v675 = vrot.slane %v625, 4
  %v676 = vsel %vm658, %v675, %v674
  %v677 = vrot.slane %v631, 3
  %v678 = vsel %vm661, %v677, %v676
  %v679 = vrot.slane %v637, 2
  %v680 = vsel %vm664, %v679, %v678
  %v681 = vrot.slane %v643, 1
  %v682 = vsel %vm667, %v681, %v680
  %v683 = vrot.slane %v608, 7
  %v684 = vsel %vm649, %v683, %v602
  %v685 = vrot.slane %v614, 6
  %v686 = vsel %vm652, %v685, %v684
  %v687 = vrot.slane %v620, 5
  %v688 = vsel %vm655, %v687, %v686
  %v689 = vrot.slane %v626, 4
  %v690 = vsel %vm658, %v689, %v688
  %v691 = vrot.slane %v632, 3
  %v692 = vsel %vm661, %v691, %v690
  %v693 = vrot.slane %v638, 2
  %v694 = vsel %vm664, %v693, %v692
  %v695 = vrot.slane %v644, 1
  %v696 = vsel %vm667, %v695, %v694
  %v697 = vrot.slane %v609, 7
  %v698 = vsel %vm649, %v697, %v603
  %v699 = vrot.slane %v615, 6
  %v700 = vsel %vm652, %v699, %v698
  %v701 = vrot.slane %v621, 5
  %v702 = vsel %vm655, %v701, %v700
  %v703 = vrot.slane %v627, 4
  %v704 = vsel %vm658, %v703, %v702
  %v705 = vrot.slane %v633, 3
  %v706 = vsel %vm661, %v705, %v704
  %v707 = vrot.slane %v639, 2
  %v708 = vsel %vm664, %v707, %v706
  %v709 = vrot.slane %v645, 1
  %v710 = vsel %vm667, %v709, %v708
  %v711 = vrot.slane %v610, 7
  %v712 = vsel %vm649, %v711, %v604
  %v713 = vrot.slane %v616, 6
  %v714 = vsel %vm652, %v713, %v712
  %v715 = vrot.slane %v622, 5
  %v716 = vsel %vm655, %v715, %v714
  %v717 = vrot.slane %v628, 4
  %v718 = vsel %vm658, %v717, %v716
  %v719 = vrot.slane %v634, 3
  %v720 = vsel %vm661, %v719, %v718
  %v721 = vrot.slane %v640, 2
  %v722 = vsel %vm664, %v721, %v720
  %v723 = vrot.slane %v646, 1
  %v724 = vsel %vm667, %v723, %v722
  %v725 = vrot.slane %v611, 7
  %v726 = vsel %vm649, %v725, %v605
  %v727 = vrot.slane %v617, 6
  %v728 = vsel %vm652, %v727, %v726
  %v729 = vrot.slane %v623, 5
  %v730 = vsel %vm655, %v729, %v728
  %v731 = vrot.slane %v629, 4
  %v732 = vsel %vm658, %v731, %v730
  %v733 = vrot.slane %v635, 3
  %v734 = vsel %vm661, %v733, %v732
  %v735 = vrot.slane %v641, 2
  %v736 = vsel %vm664, %v735, %v734
  %v737 = vrot.slane %v647, 1
  %v738 = vsel %vm667, %v737, %v736
  %v739 = vpack.c.b16 %v668, %v668
  %v740 = vpack.c.b16 %v682, %v682
  %v741 = vpack.c.b16 %v696, %v696
  %v742 = vpack.c.b16 %v710, %v710
  %v743 = vpack.c.b16 %v724, %v724
  %v744 = vpack.c.b16 %v738, %v738
  %v847 = vunpack.c.l.b16 %v449
  %v848 = vunpack.c.l.b16 %v450
  %v849 = vunpack.c.l.b16 %v451
  %v850 = vunpack.c.l.b16 %v452
  %v851 = vunpack.c.l.b16 %v453
  %v852 = vunpack.c.l.b16 %v454
  %v853 = vunpack.c.l.b16 %v455
  %v854 = vunpack.c.l.b16 %v456
  %v855 = vunpack.c.l.b16 %v457
  %v856 = vunpack.c.l.b16 %v458
  %v857 = vunpack.c.l.b16 %v459
  %v858 = vunpack.c.l.b16 %v460
  %v859 = vunpack.c.l.b16 %v461
  %v860 = vunpack.c.l.b16 %v462
  %v861 = vunpack.c.l.b16 %v463
  %v862 = vunpack.c.l.b16 %v464
  %v863 = vunpack.c.l.b16 %v465
  %v864 = vunpack.c.l.b16 %v466
  %v865 = vunpack.c.l.b16 %v467
  %v866 = vunpack.c.l.b16 %v468
  %v867 = vunpack.c.l.b16 %v469
  %v868 = vunpack.c.l.b16 %v470
  %v869 = vunpack.c.l.b16 %v471
  %v870 = vunpack.c.l.b16 %v472
  %v871 = vunpack.c.l.b16 %v473
  %v872 = vunpack.c.l.b16 %v474
  %v873 = vunpack.c.l.b16 %v475
  %v874 = vunpack.c.l.b16 %v476
  %v875 = vunpack.c.l.b16 %v477
  %v876 = vunpack.c.l.b16 %v478
  %v877 = vunpack.c.l.b16 %v479
  %v878 = vunpack.c.l.b16 %v480
  %v879 = vunpack.c.l.b16 %v481
  %v880 = vunpack.c.l.b16 %v482
  %v881 = vunpack.c.l.b16 %v483
  %v882 = vunpack.c.l.b16 %v484
  %v883 = vunpack.c.l.b16 %v485
  %v884 = vunpack.c.l.b16 %v486
  %v885 = vunpack.c.l.b16 %v487
  %v886 = vunpack.c.l.b16 %v488
  %v887 = vunpack.c.l.b16 %v489
  %v888 = vunpack.c.l.b16 %v490
  %v889 = vunpack.c.l.b16 %v491
  %v890 = vunpack.c.l.b16 %v492
  %v891 = vunpack.c.l.b16 %v493
  %v892 = vunpack.c.l.b16 %v494
  %v893 = vunpack.c.l.b16 %v495
  %v894 = vunpack.c.l.b16 %v496
  %v895 = vunpack.c.l.b16 %v497
  %v896 = vunpack.c.l.b16 %v498
  %v897 = vunpack.c.l.b16 %v499
  %v898 = vunpack.c.l.b16 %v500
  %v899 = vunpack.c.l.b16 %v501
  %v900 = vunpack.c.l.b16 %v502
  %v901 = vunpack.c.l.b16 %v503
  %v902 = vunpack.c.l.b16 %v504
  %v903 = vunpack.c.l.b16 %v505
  %v904 = vunpack.c.l.b16 %v506
  %v905 = vunpack.c.l.b16 %v507
  %v906 = vunpack.c.l.b16 %v508
  %v907 = vunpack.c.l.b16 %v509
  %v908 = vunpack.c.l.b16 %v510
  %v909 = vunpack.c.l.b16 %v511
  %v910 = vunpack.c.l.b16 %v512
  %v911 = vunpack.c.l.b16 %v513
  %v912 = vunpack.c.l.b16 %v514
  %v913 = vunpack.c.l.b16 %v515
  %v914 = vunpack.c.l.b16 %v516
  %v915 = vunpack.c.l.b16 %v517
  %v916 = vunpack.c.l.b16 %v518
  %v917 = vunpack.c.l.b16 %v519
  %v918 = vunpack.c.l.b16 %v520
  %v919 = vunpack.c.l.b16 %v521
  %v920 = vunpack.c.l.b16 %v522
  %v921 = vunpack.c.l.b16 %v523
  %v922 = vunpack.c.l.b16 %v524
  %v923 = vunpack.c.l.b16 %v525
  %v924 = vunpack.c.l.b16 %v526
  %v925 = vunpack.c.l.b16 %v527
  %v926 = vunpack.c.l.b16 %v528
  %v927 = vunpack.c.l.b16 %v529
  %v928 = vunpack.c.l.b16 %v530
  %v929 = vunpack.c.l.b16 %v531
  %v930 = vunpack.c.l.b16 %v532
  %v931 = vunpack.c.l.b16 %v533
  %v932 = vunpack.c.l.b16 %v534
  %v933 = vunpack.c.l.b16 %v535
  %v934 = vunpack.c.l.b16 %v536
  %v935 = vunpack.c.l.b16 %v537
  %v936 = vunpack.c.l.b16 %v538
  %v937 = vunpack.c.l.b16 %v539
  %v938 = vunpack.c.l.b16 %v540
  %v939 = vunpack.c.l.b16 %v541
  %v940 = vunpack.c.l.b16 %v542
  %v941 = vunpack.c.l.b16 %v543
  %v942 = vunpack.c.l.b16 %v544
  %v943 = vpack.c.b16 %v848, %v847
  %v944 = vpack.c.b16 %v850, %v849
  %v945 = vpack.c.b16 %v852, %v851
  %v946 = vpack.c.b16 %v854, %v853
  %v947 = vpack.c.b16 %v856, %v855
  %v948 = vpack.c.b16 %v858, %v857
  %v949 = vpack.c.b16 %v860, %v859
  %v950 = vpack.c.b16 %v862, %v861
  %v951 = vpack.c.b16 %v864, %v863
  %v952 = vpack.c.b16 %v866, %v865
  %v953 = vpack.c.b16 %v868, %v867
  %v954 = vpack.c.b16 %v870, %v869
  %v955 = vpack.c.b16 %v872, %v871
  %v956 = vpack.c.b16 %v874, %v873
  %v957 = vpack.c.b16 %v876, %v875
  %v958 = vpack.c.b16 %v878, %v877
  %v959 = vpack.c.b16 %v880, %v879
  %v960 = vpack.c.b16 %v882, %v881
  %v961 = vpack.c.b16 %v884, %v883
  %v962 = vpack.c.b16 %v886, %v885
  %v963 = vpack.c.b16 %v888, %v887
  %v964 = vpack.c.b16 %v890, %v889
  %v965 = vpack.c.b16 %v892, %v891
  %v966 = vpack.c.b16 %v894, %v893
  %v967 = vpack.c.b16 %v896, %v895
  %v968 = vpack.c.b16 %v898, %v897
  %v969 = vpack.c.b16 %v900, %v899
  %v970 = vpack.c.b16 %v902, %v901
  %v971 = vpack.c.b16 %v904, %v903
  %v972 = vpack.c.b16 %v906, %v905
  %v973 = vpack.c.b16 %v908, %v907
  %v974 = vpack.c.b16 %v910, %v909
  %v975 = vpack.c.b16 %v912, %v911
  %v976 = vpack.c.b16 %v914, %v913
  %v977 = vpack.c.b16 %v916, %v915
  %v978 = vpack.c.b16 %v918, %v917
  %v979 = vpack.c.b16 %v920, %v919
  %v980 = vpack.c.b16 %v922, %v921
  %v981 = vpack.c.b16 %v924, %v923
  %v982 = vpack.c.b16 %v926, %v925
  %v983 = vpack.c.b16 %v928, %v927
  %v984 = vpack.c.b16 %v930, %v929
  %v985 = vpack.c.b16 %v932, %v931
  %v986 = vpack.c.b16 %v934, %v933
  %v987 = vpack.c.b16 %v936, %v935
  %v988 = vpack.c.b16 %v938, %v937
  %v989 = vpack.c.b16 %v940, %v939
  %v990 = vpack.c.b16 %v942, %v941
  %1039 = vmatprep.subr.bf16.mxu0 0
  %1040 = vmatpush1.bf16.msra.mxu0 %v943
  %1041 = vmatprep.subr.bf16.mxu0 0
  %1042 = vmatpush1.bf16.msra.mxu0 %v944
  %1043 = vmatprep.subr.bf16.mxu0 0
  %1044 = vmatpush1.bf16.msra.mxu0 %v945
  %1045 = vmatprep.subr.bf16.mxu0 0
  %1046 = vmatpush1.bf16.msra.mxu0 %v946
  %1047 = vmatprep.subr.bf16.mxu0 0
  %1048 = vmatpush1.bf16.msra.mxu0 %v947
  %1049 = vmatprep.subr.bf16.mxu0 0
  %1050 = vmatpush1.bf16.msra.mxu0 %v948
  %1051 = vmatprep.subr.bf16.mxu0 0
  %1052 = vmatpush1.bf16.msra.mxu0 %v949
  %1053 = vmatprep.subr.bf16.mxu0 0
  %1054 = vmatpush1.bf16.msra.mxu0 %v950
  %1055 = vmatprep.subr.bf16.mxu0 0
  %1056 = vmatpush1.bf16.msra.mxu0 %v951
  %1057 = vmatprep.subr.bf16.mxu0 0
  %1058 = vmatpush1.bf16.msra.mxu0 %v952
  %1059 = vmatprep.subr.bf16.mxu0 0
  %1060 = vmatpush1.bf16.msra.mxu0 %v953
  %1061 = vmatprep.subr.bf16.mxu0 0
  %1062 = vmatpush1.bf16.msra.mxu0 %v954
  %1063 = vmatprep.subr.bf16.mxu0 0
  %1064 = vmatpush1.bf16.msra.mxu0 %v955
  %1065 = vmatprep.subr.bf16.mxu0 0
  %1066 = vmatpush1.bf16.msra.mxu0 %v956
  %1067 = vmatprep.subr.bf16.mxu0 0
  %1068 = vmatpush1.bf16.msra.mxu0 %v957
  %1069 = vmatprep.subr.bf16.mxu0 0
  %1070 = vmatpush1.bf16.msra.mxu0 %v958
  %1071 = vmatprep.mubr.bf16.mxu0 %v740
  %1072 = vmatmul.mubr.bf16.gmra.mrb[0].mxu0 %v739
  %v1073 = vpop.f32.mrb[0].mxu0
  %v1074 = vadd.f32 %v550, %v1073
  %v1075 = vpop.f32.mrb[0].mxu0
  %v1076 = vpop.f32.mrb[0].mxu0
  %v1077 = vpop.f32.mrb[0].mxu0
  %1078 = vdwg.mxu0
  %1079 = vmatprep.subr.bf16.mxu0 0
  %1080 = vmatpush1.bf16.msra.mxu0 %v959
  %1081 = vmatprep.subr.bf16.mxu0 0
  %1082 = vmatpush1.bf16.msra.mxu0 %v960
  %1083 = vmatprep.subr.bf16.mxu0 0
  %1084 = vmatpush1.bf16.msra.mxu0 %v961
  %1085 = vmatprep.subr.bf16.mxu0 0
  %1086 = vmatpush1.bf16.msra.mxu0 %v962
  %1087 = vmatprep.subr.bf16.mxu0 0
  %1088 = vmatpush1.bf16.msra.mxu0 %v963
  %1089 = vmatprep.subr.bf16.mxu0 0
  %1090 = vmatpush1.bf16.msra.mxu0 %v964
  %1091 = vmatprep.subr.bf16.mxu0 0
  %1092 = vmatpush1.bf16.msra.mxu0 %v965
  %1093 = vmatprep.subr.bf16.mxu0 0
  %1094 = vmatpush1.bf16.msra.mxu0 %v966
  %1095 = vmatprep.subr.bf16.mxu0 0
  %1096 = vmatpush1.bf16.msra.mxu0 %v967
  %1097 = vmatprep.subr.bf16.mxu0 0
  %1098 = vmatpush1.bf16.msra.mxu0 %v968
  %1099 = vmatprep.subr.bf16.mxu0 0
  %1100 = vmatpush1.bf16.msra.mxu0 %v969
  %1101 = vmatprep.subr.bf16.mxu0 0
  %1102 = vmatpush1.bf16.msra.mxu0 %v970
  %1103 = vmatprep.subr.bf16.mxu0 0
  %1104 = vmatpush1.bf16.msra.mxu0 %v971
  %1105 = vmatprep.subr.bf16.mxu0 0
  %1106 = vmatpush1.bf16.msra.mxu0 %v972
  %1107 = vmatprep.subr.bf16.mxu0 0
  %1108 = vmatpush1.bf16.msra.mxu0 %v973
  %1109 = vmatprep.subr.bf16.mxu0 0
  %1110 = vmatpush1.bf16.msra.mxu0 %v974
  %1111 = vmatprep.mubr.bf16.mxu0 %v742
  %1112 = vmatmul.mubr.bf16.gmra.mrb[0].mxu0 %v741
  %v1113 = vpop.f32.mrb[0].mxu0
  %v1114 = vadd.f32 %v1074, %v1113
  %v1115 = vpop.f32.mrb[0].mxu0
  %v1116 = vpop.f32.mrb[0].mxu0
  %v1117 = vpop.f32.mrb[0].mxu0
  %1118 = vdwg.mxu0
  %1119 = vmatprep.subr.bf16.mxu0 0
  %1120 = vmatpush1.bf16.msra.mxu0 %v975
  %1121 = vmatprep.subr.bf16.mxu0 0
  %1122 = vmatpush1.bf16.msra.mxu0 %v976
  %1123 = vmatprep.subr.bf16.mxu0 0
  %1124 = vmatpush1.bf16.msra.mxu0 %v977
  %1125 = vmatprep.subr.bf16.mxu0 0
  %1126 = vmatpush1.bf16.msra.mxu0 %v978
  %1127 = vmatprep.subr.bf16.mxu0 0
  %1128 = vmatpush1.bf16.msra.mxu0 %v979
  %1129 = vmatprep.subr.bf16.mxu0 0
  %1130 = vmatpush1.bf16.msra.mxu0 %v980
  %1131 = vmatprep.subr.bf16.mxu0 0
  %1132 = vmatpush1.bf16.msra.mxu0 %v981
  %1133 = vmatprep.subr.bf16.mxu0 0
  %1134 = vmatpush1.bf16.msra.mxu0 %v982
  %1135 = vmatprep.subr.bf16.mxu0 0
  %1136 = vmatpush1.bf16.msra.mxu0 %v983
  %1137 = vmatprep.subr.bf16.mxu0 0
  %1138 = vmatpush1.bf16.msra.mxu0 %v984
  %1139 = vmatprep.subr.bf16.mxu0 0
  %1140 = vmatpush1.bf16.msra.mxu0 %v985
  %1141 = vmatprep.subr.bf16.mxu0 0
  %1142 = vmatpush1.bf16.msra.mxu0 %v986
  %1143 = vmatprep.subr.bf16.mxu0 0
  %1144 = vmatpush1.bf16.msra.mxu0 %v987
  %1145 = vmatprep.subr.bf16.mxu0 0
  %1146 = vmatpush1.bf16.msra.mxu0 %v988
  %1147 = vmatprep.subr.bf16.mxu0 0
  %1148 = vmatpush1.bf16.msra.mxu0 %v989
  %1149 = vmatprep.subr.bf16.mxu0 0
  %1150 = vmatpush1.bf16.msra.mxu0 %v990
  %1151 = vmatprep.mubr.bf16.mxu0 %v744
  %1152 = vmatmul.mubr.bf16.gmra.mrb[0].mxu0 %v743
  %v1153 = vpop.f32.mrb[0].mxu0
  %v1154 = vadd.f32 %v1114, %v1153
  %v1155 = vpop.f32.mrb[0].mxu0
  %v1156 = vpop.f32.mrb[0].mxu0
  %v1157 = vpop.f32.mrb[0].mxu0
  %1158 = vdwg.mxu0
  %1159 = vst [vmem:[%s5] sm:$0xff] %v1154
  // Predicated region
  $region22: #{inception_aux.7} parent=0 // pred_check
    _
  $region23: #{inception_aux.7} parent=0 // pred_check_branch
    %1161 = sbr.rel (0) target = $region25
  $region24: #{inception_aux.7} parent=0 // pred_region
    _
  $region25: #{inception_aux.7} parent=0 // pred_fallthru
    _
  // Predicated region
  $region26: #{inception_aux.7} parent=0 // pred_check
    _
  $region27: #{inception_aux.7} parent=0 // pred_check_branch
    %1163 = sbr.rel (0) target = $region29
  $region28: #{inception_aux.7} parent=0 // pred_region
    _
  $region29: #{inception_aux.7} parent=0 // pred_fallthru
    _

// kernel: inception_aux.6
$region0: #{inception_aux.6}
  #allocation0 [shape = 'u32[]', space=smem, size = 0x4, offset = 0x4, fixed_abs, tag = 'smem constant byte address 0x4 - core index']
  #allocation1 [shape = 'u32[144,128]{1,0:T(1,128)}', space=vmem, size = 0x12000, scoped, tag = 'internal scratch']
  %s0 = inlined_call_operand.vmem [shape: bf16[8,3200], index: 0, kind: input, shape index: {}]
  %s1 = inlined_call_operand.vmem [shape: f32[1,3200], index: 1, kind: input, shape index: {}]
  %s2 = inlined_call_operand.vmem [shape: f32[1,3200], index: 2, kind: input, shape index: {}]
  %s3 = inlined_call_operand.vmem [shape: bf16[3200,768], index: 3, kind: input, shape index: {}]
  %s4 = inlined_call_operand.vmem [shape: bf16[8,768], index: 4, kind: output, shape index: {0}]
  %s5 = inlined_call_operand.vmem [shape: f32[1,8,768], index: 5, kind: output, shape index: {1}]
  %6 = xla_tuple %s4, %s5
  %s7 = sld [smem:[#allocation0]]
  $region83: #{inception_aux.6} parent=0
    _
  %s9 = ssub.s32 1, %s7
  %s10 = scalar_select 0, %s9, %s7
  $region1: #{inception_aux.6} parent=0
    #allocation2 [shape = 'u8[4915200]{0}', space=vmem, size = 0x4b0000, scoped, tag = 'input window, operand 3']
    loop: start=0, step=1, limit=4
    $region2: #{inception_aux.6} parent=1 // loop_pre_header
      _
    $region3: #{inception_aux.6} parent=1 // loop_header
      %s12 = sphi 0, %s16
      %p13 = scmp.ge.s32.totalorder %s12, 4
      %s19 = sphi 0, %s31
      %s20 = sphi 0, %s27
      %s21 = sphi 0, %s19
      %s22 = sphi 0, %s20
      %s23 = sphi 0, %s21
      %s24 = sphi 0, %s22
      %s34 = sphi 0, %s36
      %s37 = sphi 0, %s34
      %s38 = sphi 0, %s37
      %s54 = sphi 0, %s38
      %s58 = sphi 0, %s58
      %s60 = sphi 0, %s58
      %s61 = sphi 0, %s60
      %s75 = sphi 0, %s61
      %s79 = sphi 0, %s79
      %s81 = sphi 0, %s79
      %s82 = sphi 0, %s81
      %s96 = sphi 0, %s82
      %s102 = sphi 0, %s104
      %s105 = sphi 0, %s102
      %s106 = sphi 0, %s105
      %s122 = sphi 0, %s106
      %s130 = sphi 0, %s132
      %s133 = sphi 0, %s130
      %s134 = sphi 0, %s133
      %s150 = sphi 0, %s134
      %s158 = sphi 0, %s160
      %s161 = sphi 0, %s158
      %s162 = sphi 0, %s161
      %s178 = sphi 0, %s162
    $region4: #{inception_aux.6} parent=1 // loop_header_branch
      %15 = sbr.rel (%p13) target = $region8
    $region5: #{inception_aux.6} parent=1 // loop_body
      %s17 = ssub.s32 %s12, 1
      %s18 = ssub.s32 %s12, 2
      %s25 = sadd.s32 1, %s20
      %p26 = scmp.ge.s32.totalorder %s25, 2
      %s27 = scalar_select %p26, 0, %s25
      %s28 = sadd.s32 1, %s19
      %s29 = scalar_select %p26, %s28, %s19
      %p30 = scmp.ge.s32.totalorder %s29, 1
      %s31 = scalar_select %p30, 0, %s29
      %s32 = ssub.s32 %s19, %s31
      %p33 = scmp.eq.s32.totalorder %s32, 0
      %s35 = sadd.s32 %s34, 1
      %s36 = scalar_select %p33, %s34, %s35
      %p39 = pneg %p33
      %p40 = scmp.eq.s32.totalorder %s12, 1
      %p41 = por %p39, %p40
      %p42 = scmp.ne.s32.totalorder %s34, %s37
      %p43 = scmp.eq.s32.totalorder %s12, 0
      %p44 = por %p42, %p43
      %p45 = scmp.ne.s32.totalorder %s34, %s37
      %p46 = scmp.eq.s32.totalorder %s17, 1
      %p47 = por %p45, %p46
      %p48 = scmp.ne.s32.totalorder %s37, %s38
      %p49 = scmp.eq.s32.totalorder %s17, 0
      %p50 = por %p48, %p49
      %p51 = scmp.ne.s32.totalorder %s37, %s38
      %p52 = scmp.eq.s32.totalorder %s18, 1
      %p53 = por %p51, %p52
      %p55 = scmp.ne.s32.totalorder %s38, %s54
      %p56 = scmp.eq.s32.totalorder %s18, 0
      %p57 = por %p55, %p56
      %s59 = sadd.s32 %s58, 1
      %p62 = scmp.eq.s32.totalorder %s12, 1
      %p63 = scmp.ne.s32.totalorder %s58, %s60
      %p64 = scmp.eq.s32.totalorder %s12, 0
      %p65 = por %p63, %p64
      %p66 = scmp.ne.s32.totalorder %s58, %s60
      %p67 = scmp.eq.s32.totalorder %s17, 1
      %p68 = por %p66, %p67
      %p69 = scmp.ne.s32.totalorder %s60, %s61
      %p70 = scmp.eq.s32.totalorder %s17, 0
      %p71 = por %p69, %p70
      %p72 = scmp.ne.s32.totalorder %s60, %s61
      %p73 = scmp.eq.s32.totalorder %s18, 1
      %p74 = por %p72, %p73
      %p76 = scmp.ne.s32.totalorder %s61, %s75
      %p77 = scmp.eq.s32.totalorder %s18, 0
      %p78 = por %p76, %p77
      %s80 = sadd.s32 %s79, 1
      %p83 = scmp.eq.s32.totalorder %s12, 1
      %p84 = scmp.ne.s32.totalorder %s79, %s81
      %p85 = scmp.eq.s32.totalorder %s12, 0
      %p86 = por %p84, %p85
      %p87 = scmp.ne.s32.totalorder %s79, %s81
      %p88 = scmp.eq.s32.totalorder %s17, 1
      %p89 = por %p87, %p88
      %p90 = scmp.ne.s32.totalorder %s81, %s82
      %p91 = scmp.eq.s32.totalorder %s17, 0
      %p92 = por %p90, %p91
      %p93 = scmp.ne.s32.totalorder %s81, %s82
      %p94 = scmp.eq.s32.totalorder %s18, 1
      %p95 = por %p93, %p94
      %p97 = scmp.ne.s32.totalorder %s82, %s96
      %p98 = scmp.eq.s32.totalorder %s18, 0
      %p99 = por %p97, %p98
      %s100 = ssub.s32 %s20, %s27
      %p101 = scmp.eq.s32.totalorder %s100, 0
      %s103 = sadd.s32 %s102, 1
      %s104 = scalar_select %p101, %s102, %s103
      %p107 = pneg %p101
      %p108 = scmp.eq.s32.totalorder %s12, 1
      %p109 = por %p107, %p108
      %p110 = scmp.ne.s32.totalorder %s102, %s105
      %p111 = scmp.eq.s32.totalorder %s12, 0
      %p112 = por %p110, %p111
      %p113 = scmp.ne.s32.totalorder %s102, %s105
      %p114 = scmp.eq.s32.totalorder %s17, 1
      %p115 = por %p113, %p114
      %p116 = scmp.ne.s32.totalorder %s105, %s106
      %p117 = scmp.eq.s32.totalorder %s17, 0
      %p118 = por %p116, %p117
      %p119 = scmp.ne.s32.totalorder %s105, %s106
      %p120 = scmp.eq.s32.totalorder %s18, 1
      %p121 = por %p119, %p120
      %p123 = scmp.ne.s32.totalorder %s106, %s122
      %p124 = scmp.eq.s32.totalorder %s18, 0
      %p125 = por %p123, %p124
      %s126 = ssub.s32 %s19, %s31
      %s127 = ssub.s32 %s20, %s27
      %s128 = sor.u32 %s126, %s127
      %p129 = scmp.eq.s32.totalorder %s128, 0
      %s131 = sadd.s32 %s130, 1
      %s132 = scalar_select %p129, %s130, %s131
      %p135 = pneg %p129
      %p136 = scmp.eq.s32.totalorder %s12, 1
      %p137 = por %p135, %p136
      %p138 = scmp.ne.s32.totalorder %s130, %s133
      %p139 = scmp.eq.s32.totalorder %s12, 0
      %p140 = por %p138, %p139
      %p141 = scmp.ne.s32.totalorder %s130, %s133
      %p142 = scmp.eq.s32.totalorder %s17, 1
      %p143 = por %p141, %p142
      %p144 = scmp.ne.s32.totalorder %s133, %s134
      %p145 = scmp.eq.s32.totalorder %s17, 0
      %p146 = por %p144, %p145
      %p147 = scmp.ne.s32.totalorder %s133, %s134
      %p148 = scmp.eq.s32.totalorder %s18, 1
      %p149 = por %p147, %p148
      %p151 = scmp.ne.s32.totalorder %s134, %s150
      %p152 = scmp.eq.s32.totalorder %s18, 0
      %p153 = por %p151, %p152
      %s154 = ssub.s32 %s19, %s31
      %s155 = ssub.s32 %s20, %s27
      %s156 = sor.u32 %s154, %s155
      %p157 = scmp.eq.s32.totalorder %s156, 0
      %s159 = sadd.s32 %s158, 1
      %s160 = scalar_select %p157, %s158, %s159
      %p163 = pneg %p157
      %p164 = scmp.eq.s32.totalorder %s12, 1
      %p165 = por %p163, %p164
      %p166 = scmp.ne.s32.totalorder %s158, %s161
      %p167 = scmp.eq.s32.totalorder %s12, 0
      %p168 = por %p166, %p167
      %p169 = scmp.ne.s32.totalorder %s158, %s161
      %p170 = scmp.eq.s32.totalorder %s17, 1
      %p171 = por %p169, %p170
      %p172 = scmp.ne.s32.totalorder %s161, %s162
      %p173 = scmp.eq.s32.totalorder %s17, 0
      %p174 = por %p172, %p173
      %p175 = scmp.ne.s32.totalorder %s161, %s162
      %p176 = scmp.eq.s32.totalorder %s18, 1
      %p177 = por %p175, %p176
      %p179 = scmp.ne.s32.totalorder %s162, %s178
      %p180 = scmp.eq.s32.totalorder %s18, 0
      %p181 = por %p179, %p180
      %p182 = scmp.le.s32.totalorder 1, %s12
      %p183 = scmp.lt.s32.totalorder %s12, 3
      %p184 = pnand %p182, %p183
      %p185 = pneg %p184
      // Predicated region
      $region9: #{inception_aux.6} parent=5 // pred_check
        _
      $region10: #{inception_aux.6} parent=5 // pred_check_branch
        %187 = sbr.rel (%p184) target = $region12
      $region11: #{inception_aux.6} parent=5 // pred_region
        %s188 = ssub.s32 %s12, 1
        // Predicated region
        $region13: #{inception_aux.6} parent=11 // pred_check
          %p189 = pneg %p50
        $region14: #{inception_aux.6} parent=11 // pred_check_branch
          %191 = sbr.rel (%p189) target = $region16
        $region15: #{inception_aux.6} parent=11 // pred_region
          %p192 = scmp.lt.s32.totalorder %s21, 0
          %s193 = scalar_select %p192, %s21, 0
          %s194 = smul.addr %s193, 25
          %s195 = smul.addr %s194, 4
          %s196 = scalar_lea.vmem %s0, %s195
        $region16: #{inception_aux.6} parent=11 // pred_fallthru
          _
        // Predicated region
        $region17: #{inception_aux.6} parent=11 // pred_check
          %p197 = pneg %p71
        $region18: #{inception_aux.6} parent=11 // pred_check_branch
          %199 = sbr.rel (%p197) target = $region20
        $region19: #{inception_aux.6} parent=11 // pred_region
          _
        $region20: #{inception_aux.6} parent=11 // pred_fallthru
          _
        // Predicated region
        $region21: #{inception_aux.6} parent=11 // pred_check
          %p200 = pneg %p92
        $region22: #{inception_aux.6} parent=11 // pred_check_branch
          %202 = sbr.rel (%p200) target = $region24
        $region23: #{inception_aux.6} parent=11 // pred_region
          _
        $region24: #{inception_aux.6} parent=11 // pred_fallthru
          _
      $region12: #{inception_aux.6} parent=5 // pred_fallthru
        _
      %p203 = scmp.lt.s32.totalorder %s12, 2
      // Predicated region
      $region25: #{inception_aux.6} parent=5 // pred_check
        %p204 = pneg %p203
      $region26: #{inception_aux.6} parent=5 // pred_check_branch
        %206 = sbr.rel (%p204) target = $region28
      $region27: #{inception_aux.6} parent=5 // pred_region
        // Predicated region
        $region29: #{inception_aux.6} parent=27 // pred_check
          %p207 = pneg %p112
        $region30: #{inception_aux.6} parent=27 // pred_check_branch
          %209 = sbr.rel (%p207) target = $region32
        $region31: #{inception_aux.6} parent=27 // pred_region
          %s210 = sand.u32 %s102, 1
          %s211 = sand.u32 %s102, 1
          %s212 = smul.addr %s211, 4800
          %s213 = scalar_lea.vmem [#allocation2], %s212
          %s214 = smul.u32 3, %s20
          %s215 = smul.addr %s214, 4
          %s216 = scalar_lea.vmem %s3, %s215
          // Predicated region
          $region33: #{inception_aux.6} parent=31 // pred_check
            _
          $region34: #{inception_aux.6} parent=31 // pred_check_branch
            %218 = sbr.rel (0) target = $region36
          $region35: #{inception_aux.6} parent=31 // pred_region
            // Predicated region
            $region37: #{inception_aux.6} parent=35 // pred_check
              _
            $region38: #{inception_aux.6} parent=35 // pred_check_branch
              %220 = sbr.rel (0) target = $region40
            $region39: #{inception_aux.6} parent=35 // pred_region
              %s221 = scalar_lea.vmem %s216, 8
              %s222 = scalar_lea.vmem %s213, 8 [#allocation2]
              loop: start=0, step=1, limit=1
              $region41: #{inception_aux.6} parent=39 // loop_pre_header
                _
              $region42: #{inception_aux.6} parent=39 // loop_header
                %s224 = sphi 0, %s228
                %p225 = scmp.ge.s32.totalorder %s224, 1
                %s229 = sphi %s216, %s216
                %s230 = sphi %s213, %s213
              $region43: #{inception_aux.6} parent=39 // loop_header_branch
                %227 = sbr.rel (%p225) target = $region47
              $region44: #{inception_aux.6} parent=39 // loop_body
                %v231 = vld [vmem:[%s229] sm:$0xff]
                %232 = vst [vmem:[%s230] sm:$0xff] %v231
                %v233 = vld [vmem:[%s229 + $0x18] sm:$0xff]
                %234 = vst [vmem:[%s230 + $0xc] sm:$0xff] %v233
                %v235 = vld [vmem:[%s229 + $0x30] sm:$0xff]
                %236 = vst [vmem:[%s230 + $0x18] sm:$0xff] %v235
                %v237 = vld [vmem:[%s229 + $0x48] sm:$0xff]
                %238 = vst [vmem:[%s230 + $0x24] sm:$0xff] %v237
                %v239 = vld [vmem:[%s229 + $0x60] sm:$0xff]
                %240 = vst [vmem:[%s230 + $0x30] sm:$0xff] %v239
                %v241 = vld [vmem:[%s229 + $0x78] sm:$0xff]
                %242 = vst [vmem:[%s230 + $0x3c] sm:$0xff] %v241
                %v243 = vld [vmem:[%s229 + $0x90] sm:$0xff]
                %244 = vst [vmem:[%s230 + $0x48] sm:$0xff] %v243
                %v245 = vld [vmem:[%s229 + $0xa8] sm:$0xff]
                %246 = vst [vmem:[%s230 + $0x54] sm:$0xff] %v245
                %v247 = vld [vmem:[%s229 + $0xc0] sm:$0xff]
                %248 = vst [vmem:[%s230 + $0x60] sm:$0xff] %v247
                %v249 = vld [vmem:[%s229 + $0xd8] sm:$0xff]
                %250 = vst [vmem:[%s230 + $0x6c] sm:$0xff] %v249
                %v251 = vld [vmem:[%s229 + $0xf0] sm:$0xff]
                %252 = vst [vmem:[%s230 + $0x78] sm:$0xff] %v251
                %v253 = vld [vmem:[%s229 + $0x108] sm:$0xff]
                %254 = vst [vmem:[%s230 + $0x84] sm:$0xff] %v253
                %v255 = vld [vmem:[%s229 + $0x120] sm:$0xff]
                %256 = vst [vmem:[%s230 + $0x90] sm:$0xff] %v255
                %v257 = vld [vmem:[%s229 + $0x138] sm:$0xff]
                %258 = vst [vmem:[%s230 + $0x9c] sm:$0xff] %v257
                %v259 = vld [vmem:[%s229 + $0x150] sm:$0xff]
                %260 = vst [vmem:[%s230 + $0xa8] sm:$0xff] %v259
                %v261 = vld [vmem:[%s229 + $0x168] sm:$0xff]
                %262 = vst [vmem:[%s230 + $0xb4] sm:$0xff] %v261
                %v263 = vld [vmem:[%s229 + $0x180] sm:$0xff]
                %264 = vst [vmem:[%s230 + $0xc0] sm:$0xff] %v263
                %v265 = vld [vmem:[%s229 + $0x198] sm:$0xff]
                %266 = vst [vmem:[%s230 + $0xcc] sm:$0xff] %v265
                %v267 = vld [vmem:[%s229 + $0x1b0] sm:$0xff]
                %268 = vst [vmem:[%s230 + $0xd8] sm:$0xff] %v267
                %v269 = vld [vmem:[%s229 + $0x1c8] sm:$0xff]
                %270 = vst [vmem:[%s230 + $0xe4] sm:$0xff] %v269
                %v271 = vld [vmem:[%s229 + $0x1e0] sm:$0xff]
                %272 = vst [vmem:[%s230 + $0xf0] sm:$0xff] %v271
                %v273 = vld [vmem:[%s229 + $0x1f8] sm:$0xff]
                %274 = vst [vmem:[%s230 + $0xfc] sm:$0xff] %v273
                %v275 = vld [vmem:[%s229 + $0x210] sm:$0xff]
                %276 = vst [vmem:[%s230 + $0x108] sm:$0xff] %v275
                %v277 = vld [vmem:[%s229 + $0x228] sm:$0xff]
                %278 = vst [vmem:[%s230 + $0x114] sm:$0xff] %v277
                %v279 = vld [vmem:[%s229 + $0x240] sm:$0xff]
                %280 = vst [vmem:[%s230 + $0x120] sm:$0xff] %v279
                %v281 = vld [vmem:[%s229 + $0x258] sm:$0xff]
                %282 = vst [vmem:[%s230 + $0x12c] sm:$0xff] %v281
                %v283 = vld [vmem:[%s229 + $0x270] sm:$0xff]
                %284 = vst [vmem:[%s230 + $0x138] sm:$0xff] %v283
                %v285 = vld [vmem:[%s229 + $0x288] sm:$0xff]
                %286 = vst [vmem:[%s230 + $0x144] sm:$0xff] %v285
                %v287 = vld [vmem:[%s229 + $0x2a0] sm:$0xff]
                %288 = vst [vmem:[%s230 + $0x150] sm:$0xff] %v287
                %v289 = vld [vmem:[%s229 + $0x2b8] sm:$0xff]
                %290 = vst [vmem:[%s230 + $0x15c] sm:$0xff] %v289
                %v291 = vld [vmem:[%s229 + $0x2d0] sm:$0xff]
                %292 = vst [vmem:[%s230 + $0x168] sm:$0xff] %v291
                %v293 = vld [vmem:[%s229 + $0x2e8] sm:$0xff]
                %294 = vst [vmem:[%s230 + $0x174] sm:$0xff] %v293
                %v295 = vld [vmem:[%s229 + $0x300] sm:$0xff]
                %296 = vst [vmem:[%s230 + $0x180] sm:$0xff] %v295
                %v297 = vld [vmem:[%s229 + $0x318] sm:$0xff]
                %298 = vst [vmem:[%s230 + $0x18c] sm:$0xff] %v297
                %v299 = vld [vmem:[%s229 + $0x330] sm:$0xff]
                %300 = vst [vmem:[%s230 + $0x198] sm:$0xff] %v299
                %v301 = vld [vmem:[%s229 + $0x348] sm:$0xff]
                %302 = vst [vmem:[%s230 + $0x1a4] sm:$0xff] %v301
                %v303 = vld [vmem:[%s229 + $0x360] sm:$0xff]
                %304 = vst [vmem:[%s230 + $0x1b0] sm:$0xff] %v303
                %v305 = vld [vmem:[%s229 + $0x378] sm:$0xff]
                %306 = vst [vmem:[%s230 + $0x1bc] sm:$0xff] %v305
                %v307 = vld [vmem:[%s229 + $0x390] sm:$0xff]
                %308 = vst [vmem:[%s230 + $0x1c8] sm:$0xff] %v307
                %v309 = vld [vmem:[%s229 + $0x3a8] sm:$0xff]
                %310 = vst [vmem:[%s230 + $0x1d4] sm:$0xff] %v309
                %v311 = vld [vmem:[%s229 + $0x3c0] sm:$0xff]
                %312 = vst [vmem:[%s230 + $0x1e0] sm:$0xff] %v311
                %v313 = vld [vmem:[%s229 + $0x3d8] sm:$0xff]
                %314 = vst [vmem:[%s230 + $0x1ec] sm:$0xff] %v313
                %v315 = vld [vmem:[%s229 + $0x3f0] sm:$0xff]
                %316 = vst [vmem:[%s230 + $0x1f8] sm:$0xff] %v315
                %v317 = vld [vmem:[%s229 + $0x408] sm:$0xff]
                %318 = vst [vmem:[%s230 + $0x204] sm:$0xff] %v317
                %v319 = vld [vmem:[%s229 + $0x420] sm:$0xff]
                %320 = vst [vmem:[%s230 + $0x210] sm:$0xff] %v319
                %v321 = vld [vmem:[%s229 + $0x438] sm:$0xff]
                %322 = vst [vmem:[%s230 + $0x21c] sm:$0xff] %v321
                %v323 = vld [vmem:[%s229 + $0x450] sm:$0xff]
                %324 = vst [vmem:[%s230 + $0x228] sm:$0xff] %v323
                %v325 = vld [vmem:[%s229 + $0x468] sm:$0xff]
                %326 = vst [vmem:[%s230 + $0x234] sm:$0xff] %v325
                %v327 = vld [vmem:[%s229 + $0x480] sm:$0xff]
                %328 = vst [vmem:[%s230 + $0x240] sm:$0xff] %v327
                %v329 = vld [vmem:[%s229 + $0x498] sm:$0xff]
                %330 = vst [vmem:[%s230 + $0x24c] sm:$0xff] %v329
                %v331 = vld [vmem:[%s229 + $0x4b0] sm:$0xff]
                %332 = vst [vmem:[%s230 + $0x258] sm:$0xff] %v331
                %v333 = vld [vmem:[%s229 + $0x4c8] sm:$0xff]
                %334 = vst [vmem:[%s230 + $0x264] sm:$0xff] %v333
                %v335 = vld [vmem:[%s229 + $0x4e0] sm:$0xff]
                %336 = vst [vmem:[%s230 + $0x270] sm:$0xff] %v335
                %v337 = vld [vmem:[%s229 + $0x4f8] sm:$0xff]
                %338 = vst [vmem:[%s230 + $0x27c] sm:$0xff] %v337
                %v339 = vld [vmem:[%s229 + $0x510] sm:$0xff]
                %340 = vst [vmem:[%s230 + $0x288] sm:$0xff] %v339
                %v341 = vld [vmem:[%s229 + $0x528] sm:$0xff]
                %342 = vst [vmem:[%s230 + $0x294] sm:$0xff] %v341
                %v343 = vld [vmem:[%s229 + $0x540] sm:$0xff]
                %344 = vst [vmem:[%s230 + $0x2a0] sm:$0xff] %v343
                %v345 = vld [vmem:[%s229 + $0x558] sm:$0xff]
                %346 = vst [vmem:[%s230 + $0x2ac] sm:$0xff] %v345
                %v347 = vld [vmem:[%s229 + $0x570] sm:$0xff]
                %348 = vst [vmem:[%s230 + $0x2b8] sm:$0xff] %v347
                %v349 = vld [vmem:[%s229 + $0x588] sm:$0xff]
                %350 = vst [vmem:[%s230 + $0x2c4] sm:$0xff] %v349
                %v351 = vld [vmem:[%s229 + $0x5a0] sm:$0xff]
                %352 = vst [vmem:[%s230 + $0x2d0] sm:$0xff] %v351
                %v353 = vld [vmem:[%s229 + $0x5b8] sm:$0xff]
                %354 = vst [vmem:[%s230 + $0x2dc] sm:$0xff] %v353
                %v355 = vld [vmem:[%s229 + $0x5d0] sm:$0xff]
                %356 = vst [vmem:[%s230 + $0x2e8] sm:$0xff] %v355
                %v357 = vld [vmem:[%s229 + $0x5e8] sm:$0xff]
                %358 = vst [vmem:[%s230 + $0x2f4] sm:$0xff] %v357
                %v359 = vld [vmem:[%s229 + $0x600] sm:$0xff]
                %360 = vst [vmem:[%s230 + $0x300] sm:$0xff] %v359
                %v361 = vld [vmem:[%s229 + $0x618] sm:$0xff]
                %362 = vst [vmem:[%s230 + $0x30c] sm:$0xff] %v361
                %v363 = vld [vmem:[%s229 + $0x630] sm:$0xff]
                %364 = vst [vmem:[%s230 + $0x318] sm:$0xff] %v363
                %v365 = vld [vmem:[%s229 + $0x648] sm:$0xff]
                %366 = vst [vmem:[%s230 + $0x324] sm:$0xff] %v365
                %v367 = vld [vmem:[%s229 + $0x660] sm:$0xff]
                %368 = vst [vmem:[%s230 + $0x330] sm:$0xff] %v367
                %v369 = vld [vmem:[%s229 + $0x678] sm:$0xff]
                %370 = vst [vmem:[%s230 + $0x33c] sm:$0xff] %v369
                %v371 = vld [vmem:[%s229 + $0x690] sm:$0xff]
                %372 = vst [vmem:[%s230 + $0x348] sm:$0xff] %v371
                %v373 = vld [vmem:[%s229 + $0x6a8] sm:$0xff]
                %374 = vst [vmem:[%s230 + $0x354] sm:$0xff] %v373
                %v375 = vld [vmem:[%s229 + $0x6c0] sm:$0xff]
                %376 = vst [vmem:[%s230 + $0x360] sm:$0xff] %v375
                %v377 = vld [vmem:[%s229 + $0x6d8] sm:$0xff]
                %378 = vst [vmem:[%s230 + $0x36c] sm:$0xff] %v377
                %v379 = vld [vmem:[%s229 + $0x6f0] sm:$0xff]
                %380 = vst [vmem:[%s230 + $0x378] sm:$0xff] %v379
                %v381 = vld [vmem:[%s229 + $0x708] sm:$0xff]
                %382 = vst [vmem:[%s230 + $0x384] sm:$0xff] %v381
                %v383 = vld [vmem:[%s229 + $0x720] sm:$0xff]
                %384 = vst [vmem:[%s230 + $0x390] sm:$0xff] %v383
                %v385 = vld [vmem:[%s229 + $0x738] sm:$0xff]
                %386 = vst [vmem:[%s230 + $0x39c] sm:$0xff] %v385
                %v387 = vld [vmem:[%s229 + $0x750] sm:$0xff]
                %388 = vst [vmem:[%s230 + $0x3a8] sm:$0xff] %v387
                %v389 = vld [vmem:[%s229 + $0x768] sm:$0xff]
                %390 = vst [vmem:[%s230 + $0x3b4] sm:$0xff] %v389
                %v391 = vld [vmem:[%s229 + $0x780] sm:$0xff]
                %392 = vst [vmem:[%s230 + $0x3c0] sm:$0xff] %v391
                %v393 = vld [vmem:[%s229 + $0x798] sm:$0xff]
                %394 = vst [vmem:[%s230 + $0x3cc] sm:$0xff] %v393
                %v395 = vld [vmem:[%s229 + $0x7b0] sm:$0xff]
                %396 = vst [vmem:[%s230 + $0x3d8] sm:$0xff] %v395
                %v397 = vld [vmem:[%s229 + $0x7c8] sm:$0xff]
                %398 = vst [vmem:[%s230 + $0x3e4] sm:$0xff] %v397
                %v399 = vld [vmem:[%s229 + $0x7e0] sm:$0xff]
                %400 = vst [vmem:[%s230 + $0x3f0] sm:$0xff] %v399
                %v401 = vld [vmem:[%s229 + $0x7f8] sm:$0xff]
                %402 = vst [vmem:[%s230 + $0x3fc] sm:$0xff] %v401
                %v403 = vld [vmem:[%s229 + $0x810] sm:$0xff]
                %404 = vst [vmem:[%s230 + $0x408] sm:$0xff] %v403
                %v405 = vld [vmem:[%s229 + $0x828] sm:$0xff]
                %406 = vst [vmem:[%s230 + $0x414] sm:$0xff] %v405
                %v407 = vld [vmem:[%s229 + $0x840] sm:$0xff]
                %408 = vst [vmem:[%s230 + $0x420] sm:$0xff] %v407
                %v409 = vld [vmem:[%s229 + $0x858] sm:$0xff]
                %410 = vst [vmem:[%s230 + $0x42c] sm:$0xff] %v409
                %v411 = vld [vmem:[%s229 + $0x870] sm:$0xff]
                %412 = vst [vmem:[%s230 + $0x438] sm:$0xff] %v411
                %v413 = vld [vmem:[%s229 + $0x888] sm:$0xff]
                %414 = vst [vmem:[%s230 + $0x444] sm:$0xff] %v413
                %v415 = vld [vmem:[%s229 + $0x8a0] sm:$0xff]
                %416 = vst [vmem:[%s230 + $0x450] sm:$0xff] %v415
                %v417 = vld [vmem:[%s229 + $0x8b8] sm:$0xff]
                %418 = vst [vmem:[%s230 + $0x45c] sm:$0xff] %v417
                %v419 = vld [vmem:[%s229 + $0x8d0] sm:$0xff]
                %420 = vst [vmem:[%s230 + $0x468] sm:$0xff] %v419
                %v421 = vld [vmem:[%s229 + $0x8e8] sm:$0xff]
                %422 = vst [vmem:[%s230 + $0x474] sm:$0xff] %v421
                %v423 = vld [vmem:[%s229 + $0x900] sm:$0xff]
                %424 = vst [vmem:[%s230 + $0x480] sm:$0xff] %v423
                %v425 = vld [vmem:[%s229 + $0x918] sm:$0xff]
                %426 = vst [vmem:[%s230 + $0x48c] sm:$0xff] %v425
                %v427 = vld [vmem:[%s229 + $0x930] sm:$0xff]
                %428 = vst [vmem:[%s230 + $0x498] sm:$0xff] %v427
                %v429 = vld [vmem:[%s229 + $0x948] sm:$0xff]
                %430 = vst [vmem:[%s230 + $0x4a4] sm:$0xff] %v429
                %v431 = vld [vmem:[%s229 + $0x960] sm:$0xff]
                %432 = vst [vmem:[%s230 + $0x4b0] sm:$0xff] %v431
                %v433 = vld [vmem:[%s229 + $0x978] sm:$0xff]
                %434 = vst [vmem:[%s230 + $0x4bc] sm:$0xff] %v433
                %v435 = vld [vmem:[%s229 + $0x990] sm:$0xff]
                %436 = vst [vmem:[%s230 + $0x4c8] sm:$0xff] %v435
                %v437 = vld [vmem:[%s229 + $0x9a8] sm:$0xff]
                %438 = vst [vmem:[%s230 + $0x4d4] sm:$0xff] %v437
                %v439 = vld [vmem:[%s229 + $0x9c0] sm:$0xff]
                %440 = vst [vmem:[%s230 + $0x4e0] sm:$0xff] %v439
                %v441 = vld [vmem:[%s229 + $0x9d8] sm:$0xff]
                %442 = vst [vmem:[%s230 + $0x4ec] sm:$0xff] %v441
                %v443 = vld [vmem:[%s229 + $0x9f0] sm:$0xff]
                %444 = vst [vmem:[%s230 + $0x4f8] sm:$0xff] %v443
                %v445 = vld [vmem:[%s229 + $0xa08] sm:$0xff]
                %446 = vst [vmem:[%s230 + $0x504] sm:$0xff] %v445
                %v447 = vld [vmem:[%s229 + $0xa20] sm:$0xff]
                %448 = vst [vmem:[%s230 + $0x510] sm:$0xff] %v447
                %v449 = vld [vmem:[%s229 + $0xa38] sm:$0xff]
                %450 = vst [vmem:[%s230 + $0x51c] sm:$0xff] %v449
                %v451 = vld [vmem:[%s229 + $0xa50] sm:$0xff]
                %452 = vst [vmem:[%s230 + $0x528] sm:$0xff] %v451
                %v453 = vld [vmem:[%s229 + $0xa68] sm:$0xff]
                %454 = vst [vmem:[%s230 + $0x534] sm:$0xff] %v453
                %v455 = vld [vmem:[%s229 + $0xa80] sm:$0xff]
                %456 = vst [vmem:[%s230 + $0x540] sm:$0xff] %v455
                %v457 = vld [vmem:[%s229 + $0xa98] sm:$0xff]
                %458 = vst [vmem:[%s230 + $0x54c] sm:$0xff] %v457
                %v459 = vld [vmem:[%s229 + $0xab0] sm:$0xff]
                %460 = vst [vmem:[%s230 + $0x558] sm:$0xff] %v459
                %v461 = vld [vmem:[%s229 + $0xac8] sm:$0xff]
                %462 = vst [vmem:[%s230 + $0x564] sm:$0xff] %v461
                %v463 = vld [vmem:[%s229 + $0xae0] sm:$0xff]
                %464 = vst [vmem:[%s230 + $0x570] sm:$0xff] %v463
                %v465 = vld [vmem:[%s229 + $0xaf8] sm:$0xff]
                %466 = vst [vmem:[%s230 + $0x57c] sm:$0xff] %v465
                %v467 = vld [vmem:[%s229 + $0xb10] sm:$0xff]
                %468 = vst [vmem:[%s230 + $0x588] sm:$0xff] %v467
                %v469 = vld [vmem:[%s229 + $0xb28] sm:$0xff]
                %470 = vst [vmem:[%s230 + $0x594] sm:$0xff] %v469
                %v471 = vld [vmem:[%s229 + $0xb40] sm:$0xff]
                %472 = vst [vmem:[%s230 + $0x5a0] sm:$0xff] %v471
                %v473 = vld [vmem:[%s229 + $0xb58] sm:$0xff]
                %474 = vst [vmem:[%s230 + $0x5ac] sm:$0xff] %v473
                %v475 = vld [vmem:[%s229 + $0xb70] sm:$0xff]
                %476 = vst [vmem:[%s230 + $0x5b8] sm:$0xff] %v475
                %v477 = vld [vmem:[%s229 + $0xb88] sm:$0xff]
                %478 = vst [vmem:[%s230 + $0x5c4] sm:$0xff] %v477
                %v479 = vld [vmem:[%s229 + $0xba0] sm:$0xff]
                %480 = vst [vmem:[%s230 + $0x5d0] sm:$0xff] %v479
                %v481 = vld [vmem:[%s229 + $0xbb8] sm:$0xff]
                %482 = vst [vmem:[%s230 + $0x5dc] sm:$0xff] %v481
                %v483 = vld [vmem:[%s229 + $0xbd0] sm:$0xff]
                %484 = vst [vmem:[%s230 + $0x5e8] sm:$0xff] %v483
                %v485 = vld [vmem:[%s229 + $0xbe8] sm:$0xff]
                %486 = vst [vmem:[%s230 + $0x5f4] sm:$0xff] %v485
                %v487 = vld [vmem:[%s229 + $0xc00] sm:$0xff]
                %488 = vst [vmem:[%s230 + $0x600] sm:$0xff] %v487
                %v489 = vld [vmem:[%s229 + $0xc18] sm:$0xff]
                %490 = vst [vmem:[%s230 + $0x60c] sm:$0xff] %v489
                %v491 = vld [vmem:[%s229 + $0xc30] sm:$0xff]
                %492 = vst [vmem:[%s230 + $0x618] sm:$0xff] %v491
                %v493 = vld [vmem:[%s229 + $0xc48] sm:$0xff]
                %494 = vst [vmem:[%s230 + $0x624] sm:$0xff] %v493
                %v495 = vld [vmem:[%s229 + $0xc60] sm:$0xff]
                %496 = vst [vmem:[%s230 + $0x630] sm:$0xff] %v495
                %v497 = vld [vmem:[%s229 + $0xc78] sm:$0xff]
                %498 = vst [vmem:[%s230 + $0x63c] sm:$0xff] %v497
                %v499 = vld [vmem:[%s229 + $0xc90] sm:$0xff]
                %500 = vst [vmem:[%s230 + $0x648] sm:$0xff] %v499
                %v501 = vld [vmem:[%s229 + $0xca8] sm:$0xff]
                %502 = vst [vmem:[%s230 + $0x654] sm:$0xff] %v501
                %v503 = vld [vmem:[%s229 + $0xcc0] sm:$0xff]
                %504 = vst [vmem:[%s230 + $0x660] sm:$0xff] %v503
                %v505 = vld [vmem:[%s229 + $0xcd8] sm:$0xff]
                %506 = vst [vmem:[%s230 + $0x66c] sm:$0xff] %v505
                %v507 = vld [vmem:[%s229 + $0xcf0] sm:$0xff]
                %508 = vst [vmem:[%s230 + $0x678] sm:$0xff] %v507
                %v509 = vld [vmem:[%s229 + $0xd08] sm:$0xff]
                %510 = vst [vmem:[%s230 + $0x684] sm:$0xff] %v509
                %v511 = vld [vmem:[%s229 + $0xd20] sm:$0xff]
                %512 = vst [vmem:[%s230 + $0x690] sm:$0xff] %v511
                %v513 = vld [vmem:[%s229 + $0xd38] sm:$0xff]
                %514 = vst [vmem:[%s230 + $0x69c] sm:$0xff] %v513
                %v515 = vld [vmem:[%s229 + $0xd50] sm:$0xff]
                %516 = vst [vmem:[%s230 + $0x6a8] sm:$0xff] %v515
                %v517 = vld [vmem:[%s229 + $0xd68] sm:$0xff]
                %518 = vst [vmem:[%s230 + $0x6b4] sm:$0xff] %v517
                %v519 = vld [vmem:[%s229 + $0xd80] sm:$0xff]
                %520 = vst [vmem:[%s230 + $0x6c0] sm:$0xff] %v519
                %v521 = vld [vmem:[%s229 + $0xd98] sm:$0xff]
                %522 = vst [vmem:[%s230 + $0x6cc] sm:$0xff] %v521
                %v523 = vld [vmem:[%s229 + $0xdb0] sm:$0xff]
                %524 = vst [vmem:[%s230 + $0x6d8] sm:$0xff] %v523
                %v525 = vld [vmem:[%s229 + $0xdc8] sm:$0xff]
                %526 = vst [vmem:[%s230 + $0x6e4] sm:$0xff] %v525
                %v527 = vld [vmem:[%s229 + $0xde0] sm:$0xff]
                %528 = vst [vmem:[%s230 + $0x6f0] sm:$0xff] %v527
                %v529 = vld [vmem:[%s229 + $0xdf8] sm:$0xff]
                %530 = vst [vmem:[%s230 + $0x6fc] sm:$0xff] %v529
                %v531 = vld [vmem:[%s229 + $0xe10] sm:$0xff]
                %532 = vst [vmem:[%s230 + $0x708] sm:$0xff] %v531
                %v533 = vld [vmem:[%s229 + $0xe28] sm:$0xff]
                %534 = vst [vmem:[%s230 + $0x714] sm:$0xff] %v533
                %v535 = vld [vmem:[%s229 + $0xe40] sm:$0xff]
                %536 = vst [vmem:[%s230 + $0x720] sm:$0xff] %v535
                %v537 = vld [vmem:[%s229 + $0xe58] sm:$0xff]
                %538 = vst [vmem:[%s230 + $0x72c] sm:$0xff] %v537
                %v539 = vld [vmem:[%s229 + $0xe70] sm:$0xff]
                %540 = vst [vmem:[%s230 + $0x738] sm:$0xff] %v539
                %v541 = vld [vmem:[%s229 + $0xe88] sm:$0xff]
                %542 = vst [vmem:[%s230 + $0x744] sm:$0xff] %v541
                %v543 = vld [vmem:[%s229 + $0xea0] sm:$0xff]
                %544 = vst [vmem:[%s230 + $0x750] sm:$0xff] %v543
                %v545 = vld [vmem:[%s229 + $0xeb8] sm:$0xff]
                %546 = vst [vmem:[%s230 + $0x75c] sm:$0xff] %v545
                %v547 = vld [vmem:[%s229 + $0xed0] sm:$0xff]
                %548 = vst [vmem:[%s230 + $0x768] sm:$0xff] %v547
                %v549 = vld [vmem:[%s229 + $0xee8] sm:$0xff]
                %550 = vst [vmem:[%s230 + $0x774] sm:$0xff] %v549
                %v551 = vld [vmem:[%s229 + $0xf00] sm:$0xff]
                %552 = vst [vmem:[%s230 + $0x780] sm:$0xff] %v551
                %v553 = vld [vmem:[%s229 + $0xf18] sm:$0xff]
                %554 = vst [vmem:[%s230 + $0x78c] sm:$0xff] %v553
                %v555 = vld [vmem:[%s229 + $0xf30] sm:$0xff]
                %556 = vst [vmem:[%s230 + $0x798] sm:$0xff] %v555
                %v557 = vld [vmem:[%s229 + $0xf48] sm:$0xff]
                %558 = vst [vmem:[%s230 + $0x7a4] sm:$0xff] %v557
                %v559 = vld [vmem:[%s229 + $0xf60] sm:$0xff]
                %560 = vst [vmem:[%s230 + $0x7b0] sm:$0xff] %v559
                %v561 = vld [vmem:[%s229 + $0xf78] sm:$0xff]
                %562 = vst [vmem:[%s230 + $0x7bc] sm:$0xff] %v561
                %v563 = vld [vmem:[%s229 + $0xf90] sm:$0xff]
                %564 = vst [vmem:[%s230 + $0x7c8] sm:$0xff] %v563
                %v565 = vld [vmem:[%s229 + $0xfa8] sm:$0xff]
                %566 = vst [vmem:[%s230 + $0x7d4] sm:$0xff] %v565
                %v567 = vld [vmem:[%s229 + $0xfc0] sm:$0xff]
                %568 = vst [vmem:[%s230 + $0x7e0] sm:$0xff] %v567
                %v569 = vld [vmem:[%s229 + $0xfd8] sm:$0xff]
                %570 = vst [vmem:[%s230 + $0x7ec] sm:$0xff] %v569
                %v571 = vld [vmem:[%s229 + $0xff0] sm:$0xff]
                %572 = vst [vmem:[%s230 + $0x7f8] sm:$0xff] %v571
                %v573 = vld [vmem:[%s229 + $0x1008] sm:$0xff]
                %574 = vst [vmem:[%s230 + $0x804] sm:$0xff] %v573
                %v575 = vld [vmem:[%s229 + $0x1020] sm:$0xff]
                %576 = vst [vmem:[%s230 + $0x810] sm:$0xff] %v575
                %v577 = vld [vmem:[%s229 + $0x1038] sm:$0xff]
                %578 = vst [vmem:[%s230 + $0x81c] sm:$0xff] %v577
                %v579 = vld [vmem:[%s229 + $0x1050] sm:$0xff]
                %580 = vst [vmem:[%s230 + $0x828] sm:$0xff] %v579
                %v581 = vld [vmem:[%s229 + $0x1068] sm:$0xff]
                %582 = vst [vmem:[%s230 + $0x834] sm:$0xff] %v581
                %v583 = vld [vmem:[%s229 + $0x1080] sm:$0xff]
                %584 = vst [vmem:[%s230 + $0x840] sm:$0xff] %v583
                %v585 = vld [vmem:[%s229 + $0x1098] sm:$0xff]
                %586 = vst [vmem:[%s230 + $0x84c] sm:$0xff] %v585
                %v587 = vld [vmem:[%s229 + $0x10b0] sm:$0xff]
                %588 = vst [vmem:[%s230 + $0x858] sm:$0xff] %v587
                %v589 = vld [vmem:[%s229 + $0x10c8] sm:$0xff]
                %590 = vst [vmem:[%s230 + $0x864] sm:$0xff] %v589
                %v591 = vld [vmem:[%s229 + $0x10e0] sm:$0xff]
                %592 = vst [vmem:[%s230 + $0x870] sm:$0xff] %v591
                %v593 = vld [vmem:[%s229 + $0x10f8] sm:$0xff]
                %594 = vst [vmem:[%s230 + $0x87c] sm:$0xff] %v593
                %v595 = vld [vmem:[%s229 + $0x1110] sm:$0xff]
                %596 = vst [vmem:[%s230 + $0x888] sm:$0xff] %v595
                %v597 = vld [vmem:[%s229 + $0x1128] sm:$0xff]
                %598 = vst [vmem:[%s230 + $0x894] sm:$0xff] %v597
                %v599 = vld [vmem:[%s229 + $0x1140] sm:$0xff]
                %600 = vst [vmem:[%s230 + $0x8a0] sm:$0xff] %v599
                %v601 = vld [vmem:[%s229 + $0x1158] sm:$0xff]
                %602 = vst [vmem:[%s230 + $0x8ac] sm:$0xff] %v601
                %v603 = vld [vmem:[%s229 + $0x1170] sm:$0xff]
                %604 = vst [vmem:[%s230 + $0x8b8] sm:$0xff] %v603
                %v605 = vld [vmem:[%s229 + $0x1188] sm:$0xff]
                %606 = vst [vmem:[%s230 + $0x8c4] sm:$0xff] %v605
                %v607 = vld [vmem:[%s229 + $0x11a0] sm:$0xff]
                %608 = vst [vmem:[%s230 + $0x8d0] sm:$0xff] %v607
                %v609 = vld [vmem:[%s229 + $0x11b8] sm:$0xff]
                %610 = vst [vmem:[%s230 + $0x8dc] sm:$0xff] %v609
                %v611 = vld [vmem:[%s229 + $0x11d0] sm:$0xff]
                %612 = vst [vmem:[%s230 + $0x8e8] sm:$0xff] %v611
                %v613 = vld [vmem:[%s229 + $0x11e8] sm:$0xff]
                %614 = vst [vmem:[%s230 + $0x8f4] sm:$0xff] %v613
                %v615 = vld [vmem:[%s229 + $0x1200] sm:$0xff]
                %616 = vst [vmem:[%s230 + $0x900] sm:$0xff] %v615
                %v617 = vld [vmem:[%s229 + $0x1218] sm:$0xff]
                %618 = vst [vmem:[%s230 + $0x90c] sm:$0xff] %v617
                %v619 = vld [vmem:[%s229 + $0x1230] sm:$0xff]
                %620 = vst [vmem:[%s230 + $0x918] sm:$0xff] %v619
                %v621 = vld [vmem:[%s229 + $0x1248] sm:$0xff]
                %622 = vst [vmem:[%s230 + $0x924] sm:$0xff] %v621
                %v623 = vld [vmem:[%s229 + $0x1260] sm:$0xff]
                %624 = vst [vmem:[%s230 + $0x930] sm:$0xff] %v623
                %v625 = vld [vmem:[%s229 + $0x1278] sm:$0xff]
                %626 = vst [vmem:[%s230 + $0x93c] sm:$0xff] %v625
                %v627 = vld [vmem:[%s229 + $0x1290] sm:$0xff]
                %628 = vst [vmem:[%s230 + $0x948] sm:$0xff] %v627
                %v629 = vld [vmem:[%s229 + $0x12a8] sm:$0xff]
                %630 = vst [vmem:[%s230 + $0x954] sm:$0xff] %v629
                %v631 = vld [vmem:[%s229 + $0x12c0] sm:$0xff]
                %632 = vst [vmem:[%s230 + $0x960] sm:$0xff] %v631
                %v633 = vld [vmem:[%s229 + $0x12d8] sm:$0xff]
                %634 = vst [vmem:[%s230 + $0x96c] sm:$0xff] %v633
                %v635 = vld [vmem:[%s229 + $0x12f0] sm:$0xff]
                %636 = vst [vmem:[%s230 + $0x978] sm:$0xff] %v635
                %v637 = vld [vmem:[%s229 + $0x1308] sm:$0xff]
                %638 = vst [vmem:[%s230 + $0x984] sm:$0xff] %v637
                %v639 = vld [vmem:[%s229 + $0x1320] sm:$0xff]
                %640 = vst [vmem:[%s230 + $0x990] sm:$0xff] %v639
                %v641 = vld [vmem:[%s229 + $0x1338] sm:$0xff]
                %642 = vst [vmem:[%s230 + $0x99c] sm:$0xff] %v641
                %v643 = vld [vmem:[%s229 + $0x1350] sm:$0xff]
                %644 = vst [vmem:[%s230 + $0x9a8] sm:$0xff] %v643
                %v645 = vld [vmem:[%s229 + $0x1368] sm:$0xff]
                %646 = vst [vmem:[%s230 + $0x9b4] sm:$0xff] %v645
                %v647 = vld [vmem:[%s229 + $0x1380] sm:$0xff]
                %648 = vst [vmem:[%s230 + $0x9c0] sm:$0xff] %v647
                %v649 = vld [vmem:[%s229 + $0x1398] sm:$0xff]
                %650 = vst [vmem:[%s230 + $0x9cc] sm:$0xff] %v649
                %v651 = vld [vmem:[%s229 + $0x13b0] sm:$0xff]
                %652 = vst [vmem:[%s230 + $0x9d8] sm:$0xff] %v651
                %v653 = vld [vmem:[%s229 + $0x13c8] sm:$0xff]
                %654 = vst [vmem:[%s230 + $0x9e4] sm:$0xff] %v653
                %v655 = vld [vmem:[%s229 + $0x13e0] sm:$0xff]
                %656 = vst [vmem:[%s230 + $0x9f0] sm:$0xff] %v655
                %v657 = vld [vmem:[%s229 + $0x13f8] sm:$0xff]
                %658 = vst [vmem:[%s230 + $0x9fc] sm:$0xff] %v657
                %v659 = vld [vmem:[%s229 + $0x1410] sm:$0xff]
                %660 = vst [vmem:[%s230 + $0xa08] sm:$0xff] %v659
                %v661 = vld [vmem:[%s229 + $0x1428] sm:$0xff]
                %662 = vst [vmem:[%s230 + $0xa14] sm:$0xff] %v661
                %v663 = vld [vmem:[%s229 + $0x1440] sm:$0xff]
                %664 = vst [vmem:[%s230 + $0xa20] sm:$0xff] %v663
                %v665 = vld [vmem:[%s229 + $0x1458] sm:$0xff]
                %666 = vst [vmem:[%s230 + $0xa2c] sm:$0xff] %v665
                %v667 = vld [vmem:[%s229 + $0x1470] sm:$0xff]
                %668 = vst [vmem:[%s230 + $0xa38] sm:$0xff] %v667
                %v669 = vld [vmem:[%s229 + $0x1488] sm:$0xff]
                %670 = vst [vmem:[%s230 + $0xa44] sm:$0xff] %v669
                %v671 = vld [vmem:[%s229 + $0x14a0] sm:$0xff]
                %672 = vst [vmem:[%s230 + $0xa50] sm:$0xff] %v671
                %v673 = vld [vmem:[%s229 + $0x14b8] sm:$0xff]
                %674 = vst [vmem:[%s230 + $0xa5c] sm:$0xff] %v673
                %v675 = vld [vmem:[%s229 + $0x14d0] sm:$0xff]
                %676 = vst [vmem:[%s230 + $0xa68] sm:$0xff] %v675
                %v677 = vld [vmem:[%s229 + $0x14e8] sm:$0xff]
                %678 = vst [vmem:[%s230 + $0xa74] sm:$0xff] %v677
                %v679 = vld [vmem:[%s229 + $0x1500] sm:$0xff]
                %680 = vst [vmem:[%s230 + $0xa80] sm:$0xff] %v679
                %v681 = vld [vmem:[%s229 + $0x1518] sm:$0xff]
                %682 = vst [vmem:[%s230 + $0xa8c] sm:$0xff] %v681
                %v683 = vld [vmem:[%s229 + $0x1530] sm:$0xff]
                %684 = vst [vmem:[%s230 + $0xa98] sm:$0xff] %v683
                %v685 = vld [vmem:[%s229 + $0x1548] sm:$0xff]
                %686 = vst [vmem:[%s230 + $0xaa4] sm:$0xff] %v685
                %v687 = vld [vmem:[%s229 + $0x1560] sm:$0xff]
                %688 = vst [vmem:[%s230 + $0xab0] sm:$0xff] %v687
                %v689 = vld [vmem:[%s229 + $0x1578] sm:$0xff]
                %690 = vst [vmem:[%s230 + $0xabc] sm:$0xff] %v689
                %v691 = vld [vmem:[%s229 + $0x1590] sm:$0xff]
                %692 = vst [vmem:[%s230 + $0xac8] sm:$0xff] %v691
                %v693 = vld [vmem:[%s229 + $0x15a8] sm:$0xff]
                %694 = vst [vmem:[%s230 + $0xad4] sm:$0xff] %v693
                %v695 = vld [vmem:[%s229 + $0x15c0] sm:$0xff]
                %696 = vst [vmem:[%s230 + $0xae0] sm:$0xff] %v695
                %v697 = vld [vmem:[%s229 + $0x15d8] sm:$0xff]
                %698 = vst [vmem:[%s230 + $0xaec] sm:$0xff] %v697
                %v699 = vld [vmem:[%s229 + $0x15f0] sm:$0xff]
                %700 = vst [vmem:[%s230 + $0xaf8] sm:$0xff] %v699
                %v701 = vld [vmem:[%s229 + $0x1608] sm:$0xff]
                %702 = vst [vmem:[%s230 + $0xb04] sm:$0xff] %v701
                %v703 = vld [vmem:[%s229 + $0x1620] sm:$0xff]
                %704 = vst [vmem:[%s230 + $0xb10] sm:$0xff] %v703
                %v705 = vld [vmem:[%s229 + $0x1638] sm:$0xff]
                %706 = vst [vmem:[%s230 + $0xb1c] sm:$0xff] %v705
                %v707 = vld [vmem:[%s229 + $0x1650] sm:$0xff]
                %708 = vst [vmem:[%s230 + $0xb28] sm:$0xff] %v707
                %v709 = vld [vmem:[%s229 + $0x1668] sm:$0xff]
                %710 = vst [vmem:[%s230 + $0xb34] sm:$0xff] %v709
                %v711 = vld [vmem:[%s229 + $0x1680] sm:$0xff]
                %712 = vst [vmem:[%s230 + $0xb40] sm:$0xff] %v711
                %v713 = vld [vmem:[%s229 + $0x1698] sm:$0xff]
                %714 = vst [vmem:[%s230 + $0xb4c] sm:$0xff] %v713
                %v715 = vld [vmem:[%s229 + $0x16b0] sm:$0xff]
                %716 = vst [vmem:[%s230 + $0xb58] sm:$0xff] %v715
                %v717 = vld [vmem:[%s229 + $0x16c8] sm:$0xff]
                %718 = vst [vmem:[%s230 + $0xb64] sm:$0xff] %v717
                %v719 = vld [vmem:[%s229 + $0x16e0] sm:$0xff]
                %720 = vst [vmem:[%s230 + $0xb70] sm:$0xff] %v719
                %v721 = vld [vmem:[%s229 + $0x16f8] sm:$0xff]
                %722 = vst [vmem:[%s230 + $0xb7c] sm:$0xff] %v721
                %v723 = vld [vmem:[%s229 + $0x1710] sm:$0xff]
                %724 = vst [vmem:[%s230 + $0xb88] sm:$0xff] %v723
                %v725 = vld [vmem:[%s229 + $0x1728] sm:$0xff]
                %726 = vst [vmem:[%s230 + $0xb94] sm:$0xff] %v725
                %v727 = vld [vmem:[%s229 + $0x1740] sm:$0xff]
                %728 = vst [vmem:[%s230 + $0xba0] sm:$0xff] %v727
                %v729 = vld [vmem:[%s229 + $0x1758] sm:$0xff]
                %730 = vst [vmem:[%s230 + $0xbac] sm:$0xff] %v729
                %v731 = vld [vmem:[%s229 + $0x1770] sm:$0xff]
                %732 = vst [vmem:[%s230 + $0xbb8] sm:$0xff] %v731
                %v733 = vld [vmem:[%s229 + $0x1788] sm:$0xff]
                %734 = vst [vmem:[%s230 + $0xbc4] sm:$0xff] %v733
                %v735 = vld [vmem:[%s229 + $0x17a0] sm:$0xff]
                %736 = vst [vmem:[%s230 + $0xbd0] sm:$0xff] %v735
                %v737 = vld [vmem:[%s229 + $0x17b8] sm:$0xff]
                %738 = vst [vmem:[%s230 + $0xbdc] sm:$0xff] %v737
                %v739 = vld [vmem:[%s229 + $0x17d0] sm:$0xff]
                %740 = vst [vmem:[%s230 + $0xbe8] sm:$0xff] %v739
                %v741 = vld [vmem:[%s229 + $0x17e8] sm:$0xff]
                %742 = vst [vmem:[%s230 + $0xbf4] sm:$0xff] %v741
                %v743 = vld [vmem:[%s229 + $0x1800] sm:$0xff]
                %744 = vst [vmem:[%s230 + $0xc00] sm:$0xff] %v743
                %v745 = vld [vmem:[%s229 + $0x1818] sm:$0xff]
                %746 = vst [vmem:[%s230 + $0xc0c] sm:$0xff] %v745
                %v747 = vld [vmem:[%s229 + $0x1830] sm:$0xff]
                %748 = vst [vmem:[%s230 + $0xc18] sm:$0xff] %v747
                %v749 = vld [vmem:[%s229 + $0x1848] sm:$0xff]
                %750 = vst [vmem:[%s230 + $0xc24] sm:$0xff] %v749
                %v751 = vld [vmem:[%s229 + $0x1860] sm:$0xff]
                %752 = vst [vmem:[%s230 + $0xc30] sm:$0xff] %v751
                %v753 = vld [vmem:[%s229 + $0x1878] sm:$0xff]
                %754 = vst [vmem:[%s230 + $0xc3c] sm:$0xff] %v753
                %v755 = vld [vmem:[%s229 + $0x1890] sm:$0xff]
                %756 = vst [vmem:[%s230 + $0xc48] sm:$0xff] %v755
                %v757 = vld [vmem:[%s229 + $0x18a8] sm:$0xff]
                %758 = vst [vmem:[%s230 + $0xc54] sm:$0xff] %v757
                %v759 = vld [vmem:[%s229 + $0x18c0] sm:$0xff]
                %760 = vst [vmem:[%s230 + $0xc60] sm:$0xff] %v759
                %v761 = vld [vmem:[%s229 + $0x18d8] sm:$0xff]
                %762 = vst [vmem:[%s230 + $0xc6c] sm:$0xff] %v761
                %v763 = vld [vmem:[%s229 + $0x18f0] sm:$0xff]
                %764 = vst [vmem:[%s230 + $0xc78] sm:$0xff] %v763
                %v765 = vld [vmem:[%s229 + $0x1908] sm:$0xff]
                %766 = vst [vmem:[%s230 + $0xc84] sm:$0xff] %v765
                %v767 = vld [vmem:[%s229 + $0x1920] sm:$0xff]
                %768 = vst [vmem:[%s230 + $0xc90] sm:$0xff] %v767
                %v769 = vld [vmem:[%s229 + $0x1938] sm:$0xff]
                %770 = vst [vmem:[%s230 + $0xc9c] sm:$0xff] %v769
                %v771 = vld [vmem:[%s229 + $0x1950] sm:$0xff]
                %772 = vst [vmem:[%s230 + $0xca8] sm:$0xff] %v771
                %v773 = vld [vmem:[%s229 + $0x1968] sm:$0xff]
                %774 = vst [vmem:[%s230 + $0xcb4] sm:$0xff] %v773
                %v775 = vld [vmem:[%s229 + $0x1980] sm:$0xff]
                %776 = vst [vmem:[%s230 + $0xcc0] sm:$0xff] %v775
                %v777 = vld [vmem:[%s229 + $0x1998] sm:$0xff]
                %778 = vst [vmem:[%s230 + $0xccc] sm:$0xff] %v777
                %v779 = vld [vmem:[%s229 + $0x19b0] sm:$0xff]
                %780 = vst [vmem:[%s230 + $0xcd8] sm:$0xff] %v779
                %v781 = vld [vmem:[%s229 + $0x19c8] sm:$0xff]
                %782 = vst [vmem:[%s230 + $0xce4] sm:$0xff] %v781
                %v783 = vld [vmem:[%s229 + $0x19e0] sm:$0xff]
                %784 = vst [vmem:[%s230 + $0xcf0] sm:$0xff] %v783
                %v785 = vld [vmem:[%s229 + $0x19f8] sm:$0xff]
                %786 = vst [vmem:[%s230 + $0xcfc] sm:$0xff] %v785
                %v787 = vld [vmem:[%s229 + $0x1a10] sm:$0xff]
                %788 = vst [vmem:[%s230 + $0xd08] sm:$0xff] %v787
                %v789 = vld [vmem:[%s229 + $0x1a28] sm:$0xff]
                %790 = vst [vmem:[%s230 + $0xd14] sm:$0xff] %v789
                %v791 = vld [vmem:[%s229 + $0x1a40] sm:$0xff]
                %792 = vst [vmem:[%s230 + $0xd20] sm:$0xff] %v791
                %v793 = vld [vmem:[%s229 + $0x1a58] sm:$0xff]
                %794 = vst [vmem:[%s230 + $0xd2c] sm:$0xff] %v793
                %v795 = vld [vmem:[%s229 + $0x1a70] sm:$0xff]
                %796 = vst [vmem:[%s230 + $0xd38] sm:$0xff] %v795
                %v797 = vld [vmem:[%s229 + $0x1a88] sm:$0xff]
                %798 = vst [vmem:[%s230 + $0xd44] sm:$0xff] %v797
                %v799 = vld [vmem:[%s229 + $0x1aa0] sm:$0xff]
                %800 = vst [vmem:[%s230 + $0xd50] sm:$0xff] %v799
                %v801 = vld [vmem:[%s229 + $0x1ab8] sm:$0xff]
                %802 = vst [vmem:[%s230 + $0xd5c] sm:$0xff] %v801
                %v803 = vld [vmem:[%s229 + $0x1ad0] sm:$0xff]
                %804 = vst [vmem:[%s230 + $0xd68] sm:$0xff] %v803
                %v805 = vld [vmem:[%s229 + $0x1ae8] sm:$0xff]
                %806 = vst [vmem:[%s230 + $0xd74] sm:$0xff] %v805
                %v807 = vld [vmem:[%s229 + $0x1b00] sm:$0xff]
                %808 = vst [vmem:[%s230 + $0xd80] sm:$0xff] %v807
                %v809 = vld [vmem:[%s229 + $0x1b18] sm:$0xff]
                %810 = vst [vmem:[%s230 + $0xd8c] sm:$0xff] %v809
                %v811 = vld [vmem:[%s229 + $0x1b30] sm:$0xff]
                %812 = vst [vmem:[%s230 + $0xd98] sm:$0xff] %v811
                %v813 = vld [vmem:[%s229 + $0x1b48] sm:$0xff]
                %814 = vst [vmem:[%s230 + $0xda4] sm:$0xff] %v813
                %v815 = vld [vmem:[%s229 + $0x1b60] sm:$0xff]
                %816 = vst [vmem:[%s230 + $0xdb0] sm:$0xff] %v815
                %v817 = vld [vmem:[%s229 + $0x1b78] sm:$0xff]
                %818 = vst [vmem:[%s230 + $0xdbc] sm:$0xff] %v817
                %v819 = vld [vmem:[%s229 + $0x1b90] sm:$0xff]
                %820 = vst [vmem:[%s230 + $0xdc8] sm:$0xff] %v819
                %v821 = vld [vmem:[%s229 + $0x1ba8] sm:$0xff]
                %822 = vst [vmem:[%s230 + $0xdd4] sm:$0xff] %v821
                %v823 = vld [vmem:[%s229 + $0x1bc0] sm:$0xff]
                %824 = vst [vmem:[%s230 + $0xde0] sm:$0xff] %v823
                %v825 = vld [vmem:[%s229 + $0x1bd8] sm:$0xff]
                %826 = vst [vmem:[%s230 + $0xdec] sm:$0xff] %v825
                %v827 = vld [vmem:[%s229 + $0x1bf0] sm:$0xff]
                %828 = vst [vmem:[%s230 + $0xdf8] sm:$0xff] %v827
                %v829 = vld [vmem:[%s229 + $0x1c08] sm:$0xff]
                %830 = vst [vmem:[%s230 + $0xe04] sm:$0xff] %v829
                %v831 = vld [vmem:[%s229 + $0x1c20] sm:$0xff]
                %832 = vst [vmem:[%s230 + $0xe10] sm:$0xff] %v831
                %v833 = vld [vmem:[%s229 + $0x1c38] sm:$0xff]
                %834 = vst [vmem:[%s230 + $0xe1c] sm:$0xff] %v833
                %v835 = vld [vmem:[%s229 + $0x1c50] sm:$0xff]
                %836 = vst [vmem:[%s230 + $0xe28] sm:$0xff] %v835
                %v837 = vld [vmem:[%s229 + $0x1c68] sm:$0xff]
                %838 = vst [vmem:[%s230 + $0xe34] sm:$0xff] %v837
                %v839 = vld [vmem:[%s229 + $0x1c80] sm:$0xff]
                %840 = vst [vmem:[%s230 + $0xe40] sm:$0xff] %v839
                %v841 = vld [vmem:[%s229 + $0x1c98] sm:$0xff]
                %842 = vst [vmem:[%s230 + $0xe4c] sm:$0xff] %v841
                %v843 = vld [vmem:[%s229 + $0x1cb0] sm:$0xff]
                %844 = vst [vmem:[%s230 + $0xe58] sm:$0xff] %v843
                %v845 = vld [vmem:[%s229 + $0x1cc8] sm:$0xff]
                %846 = vst [vmem:[%s230 + $0xe64] sm:$0xff] %v845
                %v847 = vld [vmem:[%s229 + $0x1ce0] sm:$0xff]
                %848 = vst [vmem:[%s230 + $0xe70] sm:$0xff] %v847
                %v849 = vld [vmem:[%s229 + $0x1cf8] sm:$0xff]
                %850 = vst [vmem:[%s230 + $0xe7c] sm:$0xff] %v849
                %v851 = vld [vmem:[%s229 + $0x1d10] sm:$0xff]
                %852 = vst [vmem:[%s230 + $0xe88] sm:$0xff] %v851
                %v853 = vld [vmem:[%s229 + $0x1d28] sm:$0xff]
                %854 = vst [vmem:[%s230 + $0xe94] sm:$0xff] %v853
                %v855 = vld [vmem:[%s229 + $0x1d40] sm:$0xff]
                %856 = vst [vmem:[%s230 + $0xea0] sm:$0xff] %v855
                %v857 = vld [vmem:[%s229 + $0x1d58] sm:$0xff]
                %858 = vst [vmem:[%s230 + $0xeac] sm:$0xff] %v857
                %v859 = vld [vmem:[%s229 + $0x1d70] sm:$0xff]
                %860 = vst [vmem:[%s230 + $0xeb8] sm:$0xff] %v859
                %v861 = vld [vmem:[%s229 + $0x1d88] sm:$0xff]
                %862 = vst [vmem:[%s230 + $0xec4] sm:$0xff] %v861
                %v863 = vld [vmem:[%s229 + $0x1da0] sm:$0xff]
                %864 = vst [vmem:[%s230 + $0xed0] sm:$0xff] %v863
                %v865 = vld [vmem:[%s229 + $0x1db8] sm:$0xff]
                %866 = vst [vmem:[%s230 + $0xedc] sm:$0xff] %v865
                %v867 = vld [vmem:[%s229 + $0x1dd0] sm:$0xff]
                %868 = vst [vmem:[%s230 + $0xee8] sm:$0xff] %v867
                %v869 = vld [vmem:[%s229 + $0x1de8] sm:$0xff]
                %870 = vst [vmem:[%s230 + $0xef4] sm:$0xff] %v869
                %v871 = vld [vmem:[%s229 + $0x1e00] sm:$0xff]
                %872 = vst [vmem:[%s230 + $0xf00] sm:$0xff] %v871
                %v873 = vld [vmem:[%s229 + $0x1e18] sm:$0xff]
                %874 = vst [vmem:[%s230 + $0xf0c] sm:$0xff] %v873
                %v875 = vld [vmem:[%s229 + $0x1e30] sm:$0xff]
                %876 = vst [vmem:[%s230 + $0xf18] sm:$0xff] %v875
                %v877 = vld [vmem:[%s229 + $0x1e48] sm:$0xff]
                %878 = vst [vmem:[%s230 + $0xf24] sm:$0xff] %v877
                %v879 = vld [vmem:[%s229 + $0x1e60] sm:$0xff]
                %880 = vst [vmem:[%s230 + $0xf30] sm:$0xff] %v879
                %v881 = vld [vmem:[%s229 + $0x1e78] sm:$0xff]
                %882 = vst [vmem:[%s230 + $0xf3c] sm:$0xff] %v881
                %v883 = vld [vmem:[%s229 + $0x1e90] sm:$0xff]
                %884 = vst [vmem:[%s230 + $0xf48] sm:$0xff] %v883
                %v885 = vld [vmem:[%s229 + $0x1ea8] sm:$0xff]
                %886 = vst [vmem:[%s230 + $0xf54] sm:$0xff] %v885
                %v887 = vld [vmem:[%s229 + $0x1ec0] sm:$0xff]
                %888 = vst [vmem:[%s230 + $0xf60] sm:$0xff] %v887
                %v889 = vld [vmem:[%s229 + $0x1ed8] sm:$0xff]
                %890 = vst [vmem:[%s230 + $0xf6c] sm:$0xff] %v889
                %v891 = vld [vmem:[%s229 + $0x1ef0] sm:$0xff]
                %892 = vst [vmem:[%s230 + $0xf78] sm:$0xff] %v891
                %v893 = vld [vmem:[%s229 + $0x1f08] sm:$0xff]
                %894 = vst [vmem:[%s230 + $0xf84] sm:$0xff] %v893
                %v895 = vld [vmem:[%s229 + $0x1f20] sm:$0xff]
                %896 = vst [vmem:[%s230 + $0xf90] sm:$0xff] %v895
                %v897 = vld [vmem:[%s229 + $0x1f38] sm:$0xff]
                %898 = vst [vmem:[%s230 + $0xf9c] sm:$0xff] %v897
                %v899 = vld [vmem:[%s229 + $0x1f50] sm:$0xff]
                %900 = vst [vmem:[%s230 + $0xfa8] sm:$0xff] %v899
                %v901 = vld [vmem:[%s229 + $0x1f68] sm:$0xff]
                %902 = vst [vmem:[%s230 + $0xfb4] sm:$0xff] %v901
                %v903 = vld [vmem:[%s229 + $0x1f80] sm:$0xff]
                %904 = vst [vmem:[%s230 + $0xfc0] sm:$0xff] %v903
                %v905 = vld [vmem:[%s229 + $0x1f98] sm:$0xff]
                %906 = vst [vmem:[%s230 + $0xfcc] sm:$0xff] %v905
                %v907 = vld [vmem:[%s229 + $0x1fb0] sm:$0xff]
                %908 = vst [vmem:[%s230 + $0xfd8] sm:$0xff] %v907
                %v909 = vld [vmem:[%s229 + $0x1fc8] sm:$0xff]
                %910 = vst [vmem:[%s230 + $0xfe4] sm:$0xff] %v909
                %v911 = vld [vmem:[%s229 + $0x1fe0] sm:$0xff]
                %912 = vst [vmem:[%s230 + $0xff0] sm:$0xff] %v911
                %v913 = vld [vmem:[%s229 + $0x1ff8] sm:$0xff]
                %914 = vst [vmem:[%s230 + $0xffc] sm:$0xff] %v913
                %v915 = vld [vmem:[%s229 + $0x2010] sm:$0xff]
                %916 = vst [vmem:[%s230 + $0x1008] sm:$0xff] %v915
                %v917 = vld [vmem:[%s229 + $0x2028] sm:$0xff]
                %918 = vst [vmem:[%s230 + $0x1014] sm:$0xff] %v917
                %v919 = vld [vmem:[%s229 + $0x2040] sm:$0xff]
                %920 = vst [vmem:[%s230 + $0x1020] sm:$0xff] %v919
                %v921 = vld [vmem:[%s229 + $0x2058] sm:$0xff]
                %922 = vst [vmem:[%s230 + $0x102c] sm:$0xff] %v921
                %v923 = vld [vmem:[%s229 + $0x2070] sm:$0xff]
                %924 = vst [vmem:[%s230 + $0x1038] sm:$0xff] %v923
                %v925 = vld [vmem:[%s229 + $0x2088] sm:$0xff]
                %926 = vst [vmem:[%s230 + $0x1044] sm:$0xff] %v925
                %v927 = vld [vmem:[%s229 + $0x20a0] sm:$0xff]
                %928 = vst [vmem:[%s230 + $0x1050] sm:$0xff] %v927
                %v929 = vld [vmem:[%s229 + $0x20b8] sm:$0xff]
                %930 = vst [vmem:[%s230 + $0x105c] sm:$0xff] %v929
                %v931 = vld [vmem:[%s229 + $0x20d0] sm:$0xff]
                %932 = vst [vmem:[%s230 + $0x1068] sm:$0xff] %v931
                %v933 = vld [vmem:[%s229 + $0x20e8] sm:$0xff]
                %934 = vst [vmem:[%s230 + $0x1074] sm:$0xff] %v933
                %v935 = vld [vmem:[%s229 + $0x2100] sm:$0xff]
                %936 = vst [vmem:[%s230 + $0x1080] sm:$0xff] %v935
                %v937 = vld [vmem:[%s229 + $0x2118] sm:$0xff]
                %938 = vst [vmem:[%s230 + $0x108c] sm:$0xff] %v937
                %v939 = vld [vmem:[%s229 + $0x2130] sm:$0xff]
                %940 = vst [vmem:[%s230 + $0x1098] sm:$0xff] %v939
                %v941 = vld [vmem:[%s229 + $0x2148] sm:$0xff]
                %942 = vst [vmem:[%s230 + $0x10a4] sm:$0xff] %v941
                %v943 = vld [vmem:[%s229 + $0x2160] sm:$0xff]
                %944 = vst [vmem:[%s230 + $0x10b0] sm:$0xff] %v943
                %v945 = vld [vmem:[%s229 + $0x2178] sm:$0xff]
                %946 = vst [vmem:[%s230 + $0x10bc] sm:$0xff] %v945
                %v947 = vld [vmem:[%s229 + $0x2190] sm:$0xff]
                %948 = vst [vmem:[%s230 + $0x10c8] sm:$0xff] %v947
                %v949 = vld [vmem:[%s229 + $0x21a8] sm:$0xff]
                %950 = vst [vmem:[%s230 + $0x10d4] sm:$0xff] %v949
                %v951 = vld [vmem:[%s229 + $0x21c0] sm:$0xff]
                %952 = vst [vmem:[%s230 + $0x10e0] sm:$0xff] %v951
                %v953 = vld [vmem:[%s229 + $0x21d8] sm:$0xff]
                %954 = vst [vmem:[%s230 + $0x10ec] sm:$0xff] %v953
                %v955 = vld [vmem:[%s229 + $0x21f0] sm:$0xff]
                %956 = vst [vmem:[%s230 + $0x10f8] sm:$0xff] %v955
                %v957 = vld [vmem:[%s229 + $0x2208] sm:$0xff]
                %958 = vst [vmem:[%s230 + $0x1104] sm:$0xff] %v957
                %v959 = vld [vmem:[%s229 + $0x2220] sm:$0xff]
                %960 = vst [vmem:[%s230 + $0x1110] sm:$0xff] %v959
                %v961 = vld [vmem:[%s229 + $0x2238] sm:$0xff]
                %962 = vst [vmem:[%s230 + $0x111c] sm:$0xff] %v961
                %v963 = vld [vmem:[%s229 + $0x2250] sm:$0xff]
                %964 = vst [vmem:[%s230 + $0x1128] sm:$0xff] %v963
                %v965 = vld [vmem:[%s229 + $0x2268] sm:$0xff]
                %966 = vst [vmem:[%s230 + $0x1134] sm:$0xff] %v965
                %v967 = vld [vmem:[%s229 + $0x2280] sm:$0xff]
                %968 = vst [vmem:[%s230 + $0x1140] sm:$0xff] %v967
                %v969 = vld [vmem:[%s229 + $0x2298] sm:$0xff]
                %970 = vst [vmem:[%s230 + $0x114c] sm:$0xff] %v969
                %v971 = vld [vmem:[%s229 + $0x22b0] sm:$0xff]
                %972 = vst [vmem:[%s230 + $0x1158] sm:$0xff] %v971
                %v973 = vld [vmem:[%s229 + $0x22c8] sm:$0xff]
                %974 = vst [vmem:[%s230 + $0x1164] sm:$0xff] %v973
                %v975 = vld [vmem:[%s229 + $0x22e0] sm:$0xff]
                %976 = vst [vmem:[%s230 + $0x1170] sm:$0xff] %v975
                %v977 = vld [vmem:[%s229 + $0x22f8] sm:$0xff]
                %978 = vst [vmem:[%s230 + $0x117c] sm:$0xff] %v977
                %v979 = vld [vmem:[%s229 + $0x2310] sm:$0xff]
                %980 = vst [vmem:[%s230 + $0x1188] sm:$0xff] %v979
                %v981 = vld [vmem:[%s229 + $0x2328] sm:$0xff]
                %982 = vst [vmem:[%s230 + $0x1194] sm:$0xff] %v981
                %v983 = vld [vmem:[%s229 + $0x2340] sm:$0xff]
                %984 = vst [vmem:[%s230 + $0x11a0] sm:$0xff] %v983
                %v985 = vld [vmem:[%s229 + $0x2358] sm:$0xff]
                %986 = vst [vmem:[%s230 + $0x11ac] sm:$0xff] %v985
                %v987 = vld [vmem:[%s229 + $0x2370] sm:$0xff]
                %988 = vst [vmem:[%s230 + $0x11b8] sm:$0xff] %v987
                %v989 = vld [vmem:[%s229 + $0x2388] sm:$0xff]
                %990 = vst [vmem:[%s230 + $0x11c4] sm:$0xff] %v989
                %v991 = vld [vmem:[%s229 + $0x23a0] sm:$0xff]
                %992 = vst [vmem:[%s230 + $0x11d0] sm:$0xff] %v991
                %v993 = vld [vmem:[%s229 + $0x23b8] sm:$0xff]
                %994 = vst [vmem:[%s230 + $0x11dc] sm:$0xff] %v993
                %v995 = vld [vmem:[%s229 + $0x23d0] sm:$0xff]
                %996 = vst [vmem:[%s230 + $0x11e8] sm:$0xff] %v995
                %v997 = vld [vmem:[%s229 + $0x23e8] sm:$0xff]
                %998 = vst [vmem:[%s230 + $0x11f4] sm:$0xff] %v997
                %v999 = vld [vmem:[%s229 + $0x2400] sm:$0xff]
                %1000 = vst [vmem:[%s230 + $0x1200] sm:$0xff] %v999
                %v1001 = vld [vmem:[%s229 + $0x2418] sm:$0xff]
                %1002 = vst [vmem:[%s230 + $0x120c] sm:$0xff] %v1001
                %v1003 = vld [vmem:[%s229 + $0x2430] sm:$0xff]
                %1004 = vst [vmem:[%s230 + $0x1218] sm:$0xff] %v1003
                %v1005 = vld [vmem:[%s229 + $0x2448] sm:$0xff]
                %1006 = vst [vmem:[%s230 + $0x1224] sm:$0xff] %v1005
                %v1007 = vld [vmem:[%s229 + $0x2460] sm:$0xff]
                %1008 = vst [vmem:[%s230 + $0x1230] sm:$0xff] %v1007
                %v1009 = vld [vmem:[%s229 + $0x2478] sm:$0xff]
                %1010 = vst [vmem:[%s230 + $0x123c] sm:$0xff] %v1009
                %v1011 = vld [vmem:[%s229 + $0x2490] sm:$0xff]
                %1012 = vst [vmem:[%s230 + $0x1248] sm:$0xff] %v1011
                %v1013 = vld [vmem:[%s229 + $0x24a8] sm:$0xff]
                %1014 = vst [vmem:[%s230 + $0x1254] sm:$0xff] %v1013
                %v1015 = vld [vmem:[%s229 + $0x24c0] sm:$0xff]
                %1016 = vst [vmem:[%s230 + $0x1260] sm:$0xff] %v1015
                %v1017 = vld [vmem:[%s229 + $0x24d8] sm:$0xff]
                %1018 = vst [vmem:[%s230 + $0x126c] sm:$0xff] %v1017
                %v1019 = vld [vmem:[%s229 + $0x24f0] sm:$0xff]
                %1020 = vst [vmem:[%s230 + $0x1278] sm:$0xff] %v1019
                %v1021 = vld [vmem:[%s229 + $0x2508] sm:$0xff]
                %1022 = vst [vmem:[%s230 + $0x1284] sm:$0xff] %v1021
                %v1023 = vld [vmem:[%s229 + $0x2520] sm:$0xff]
                %1024 = vst [vmem:[%s230 + $0x1290] sm:$0xff] %v1023
                %v1025 = vld [vmem:[%s229 + $0x2538] sm:$0xff]
                %1026 = vst [vmem:[%s230 + $0x129c] sm:$0xff] %v1025
                %v1027 = vld [vmem:[%s229 + $0x2550] sm:$0xff]
                %1028 = vst [vmem:[%s230 + $0x12a8] sm:$0xff] %v1027
                %v1029 = vld [vmem:[%s229 + $0x2568] sm:$0xff]
                %1030 = vst [vmem:[%s230 + $0x12b4] sm:$0xff] %v1029
              $region45: #{inception_aux.6} parent=39 // loop_footer
                %s228 = sadd.s32 1, %s224
              $region46: #{inception_aux.6} parent=39 // loop_footer_branch
                %223 = sbr.rel target = $region42
              $region47: #{inception_aux.6} parent=39 // loop_exit
                _
              loop: start=0, step=1, limit=1
              $region48: #{inception_aux.6} parent=39 // loop_pre_header
                _
              $region49: #{inception_aux.6} parent=39 // loop_header
                %s1033 = sphi 0, %s1037
                %p1034 = scmp.ge.s32.totalorder %s1033, 1
                %s1038 = sphi %s221, %s221
                %s1039 = sphi %s222, %s222
              $region50: #{inception_aux.6} parent=39 // loop_header_branch
                %1036 = sbr.rel (%p1034) target = $region54
              $region51: #{inception_aux.6} parent=39 // loop_body
                %v1040 = vld [vmem:[%s1038] sm:$0xf]
                %1041 = vst [vmem:[%s1039] sm:$0xf] %v1040
                %v1042 = vld [vmem:[%s1038 + $0x18] sm:$0xf]
                %1043 = vst [vmem:[%s1039 + $0xc] sm:$0xf] %v1042
                %v1044 = vld [vmem:[%s1038 + $0x30] sm:$0xf]
                %1045 = vst [vmem:[%s1039 + $0x18] sm:$0xf] %v1044
                %v1046 = vld [vmem:[%s1038 + $0x48] sm:$0xf]
                %1047 = vst [vmem:[%s1039 + $0x24] sm:$0xf] %v1046
                %v1048 = vld [vmem:[%s1038 + $0x60] sm:$0xf]
                %1049 = vst [vmem:[%s1039 + $0x30] sm:$0xf] %v1048
                %v1050 = vld [vmem:[%s1038 + $0x78] sm:$0xf]
                %1051 = vst [vmem:[%s1039 + $0x3c] sm:$0xf] %v1050
                %v1052 = vld [vmem:[%s1038 + $0x90] sm:$0xf]
                %1053 = vst [vmem:[%s1039 + $0x48] sm:$0xf] %v1052
                %v1054 = vld [vmem:[%s1038 + $0xa8] sm:$0xf]
                %1055 = vst [vmem:[%s1039 + $0x54] sm:$0xf] %v1054
                %v1056 = vld [vmem:[%s1038 + $0xc0] sm:$0xf]
                %1057 = vst [vmem:[%s1039 + $0x60] sm:$0xf] %v1056
                %v1058 = vld [vmem:[%s1038 + $0xd8] sm:$0xf]
                %1059 = vst [vmem:[%s1039 + $0x6c] sm:$0xf] %v1058
                %v1060 = vld [vmem:[%s1038 + $0xf0] sm:$0xf]
                %1061 = vst [vmem:[%s1039 + $0x78] sm:$0xf] %v1060
                %v1062 = vld [vmem:[%s1038 + $0x108] sm:$0xf]
                %1063 = vst [vmem:[%s1039 + $0x84] sm:$0xf] %v1062
                %v1064 = vld [vmem:[%s1038 + $0x120] sm:$0xf]
                %1065 = vst [vmem:[%s1039 + $0x90] sm:$0xf] %v1064
                %v1066 = vld [vmem:[%s1038 + $0x138] sm:$0xf]
                %1067 = vst [vmem:[%s1039 + $0x9c] sm:$0xf] %v1066
                %v1068 = vld [vmem:[%s1038 + $0x150] sm:$0xf]
                %1069 = vst [vmem:[%s1039 + $0xa8] sm:$0xf] %v1068
                %v1070 = vld [vmem:[%s1038 + $0x168] sm:$0xf]
                %1071 = vst [vmem:[%s1039 + $0xb4] sm:$0xf] %v1070
                %v1072 = vld [vmem:[%s1038 + $0x180] sm:$0xf]
                %1073 = vst [vmem:[%s1039 + $0xc0] sm:$0xf] %v1072
                %v1074 = vld [vmem:[%s1038 + $0x198] sm:$0xf]
                %1075 = vst [vmem:[%s1039 + $0xcc] sm:$0xf] %v1074
                %v1076 = vld [vmem:[%s1038 + $0x1b0] sm:$0xf]
                %1077 = vst [vmem:[%s1039 + $0xd8] sm:$0xf] %v1076
                %v1078 = vld [vmem:[%s1038 + $0x1c8] sm:$0xf]
                %1079 = vst [vmem:[%s1039 + $0xe4] sm:$0xf] %v1078
                %v1080 = vld [vmem:[%s1038 + $0x1e0] sm:$0xf]
                %1081 = vst [vmem:[%s1039 + $0xf0] sm:$0xf] %v1080
                %v1082 = vld [vmem:[%s1038 + $0x1f8] sm:$0xf]
                %1083 = vst [vmem:[%s1039 + $0xfc] sm:$0xf] %v1082
                %v1084 = vld [vmem:[%s1038 + $0x210] sm:$0xf]
                %1085 = vst [vmem:[%s1039 + $0x108] sm:$0xf] %v1084
                %v1086 = vld [vmem:[%s1038 + $0x228] sm:$0xf]
                %1087 = vst [vmem:[%s1039 + $0x114] sm:$0xf] %v1086
                %v1088 = vld [vmem:[%s1038 + $0x240] sm:$0xf]
                %1089 = vst [vmem:[%s1039 + $0x120] sm:$0xf] %v1088
                %v1090 = vld [vmem:[%s1038 + $0x258] sm:$0xf]
                %1091 = vst [vmem:[%s1039 + $0x12c] sm:$0xf] %v1090
                %v1092 = vld [vmem:[%s1038 + $0x270] sm:$0xf]
                %1093 = vst [vmem:[%s1039 + $0x138] sm:$0xf] %v1092
                %v1094 = vld [vmem:[%s1038 + $0x288] sm:$0xf]
                %1095 = vst [vmem:[%s1039 + $0x144] sm:$0xf] %v1094
                %v1096 = vld [vmem:[%s1038 + $0x2a0] sm:$0xf]
                %1097 = vst [vmem:[%s1039 + $0x150] sm:$0xf] %v1096
                %v1098 = vld [vmem:[%s1038 + $0x2b8] sm:$0xf]
                %1099 = vst [vmem:[%s1039 + $0x15c] sm:$0xf] %v1098
                %v1100 = vld [vmem:[%s1038 + $0x2d0] sm:$0xf]
                %1101 = vst [vmem:[%s1039 + $0x168] sm:$0xf] %v1100
                %v1102 = vld [vmem:[%s1038 + $0x2e8] sm:$0xf]
                %1103 = vst [vmem:[%s1039 + $0x174] sm:$0xf] %v1102
                %v1104 = vld [vmem:[%s1038 + $0x300] sm:$0xf]
                %1105 = vst [vmem:[%s1039 + $0x180] sm:$0xf] %v1104
                %v1106 = vld [vmem:[%s1038 + $0x318] sm:$0xf]
                %1107 = vst [vmem:[%s1039 + $0x18c] sm:$0xf] %v1106
                %v1108 = vld [vmem:[%s1038 + $0x330] sm:$0xf]
                %1109 = vst [vmem:[%s1039 + $0x198] sm:$0xf] %v1108
                %v1110 = vld [vmem:[%s1038 + $0x348] sm:$0xf]
                %1111 = vst [vmem:[%s1039 + $0x1a4] sm:$0xf] %v1110
                %v1112 = vld [vmem:[%s1038 + $0x360] sm:$0xf]
                %1113 = vst [vmem:[%s1039 + $0x1b0] sm:$0xf] %v1112
                %v1114 = vld [vmem:[%s1038 + $0x378] sm:$0xf]
                %1115 = vst [vmem:[%s1039 + $0x1bc] sm:$0xf] %v1114
                %v1116 = vld [vmem:[%s1038 + $0x390] sm:$0xf]
                %1117 = vst [vmem:[%s1039 + $0x1c8] sm:$0xf] %v1116
                %v1118 = vld [vmem:[%s1038 + $0x3a8] sm:$0xf]
                %1119 = vst [vmem:[%s1039 + $0x1d4] sm:$0xf] %v1118
                %v1120 = vld [vmem:[%s1038 + $0x3c0] sm:$0xf]
                %1121 = vst [vmem:[%s1039 + $0x1e0] sm:$0xf] %v1120
                %v1122 = vld [vmem:[%s1038 + $0x3d8] sm:$0xf]
                %1123 = vst [vmem:[%s1039 + $0x1ec] sm:$0xf] %v1122
                %v1124 = vld [vmem:[%s1038 + $0x3f0] sm:$0xf]
                %1125 = vst [vmem:[%s1039 + $0x1f8] sm:$0xf] %v1124
                %v1126 = vld [vmem:[%s1038 + $0x408] sm:$0xf]
                %1127 = vst [vmem:[%s1039 + $0x204] sm:$0xf] %v1126
                %v1128 = vld [vmem:[%s1038 + $0x420] sm:$0xf]
                %1129 = vst [vmem:[%s1039 + $0x210] sm:$0xf] %v1128
                %v1130 = vld [vmem:[%s1038 + $0x438] sm:$0xf]
                %1131 = vst [vmem:[%s1039 + $0x21c] sm:$0xf] %v1130
                %v1132 = vld [vmem:[%s1038 + $0x450] sm:$0xf]
                %1133 = vst [vmem:[%s1039 + $0x228] sm:$0xf] %v1132
                %v1134 = vld [vmem:[%s1038 + $0x468] sm:$0xf]
                %1135 = vst [vmem:[%s1039 + $0x234] sm:$0xf] %v1134
                %v1136 = vld [vmem:[%s1038 + $0x480] sm:$0xf]
                %1137 = vst [vmem:[%s1039 + $0x240] sm:$0xf] %v1136
                %v1138 = vld [vmem:[%s1038 + $0x498] sm:$0xf]
                %1139 = vst [vmem:[%s1039 + $0x24c] sm:$0xf] %v1138
                %v1140 = vld [vmem:[%s1038 + $0x4b0] sm:$0xf]
                %1141 = vst [vmem:[%s1039 + $0x258] sm:$0xf] %v1140
                %v1142 = vld [vmem:[%s1038 + $0x4c8] sm:$0xf]
                %1143 = vst [vmem:[%s1039 + $0x264] sm:$0xf] %v1142
                %v1144 = vld [vmem:[%s1038 + $0x4e0] sm:$0xf]
                %1145 = vst [vmem:[%s1039 + $0x270] sm:$0xf] %v1144
                %v1146 = vld [vmem:[%s1038 + $0x4f8] sm:$0xf]
                %1147 = vst [vmem:[%s1039 + $0x27c] sm:$0xf] %v1146
                %v1148 = vld [vmem:[%s1038 + $0x510] sm:$0xf]
                %1149 = vst [vmem:[%s1039 + $0x288] sm:$0xf] %v1148
                %v1150 = vld [vmem:[%s1038 + $0x528] sm:$0xf]
                %1151 = vst [vmem:[%s1039 + $0x294] sm:$0xf] %v1150
                %v1152 = vld [vmem:[%s1038 + $0x540] sm:$0xf]
                %1153 = vst [vmem:[%s1039 + $0x2a0] sm:$0xf] %v1152
                %v1154 = vld [vmem:[%s1038 + $0x558] sm:$0xf]
                %1155 = vst [vmem:[%s1039 + $0x2ac] sm:$0xf] %v1154
                %v1156 = vld [vmem:[%s1038 + $0x570] sm:$0xf]
                %1157 = vst [vmem:[%s1039 + $0x2b8] sm:$0xf] %v1156
                %v1158 = vld [vmem:[%s1038 + $0x588] sm:$0xf]
                %1159 = vst [vmem:[%s1039 + $0x2c4] sm:$0xf] %v1158
                %v1160 = vld [vmem:[%s1038 + $0x5a0] sm:$0xf]
                %1161 = vst [vmem:[%s1039 + $0x2d0] sm:$0xf] %v1160
                %v1162 = vld [vmem:[%s1038 + $0x5b8] sm:$0xf]
                %1163 = vst [vmem:[%s1039 + $0x2dc] sm:$0xf] %v1162
                %v1164 = vld [vmem:[%s1038 + $0x5d0] sm:$0xf]
                %1165 = vst [vmem:[%s1039 + $0x2e8] sm:$0xf] %v1164
                %v1166 = vld [vmem:[%s1038 + $0x5e8] sm:$0xf]
                %1167 = vst [vmem:[%s1039 + $0x2f4] sm:$0xf] %v1166
                %v1168 = vld [vmem:[%s1038 + $0x600] sm:$0xf]
                %1169 = vst [vmem:[%s1039 + $0x300] sm:$0xf] %v1168
                %v1170 = vld [vmem:[%s1038 + $0x618] sm:$0xf]
                %1171 = vst [vmem:[%s1039 + $0x30c] sm:$0xf] %v1170
                %v1172 = vld [vmem:[%s1038 + $0x630] sm:$0xf]
                %1173 = vst [vmem:[%s1039 + $0x318] sm:$0xf] %v1172
                %v1174 = vld [vmem:[%s1038 + $0x648] sm:$0xf]
                %1175 = vst [vmem:[%s1039 + $0x324] sm:$0xf] %v1174
                %v1176 = vld [vmem:[%s1038 + $0x660] sm:$0xf]
                %1177 = vst [vmem:[%s1039 + $0x330] sm:$0xf] %v1176
                %v1178 = vld [vmem:[%s1038 + $0x678] sm:$0xf]
                %1179 = vst [vmem:[%s1039 + $0x33c] sm:$0xf] %v1178
                %v1180 = vld [vmem:[%s1038 + $0x690] sm:$0xf]
                %1181 = vst [vmem:[%s1039 + $0x348] sm:$0xf] %v1180
                %v1182 = vld [vmem:[%s1038 + $0x6a8] sm:$0xf]
                %1183 = vst [vmem:[%s1039 + $0x354] sm:$0xf] %v1182
                %v1184 = vld [vmem:[%s1038 + $0x6c0] sm:$0xf]
                %1185 = vst [vmem:[%s1039 + $0x360] sm:$0xf] %v1184
                %v1186 = vld [vmem:[%s1038 + $0x6d8] sm:$0xf]
                %1187 = vst [vmem:[%s1039 + $0x36c] sm:$0xf] %v1186
                %v1188 = vld [vmem:[%s1038 + $0x6f0] sm:$0xf]
                %1189 = vst [vmem:[%s1039 + $0x378] sm:$0xf] %v1188
                %v1190 = vld [vmem:[%s1038 + $0x708] sm:$0xf]
                %1191 = vst [vmem:[%s1039 + $0x384] sm:$0xf] %v1190
                %v1192 = vld [vmem:[%s1038 + $0x720] sm:$0xf]
                %1193 = vst [vmem:[%s1039 + $0x390] sm:$0xf] %v1192
                %v1194 = vld [vmem:[%s1038 + $0x738] sm:$0xf]
                %1195 = vst [vmem:[%s1039 + $0x39c] sm:$0xf] %v1194
                %v1196 = vld [vmem:[%s1038 + $0x750] sm:$0xf]
                %1197 = vst [vmem:[%s1039 + $0x3a8] sm:$0xf] %v1196
                %v1198 = vld [vmem:[%s1038 + $0x768] sm:$0xf]
                %1199 = vst [vmem:[%s1039 + $0x3b4] sm:$0xf] %v1198
                %v1200 = vld [vmem:[%s1038 + $0x780] sm:$0xf]
                %1201 = vst [vmem:[%s1039 + $0x3c0] sm:$0xf] %v1200
                %v1202 = vld [vmem:[%s1038 + $0x798] sm:$0xf]
                %1203 = vst [vmem:[%s1039 + $0x3cc] sm:$0xf] %v1202
                %v1204 = vld [vmem:[%s1038 + $0x7b0] sm:$0xf]
                %1205 = vst [vmem:[%s1039 + $0x3d8] sm:$0xf] %v1204
                %v1206 = vld [vmem:[%s1038 + $0x7c8] sm:$0xf]
                %1207 = vst [vmem:[%s1039 + $0x3e4] sm:$0xf] %v1206
                %v1208 = vld [vmem:[%s1038 + $0x7e0] sm:$0xf]
                %1209 = vst [vmem:[%s1039 + $0x3f0] sm:$0xf] %v1208
                %v1210 = vld [vmem:[%s1038 + $0x7f8] sm:$0xf]
                %1211 = vst [vmem:[%s1039 + $0x3fc] sm:$0xf] %v1210
                %v1212 = vld [vmem:[%s1038 + $0x810] sm:$0xf]
                %1213 = vst [vmem:[%s1039 + $0x408] sm:$0xf] %v1212
                %v1214 = vld [vmem:[%s1038 + $0x828] sm:$0xf]
                %1215 = vst [vmem:[%s1039 + $0x414] sm:$0xf] %v1214
                %v1216 = vld [vmem:[%s1038 + $0x840] sm:$0xf]
                %1217 = vst [vmem:[%s1039 + $0x420] sm:$0xf] %v1216
                %v1218 = vld [vmem:[%s1038 + $0x858] sm:$0xf]
                %1219 = vst [vmem:[%s1039 + $0x42c] sm:$0xf] %v1218
                %v1220 = vld [vmem:[%s1038 + $0x870] sm:$0xf]
                %1221 = vst [vmem:[%s1039 + $0x438] sm:$0xf] %v1220
                %v1222 = vld [vmem:[%s1038 + $0x888] sm:$0xf]
                %1223 = vst [vmem:[%s1039 + $0x444] sm:$0xf] %v1222
                %v1224 = vld [vmem:[%s1038 + $0x8a0] sm:$0xf]
                %1225 = vst [vmem:[%s1039 + $0x450] sm:$0xf] %v1224
                %v1226 = vld [vmem:[%s1038 + $0x8b8] sm:$0xf]
                %1227 = vst [vmem:[%s1039 + $0x45c] sm:$0xf] %v1226
                %v1228 = vld [vmem:[%s1038 + $0x8d0] sm:$0xf]
                %1229 = vst [vmem:[%s1039 + $0x468] sm:$0xf] %v1228
                %v1230 = vld [vmem:[%s1038 + $0x8e8] sm:$0xf]
                %1231 = vst [vmem:[%s1039 + $0x474] sm:$0xf] %v1230
                %v1232 = vld [vmem:[%s1038 + $0x900] sm:$0xf]
                %1233 = vst [vmem:[%s1039 + $0x480] sm:$0xf] %v1232
                %v1234 = vld [vmem:[%s1038 + $0x918] sm:$0xf]
                %1235 = vst [vmem:[%s1039 + $0x48c] sm:$0xf] %v1234
                %v1236 = vld [vmem:[%s1038 + $0x930] sm:$0xf]
                %1237 = vst [vmem:[%s1039 + $0x498] sm:$0xf] %v1236
                %v1238 = vld [vmem:[%s1038 + $0x948] sm:$0xf]
                %1239 = vst [vmem:[%s1039 + $0x4a4] sm:$0xf] %v1238
                %v1240 = vld [vmem:[%s1038 + $0x960] sm:$0xf]
                %1241 = vst [vmem:[%s1039 + $0x4b0] sm:$0xf] %v1240
                %v1242 = vld [vmem:[%s1038 + $0x978] sm:$0xf]
                %1243 = vst [vmem:[%s1039 + $0x4bc] sm:$0xf] %v1242
                %v1244 = vld [vmem:[%s1038 + $0x990] sm:$0xf]
                %1245 = vst [vmem:[%s1039 + $0x4c8] sm:$0xf] %v1244
                %v1246 = vld [vmem:[%s1038 + $0x9a8] sm:$0xf]
                %1247 = vst [vmem:[%s1039 + $0x4d4] sm:$0xf] %v1246
                %v1248 = vld [vmem:[%s1038 + $0x9c0] sm:$0xf]
                %1249 = vst [vmem:[%s1039 + $0x4e0] sm:$0xf] %v1248
                %v1250 = vld [vmem:[%s1038 + $0x9d8] sm:$0xf]
                %1251 = vst [vmem:[%s1039 + $0x4ec] sm:$0xf] %v1250
                %v1252 = vld [vmem:[%s1038 + $0x9f0] sm:$0xf]
                %1253 = vst [vmem:[%s1039 + $0x4f8] sm:$0xf] %v1252
                %v1254 = vld [vmem:[%s1038 + $0xa08] sm:$0xf]
                %1255 = vst [vmem:[%s1039 + $0x504] sm:$0xf] %v1254
                %v1256 = vld [vmem:[%s1038 + $0xa20] sm:$0xf]
                %1257 = vst [vmem:[%s1039 + $0x510] sm:$0xf] %v1256
                %v1258 = vld [vmem:[%s1038 + $0xa38] sm:$0xf]
                %1259 = vst [vmem:[%s1039 + $0x51c] sm:$0xf] %v1258
                %v1260 = vld [vmem:[%s1038 + $0xa50] sm:$0xf]
                %1261 = vst [vmem:[%s1039 + $0x528] sm:$0xf] %v1260
                %v1262 = vld [vmem:[%s1038 + $0xa68] sm:$0xf]
                %1263 = vst [vmem:[%s1039 + $0x534] sm:$0xf] %v1262
                %v1264 = vld [vmem:[%s1038 + $0xa80] sm:$0xf]
                %1265 = vst [vmem:[%s1039 + $0x540] sm:$0xf] %v1264
                %v1266 = vld [vmem:[%s1038 + $0xa98] sm:$0xf]
                %1267 = vst [vmem:[%s1039 + $0x54c] sm:$0xf] %v1266
                %v1268 = vld [vmem:[%s1038 + $0xab0] sm:$0xf]
                %1269 = vst [vmem:[%s1039 + $0x558] sm:$0xf] %v1268
                %v1270 = vld [vmem:[%s1038 + $0xac8] sm:$0xf]
                %1271 = vst [vmem:[%s1039 + $0x564] sm:$0xf] %v1270
                %v1272 = vld [vmem:[%s1038 + $0xae0] sm:$0xf]
                %1273 = vst [vmem:[%s1039 + $0x570] sm:$0xf] %v1272
                %v1274 = vld [vmem:[%s1038 + $0xaf8] sm:$0xf]
                %1275 = vst [vmem:[%s1039 + $0x57c] sm:$0xf] %v1274
                %v1276 = vld [vmem:[%s1038 + $0xb10] sm:$0xf]
                %1277 = vst [vmem:[%s1039 + $0x588] sm:$0xf] %v1276
                %v1278 = vld [vmem:[%s1038 + $0xb28] sm:$0xf]
                %1279 = vst [vmem:[%s1039 + $0x594] sm:$0xf] %v1278
                %v1280 = vld [vmem:[%s1038 + $0xb40] sm:$0xf]
                %1281 = vst [vmem:[%s1039 + $0x5a0] sm:$0xf] %v1280
                %v1282 = vld [vmem:[%s1038 + $0xb58] sm:$0xf]
                %1283 = vst [vmem:[%s1039 + $0x5ac] sm:$0xf] %v1282
                %v1284 = vld [vmem:[%s1038 + $0xb70] sm:$0xf]
                %1285 = vst [vmem:[%s1039 + $0x5b8] sm:$0xf] %v1284
                %v1286 = vld [vmem:[%s1038 + $0xb88] sm:$0xf]
                %1287 = vst [vmem:[%s1039 + $0x5c4] sm:$0xf] %v1286
                %v1288 = vld [vmem:[%s1038 + $0xba0] sm:$0xf]
                %1289 = vst [vmem:[%s1039 + $0x5d0] sm:$0xf] %v1288
                %v1290 = vld [vmem:[%s1038 + $0xbb8] sm:$0xf]
                %1291 = vst [vmem:[%s1039 + $0x5dc] sm:$0xf] %v1290
                %v1292 = vld [vmem:[%s1038 + $0xbd0] sm:$0xf]
                %1293 = vst [vmem:[%s1039 + $0x5e8] sm:$0xf] %v1292
                %v1294 = vld [vmem:[%s1038 + $0xbe8] sm:$0xf]
                %1295 = vst [vmem:[%s1039 + $0x5f4] sm:$0xf] %v1294
                %v1296 = vld [vmem:[%s1038 + $0xc00] sm:$0xf]
                %1297 = vst [vmem:[%s1039 + $0x600] sm:$0xf] %v1296
                %v1298 = vld [vmem:[%s1038 + $0xc18] sm:$0xf]
                %1299 = vst [vmem:[%s1039 + $0x60c] sm:$0xf] %v1298
                %v1300 = vld [vmem:[%s1038 + $0xc30] sm:$0xf]
                %1301 = vst [vmem:[%s1039 + $0x618] sm:$0xf] %v1300
                %v1302 = vld [vmem:[%s1038 + $0xc48] sm:$0xf]
                %1303 = vst [vmem:[%s1039 + $0x624] sm:$0xf] %v1302
                %v1304 = vld [vmem:[%s1038 + $0xc60] sm:$0xf]
                %1305 = vst [vmem:[%s1039 + $0x630] sm:$0xf] %v1304
                %v1306 = vld [vmem:[%s1038 + $0xc78] sm:$0xf]
                %1307 = vst [vmem:[%s1039 + $0x63c] sm:$0xf] %v1306
                %v1308 = vld [vmem:[%s1038 + $0xc90] sm:$0xf]
                %1309 = vst [vmem:[%s1039 + $0x648] sm:$0xf] %v1308
                %v1310 = vld [vmem:[%s1038 + $0xca8] sm:$0xf]
                %1311 = vst [vmem:[%s1039 + $0x654] sm:$0xf] %v1310
                %v1312 = vld [vmem:[%s1038 + $0xcc0] sm:$0xf]
                %1313 = vst [vmem:[%s1039 + $0x660] sm:$0xf] %v1312
                %v1314 = vld [vmem:[%s1038 + $0xcd8] sm:$0xf]
                %1315 = vst [vmem:[%s1039 + $0x66c] sm:$0xf] %v1314
                %v1316 = vld [vmem:[%s1038 + $0xcf0] sm:$0xf]
                %1317 = vst [vmem:[%s1039 + $0x678] sm:$0xf] %v1316
                %v1318 = vld [vmem:[%s1038 + $0xd08] sm:$0xf]
                %1319 = vst [vmem:[%s1039 + $0x684] sm:$0xf] %v1318
                %v1320 = vld [vmem:[%s1038 + $0xd20] sm:$0xf]
                %1321 = vst [vmem:[%s1039 + $0x690] sm:$0xf] %v1320
                %v1322 = vld [vmem:[%s1038 + $0xd38] sm:$0xf]
                %1323 = vst [vmem:[%s1039 + $0x69c] sm:$0xf] %v1322
                %v1324 = vld [vmem:[%s1038 + $0xd50] sm:$0xf]
                %1325 = vst [vmem:[%s1039 + $0x6a8] sm:$0xf] %v1324
                %v1326 = vld [vmem:[%s1038 + $0xd68] sm:$0xf]
                %1327 = vst [vmem:[%s1039 + $0x6b4] sm:$0xf] %v1326
                %v1328 = vld [vmem:[%s1038 + $0xd80] sm:$0xf]
                %1329 = vst [vmem:[%s1039 + $0x6c0] sm:$0xf] %v1328
                %v1330 = vld [vmem:[%s1038 + $0xd98] sm:$0xf]
                %1331 = vst [vmem:[%s1039 + $0x6cc] sm:$0xf] %v1330
                %v1332 = vld [vmem:[%s1038 + $0xdb0] sm:$0xf]
                %1333 = vst [vmem:[%s1039 + $0x6d8] sm:$0xf] %v1332
                %v1334 = vld [vmem:[%s1038 + $0xdc8] sm:$0xf]
                %1335 = vst [vmem:[%s1039 + $0x6e4] sm:$0xf] %v1334
                %v1336 = vld [vmem:[%s1038 + $0xde0] sm:$0xf]
                %1337 = vst [vmem:[%s1039 + $0x6f0] sm:$0xf] %v1336
                %v1338 = vld [vmem:[%s1038 + $0xdf8] sm:$0xf]
                %1339 = vst [vmem:[%s1039 + $0x6fc] sm:$0xf] %v1338
                %v1340 = vld [vmem:[%s1038 + $0xe10] sm:$0xf]
                %1341 = vst [vmem:[%s1039 + $0x708] sm:$0xf] %v1340
                %v1342 = vld [vmem:[%s1038 + $0xe28] sm:$0xf]
                %1343 = vst [vmem:[%s1039 + $0x714] sm:$0xf] %v1342
                %v1344 = vld [vmem:[%s1038 + $0xe40] sm:$0xf]
                %1345 = vst [vmem:[%s1039 + $0x720] sm:$0xf] %v1344
                %v1346 = vld [vmem:[%s1038 + $0xe58] sm:$0xf]
                %1347 = vst [vmem:[%s1039 + $0x72c] sm:$0xf] %v1346
                %v1348 = vld [vmem:[%s1038 + $0xe70] sm:$0xf]
                %1349 = vst [vmem:[%s1039 + $0x738] sm:$0xf] %v1348
                %v1350 = vld [vmem:[%s1038 + $0xe88] sm:$0xf]
                %1351 = vst [vmem:[%s1039 + $0x744] sm:$0xf] %v1350
                %v1352 = vld [vmem:[%s1038 + $0xea0] sm:$0xf]
                %1353 = vst [vmem:[%s1039 + $0x750] sm:$0xf] %v1352
                %v1354 = vld [vmem:[%s1038 + $0xeb8] sm:$0xf]
                %1355 = vst [vmem:[%s1039 + $0x75c] sm:$0xf] %v1354
                %v1356 = vld [vmem:[%s1038 + $0xed0] sm:$0xf]
                %1357 = vst [vmem:[%s1039 + $0x768] sm:$0xf] %v1356
                %v1358 = vld [vmem:[%s1038 + $0xee8] sm:$0xf]
                %1359 = vst [vmem:[%s1039 + $0x774] sm:$0xf] %v1358
                %v1360 = vld [vmem:[%s1038 + $0xf00] sm:$0xf]
                %1361 = vst [vmem:[%s1039 + $0x780] sm:$0xf] %v1360
                %v1362 = vld [vmem:[%s1038 + $0xf18] sm:$0xf]
                %1363 = vst [vmem:[%s1039 + $0x78c] sm:$0xf] %v1362
                %v1364 = vld [vmem:[%s1038 + $0xf30] sm:$0xf]
                %1365 = vst [vmem:[%s1039 + $0x798] sm:$0xf] %v1364
                %v1366 = vld [vmem:[%s1038 + $0xf48] sm:$0xf]
                %1367 = vst [vmem:[%s1039 + $0x7a4] sm:$0xf] %v1366
                %v1368 = vld [vmem:[%s1038 + $0xf60] sm:$0xf]
                %1369 = vst [vmem:[%s1039 + $0x7b0] sm:$0xf] %v1368
                %v1370 = vld [vmem:[%s1038 + $0xf78] sm:$0xf]
                %1371 = vst [vmem:[%s1039 + $0x7bc] sm:$0xf] %v1370
                %v1372 = vld [vmem:[%s1038 + $0xf90] sm:$0xf]
                %1373 = vst [vmem:[%s1039 + $0x7c8] sm:$0xf] %v1372
                %v1374 = vld [vmem:[%s1038 + $0xfa8] sm:$0xf]
                %1375 = vst [vmem:[%s1039 + $0x7d4] sm:$0xf] %v1374
                %v1376 = vld [vmem:[%s1038 + $0xfc0] sm:$0xf]
                %1377 = vst [vmem:[%s1039 + $0x7e0] sm:$0xf] %v1376
                %v1378 = vld [vmem:[%s1038 + $0xfd8] sm:$0xf]
                %1379 = vst [vmem:[%s1039 + $0x7ec] sm:$0xf] %v1378
                %v1380 = vld [vmem:[%s1038 + $0xff0] sm:$0xf]
                %1381 = vst [vmem:[%s1039 + $0x7f8] sm:$0xf] %v1380
                %v1382 = vld [vmem:[%s1038 + $0x1008] sm:$0xf]
                %1383 = vst [vmem:[%s1039 + $0x804] sm:$0xf] %v1382
                %v1384 = vld [vmem:[%s1038 + $0x1020] sm:$0xf]
                %1385 = vst [vmem:[%s1039 + $0x810] sm:$0xf] %v1384
                %v1386 = vld [vmem:[%s1038 + $0x1038] sm:$0xf]
                %1387 = vst [vmem:[%s1039 + $0x81c] sm:$0xf] %v1386
                %v1388 = vld [vmem:[%s1038 + $0x1050] sm:$0xf]
                %1389 = vst [vmem:[%s1039 + $0x828] sm:$0xf] %v1388
                %v1390 = vld [vmem:[%s1038 + $0x1068] sm:$0xf]
                %1391 = vst [vmem:[%s1039 + $0x834] sm:$0xf] %v1390
                %v1392 = vld [vmem:[%s1038 + $0x1080] sm:$0xf]
                %1393 = vst [vmem:[%s1039 + $0x840] sm:$0xf] %v1392
                %v1394 = vld [vmem:[%s1038 + $0x1098] sm:$0xf]
                %1395 = vst [vmem:[%s1039 + $0x84c] sm:$0xf] %v1394
                %v1396 = vld [vmem:[%s1038 + $0x10b0] sm:$0xf]
                %1397 = vst [vmem:[%s1039 + $0x858] sm:$0xf] %v1396
                %v1398 = vld [vmem:[%s1038 + $0x10c8] sm:$0xf]
                %1399 = vst [vmem:[%s1039 + $0x864] sm:$0xf] %v1398
                %v1400 = vld [vmem:[%s1038 + $0x10e0] sm:$0xf]
                %1401 = vst [vmem:[%s1039 + $0x870] sm:$0xf] %v1400
                %v1402 = vld [vmem:[%s1038 + $0x10f8] sm:$0xf]
                %1403 = vst [vmem:[%s1039 + $0x87c] sm:$0xf] %v1402
                %v1404 = vld [vmem:[%s1038 + $0x1110] sm:$0xf]
                %1405 = vst [vmem:[%s1039 + $0x888] sm:$0xf] %v1404
                %v1406 = vld [vmem:[%s1038 + $0x1128] sm:$0xf]
                %1407 = vst [vmem:[%s1039 + $0x894] sm:$0xf] %v1406
                %v1408 = vld [vmem:[%s1038 + $0x1140] sm:$0xf]
                %1409 = vst [vmem:[%s1039 + $0x8a0] sm:$0xf] %v1408
                %v1410 = vld [vmem:[%s1038 + $0x1158] sm:$0xf]
                %1411 = vst [vmem:[%s1039 + $0x8ac] sm:$0xf] %v1410
                %v1412 = vld [vmem:[%s1038 + $0x1170] sm:$0xf]
                %1413 = vst [vmem:[%s1039 + $0x8b8] sm:$0xf] %v1412
                %v1414 = vld [vmem:[%s1038 + $0x1188] sm:$0xf]
                %1415 = vst [vmem:[%s1039 + $0x8c4] sm:$0xf] %v1414
                %v1416 = vld [vmem:[%s1038 + $0x11a0] sm:$0xf]
                %1417 = vst [vmem:[%s1039 + $0x8d0] sm:$0xf] %v1416
                %v1418 = vld [vmem:[%s1038 + $0x11b8] sm:$0xf]
                %1419 = vst [vmem:[%s1039 + $0x8dc] sm:$0xf] %v1418
                %v1420 = vld [vmem:[%s1038 + $0x11d0] sm:$0xf]
                %1421 = vst [vmem:[%s1039 + $0x8e8] sm:$0xf] %v1420
                %v1422 = vld [vmem:[%s1038 + $0x11e8] sm:$0xf]
                %1423 = vst [vmem:[%s1039 + $0x8f4] sm:$0xf] %v1422
                %v1424 = vld [vmem:[%s1038 + $0x1200] sm:$0xf]
                %1425 = vst [vmem:[%s1039 + $0x900] sm:$0xf] %v1424
                %v1426 = vld [vmem:[%s1038 + $0x1218] sm:$0xf]
                %1427 = vst [vmem:[%s1039 + $0x90c] sm:$0xf] %v1426
                %v1428 = vld [vmem:[%s1038 + $0x1230] sm:$0xf]
                %1429 = vst [vmem:[%s1039 + $0x918] sm:$0xf] %v1428
                %v1430 = vld [vmem:[%s1038 + $0x1248] sm:$0xf]
                %1431 = vst [vmem:[%s1039 + $0x924] sm:$0xf] %v1430
                %v1432 = vld [vmem:[%s1038 + $0x1260] sm:$0xf]
                %1433 = vst [vmem:[%s1039 + $0x930] sm:$0xf] %v1432
                %v1434 = vld [vmem:[%s1038 + $0x1278] sm:$0xf]
                %1435 = vst [vmem:[%s1039 + $0x93c] sm:$0xf] %v1434
                %v1436 = vld [vmem:[%s1038 + $0x1290] sm:$0xf]
                %1437 = vst [vmem:[%s1039 + $0x948] sm:$0xf] %v1436
                %v1438 = vld [vmem:[%s1038 + $0x12a8] sm:$0xf]
                %1439 = vst [vmem:[%s1039 + $0x954] sm:$0xf] %v1438
                %v1440 = vld [vmem:[%s1038 + $0x12c0] sm:$0xf]
                %1441 = vst [vmem:[%s1039 + $0x960] sm:$0xf] %v1440
                %v1442 = vld [vmem:[%s1038 + $0x12d8] sm:$0xf]
                %1443 = vst [vmem:[%s1039 + $0x96c] sm:$0xf] %v1442
                %v1444 = vld [vmem:[%s1038 + $0x12f0] sm:$0xf]
                %1445 = vst [vmem:[%s1039 + $0x978] sm:$0xf] %v1444
                %v1446 = vld [vmem:[%s1038 + $0x1308] sm:$0xf]
                %1447 = vst [vmem:[%s1039 + $0x984] sm:$0xf] %v1446
                %v1448 = vld [vmem:[%s1038 + $0x1320] sm:$0xf]
                %1449 = vst [vmem:[%s1039 + $0x990] sm:$0xf] %v1448
                %v1450 = vld [vmem:[%s1038 + $0x1338] sm:$0xf]
                %1451 = vst [vmem:[%s1039 + $0x99c] sm:$0xf] %v1450
                %v1452 = vld [vmem:[%s1038 + $0x1350] sm:$0xf]
                %1453 = vst [vmem:[%s1039 + $0x9a8] sm:$0xf] %v1452
                %v1454 = vld [vmem:[%s1038 + $0x1368] sm:$0xf]
                %1455 = vst [vmem:[%s1039 + $0x9b4] sm:$0xf] %v1454
                %v1456 = vld [vmem:[%s1038 + $0x1380] sm:$0xf]
                %1457 = vst [vmem:[%s1039 + $0x9c0] sm:$0xf] %v1456
                %v1458 = vld [vmem:[%s1038 + $0x1398] sm:$0xf]
                %1459 = vst [vmem:[%s1039 + $0x9cc] sm:$0xf] %v1458
                %v1460 = vld [vmem:[%s1038 + $0x13b0] sm:$0xf]
                %1461 = vst [vmem:[%s1039 + $0x9d8] sm:$0xf] %v1460
                %v1462 = vld [vmem:[%s1038 + $0x13c8] sm:$0xf]
                %1463 = vst [vmem:[%s1039 + $0x9e4] sm:$0xf] %v1462
                %v1464 = vld [vmem:[%s1038 + $0x13e0] sm:$0xf]
                %1465 = vst [vmem:[%s1039 + $0x9f0] sm:$0xf] %v1464
                %v1466 = vld [vmem:[%s1038 + $0x13f8] sm:$0xf]
                %1467 = vst [vmem:[%s1039 + $0x9fc] sm:$0xf] %v1466
                %v1468 = vld [vmem:[%s1038 + $0x1410] sm:$0xf]
                %1469 = vst [vmem:[%s1039 + $0xa08] sm:$0xf] %v1468
                %v1470 = vld [vmem:[%s1038 + $0x1428] sm:$0xf]
                %1471 = vst [vmem:[%s1039 + $0xa14] sm:$0xf] %v1470
                %v1472 = vld [vmem:[%s1038 + $0x1440] sm:$0xf]
                %1473 = vst [vmem:[%s1039 + $0xa20] sm:$0xf] %v1472
                %v1474 = vld [vmem:[%s1038 + $0x1458] sm:$0xf]
                %1475 = vst [vmem:[%s1039 + $0xa2c] sm:$0xf] %v1474
                %v1476 = vld [vmem:[%s1038 + $0x1470] sm:$0xf]
                %1477 = vst [vmem:[%s1039 + $0xa38] sm:$0xf] %v1476
                %v1478 = vld [vmem:[%s1038 + $0x1488] sm:$0xf]
                %1479 = vst [vmem:[%s1039 + $0xa44] sm:$0xf] %v1478
                %v1480 = vld [vmem:[%s1038 + $0x14a0] sm:$0xf]
                %1481 = vst [vmem:[%s1039 + $0xa50] sm:$0xf] %v1480
                %v1482 = vld [vmem:[%s1038 + $0x14b8] sm:$0xf]
                %1483 = vst [vmem:[%s1039 + $0xa5c] sm:$0xf] %v1482
                %v1484 = vld [vmem:[%s1038 + $0x14d0] sm:$0xf]
                %1485 = vst [vmem:[%s1039 + $0xa68] sm:$0xf] %v1484
                %v1486 = vld [vmem:[%s1038 + $0x14e8] sm:$0xf]
                %1487 = vst [vmem:[%s1039 + $0xa74] sm:$0xf] %v1486
                %v1488 = vld [vmem:[%s1038 + $0x1500] sm:$0xf]
                %1489 = vst [vmem:[%s1039 + $0xa80] sm:$0xf] %v1488
                %v1490 = vld [vmem:[%s1038 + $0x1518] sm:$0xf]
                %1491 = vst [vmem:[%s1039 + $0xa8c] sm:$0xf] %v1490
                %v1492 = vld [vmem:[%s1038 + $0x1530] sm:$0xf]
                %1493 = vst [vmem:[%s1039 + $0xa98] sm:$0xf] %v1492
                %v1494 = vld [vmem:[%s1038 + $0x1548] sm:$0xf]
                %1495 = vst [vmem:[%s1039 + $0xaa4] sm:$0xf] %v1494
                %v1496 = vld [vmem:[%s1038 + $0x1560] sm:$0xf]
                %1497 = vst [vmem:[%s1039 + $0xab0] sm:$0xf] %v1496
                %v1498 = vld [vmem:[%s1038 + $0x1578] sm:$0xf]
                %1499 = vst [vmem:[%s1039 + $0xabc] sm:$0xf] %v1498
                %v1500 = vld [vmem:[%s1038 + $0x1590] sm:$0xf]
                %1501 = vst [vmem:[%s1039 + $0xac8] sm:$0xf] %v1500
                %v1502 = vld [vmem:[%s1038 + $0x15a8] sm:$0xf]
                %1503 = vst [vmem:[%s1039 + $0xad4] sm:$0xf] %v1502
                %v1504 = vld [vmem:[%s1038 + $0x15c0] sm:$0xf]
                %1505 = vst [vmem:[%s1039 + $0xae0] sm:$0xf] %v1504
                %v1506 = vld [vmem:[%s1038 + $0x15d8] sm:$0xf]
                %1507 = vst [vmem:[%s1039 + $0xaec] sm:$0xf] %v1506
                %v1508 = vld [vmem:[%s1038 + $0x15f0] sm:$0xf]
                %1509 = vst [vmem:[%s1039 + $0xaf8] sm:$0xf] %v1508
                %v1510 = vld [vmem:[%s1038 + $0x1608] sm:$0xf]
                %1511 = vst [vmem:[%s1039 + $0xb04] sm:$0xf] %v1510
                %v1512 = vld [vmem:[%s1038 + $0x1620] sm:$0xf]
                %1513 = vst [vmem:[%s1039 + $0xb10] sm:$0xf] %v1512
                %v1514 = vld [vmem:[%s1038 + $0x1638] sm:$0xf]
                %1515 = vst [vmem:[%s1039 + $0xb1c] sm:$0xf] %v1514
                %v1516 = vld [vmem:[%s1038 + $0x1650] sm:$0xf]
                %1517 = vst [vmem:[%s1039 + $0xb28] sm:$0xf] %v1516
                %v1518 = vld [vmem:[%s1038 + $0x1668] sm:$0xf]
                %1519 = vst [vmem:[%s1039 + $0xb34] sm:$0xf] %v1518
                %v1520 = vld [vmem:[%s1038 + $0x1680] sm:$0xf]
                %1521 = vst [vmem:[%s1039 + $0xb40] sm:$0xf] %v1520
                %v1522 = vld [vmem:[%s1038 + $0x1698] sm:$0xf]
                %1523 = vst [vmem:[%s1039 + $0xb4c] sm:$0xf] %v1522
                %v1524 = vld [vmem:[%s1038 + $0x16b0] sm:$0xf]
                %1525 = vst [vmem:[%s1039 + $0xb58] sm:$0xf] %v1524
                %v1526 = vld [vmem:[%s1038 + $0x16c8] sm:$0xf]
                %1527 = vst [vmem:[%s1039 + $0xb64] sm:$0xf] %v1526
                %v1528 = vld [vmem:[%s1038 + $0x16e0] sm:$0xf]
                %1529 = vst [vmem:[%s1039 + $0xb70] sm:$0xf] %v1528
                %v1530 = vld [vmem:[%s1038 + $0x16f8] sm:$0xf]
                %1531 = vst [vmem:[%s1039 + $0xb7c] sm:$0xf] %v1530
                %v1532 = vld [vmem:[%s1038 + $0x1710] sm:$0xf]
                %1533 = vst [vmem:[%s1039 + $0xb88] sm:$0xf] %v1532
                %v1534 = vld [vmem:[%s1038 + $0x1728] sm:$0xf]
                %1535 = vst [vmem:[%s1039 + $0xb94] sm:$0xf] %v1534
                %v1536 = vld [vmem:[%s1038 + $0x1740] sm:$0xf]
                %1537 = vst [vmem:[%s1039 + $0xba0] sm:$0xf] %v1536
                %v1538 = vld [vmem:[%s1038 + $0x1758] sm:$0xf]
                %1539 = vst [vmem:[%s1039 + $0xbac] sm:$0xf] %v1538
                %v1540 = vld [vmem:[%s1038 + $0x1770] sm:$0xf]
                %1541 = vst [vmem:[%s1039 + $0xbb8] sm:$0xf] %v1540
                %v1542 = vld [vmem:[%s1038 + $0x1788] sm:$0xf]
                %1543 = vst [vmem:[%s1039 + $0xbc4] sm:$0xf] %v1542
                %v1544 = vld [vmem:[%s1038 + $0x17a0] sm:$0xf]
                %1545 = vst [vmem:[%s1039 + $0xbd0] sm:$0xf] %v1544
                %v1546 = vld [vmem:[%s1038 + $0x17b8] sm:$0xf]
                %1547 = vst [vmem:[%s1039 + $0xbdc] sm:$0xf] %v1546
                %v1548 = vld [vmem:[%s1038 + $0x17d0] sm:$0xf]
                %1549 = vst [vmem:[%s1039 + $0xbe8] sm:$0xf] %v1548
                %v1550 = vld [vmem:[%s1038 + $0x17e8] sm:$0xf]
                %1551 = vst [vmem:[%s1039 + $0xbf4] sm:$0xf] %v1550
                %v1552 = vld [vmem:[%s1038 + $0x1800] sm:$0xf]
                %1553 = vst [vmem:[%s1039 + $0xc00] sm:$0xf] %v1552
                %v1554 = vld [vmem:[%s1038 + $0x1818] sm:$0xf]
                %1555 = vst [vmem:[%s1039 + $0xc0c] sm:$0xf] %v1554
                %v1556 = vld [vmem:[%s1038 + $0x1830] sm:$0xf]
                %1557 = vst [vmem:[%s1039 + $0xc18] sm:$0xf] %v1556
                %v1558 = vld [vmem:[%s1038 + $0x1848] sm:$0xf]
                %1559 = vst [vmem:[%s1039 + $0xc24] sm:$0xf] %v1558
                %v1560 = vld [vmem:[%s1038 + $0x1860] sm:$0xf]
                %1561 = vst [vmem:[%s1039 + $0xc30] sm:$0xf] %v1560
                %v1562 = vld [vmem:[%s1038 + $0x1878] sm:$0xf]
                %1563 = vst [vmem:[%s1039 + $0xc3c] sm:$0xf] %v1562
                %v1564 = vld [vmem:[%s1038 + $0x1890] sm:$0xf]
                %1565 = vst [vmem:[%s1039 + $0xc48] sm:$0xf] %v1564
                %v1566 = vld [vmem:[%s1038 + $0x18a8] sm:$0xf]
                %1567 = vst [vmem:[%s1039 + $0xc54] sm:$0xf] %v1566
                %v1568 = vld [vmem:[%s1038 + $0x18c0] sm:$0xf]
                %1569 = vst [vmem:[%s1039 + $0xc60] sm:$0xf] %v1568
                %v1570 = vld [vmem:[%s1038 + $0x18d8] sm:$0xf]
                %1571 = vst [vmem:[%s1039 + $0xc6c] sm:$0xf] %v1570
                %v1572 = vld [vmem:[%s1038 + $0x18f0] sm:$0xf]
                %1573 = vst [vmem:[%s1039 + $0xc78] sm:$0xf] %v1572
                %v1574 = vld [vmem:[%s1038 + $0x1908] sm:$0xf]
                %1575 = vst [vmem:[%s1039 + $0xc84] sm:$0xf] %v1574
                %v1576 = vld [vmem:[%s1038 + $0x1920] sm:$0xf]
                %1577 = vst [vmem:[%s1039 + $0xc90] sm:$0xf] %v1576
                %v1578 = vld [vmem:[%s1038 + $0x1938] sm:$0xf]
                %1579 = vst [vmem:[%s1039 + $0xc9c] sm:$0xf] %v1578
                %v1580 = vld [vmem:[%s1038 + $0x1950] sm:$0xf]
                %1581 = vst [vmem:[%s1039 + $0xca8] sm:$0xf] %v1580
                %v1582 = vld [vmem:[%s1038 + $0x1968] sm:$0xf]
                %1583 = vst [vmem:[%s1039 + $0xcb4] sm:$0xf] %v1582
                %v1584 = vld [vmem:[%s1038 + $0x1980] sm:$0xf]
                %1585 = vst [vmem:[%s1039 + $0xcc0] sm:$0xf] %v1584
                %v1586 = vld [vmem:[%s1038 + $0x1998] sm:$0xf]
                %1587 = vst [vmem:[%s1039 + $0xccc] sm:$0xf] %v1586
                %v1588 = vld [vmem:[%s1038 + $0x19b0] sm:$0xf]
                %1589 = vst [vmem:[%s1039 + $0xcd8] sm:$0xf] %v1588
                %v1590 = vld [vmem:[%s1038 + $0x19c8] sm:$0xf]
                %1591 = vst [vmem:[%s1039 + $0xce4] sm:$0xf] %v1590
                %v1592 = vld [vmem:[%s1038 + $0x19e0] sm:$0xf]
                %1593 = vst [vmem:[%s1039 + $0xcf0] sm:$0xf] %v1592
                %v1594 = vld [vmem:[%s1038 + $0x19f8] sm:$0xf]
                %1595 = vst [vmem:[%s1039 + $0xcfc] sm:$0xf] %v1594
                %v1596 = vld [vmem:[%s1038 + $0x1a10] sm:$0xf]
                %1597 = vst [vmem:[%s1039 + $0xd08] sm:$0xf] %v1596
                %v1598 = vld [vmem:[%s1038 + $0x1a28] sm:$0xf]
                %1599 = vst [vmem:[%s1039 + $0xd14] sm:$0xf] %v1598
                %v1600 = vld [vmem:[%s1038 + $0x1a40] sm:$0xf]
                %1601 = vst [vmem:[%s1039 + $0xd20] sm:$0xf] %v1600
                %v1602 = vld [vmem:[%s1038 + $0x1a58] sm:$0xf]
                %1603 = vst [vmem:[%s1039 + $0xd2c] sm:$0xf] %v1602
                %v1604 = vld [vmem:[%s1038 + $0x1a70] sm:$0xf]
                %1605 = vst [vmem:[%s1039 + $0xd38] sm:$0xf] %v1604
                %v1606 = vld [vmem:[%s1038 + $0x1a88] sm:$0xf]
                %1607 = vst [vmem:[%s1039 + $0xd44] sm:$0xf] %v1606
                %v1608 = vld [vmem:[%s1038 + $0x1aa0] sm:$0xf]
                %1609 = vst [vmem:[%s1039 + $0xd50] sm:$0xf] %v1608
                %v1610 = vld [vmem:[%s1038 + $0x1ab8] sm:$0xf]
                %1611 = vst [vmem:[%s1039 + $0xd5c] sm:$0xf] %v1610
                %v1612 = vld [vmem:[%s1038 + $0x1ad0] sm:$0xf]
                %1613 = vst [vmem:[%s1039 + $0xd68] sm:$0xf] %v1612
                %v1614 = vld [vmem:[%s1038 + $0x1ae8] sm:$0xf]
                %1615 = vst [vmem:[%s1039 + $0xd74] sm:$0xf] %v1614
                %v1616 = vld [vmem:[%s1038 + $0x1b00] sm:$0xf]
                %1617 = vst [vmem:[%s1039 + $0xd80] sm:$0xf] %v1616
                %v1618 = vld [vmem:[%s1038 + $0x1b18] sm:$0xf]
                %1619 = vst [vmem:[%s1039 + $0xd8c] sm:$0xf] %v1618
                %v1620 = vld [vmem:[%s1038 + $0x1b30] sm:$0xf]
                %1621 = vst [vmem:[%s1039 + $0xd98] sm:$0xf] %v1620
                %v1622 = vld [vmem:[%s1038 + $0x1b48] sm:$0xf]
                %1623 = vst [vmem:[%s1039 + $0xda4] sm:$0xf] %v1622
                %v1624 = vld [vmem:[%s1038 + $0x1b60] sm:$0xf]
                %1625 = vst [vmem:[%s1039 + $0xdb0] sm:$0xf] %v1624
                %v1626 = vld [vmem:[%s1038 + $0x1b78] sm:$0xf]
                %1627 = vst [vmem:[%s1039 + $0xdbc] sm:$0xf] %v1626
                %v1628 = vld [vmem:[%s1038 + $0x1b90] sm:$0xf]
                %1629 = vst [vmem:[%s1039 + $0xdc8] sm:$0xf] %v1628
                %v1630 = vld [vmem:[%s1038 + $0x1ba8] sm:$0xf]
                %1631 = vst [vmem:[%s1039 + $0xdd4] sm:$0xf] %v1630
                %v1632 = vld [vmem:[%s1038 + $0x1bc0] sm:$0xf]
                %1633 = vst [vmem:[%s1039 + $0xde0] sm:$0xf] %v1632
                %v1634 = vld [vmem:[%s1038 + $0x1bd8] sm:$0xf]
                %1635 = vst [vmem:[%s1039 + $0xdec] sm:$0xf] %v1634
                %v1636 = vld [vmem:[%s1038 + $0x1bf0] sm:$0xf]
                %1637 = vst [vmem:[%s1039 + $0xdf8] sm:$0xf] %v1636
                %v1638 = vld [vmem:[%s1038 + $0x1c08] sm:$0xf]
                %1639 = vst [vmem:[%s1039 + $0xe04] sm:$0xf] %v1638
                %v1640 = vld [vmem:[%s1038 + $0x1c20] sm:$0xf]
                %1641 = vst [vmem:[%s1039 + $0xe10] sm:$0xf] %v1640
                %v1642 = vld [vmem:[%s1038 + $0x1c38] sm:$0xf]
                %1643 = vst [vmem:[%s1039 + $0xe1c] sm:$0xf] %v1642
                %v1644 = vld [vmem:[%s1038 + $0x1c50] sm:$0xf]
                %1645 = vst [vmem:[%s1039 + $0xe28] sm:$0xf] %v1644
                %v1646 = vld [vmem:[%s1038 + $0x1c68] sm:$0xf]
                %1647 = vst [vmem:[%s1039 + $0xe34] sm:$0xf] %v1646
                %v1648 = vld [vmem:[%s1038 + $0x1c80] sm:$0xf]
                %1649 = vst [vmem:[%s1039 + $0xe40] sm:$0xf] %v1648
                %v1650 = vld [vmem:[%s1038 + $0x1c98] sm:$0xf]
                %1651 = vst [vmem:[%s1039 + $0xe4c] sm:$0xf] %v1650
                %v1652 = vld [vmem:[%s1038 + $0x1cb0] sm:$0xf]
                %1653 = vst [vmem:[%s1039 + $0xe58] sm:$0xf] %v1652
                %v1654 = vld [vmem:[%s1038 + $0x1cc8] sm:$0xf]
                %1655 = vst [vmem:[%s1039 + $0xe64] sm:$0xf] %v1654
                %v1656 = vld [vmem:[%s1038 + $0x1ce0] sm:$0xf]
                %1657 = vst [vmem:[%s1039 + $0xe70] sm:$0xf] %v1656
                %v1658 = vld [vmem:[%s1038 + $0x1cf8] sm:$0xf]
                %1659 = vst [vmem:[%s1039 + $0xe7c] sm:$0xf] %v1658
                %v1660 = vld [vmem:[%s1038 + $0x1d10] sm:$0xf]
                %1661 = vst [vmem:[%s1039 + $0xe88] sm:$0xf] %v1660
                %v1662 = vld [vmem:[%s1038 + $0x1d28] sm:$0xf]
                %1663 = vst [vmem:[%s1039 + $0xe94] sm:$0xf] %v1662
                %v1664 = vld [vmem:[%s1038 + $0x1d40] sm:$0xf]
                %1665 = vst [vmem:[%s1039 + $0xea0] sm:$0xf] %v1664
                %v1666 = vld [vmem:[%s1038 + $0x1d58] sm:$0xf]
                %1667 = vst [vmem:[%s1039 + $0xeac] sm:$0xf] %v1666
                %v1668 = vld [vmem:[%s1038 + $0x1d70] sm:$0xf]
                %1669 = vst [vmem:[%s1039 + $0xeb8] sm:$0xf] %v1668
                %v1670 = vld [vmem:[%s1038 + $0x1d88] sm:$0xf]
                %1671 = vst [vmem:[%s1039 + $0xec4] sm:$0xf] %v1670
                %v1672 = vld [vmem:[%s1038 + $0x1da0] sm:$0xf]
                %1673 = vst [vmem:[%s1039 + $0xed0] sm:$0xf] %v1672
                %v1674 = vld [vmem:[%s1038 + $0x1db8] sm:$0xf]
                %1675 = vst [vmem:[%s1039 + $0xedc] sm:$0xf] %v1674
                %v1676 = vld [vmem:[%s1038 + $0x1dd0] sm:$0xf]
                %1677 = vst [vmem:[%s1039 + $0xee8] sm:$0xf] %v1676
                %v1678 = vld [vmem:[%s1038 + $0x1de8] sm:$0xf]
                %1679 = vst [vmem:[%s1039 + $0xef4] sm:$0xf] %v1678
                %v1680 = vld [vmem:[%s1038 + $0x1e00] sm:$0xf]
                %1681 = vst [vmem:[%s1039 + $0xf00] sm:$0xf] %v1680
                %v1682 = vld [vmem:[%s1038 + $0x1e18] sm:$0xf]
                %1683 = vst [vmem:[%s1039 + $0xf0c] sm:$0xf] %v1682
                %v1684 = vld [vmem:[%s1038 + $0x1e30] sm:$0xf]
                %1685 = vst [vmem:[%s1039 + $0xf18] sm:$0xf] %v1684
                %v1686 = vld [vmem:[%s1038 + $0x1e48] sm:$0xf]
                %1687 = vst [vmem:[%s1039 + $0xf24] sm:$0xf] %v1686
                %v1688 = vld [vmem:[%s1038 + $0x1e60] sm:$0xf]
                %1689 = vst [vmem:[%s1039 + $0xf30] sm:$0xf] %v1688
                %v1690 = vld [vmem:[%s1038 + $0x1e78] sm:$0xf]
                %1691 = vst [vmem:[%s1039 + $0xf3c] sm:$0xf] %v1690
                %v1692 = vld [vmem:[%s1038 + $0x1e90] sm:$0xf]
                %1693 = vst [vmem:[%s1039 + $0xf48] sm:$0xf] %v1692
                %v1694 = vld [vmem:[%s1038 + $0x1ea8] sm:$0xf]
                %1695 = vst [vmem:[%s1039 + $0xf54] sm:$0xf] %v1694
                %v1696 = vld [vmem:[%s1038 + $0x1ec0] sm:$0xf]
                %1697 = vst [vmem:[%s1039 + $0xf60] sm:$0xf] %v1696
                %v1698 = vld [vmem:[%s1038 + $0x1ed8] sm:$0xf]
                %1699 = vst [vmem:[%s1039 + $0xf6c] sm:$0xf] %v1698
                %v1700 = vld [vmem:[%s1038 + $0x1ef0] sm:$0xf]
                %1701 = vst [vmem:[%s1039 + $0xf78] sm:$0xf] %v1700
                %v1702 = vld [vmem:[%s1038 + $0x1f08] sm:$0xf]
                %1703 = vst [vmem:[%s1039 + $0xf84] sm:$0xf] %v1702
                %v1704 = vld [vmem:[%s1038 + $0x1f20] sm:$0xf]
                %1705 = vst [vmem:[%s1039 + $0xf90] sm:$0xf] %v1704
                %v1706 = vld [vmem:[%s1038 + $0x1f38] sm:$0xf]
                %1707 = vst [vmem:[%s1039 + $0xf9c] sm:$0xf] %v1706
                %v1708 = vld [vmem:[%s1038 + $0x1f50] sm:$0xf]
                %1709 = vst [vmem:[%s1039 + $0xfa8] sm:$0xf] %v1708
                %v1710 = vld [vmem:[%s1038 + $0x1f68] sm:$0xf]
                %1711 = vst [vmem:[%s1039 + $0xfb4] sm:$0xf] %v1710
                %v1712 = vld [vmem:[%s1038 + $0x1f80] sm:$0xf]
                %1713 = vst [vmem:[%s1039 + $0xfc0] sm:$0xf] %v1712
                %v1714 = vld [vmem:[%s1038 + $0x1f98] sm:$0xf]
                %1715 = vst [vmem:[%s1039 + $0xfcc] sm:$0xf] %v1714
                %v1716 = vld [vmem:[%s1038 + $0x1fb0] sm:$0xf]
                %1717 = vst [vmem:[%s1039 + $0xfd8] sm:$0xf] %v1716
                %v1718 = vld [vmem:[%s1038 + $0x1fc8] sm:$0xf]
                %1719 = vst [vmem:[%s1039 + $0xfe4] sm:$0xf] %v1718
                %v1720 = vld [vmem:[%s1038 + $0x1fe0] sm:$0xf]
                %1721 = vst [vmem:[%s1039 + $0xff0] sm:$0xf] %v1720
                %v1722 = vld [vmem:[%s1038 + $0x1ff8] sm:$0xf]
                %1723 = vst [vmem:[%s1039 + $0xffc] sm:$0xf] %v1722
                %v1724 = vld [vmem:[%s1038 + $0x2010] sm:$0xf]
                %1725 = vst [vmem:[%s1039 + $0x1008] sm:$0xf] %v1724
                %v1726 = vld [vmem:[%s1038 + $0x2028] sm:$0xf]
                %1727 = vst [vmem:[%s1039 + $0x1014] sm:$0xf] %v1726
                %v1728 = vld [vmem:[%s1038 + $0x2040] sm:$0xf]
                %1729 = vst [vmem:[%s1039 + $0x1020] sm:$0xf] %v1728
                %v1730 = vld [vmem:[%s1038 + $0x2058] sm:$0xf]
                %1731 = vst [vmem:[%s1039 + $0x102c] sm:$0xf] %v1730
                %v1732 = vld [vmem:[%s1038 + $0x2070] sm:$0xf]
                %1733 = vst [vmem:[%s1039 + $0x1038] sm:$0xf] %v1732
                %v1734 = vld [vmem:[%s1038 + $0x2088] sm:$0xf]
                %1735 = vst [vmem:[%s1039 + $0x1044] sm:$0xf] %v1734
                %v1736 = vld [vmem:[%s1038 + $0x20a0] sm:$0xf]
                %1737 = vst [vmem:[%s1039 + $0x1050] sm:$0xf] %v1736
                %v1738 = vld [vmem:[%s1038 + $0x20b8] sm:$0xf]
                %1739 = vst [vmem:[%s1039 + $0x105c] sm:$0xf] %v1738
                %v1740 = vld [vmem:[%s1038 + $0x20d0] sm:$0xf]
                %1741 = vst [vmem:[%s1039 + $0x1068] sm:$0xf] %v1740
                %v1742 = vld [vmem:[%s1038 + $0x20e8] sm:$0xf]
                %1743 = vst [vmem:[%s1039 + $0x1074] sm:$0xf] %v1742
                %v1744 = vld [vmem:[%s1038 + $0x2100] sm:$0xf]
                %1745 = vst [vmem:[%s1039 + $0x1080] sm:$0xf] %v1744
                %v1746 = vld [vmem:[%s1038 + $0x2118] sm:$0xf]
                %1747 = vst [vmem:[%s1039 + $0x108c] sm:$0xf] %v1746
                %v1748 = vld [vmem:[%s1038 + $0x2130] sm:$0xf]
                %1749 = vst [vmem:[%s1039 + $0x1098] sm:$0xf] %v1748
                %v1750 = vld [vmem:[%s1038 + $0x2148] sm:$0xf]
                %1751 = vst [vmem:[%s1039 + $0x10a4] sm:$0xf] %v1750
                %v1752 = vld [vmem:[%s1038 + $0x2160] sm:$0xf]
                %1753 = vst [vmem:[%s1039 + $0x10b0] sm:$0xf] %v1752
                %v1754 = vld [vmem:[%s1038 + $0x2178] sm:$0xf]
                %1755 = vst [vmem:[%s1039 + $0x10bc] sm:$0xf] %v1754
                %v1756 = vld [vmem:[%s1038 + $0x2190] sm:$0xf]
                %1757 = vst [vmem:[%s1039 + $0x10c8] sm:$0xf] %v1756
                %v1758 = vld [vmem:[%s1038 + $0x21a8] sm:$0xf]
                %1759 = vst [vmem:[%s1039 + $0x10d4] sm:$0xf] %v1758
                %v1760 = vld [vmem:[%s1038 + $0x21c0] sm:$0xf]
                %1761 = vst [vmem:[%s1039 + $0x10e0] sm:$0xf] %v1760
                %v1762 = vld [vmem:[%s1038 + $0x21d8] sm:$0xf]
                %1763 = vst [vmem:[%s1039 + $0x10ec] sm:$0xf] %v1762
                %v1764 = vld [vmem:[%s1038 + $0x21f0] sm:$0xf]
                %1765 = vst [vmem:[%s1039 + $0x10f8] sm:$0xf] %v1764
                %v1766 = vld [vmem:[%s1038 + $0x2208] sm:$0xf]
                %1767 = vst [vmem:[%s1039 + $0x1104] sm:$0xf] %v1766
                %v1768 = vld [vmem:[%s1038 + $0x2220] sm:$0xf]
                %1769 = vst [vmem:[%s1039 + $0x1110] sm:$0xf] %v1768
                %v1770 = vld [vmem:[%s1038 + $0x2238] sm:$0xf]
                %1771 = vst [vmem:[%s1039 + $0x111c] sm:$0xf] %v1770
                %v1772 = vld [vmem:[%s1038 + $0x2250] sm:$0xf]
                %1773 = vst [vmem:[%s1039 + $0x1128] sm:$0xf] %v1772
                %v1774 = vld [vmem:[%s1038 + $0x2268] sm:$0xf]
                %1775 = vst [vmem:[%s1039 + $0x1134] sm:$0xf] %v1774
                %v1776 = vld [vmem:[%s1038 + $0x2280] sm:$0xf]
                %1777 = vst [vmem:[%s1039 + $0x1140] sm:$0xf] %v1776
                %v1778 = vld [vmem:[%s1038 + $0x2298] sm:$0xf]
                %1779 = vst [vmem:[%s1039 + $0x114c] sm:$0xf] %v1778
                %v1780 = vld [vmem:[%s1038 + $0x22b0] sm:$0xf]
                %1781 = vst [vmem:[%s1039 + $0x1158] sm:$0xf] %v1780
                %v1782 = vld [vmem:[%s1038 + $0x22c8] sm:$0xf]
                %1783 = vst [vmem:[%s1039 + $0x1164] sm:$0xf] %v1782
                %v1784 = vld [vmem:[%s1038 + $0x22e0] sm:$0xf]
                %1785 = vst [vmem:[%s1039 + $0x1170] sm:$0xf] %v1784
                %v1786 = vld [vmem:[%s1038 + $0x22f8] sm:$0xf]
                %1787 = vst [vmem:[%s1039 + $0x117c] sm:$0xf] %v1786
                %v1788 = vld [vmem:[%s1038 + $0x2310] sm:$0xf]
                %1789 = vst [vmem:[%s1039 + $0x1188] sm:$0xf] %v1788
                %v1790 = vld [vmem:[%s1038 + $0x2328] sm:$0xf]
                %1791 = vst [vmem:[%s1039 + $0x1194] sm:$0xf] %v1790
                %v1792 = vld [vmem:[%s1038 + $0x2340] sm:$0xf]
                %1793 = vst [vmem:[%s1039 + $0x11a0] sm:$0xf] %v1792
                %v1794 = vld [vmem:[%s1038 + $0x2358] sm:$0xf]
                %1795 = vst [vmem:[%s1039 + $0x11ac] sm:$0xf] %v1794
                %v1796 = vld [vmem:[%s1038 + $0x2370] sm:$0xf]
                %1797 = vst [vmem:[%s1039 + $0x11b8] sm:$0xf] %v1796
                %v1798 = vld [vmem:[%s1038 + $0x2388] sm:$0xf]
                %1799 = vst [vmem:[%s1039 + $0x11c4] sm:$0xf] %v1798
                %v1800 = vld [vmem:[%s1038 + $0x23a0] sm:$0xf]
                %1801 = vst [vmem:[%s1039 + $0x11d0] sm:$0xf] %v1800
                %v1802 = vld [vmem:[%s1038 + $0x23b8] sm:$0xf]
                %1803 = vst [vmem:[%s1039 + $0x11dc] sm:$0xf] %v1802
                %v1804 = vld [vmem:[%s1038 + $0x23d0] sm:$0xf]
                %1805 = vst [vmem:[%s1039 + $0x11e8] sm:$0xf] %v1804
                %v1806 = vld [vmem:[%s1038 + $0x23e8] sm:$0xf]
                %1807 = vst [vmem:[%s1039 + $0x11f4] sm:$0xf] %v1806
                %v1808 = vld [vmem:[%s1038 + $0x2400] sm:$0xf]
                %1809 = vst [vmem:[%s1039 + $0x1200] sm:$0xf] %v1808
                %v1810 = vld [vmem:[%s1038 + $0x2418] sm:$0xf]
                %1811 = vst [vmem:[%s1039 + $0x120c] sm:$0xf] %v1810
                %v1812 = vld [vmem:[%s1038 + $0x2430] sm:$0xf]
                %1813 = vst [vmem:[%s1039 + $0x1218] sm:$0xf] %v1812
                %v1814 = vld [vmem:[%s1038 + $0x2448] sm:$0xf]
                %1815 = vst [vmem:[%s1039 + $0x1224] sm:$0xf] %v1814
                %v1816 = vld [vmem:[%s1038 + $0x2460] sm:$0xf]
                %1817 = vst [vmem:[%s1039 + $0x1230] sm:$0xf] %v1816
                %v1818 = vld [vmem:[%s1038 + $0x2478] sm:$0xf]
                %1819 = vst [vmem:[%s1039 + $0x123c] sm:$0xf] %v1818
                %v1820 = vld [vmem:[%s1038 + $0x2490] sm:$0xf]
                %1821 = vst [vmem:[%s1039 + $0x1248] sm:$0xf] %v1820
                %v1822 = vld [vmem:[%s1038 + $0x24a8] sm:$0xf]
                %1823 = vst [vmem:[%s1039 + $0x1254] sm:$0xf] %v1822
                %v1824 = vld [vmem:[%s1038 + $0x24c0] sm:$0xf]
                %1825 = vst [vmem:[%s1039 + $0x1260] sm:$0xf] %v1824
                %v1826 = vld [vmem:[%s1038 + $0x24d8] sm:$0xf]
                %1827 = vst [vmem:[%s1039 + $0x126c] sm:$0xf] %v1826
                %v1828 = vld [vmem:[%s1038 + $0x24f0] sm:$0xf]
                %1829 = vst [vmem:[%s1039 + $0x1278] sm:$0xf] %v1828
                %v1830 = vld [vmem:[%s1038 + $0x2508] sm:$0xf]
                %1831 = vst [vmem:[%s1039 + $0x1284] sm:$0xf] %v1830
                %v1832 = vld [vmem:[%s1038 + $0x2520] sm:$0xf]
                %1833 = vst [vmem:[%s1039 + $0x1290] sm:$0xf] %v1832
                %v1834 = vld [vmem:[%s1038 + $0x2538] sm:$0xf]
                %1835 = vst [vmem:[%s1039 + $0x129c] sm:$0xf] %v1834
                %v1836 = vld [vmem:[%s1038 + $0x2550] sm:$0xf]
                %1837 = vst [vmem:[%s1039 + $0x12a8] sm:$0xf] %v1836
                %v1838 = vld [vmem:[%s1038 + $0x2568] sm:$0xf]
                %1839 = vst [vmem:[%s1039 + $0x12b4] sm:$0xf] %v1838
              $region52: #{inception_aux.6} parent=39 // loop_footer
                %s1037 = sadd.s32 1, %s1033
              $region53: #{inception_aux.6} parent=39 // loop_footer_branch
                %1032 = sbr.rel target = $region49
              $region54: #{inception_aux.6} parent=39 // loop_exit
                _
            $region40: #{inception_aux.6} parent=35 // pred_fallthru
              _
          $region36: #{inception_aux.6} parent=31 // pred_fallthru
            _
          %1840 = vnop
        $region32: #{inception_aux.6} parent=27 // pred_fallthru
          _
      $region28: #{inception_aux.6} parent=5 // pred_fallthru
        _
      %p1841 = scmp.le.s32.totalorder 1, %s12
      %p1842 = scmp.lt.s32.totalorder %s12, 3
      %p1843 = pnand %p1841, %p1842
      %p1844 = pneg %p1843
      // Predicated region
      $region55: #{inception_aux.6} parent=5 // pred_check
        _
      $region56: #{inception_aux.6} parent=5 // pred_check_branch
        %1846 = sbr.rel (%p1843) target = $region58
      $region57: #{inception_aux.6} parent=5 // pred_region
        %s1847 = ssub.s32 %s12, 1
        %s1848 = sand.u32 %s105, 1
        %s1849 = sand.u32 %s105, 1
        %s1850 = smul.addr %s1849, 4800
        %s1851 = scalar_lea.vmem [#allocation2], %s1850
        // Predicated region
        $region59: #{inception_aux.6} parent=57 // pred_check
          %p1852 = pneg %p118
        $region60: #{inception_aux.6} parent=57 // pred_check_branch
          %1854 = sbr.rel (%p1852) target = $region62
        $region61: #{inception_aux.6} parent=57 // pred_region
          _
        $region62: #{inception_aux.6} parent=57 // pred_fallthru
          _
        %p1855 = scmp.lt.s32.totalorder %s21, 0
        %s1856 = scalar_select %p1855, %s21, 0
        %s1857 = smul.addr %s1856, 25
        %s1858 = smul.addr %s1857, 4
        %s1859 = scalar_lea.vmem %s0, %s1858
        %p1860 = pneg %p50
        %p1861 = pneg %p47
        %p1862 = pneg %p71
        %p1863 = pneg %p68
        %p1864 = pneg %p92
        %p1865 = pneg %p89
        %s1866 = sand.u32 %s105, 1
        %s1867 = sand.u32 %s105, 1
        %s1868 = smul.addr %s1867, 4800
        %s1869 = scalar_lea.vmem [#allocation2], %s1868
        %p1870 = pneg %p118
        %p1871 = pneg %p115
        %p1872 = pneg %p146
        %p1873 = pneg %p143
        %s1874 = smul.u32 3, %s22
        %p1875 = scmp.lt.s32.totalorder %s21, 0
        %s1876 = scalar_select %p1875, %s21, 0
        %p1877 = scmp.lt.s32.totalorder %s1874, 5
        %s1878 = scalar_select %p1877, %s1874, 5
        %s1879 = smul.addr %s1876, 6
        %s1880 = sadd.s32 %s1878, %s1879
        %s1881 = smul.addr %s1880, 4
        %s1882 = scalar_lea.vmem %s4, %s1881
        %p1883 = pneg %p174
        %p1884 = pneg %p171
        %s1885 = smul.u32 3, %s22
        %p1886 = scmp.lt.s32.totalorder %s21, 0
        %s1887 = scalar_select %p1886, %s21, 0
        %p1888 = scmp.lt.s32.totalorder %s1885, 5
        %s1889 = scalar_select %p1888, %s1885, 5
        %s1890 = smul.addr %s1887, 6
        %s1891 = sadd.s32 %s1889, %s1890
        %s1892 = smul.addr %s1891, 8
        %s1893 = scalar_lea.vmem %s5, %s1892
        %p1894 = scmp.lt.s32.totalorder %s21, 0
        %s1895 = scalar_select %p1894, %s21, 0
        %s1896 = smul.addr %s1895, 25
        %s1897 = smul.addr %s1896, 4
        %s1898 = scalar_lea.vmem %s0, %s1897
        %s1899 = smul.u32 3, %s22
        %s1900 = smul.u32 3, %s22
        %p1901 = scmp.lt.s32.totalorder %s21, 0
        %s1902 = scalar_select %p1901, %s21, 0
        %p1903 = scmp.lt.s32.totalorder %s1900, 5
        %s1904 = scalar_select %p1903, %s1900, 5
        %s1905 = smul.addr %s1902, 6
        %s1906 = sadd.s32 %s1904, %s1905
        %s1907 = smul.addr %s1906, 4
        %s1908 = scalar_lea.vmem %s4, %s1907
        %s1909 = smul.u32 3, %s22
        %s1910 = smul.u32 3, %s22
        %p1911 = scmp.lt.s32.totalorder %s21, 0
        %s1912 = scalar_select %p1911, %s21, 0
        %p1913 = scmp.lt.s32.totalorder %s1910, 5
        %s1914 = scalar_select %p1913, %s1910, 5
        %s1915 = smul.addr %s1912, 6
        %s1916 = sadd.s32 %s1914, %s1915
        %s1917 = smul.addr %s1916, 8
        %s1918 = scalar_lea.vmem %s5, %s1917
        %s1919 = smul.u32 3, %s22
        %v1921 = vld [vmem:[%s1898] sm:$0xff]
        %v1922 = vld [vmem:[%s1898 + $0x8] sm:$0xff]
        %v1923 = vld [vmem:[%s1898 + $0x10] sm:$0xff]
        %v1924 = vld [vmem:[%s1898 + $0x18] sm:$0xff]
        %v1925 = vld [vmem:[%s1898 + $0x20] sm:$0xff]
        %v1926 = vld [vmem:[%s1898 + $0x28] sm:$0xff]
        %v1927 = vld [vmem:[%s1898 + $0x30] sm:$0xff]
        %v1928 = vld [vmem:[%s1898 + $0x38] sm:$0xff]
        %v1929 = vld [vmem:[%s1898 + $0x40] sm:$0xff]
        %v1930 = vld [vmem:[%s1898 + $0x48] sm:$0xff]
        %v1931 = vld [vmem:[%s1898 + $0x50] sm:$0xff]
        %v1932 = vld [vmem:[%s1898 + $0x58] sm:$0xff]
        %v1933 = vld [vmem:[%s1898 + $0x60] sm:$0xf]
        %v1934 = vunpack.c.l.bf16 %v1921
        %v1935 = vunpack.c.h.bf16 %v1921
        %v1936 = vunpack.c.l.bf16 %v1922
        %v1937 = vunpack.c.h.bf16 %v1922
        %v1938 = vunpack.c.l.bf16 %v1923
        %v1939 = vunpack.c.h.bf16 %v1923
        %v1940 = vunpack.c.l.bf16 %v1924
        %v1941 = vunpack.c.h.bf16 %v1924
        %v1942 = vunpack.c.l.bf16 %v1925
        %v1943 = vunpack.c.h.bf16 %v1925
        %v1944 = vunpack.c.l.bf16 %v1926
        %v1945 = vunpack.c.h.bf16 %v1926
        %v1946 = vunpack.c.l.bf16 %v1927
        %v1947 = vunpack.c.h.bf16 %v1927
        %v1948 = vunpack.c.l.bf16 %v1928
        %v1949 = vunpack.c.h.bf16 %v1928
        %v1950 = vunpack.c.l.bf16 %v1929
        %v1951 = vunpack.c.h.bf16 %v1929
        %v1952 = vunpack.c.l.bf16 %v1930
        %v1953 = vunpack.c.h.bf16 %v1930
        %v1954 = vunpack.c.l.bf16 %v1931
        %v1955 = vunpack.c.h.bf16 %v1931
        %v1956 = vunpack.c.l.bf16 %v1932
        %v1957 = vunpack.c.h.bf16 %v1932
        %v1958 = vunpack.c.l.bf16 %v1933
        %v1959 = vld [vmem:[%s1] sm:$0xff]
        %v1960 = vld [vmem:[%s1 + $0x8] sm:$0xff]
        %v1961 = vld [vmem:[%s1 + $0x10] sm:$0xff]
        %v1962 = vld [vmem:[%s1 + $0x18] sm:$0x1]
        %v1967 = vlaneseq
        %v1968 = vshrl.u32 %v1967, 7
        %v1969 = vsub.s32 0, %v1968
        %v1970 = vrot.slane %v1959, %v1969
        %v1971 = vlaneseq
        %v1972 = vshrl.u32 %v1971, 7
        %v1973 = vsub.s32 1, %v1972
        %v1974 = vrot.slane %v1959, %v1973
        %v1975 = vlaneseq
        %v1976 = vshrl.u32 %v1975, 7
        %v1977 = vsub.s32 2, %v1976
        %v1978 = vrot.slane %v1959, %v1977
        %v1979 = vlaneseq
        %v1980 = vshrl.u32 %v1979, 7
        %v1981 = vsub.s32 3, %v1980
        %v1982 = vrot.slane %v1959, %v1981
        %v1983 = vlaneseq
        %v1984 = vshrl.u32 %v1983, 7
        %v1985 = vsub.s32 4, %v1984
        %v1986 = vrot.slane %v1959, %v1985
        %v1987 = vlaneseq
        %v1988 = vshrl.u32 %v1987, 7
        %v1989 = vsub.s32 5, %v1988
        %v1990 = vrot.slane %v1959, %v1989
        %v1991 = vlaneseq
        %v1992 = vshrl.u32 %v1991, 7
        %v1993 = vsub.s32 6, %v1992
        %v1994 = vrot.slane %v1959, %v1993
        %v1995 = vlaneseq
        %v1996 = vshrl.u32 %v1995, 7
        %v1997 = vsub.s32 7, %v1996
        %v1998 = vrot.slane %v1959, %v1997
        %v1999 = vlaneseq
        %v2000 = vshrl.u32 %v1999, 7
        %v2001 = vsub.s32 0, %v2000
        %v2002 = vrot.slane %v1960, %v2001
        %v2003 = vlaneseq
        %v2004 = vshrl.u32 %v2003, 7
        %v2005 = vsub.s32 1, %v2004
        %v2006 = vrot.slane %v1960, %v2005
        %v2007 = vlaneseq
        %v2008 = vshrl.u32 %v2007, 7
        %v2009 = vsub.s32 2, %v2008
        %v2010 = vrot.slane %v1960, %v2009
        %v2011 = vlaneseq
        %v2012 = vshrl.u32 %v2011, 7
        %v2013 = vsub.s32 3, %v2012
        %v2014 = vrot.slane %v1960, %v2013
        %v2015 = vlaneseq
        %v2016 = vshrl.u32 %v2015, 7
        %v2017 = vsub.s32 4, %v2016
        %v2018 = vrot.slane %v1960, %v2017
        %v2019 = vlaneseq
        %v2020 = vshrl.u32 %v2019, 7
        %v2021 = vsub.s32 5, %v2020
        %v2022 = vrot.slane %v1960, %v2021
        %v2023 = vlaneseq
        %v2024 = vshrl.u32 %v2023, 7
        %v2025 = vsub.s32 6, %v2024
        %v2026 = vrot.slane %v1960, %v2025
        %v2027 = vlaneseq
        %v2028 = vshrl.u32 %v2027, 7
        %v2029 = vsub.s32 7, %v2028
        %v2030 = vrot.slane %v1960, %v2029
        %v2031 = vlaneseq
        %v2032 = vshrl.u32 %v2031, 7
        %v2033 = vsub.s32 0, %v2032
        %v2034 = vrot.slane %v1961, %v2033
        %v2035 = vlaneseq
        %v2036 = vshrl.u32 %v2035, 7
        %v2037 = vsub.s32 1, %v2036
        %v2038 = vrot.slane %v1961, %v2037
        %v2039 = vlaneseq
        %v2040 = vshrl.u32 %v2039, 7
        %v2041 = vsub.s32 2, %v2040
        %v2042 = vrot.slane %v1961, %v2041
        %v2043 = vlaneseq
        %v2044 = vshrl.u32 %v2043, 7
        %v2045 = vsub.s32 3, %v2044
        %v2046 = vrot.slane %v1961, %v2045
        %v2047 = vlaneseq
        %v2048 = vshrl.u32 %v2047, 7
        %v2049 = vsub.s32 4, %v2048
        %v2050 = vrot.slane %v1961, %v2049
        %v2051 = vlaneseq
        %v2052 = vshrl.u32 %v2051, 7
        %v2053 = vsub.s32 5, %v2052
        %v2054 = vrot.slane %v1961, %v2053
        %v2055 = vlaneseq
        %v2056 = vshrl.u32 %v2055, 7
        %v2057 = vsub.s32 6, %v2056
        %v2058 = vrot.slane %v1961, %v2057
        %v2059 = vlaneseq
        %v2060 = vshrl.u32 %v2059, 7
        %v2061 = vsub.s32 7, %v2060
        %v2062 = vrot.slane %v1961, %v2061
        %v2063 = vlaneseq
        %v2064 = vshrl.u32 %v2063, 7
        %v2065 = vsub.s32 0, %v2064
        %v2066 = vrot.slane %v1962, %v2065
        %v2092 = vmul.f32 %v1934, %v1970
        %v2093 = vmul.f32 %v1935, %v1974
        %v2094 = vmul.f32 %v1936, %v1978
        %v2095 = vmul.f32 %v1937, %v1982
        %v2096 = vmul.f32 %v1938, %v1986
        %v2097 = vmul.f32 %v1939, %v1990
        %v2098 = vmul.f32 %v1940, %v1994
        %v2099 = vmul.f32 %v1941, %v1998
        %v2100 = vmul.f32 %v1942, %v2002
        %v2101 = vmul.f32 %v1943, %v2006
        %v2102 = vmul.f32 %v1944, %v2010
        %v2103 = vmul.f32 %v1945, %v2014
        %v2104 = vmul.f32 %v1946, %v2018
        %v2105 = vmul.f32 %v1947, %v2022
        %v2106 = vmul.f32 %v1948, %v2026
        %v2107 = vmul.f32 %v1949, %v2030
        %v2108 = vmul.f32 %v1950, %v2034
        %v2109 = vmul.f32 %v1951, %v2038
        %v2110 = vmul.f32 %v1952, %v2042
        %v2111 = vmul.f32 %v1953, %v2046
        %v2112 = vmul.f32 %v1954, %v2050
        %v2113 = vmul.f32 %v1955, %v2054
        %v2114 = vmul.f32 %v1956, %v2058
        %v2115 = vmul.f32 %v1957, %v2062
        %v2116 = vmul.f32 %v1958, %v2066
        %v2117 = vld [vmem:[%s2] sm:$0xff]
        %v2118 = vld [vmem:[%s2 + $0x8] sm:$0xff]
        %v2119 = vld [vmem:[%s2 + $0x10] sm:$0xff]
        %v2120 = vld [vmem:[%s2 + $0x18] sm:$0x1]
        %v2125 = vlaneseq
        %v2126 = vshrl.u32 %v2125, 7
        %v2127 = vsub.s32 0, %v2126
        %v2128 = vrot.slane %v2117, %v2127
        %v2129 = vlaneseq
        %v2130 = vshrl.u32 %v2129, 7
        %v2131 = vsub.s32 1, %v2130
        %v2132 = vrot.slane %v2117, %v2131
        %v2133 = vlaneseq
        %v2134 = vshrl.u32 %v2133, 7
        %v2135 = vsub.s32 2, %v2134
        %v2136 = vrot.slane %v2117, %v2135
        %v2137 = vlaneseq
        %v2138 = vshrl.u32 %v2137, 7
        %v2139 = vsub.s32 3, %v2138
        %v2140 = vrot.slane %v2117, %v2139
        %v2141 = vlaneseq
        %v2142 = vshrl.u32 %v2141, 7
        %v2143 = vsub.s32 4, %v2142
        %v2144 = vrot.slane %v2117, %v2143
        %v2145 = vlaneseq
        %v2146 = vshrl.u32 %v2145, 7
        %v2147 = vsub.s32 5, %v2146
        %v2148 = vrot.slane %v2117, %v2147
        %v2149 = vlaneseq
        %v2150 = vshrl.u32 %v2149, 7
        %v2151 = vsub.s32 6, %v2150
        %v2152 = vrot.slane %v2117, %v2151
        %v2153 = vlaneseq
        %v2154 = vshrl.u32 %v2153, 7
        %v2155 = vsub.s32 7, %v2154
        %v2156 = vrot.slane %v2117, %v2155
        %v2157 = vlaneseq
        %v2158 = vshrl.u32 %v2157, 7
        %v2159 = vsub.s32 0, %v2158
        %v2160 = vrot.slane %v2118, %v2159
        %v2161 = vlaneseq
        %v2162 = vshrl.u32 %v2161, 7
        %v2163 = vsub.s32 1, %v2162
        %v2164 = vrot.slane %v2118, %v2163
        %v2165 = vlaneseq
        %v2166 = vshrl.u32 %v2165, 7
        %v2167 = vsub.s32 2, %v2166
        %v2168 = vrot.slane %v2118, %v2167
        %v2169 = vlaneseq
        %v2170 = vshrl.u32 %v2169, 7
        %v2171 = vsub.s32 3, %v2170
        %v2172 = vrot.slane %v2118, %v2171
        %v2173 = vlaneseq
        %v2174 = vshrl.u32 %v2173, 7
        %v2175 = vsub.s32 4, %v2174
        %v2176 = vrot.slane %v2118, %v2175
        %v2177 = vlaneseq
        %v2178 = vshrl.u32 %v2177, 7
        %v2179 = vsub.s32 5, %v2178
        %v2180 = vrot.slane %v2118, %v2179
        %v2181 = vlaneseq
        %v2182 = vshrl.u32 %v2181, 7
        %v2183 = vsub.s32 6, %v2182
        %v2184 = vrot.slane %v2118, %v2183
        %v2185 = vlaneseq
        %v2186 = vshrl.u32 %v2185, 7
        %v2187 = vsub.s32 7, %v2186
        %v2188 = vrot.slane %v2118, %v2187
        %v2189 = vlaneseq
        %v2190 = vshrl.u32 %v2189, 7
        %v2191 = vsub.s32 0, %v2190
        %v2192 = vrot.slane %v2119, %v2191
        %v2193 = vlaneseq
        %v2194 = vshrl.u32 %v2193, 7
        %v2195 = vsub.s32 1, %v2194
        %v2196 = vrot.slane %v2119, %v2195
        %v2197 = vlaneseq
        %v2198 = vshrl.u32 %v2197, 7
        %v2199 = vsub.s32 2, %v2198
        %v2200 = vrot.slane %v2119, %v2199
        %v2201 = vlaneseq
        %v2202 = vshrl.u32 %v2201, 7
        %v2203 = vsub.s32 3, %v2202
        %v2204 = vrot.slane %v2119, %v2203
        %v2205 = vlaneseq
        %v2206 = vshrl.u32 %v2205, 7
        %v2207 = vsub.s32 4, %v2206
        %v2208 = vrot.slane %v2119, %v2207
        %v2209 = vlaneseq
        %v2210 = vshrl.u32 %v2209, 7
        %v2211 = vsub.s32 5, %v2210
        %v2212 = vrot.slane %v2119, %v2211
        %v2213 = vlaneseq
        %v2214 = vshrl.u32 %v2213, 7
        %v2215 = vsub.s32 6, %v2214
        %v2216 = vrot.slane %v2119, %v2215
        %v2217 = vlaneseq
        %v2218 = vshrl.u32 %v2217, 7
        %v2219 = vsub.s32 7, %v2218
        %v2220 = vrot.slane %v2119, %v2219
        %v2221 = vlaneseq
        %v2222 = vshrl.u32 %v2221, 7
        %v2223 = vsub.s32 0, %v2222
        %v2224 = vrot.slane %v2120, %v2223
        %v2250 = vadd.f32 %v2092, %v2128
        %v2251 = vadd.f32 %v2093, %v2132
        %v2252 = vadd.f32 %v2094, %v2136
        %v2253 = vadd.f32 %v2095, %v2140
        %v2254 = vadd.f32 %v2096, %v2144
        %v2255 = vadd.f32 %v2097, %v2148
        %v2256 = vadd.f32 %v2098, %v2152
        %v2257 = vadd.f32 %v2099, %v2156
        %v2258 = vadd.f32 %v2100, %v2160
        %v2259 = vadd.f32 %v2101, %v2164
        %v2260 = vadd.f32 %v2102, %v2168
        %v2261 = vadd.f32 %v2103, %v2172
        %v2262 = vadd.f32 %v2104, %v2176
        %v2263 = vadd.f32 %v2105, %v2180
        %v2264 = vadd.f32 %v2106, %v2184
        %v2265 = vadd.f32 %v2107, %v2188
        %v2266 = vadd.f32 %v2108, %v2192
        %v2267 = vadd.f32 %v2109, %v2196
        %v2268 = vadd.f32 %v2110, %v2200
        %v2269 = vadd.f32 %v2111, %v2204
        %v2270 = vadd.f32 %v2112, %v2208
        %v2271 = vadd.f32 %v2113, %v2212
        %v2272 = vadd.f32 %v2114, %v2216
        %v2273 = vadd.f32 %v2115, %v2220
        %v2274 = vadd.f32 %v2116, %v2224
        %v2275 = vmax.f32 %v2250, 0.0
        %v2276 = vmax.f32 %v2251, 0.0
        %v2277 = vmax.f32 %v2252, 0.0
        %v2278 = vmax.f32 %v2253, 0.0
        %v2279 = vmax.f32 %v2254, 0.0
        %v2280 = vmax.f32 %v2255, 0.0
        %v2281 = vmax.f32 %v2256, 0.0
        %v2282 = vmax.f32 %v2257, 0.0
        %v2283 = vmax.f32 %v2258, 0.0
        %v2284 = vmax.f32 %v2259, 0.0
        %v2285 = vmax.f32 %v2260, 0.0
        %v2286 = vmax.f32 %v2261, 0.0
        %v2287 = vmax.f32 %v2262, 0.0
        %v2288 = vmax.f32 %v2263, 0.0
        %v2289 = vmax.f32 %v2264, 0.0
        %v2290 = vmax.f32 %v2265, 0.0
        %v2291 = vmax.f32 %v2266, 0.0
        %v2292 = vmax.f32 %v2267, 0.0
        %v2293 = vmax.f32 %v2268, 0.0
        %v2294 = vmax.f32 %v2269, 0.0
        %v2295 = vmax.f32 %v2270, 0.0
        %v2296 = vmax.f32 %v2271, 0.0
        %v2297 = vmax.f32 %v2272, 0.0
        %v2298 = vmax.f32 %v2273, 0.0
        %v2299 = vmax.f32 %v2274, 0.0
        %s2300 = smul.u32 %s21, 8
        %v2301 = vlaneseq
        %v2302 = vshrl.u32 %v2301, 7
        %v2303 = vstv %s2300
        %v2304 = vadd.s32 %v2303, %v2302
        %vm2305 = vcmp.lt.s32.totalorder %v2304, 2
        %v2306 = vsel %vm2305, 1, 0
        %vm2307 = vcmp.eq.s32.totalorder %v2306, 1
        %v2308 = vsel %vm2307, %v2275, 0.0
        %v2309 = vsel %vm2307, %v2276, 0.0
        %v2310 = vsel %vm2307, %v2277, 0.0
        %v2311 = vsel %vm2307, %v2278, 0.0
        %v2312 = vsel %vm2307, %v2279, 0.0
        %v2313 = vsel %vm2307, %v2280, 0.0
        %v2314 = vsel %vm2307, %v2281, 0.0
        %v2315 = vsel %vm2307, %v2282, 0.0
        %v2316 = vsel %vm2307, %v2283, 0.0
        %v2317 = vsel %vm2307, %v2284, 0.0
        %v2318 = vsel %vm2307, %v2285, 0.0
        %v2319 = vsel %vm2307, %v2286, 0.0
        %v2320 = vsel %vm2307, %v2287, 0.0
        %v2321 = vsel %vm2307, %v2288, 0.0
        %v2322 = vsel %vm2307, %v2289, 0.0
        %v2323 = vsel %vm2307, %v2290, 0.0
        %v2324 = vsel %vm2307, %v2291, 0.0
        %v2325 = vsel %vm2307, %v2292, 0.0
        %v2326 = vsel %vm2307, %v2293, 0.0
        %v2327 = vsel %vm2307, %v2294, 0.0
        %v2328 = vsel %vm2307, %v2295, 0.0
        %v2329 = vsel %vm2307, %v2296, 0.0
        %v2330 = vsel %vm2307, %v2297, 0.0
        %v2331 = vsel %vm2307, %v2298, 0.0
        %v2332 = vsel %vm2307, %v2299, 0.0
        %v2333 = vpack.c.bf16 %v2308, %v2308
        %v2334 = vpack.c.bf16 %v2309, %v2309
        %v2335 = vpack.c.bf16 %v2310, %v2310
        %v2336 = vpack.c.bf16 %v2311, %v2311
        %v2337 = vpack.c.bf16 %v2312, %v2312
        %v2338 = vpack.c.bf16 %v2313, %v2313
        %v2339 = vpack.c.bf16 %v2314, %v2314
        %v2340 = vpack.c.bf16 %v2315, %v2315
        %v2341 = vpack.c.bf16 %v2316, %v2316
        %v2342 = vpack.c.bf16 %v2317, %v2317
        %v2343 = vpack.c.bf16 %v2318, %v2318
        %v2344 = vpack.c.bf16 %v2319, %v2319
        %v2345 = vpack.c.bf16 %v2320, %v2320
        %v2346 = vpack.c.bf16 %v2321, %v2321
        %v2347 = vpack.c.bf16 %v2322, %v2322
        %v2348 = vpack.c.bf16 %v2323, %v2323
        %v2349 = vpack.c.bf16 %v2324, %v2324
        %v2350 = vpack.c.bf16 %v2325, %v2325
        %v2351 = vpack.c.bf16 %v2326, %v2326
        %v2352 = vpack.c.bf16 %v2327, %v2327
        %v2353 = vpack.c.bf16 %v2328, %v2328
        %v2354 = vpack.c.bf16 %v2329, %v2329
        %v2355 = vpack.c.bf16 %v2330, %v2330
        %v2356 = vpack.c.bf16 %v2331, %v2331
        %v2357 = vpack.c.bf16 %v2332, %v2332
        %v2358 = vld [vmem:[%s1851] sm:$0xff]
        %v2359 = vld [vmem:[%s1851 + $0x8] sm:$0xf]
        %v2360 = vld [vmem:[%s1851 + $0xc] sm:$0xff]
        %v2361 = vld [vmem:[%s1851 + $0x14] sm:$0xf]
        %v2362 = vld [vmem:[%s1851 + $0x18] sm:$0xff]
        %v2363 = vld [vmem:[%s1851 + $0x20] sm:$0xf]
        %v2364 = vld [vmem:[%s1851 + $0x24] sm:$0xff]
        %v2365 = vld [vmem:[%s1851 + $0x2c] sm:$0xf]
        %v2366 = vld [vmem:[%s1851 + $0x30] sm:$0xff]
        %v2367 = vld [vmem:[%s1851 + $0x38] sm:$0xf]
        %v2368 = vld [vmem:[%s1851 + $0x3c] sm:$0xff]
        %v2369 = vld [vmem:[%s1851 + $0x44] sm:$0xf]
        %v2370 = vld [vmem:[%s1851 + $0x48] sm:$0xff]
        %v2371 = vld [vmem:[%s1851 + $0x50] sm:$0xf]
        %v2372 = vld [vmem:[%s1851 + $0x54] sm:$0xff]
        %v2373 = vld [vmem:[%s1851 + $0x5c] sm:$0xf]
        %v2374 = vld [vmem:[%s1851 + $0x60] sm:$0xff]
        %v2375 = vld [vmem:[%s1851 + $0x68] sm:$0xf]
        %v2376 = vld [vmem:[%s1851 + $0x6c] sm:$0xff]
        %v2377 = vld [vmem:[%s1851 + $0x74] sm:$0xf]
        %v2378 = vld [vmem:[%s1851 + $0x78] sm:$0xff]
        %v2379 = vld [vmem:[%s1851 + $0x80] sm:$0xf]
        %v2380 = vld [vmem:[%s1851 + $0x84] sm:$0xff]
        %v2381 = vld [vmem:[%s1851 + $0x8c] sm:$0xf]
        %v2382 = vld [vmem:[%s1851 + $0x90] sm:$0xff]
        %v2383 = vld [vmem:[%s1851 + $0x98] sm:$0xf]
        %v2384 = vld [vmem:[%s1851 + $0x9c] sm:$0xff]
        %v2385 = vld [vmem:[%s1851 + $0xa4] sm:$0xf]
        %v2386 = vld [vmem:[%s1851 + $0xa8] sm:$0xff]
        %v2387 = vld [vmem:[%s1851 + $0xb0] sm:$0xf]
        %v2388 = vld [vmem:[%s1851 + $0xb4] sm:$0xff]
        %v2389 = vld [vmem:[%s1851 + $0xbc] sm:$0xf]
        %v2390 = vld [vmem:[%s1851 + $0xc0] sm:$0xff]
        %v2391 = vld [vmem:[%s1851 + $0xc8] sm:$0xf]
        %v2392 = vld [vmem:[%s1851 + $0xcc] sm:$0xff]
        %v2393 = vld [vmem:[%s1851 + $0xd4] sm:$0xf]
        %v2394 = vld [vmem:[%s1851 + $0xd8] sm:$0xff]
        %v2395 = vld [vmem:[%s1851 + $0xe0] sm:$0xf]
        %v2396 = vld [vmem:[%s1851 + $0xe4] sm:$0xff]
        %v2397 = vld [vmem:[%s1851 + $0xec] sm:$0xf]
        %v2398 = vld [vmem:[%s1851 + $0xf0] sm:$0xff]
        %v2399 = vld [vmem:[%s1851 + $0xf8] sm:$0xf]
        %v2400 = vld [vmem:[%s1851 + $0xfc] sm:$0xff]
        %v2401 = vld [vmem:[%s1851 + $0x104] sm:$0xf]
        %v2402 = vld [vmem:[%s1851 + $0x108] sm:$0xff]
        %v2403 = vld [vmem:[%s1851 + $0x110] sm:$0xf]
        %v2404 = vld [vmem:[%s1851 + $0x114] sm:$0xff]
        %v2405 = vld [vmem:[%s1851 + $0x11c] sm:$0xf]
        %v2406 = vld [vmem:[%s1851 + $0x120] sm:$0xff]
        %v2407 = vld [vmem:[%s1851 + $0x128] sm:$0xf]
        %v2408 = vld [vmem:[%s1851 + $0x12c] sm:$0xff]
        %v2409 = vld [vmem:[%s1851 + $0x134] sm:$0xf]
        %v2410 = vld [vmem:[%s1851 + $0x138] sm:$0xff]
        %v2411 = vld [vmem:[%s1851 + $0x140] sm:$0xf]
        %v2412 = vld [vmem:[%s1851 + $0x144] sm:$0xff]
        %v2413 = vld [vmem:[%s1851 + $0x14c] sm:$0xf]
        %v2414 = vld [vmem:[%s1851 + $0x150] sm:$0xff]
        %v2415 = vld [vmem:[%s1851 + $0x158] sm:$0xf]
        %v2416 = vld [vmem:[%s1851 + $0x15c] sm:$0xff]
        %v2417 = vld [vmem:[%s1851 + $0x164] sm:$0xf]
        %v2418 = vld [vmem:[%s1851 + $0x168] sm:$0xff]
        %v2419 = vld [vmem:[%s1851 + $0x170] sm:$0xf]
        %v2420 = vld [vmem:[%s1851 + $0x174] sm:$0xff]
        %v2421 = vld [vmem:[%s1851 + $0x17c] sm:$0xf]
        %v2422 = vld [vmem:[%s1851 + $0x180] sm:$0xff]
        %v2423 = vld [vmem:[%s1851 + $0x188] sm:$0xf]
        %v2424 = vld [vmem:[%s1851 + $0x18c] sm:$0xff]
        %v2425 = vld [vmem:[%s1851 + $0x194] sm:$0xf]
        %v2426 = vld [vmem:[%s1851 + $0x198] sm:$0xff]
        %v2427 = vld [vmem:[%s1851 + $0x1a0] sm:$0xf]
        %v2428 = vld [vmem:[%s1851 + $0x1a4] sm:$0xff]
        %v2429 = vld [vmem:[%s1851 + $0x1ac] sm:$0xf]
        %v2430 = vld [vmem:[%s1851 + $0x1b0] sm:$0xff]
        %v2431 = vld [vmem:[%s1851 + $0x1b8] sm:$0xf]
        %v2432 = vld [vmem:[%s1851 + $0x1bc] sm:$0xff]
        %v2433 = vld [vmem:[%s1851 + $0x1c4] sm:$0xf]
        %v2434 = vld [vmem:[%s1851 + $0x1c8] sm:$0xff]
        %v2435 = vld [vmem:[%s1851 + $0x1d0] sm:$0xf]
        %v2436 = vld [vmem:[%s1851 + $0x1d4] sm:$0xff]
        %v2437 = vld [vmem:[%s1851 + $0x1dc] sm:$0xf]
        %v2438 = vld [vmem:[%s1851 + $0x1e0] sm:$0xff]
        %v2439 = vld [vmem:[%s1851 + $0x1e8] sm:$0xf]
        %v2440 = vld [vmem:[%s1851 + $0x1ec] sm:$0xff]
        %v2441 = vld [vmem:[%s1851 + $0x1f4] sm:$0xf]
        %v2442 = vld [vmem:[%s1851 + $0x1f8] sm:$0xff]
        %v2443 = vld [vmem:[%s1851 + $0x200] sm:$0xf]
        %v2444 = vld [vmem:[%s1851 + $0x204] sm:$0xff]
        %v2445 = vld [vmem:[%s1851 + $0x20c] sm:$0xf]
        %v2446 = vld [vmem:[%s1851 + $0x210] sm:$0xff]
        %v2447 = vld [vmem:[%s1851 + $0x218] sm:$0xf]
        %v2448 = vld [vmem:[%s1851 + $0x21c] sm:$0xff]
        %v2449 = vld [vmem:[%s1851 + $0x224] sm:$0xf]
        %v2450 = vld [vmem:[%s1851 + $0x228] sm:$0xff]
        %v2451 = vld [vmem:[%s1851 + $0x230] sm:$0xf]
        %v2452 = vld [vmem:[%s1851 + $0x234] sm:$0xff]
        %v2453 = vld [vmem:[%s1851 + $0x23c] sm:$0xf]
        %v2454 = vld [vmem:[%s1851 + $0x240] sm:$0xff]
        %v2455 = vld [vmem:[%s1851 + $0x248] sm:$0xf]
        %v2456 = vld [vmem:[%s1851 + $0x24c] sm:$0xff]
        %v2457 = vld [vmem:[%s1851 + $0x254] sm:$0xf]
        %v2458 = vld [vmem:[%s1851 + $0x258] sm:$0xff]
        %v2459 = vld [vmem:[%s1851 + $0x260] sm:$0xf]
        %v2460 = vld [vmem:[%s1851 + $0x264] sm:$0xff]
        %v2461 = vld [vmem:[%s1851 + $0x26c] sm:$0xf]
        %v2462 = vld [vmem:[%s1851 + $0x270] sm:$0xff]
        %v2463 = vld [vmem:[%s1851 + $0x278] sm:$0xf]
        %v2464 = vld [vmem:[%s1851 + $0x27c] sm:$0xff]
        %v2465 = vld [vmem:[%s1851 + $0x284] sm:$0xf]
        %v2466 = vld [vmem:[%s1851 + $0x288] sm:$0xff]
        %v2467 = vld [vmem:[%s1851 + $0x290] sm:$0xf]
        %v2468 = vld [vmem:[%s1851 + $0x294] sm:$0xff]
        %v2469 = vld [vmem:[%s1851 + $0x29c] sm:$0xf]
        %v2470 = vld [vmem:[%s1851 + $0x2a0] sm:$0xff]
        %v2471 = vld [vmem:[%s1851 + $0x2a8] sm:$0xf]
        %v2472 = vld [vmem:[%s1851 + $0x2ac] sm:$0xff]
        %v2473 = vld [vmem:[%s1851 + $0x2b4] sm:$0xf]
        %v2474 = vld [vmem:[%s1851 + $0x2b8] sm:$0xff]
        %v2475 = vld [vmem:[%s1851 + $0x2c0] sm:$0xf]
        %v2476 = vld [vmem:[%s1851 + $0x2c4] sm:$0xff]
        %v2477 = vld [vmem:[%s1851 + $0x2cc] sm:$0xf]
        %v2478 = vld [vmem:[%s1851 + $0x2d0] sm:$0xff]
        %v2479 = vld [vmem:[%s1851 + $0x2d8] sm:$0xf]
        %v2480 = vld [vmem:[%s1851 + $0x2dc] sm:$0xff]
        %v2481 = vld [vmem:[%s1851 + $0x2e4] sm:$0xf]
        %v2482 = vld [vmem:[%s1851 + $0x2e8] sm:$0xff]
        %v2483 = vld [vmem:[%s1851 + $0x2f0] sm:$0xf]
        %v2484 = vld [vmem:[%s1851 + $0x2f4] sm:$0xff]
        %v2485 = vld [vmem:[%s1851 + $0x2fc] sm:$0xf]
        %v2486 = vld [vmem:[%s1851 + $0x300] sm:$0xff]
        %v2487 = vld [vmem:[%s1851 + $0x308] sm:$0xf]
        %v2488 = vld [vmem:[%s1851 + $0x30c] sm:$0xff]
        %v2489 = vld [vmem:[%s1851 + $0x314] sm:$0xf]
        %v2490 = vld [vmem:[%s1851 + $0x318] sm:$0xff]
        %v2491 = vld [vmem:[%s1851 + $0x320] sm:$0xf]
        %v2492 = vld [vmem:[%s1851 + $0x324] sm:$0xff]
        %v2493 = vld [vmem:[%s1851 + $0x32c] sm:$0xf]
        %v2494 = vld [vmem:[%s1851 + $0x330] sm:$0xff]
        %v2495 = vld [vmem:[%s1851 + $0x338] sm:$0xf]
        %v2496 = vld [vmem:[%s1851 + $0x33c] sm:$0xff]
        %v2497 = vld [vmem:[%s1851 + $0x344] sm:$0xf]
        %v2498 = vld [vmem:[%s1851 + $0x348] sm:$0xff]
        %v2499 = vld [vmem:[%s1851 + $0x350] sm:$0xf]
        %v2500 = vld [vmem:[%s1851 + $0x354] sm:$0xff]
        %v2501 = vld [vmem:[%s1851 + $0x35c] sm:$0xf]
        %v2502 = vld [vmem:[%s1851 + $0x360] sm:$0xff]
        %v2503 = vld [vmem:[%s1851 + $0x368] sm:$0xf]
        %v2504 = vld [vmem:[%s1851 + $0x36c] sm:$0xff]
        %v2505 = vld [vmem:[%s1851 + $0x374] sm:$0xf]
        %v2506 = vld [vmem:[%s1851 + $0x378] sm:$0xff]
        %v2507 = vld [vmem:[%s1851 + $0x380] sm:$0xf]
        %v2508 = vld [vmem:[%s1851 + $0x384] sm:$0xff]
        %v2509 = vld [vmem:[%s1851 + $0x38c] sm:$0xf]
        %v2510 = vld [vmem:[%s1851 + $0x390] sm:$0xff]
        %v2511 = vld [vmem:[%s1851 + $0x398] sm:$0xf]
        %v2512 = vld [vmem:[%s1851 + $0x39c] sm:$0xff]
        %v2513 = vld [vmem:[%s1851 + $0x3a4] sm:$0xf]
        %v2514 = vld [vmem:[%s1851 + $0x3a8] sm:$0xff]
        %v2515 = vld [vmem:[%s1851 + $0x3b0] sm:$0xf]
        %v2516 = vld [vmem:[%s1851 + $0x3b4] sm:$0xff]
        %v2517 = vld [vmem:[%s1851 + $0x3bc] sm:$0xf]
        %v2518 = vld [vmem:[%s1851 + $0x3c0] sm:$0xff]
        %v2519 = vld [vmem:[%s1851 + $0x3c8] sm:$0xf]
        %v2520 = vld [vmem:[%s1851 + $0x3cc] sm:$0xff]
        %v2521 = vld [vmem:[%s1851 + $0x3d4] sm:$0xf]
        %v2522 = vld [vmem:[%s1851 + $0x3d8] sm:$0xff]
        %v2523 = vld [vmem:[%s1851 + $0x3e0] sm:$0xf]
        %v2524 = vld [vmem:[%s1851 + $0x3e4] sm:$0xff]
        %v2525 = vld [vmem:[%s1851 + $0x3ec] sm:$0xf]
        %v2526 = vld [vmem:[%s1851 + $0x3f0] sm:$0xff]
        %v2527 = vld [vmem:[%s1851 + $0x3f8] sm:$0xf]
        %v2528 = vld [vmem:[%s1851 + $0x3fc] sm:$0xff]
        %v2529 = vld [vmem:[%s1851 + $0x404] sm:$0xf]
        %v2530 = vld [vmem:[%s1851 + $0x408] sm:$0xff]
        %v2531 = vld [vmem:[%s1851 + $0x410] sm:$0xf]
        %v2532 = vld [vmem:[%s1851 + $0x414] sm:$0xff]
        %v2533 = vld [vmem:[%s1851 + $0x41c] sm:$0xf]
        %v2534 = vld [vmem:[%s1851 + $0x420] sm:$0xff]
        %v2535 = vld [vmem:[%s1851 + $0x428] sm:$0xf]
        %v2536 = vld [vmem:[%s1851 + $0x42c] sm:$0xff]
        %v2537 = vld [vmem:[%s1851 + $0x434] sm:$0xf]
        %v2538 = vld [vmem:[%s1851 + $0x438] sm:$0xff]
        %v2539 = vld [vmem:[%s1851 + $0x440] sm:$0xf]
        %v2540 = vld [vmem:[%s1851 + $0x444] sm:$0xff]
        %v2541 = vld [vmem:[%s1851 + $0x44c] sm:$0xf]
        %v2542 = vld [vmem:[%s1851 + $0x450] sm:$0xff]
        %v2543 = vld [vmem:[%s1851 + $0x458] sm:$0xf]
        %v2544 = vld [vmem:[%s1851 + $0x45c] sm:$0xff]
        %v2545 = vld [vmem:[%s1851 + $0x464] sm:$0xf]
        %v2546 = vld [vmem:[%s1851 + $0x468] sm:$0xff]
        %v2547 = vld [vmem:[%s1851 + $0x470] sm:$0xf]
        %v2548 = vld [vmem:[%s1851 + $0x474] sm:$0xff]
        %v2549 = vld [vmem:[%s1851 + $0x47c] sm:$0xf]
        %v2550 = vld [vmem:[%s1851 + $0x480] sm:$0xff]
        %v2551 = vld [vmem:[%s1851 + $0x488] sm:$0xf]
        %v2552 = vld [vmem:[%s1851 + $0x48c] sm:$0xff]
        %v2553 = vld [vmem:[%s1851 + $0x494] sm:$0xf]
        %v2554 = vld [vmem:[%s1851 + $0x498] sm:$0xff]
        %v2555 = vld [vmem:[%s1851 + $0x4a0] sm:$0xf]
        %v2556 = vld [vmem:[%s1851 + $0x4a4] sm:$0xff]
        %v2557 = vld [vmem:[%s1851 + $0x4ac] sm:$0xf]
        %v2558 = vld [vmem:[%s1851 + $0x4b0] sm:$0xff]
        %v2559 = vld [vmem:[%s1851 + $0x4b8] sm:$0xf]
        %v2560 = vld [vmem:[%s1851 + $0x4bc] sm:$0xff]
        %v2561 = vld [vmem:[%s1851 + $0x4c4] sm:$0xf]
        %v2562 = vld [vmem:[%s1851 + $0x4c8] sm:$0xff]
        %v2563 = vld [vmem:[%s1851 + $0x4d0] sm:$0xf]
        %v2564 = vld [vmem:[%s1851 + $0x4d4] sm:$0xff]
        %v2565 = vld [vmem:[%s1851 + $0x4dc] sm:$0xf]
        %v2566 = vld [vmem:[%s1851 + $0x4e0] sm:$0xff]
        %v2567 = vld [vmem:[%s1851 + $0x4e8] sm:$0xf]
        %v2568 = vld [vmem:[%s1851 + $0x4ec] sm:$0xff]
        %v2569 = vld [vmem:[%s1851 + $0x4f4] sm:$0xf]
        %v2570 = vld [vmem:[%s1851 + $0x4f8] sm:$0xff]
        %v2571 = vld [vmem:[%s1851 + $0x500] sm:$0xf]
        %v2572 = vld [vmem:[%s1851 + $0x504] sm:$0xff]
        %v2573 = vld [vmem:[%s1851 + $0x50c] sm:$0xf]
        %v2574 = vld [vmem:[%s1851 + $0x510] sm:$0xff]
        %v2575 = vld [vmem:[%s1851 + $0x518] sm:$0xf]
        %v2576 = vld [vmem:[%s1851 + $0x51c] sm:$0xff]
        %v2577 = vld [vmem:[%s1851 + $0x524] sm:$0xf]
        %v2578 = vld [vmem:[%s1851 + $0x528] sm:$0xff]
        %v2579 = vld [vmem:[%s1851 + $0x530] sm:$0xf]
        %v2580 = vld [vmem:[%s1851 + $0x534] sm:$0xff]
        %v2581 = vld [vmem:[%s1851 + $0x53c] sm:$0xf]
        %v2582 = vld [vmem:[%s1851 + $0x540] sm:$0xff]
        %v2583 = vld [vmem:[%s1851 + $0x548] sm:$0xf]
        %v2584 = vld [vmem:[%s1851 + $0x54c] sm:$0xff]
        %v2585 = vld [vmem:[%s1851 + $0x554] sm:$0xf]
        %v2586 = vld [vmem:[%s1851 + $0x558] sm:$0xff]
        %v2587 = vld [vmem:[%s1851 + $0x560] sm:$0xf]
        %v2588 = vld [vmem:[%s1851 + $0x564] sm:$0xff]
        %v2589 = vld [vmem:[%s1851 + $0x56c] sm:$0xf]
        %v2590 = vld [vmem:[%s1851 + $0x570] sm:$0xff]
        %v2591 = vld [vmem:[%s1851 + $0x578] sm:$0xf]
        %v2592 = vld [vmem:[%s1851 + $0x57c] sm:$0xff]
        %v2593 = vld [vmem:[%s1851 + $0x584] sm:$0xf]
        %v2594 = vld [vmem:[%s1851 + $0x588] sm:$0xff]
        %v2595 = vld [vmem:[%s1851 + $0x590] sm:$0xf]
        %v2596 = vld [vmem:[%s1851 + $0x594] sm:$0xff]
        %v2597 = vld [vmem:[%s1851 + $0x59c] sm:$0xf]
        %v2598 = vld [vmem:[%s1851 + $0x5a0] sm:$0xff]
        %v2599 = vld [vmem:[%s1851 + $0x5a8] sm:$0xf]
        %v2600 = vld [vmem:[%s1851 + $0x5ac] sm:$0xff]
        %v2601 = vld [vmem:[%s1851 + $0x5b4] sm:$0xf]
        %v2602 = vld [vmem:[%s1851 + $0x5b8] sm:$0xff]
        %v2603 = vld [vmem:[%s1851 + $0x5c0] sm:$0xf]
        %v2604 = vld [vmem:[%s1851 + $0x5c4] sm:$0xff]
        %v2605 = vld [vmem:[%s1851 + $0x5cc] sm:$0xf]
        %v2606 = vld [vmem:[%s1851 + $0x5d0] sm:$0xff]
        %v2607 = vld [vmem:[%s1851 + $0x5d8] sm:$0xf]
        %v2608 = vld [vmem:[%s1851 + $0x5dc] sm:$0xff]
        %v2609 = vld [vmem:[%s1851 + $0x5e4] sm:$0xf]
        %v2610 = vld [vmem:[%s1851 + $0x5e8] sm:$0xff]
        %v2611 = vld [vmem:[%s1851 + $0x5f0] sm:$0xf]
        %v2612 = vld [vmem:[%s1851 + $0x5f4] sm:$0xff]
        %v2613 = vld [vmem:[%s1851 + $0x5fc] sm:$0xf]
        %v2614 = vld [vmem:[%s1851 + $0x600] sm:$0xff]
        %v2615 = vld [vmem:[%s1851 + $0x608] sm:$0xf]
        %v2616 = vld [vmem:[%s1851 + $0x60c] sm:$0xff]
        %v2617 = vld [vmem:[%s1851 + $0x614] sm:$0xf]
        %v2618 = vld [vmem:[%s1851 + $0x618] sm:$0xff]
        %v2619 = vld [vmem:[%s1851 + $0x620] sm:$0xf]
        %v2620 = vld [vmem:[%s1851 + $0x624] sm:$0xff]
        %v2621 = vld [vmem:[%s1851 + $0x62c] sm:$0xf]
        %v2622 = vld [vmem:[%s1851 + $0x630] sm:$0xff]
        %v2623 = vld [vmem:[%s1851 + $0x638] sm:$0xf]
        %v2624 = vld [vmem:[%s1851 + $0x63c] sm:$0xff]
        %v2625 = vld [vmem:[%s1851 + $0x644] sm:$0xf]
        %v2626 = vld [vmem:[%s1851 + $0x648] sm:$0xff]
        %v2627 = vld [vmem:[%s1851 + $0x650] sm:$0xf]
        %v2628 = vld [vmem:[%s1851 + $0x654] sm:$0xff]
        %v2629 = vld [vmem:[%s1851 + $0x65c] sm:$0xf]
        %v2630 = vld [vmem:[%s1851 + $0x660] sm:$0xff]
        %v2631 = vld [vmem:[%s1851 + $0x668] sm:$0xf]
        %v2632 = vld [vmem:[%s1851 + $0x66c] sm:$0xff]
        %v2633 = vld [vmem:[%s1851 + $0x674] sm:$0xf]
        %v2634 = vld [vmem:[%s1851 + $0x678] sm:$0xff]
        %v2635 = vld [vmem:[%s1851 + $0x680] sm:$0xf]
        %v2636 = vld [vmem:[%s1851 + $0x684] sm:$0xff]
        %v2637 = vld [vmem:[%s1851 + $0x68c] sm:$0xf]
        %v2638 = vld [vmem:[%s1851 + $0x690] sm:$0xff]
        %v2639 = vld [vmem:[%s1851 + $0x698] sm:$0xf]
        %v2640 = vld [vmem:[%s1851 + $0x69c] sm:$0xff]
        %v2641 = vld [vmem:[%s1851 + $0x6a4] sm:$0xf]
        %v2642 = vld [vmem:[%s1851 + $0x6a8] sm:$0xff]
        %v2643 = vld [vmem:[%s1851 + $0x6b0] sm:$0xf]
        %v2644 = vld [vmem:[%s1851 + $0x6b4] sm:$0xff]
        %v2645 = vld [vmem:[%s1851 + $0x6bc] sm:$0xf]
        %v2646 = vld [vmem:[%s1851 + $0x6c0] sm:$0xff]
        %v2647 = vld [vmem:[%s1851 + $0x6c8] sm:$0xf]
        %v2648 = vld [vmem:[%s1851 + $0x6cc] sm:$0xff]
        %v2649 = vld [vmem:[%s1851 + $0x6d4] sm:$0xf]
        %v2650 = vld [vmem:[%s1851 + $0x6d8] sm:$0xff]
        %v2651 = vld [vmem:[%s1851 + $0x6e0] sm:$0xf]
        %v2652 = vld [vmem:[%s1851 + $0x6e4] sm:$0xff]
        %v2653 = vld [vmem:[%s1851 + $0x6ec] sm:$0xf]
        %v2654 = vld [vmem:[%s1851 + $0x6f0] sm:$0xff]
        %v2655 = vld [vmem:[%s1851 + $0x6f8] sm:$0xf]
        %v2656 = vld [vmem:[%s1851 + $0x6fc] sm:$0xff]
        %v2657 = vld [vmem:[%s1851 + $0x704] sm:$0xf]
        %v2658 = vld [vmem:[%s1851 + $0x708] sm:$0xff]
        %v2659 = vld [vmem:[%s1851 + $0x710] sm:$0xf]
        %v2660 = vld [vmem:[%s1851 + $0x714] sm:$0xff]
        %v2661 = vld [vmem:[%s1851 + $0x71c] sm:$0xf]
        %v2662 = vld [vmem:[%s1851 + $0x720] sm:$0xff]
        %v2663 = vld [vmem:[%s1851 + $0x728] sm:$0xf]
        %v2664 = vld [vmem:[%s1851 + $0x72c] sm:$0xff]
        %v2665 = vld [vmem:[%s1851 + $0x734] sm:$0xf]
        %v2666 = vld [vmem:[%s1851 + $0x738] sm:$0xff]
        %v2667 = vld [vmem:[%s1851 + $0x740] sm:$0xf]
        %v2668 = vld [vmem:[%s1851 + $0x744] sm:$0xff]
        %v2669 = vld [vmem:[%s1851 + $0x74c] sm:$0xf]
        %v2670 = vld [vmem:[%s1851 + $0x750] sm:$0xff]
        %v2671 = vld [vmem:[%s1851 + $0x758] sm:$0xf]
        %v2672 = vld [vmem:[%s1851 + $0x75c] sm:$0xff]
        %v2673 = vld [vmem:[%s1851 + $0x764] sm:$0xf]
        %v2674 = vld [vmem:[%s1851 + $0x768] sm:$0xff]
        %v2675 = vld [vmem:[%s1851 + $0x770] sm:$0xf]
        %v2676 = vld [vmem:[%s1851 + $0x774] sm:$0xff]
        %v2677 = vld [vmem:[%s1851 + $0x77c] sm:$0xf]
        %v2678 = vld [vmem:[%s1851 + $0x780] sm:$0xff]
        %v2679 = vld [vmem:[%s1851 + $0x788] sm:$0xf]
        %v2680 = vld [vmem:[%s1851 + $0x78c] sm:$0xff]
        %v2681 = vld [vmem:[%s1851 + $0x794] sm:$0xf]
        %v2682 = vld [vmem:[%s1851 + $0x798] sm:$0xff]
        %v2683 = vld [vmem:[%s1851 + $0x7a0] sm:$0xf]
        %v2684 = vld [vmem:[%s1851 + $0x7a4] sm:$0xff]
        %v2685 = vld [vmem:[%s1851 + $0x7ac] sm:$0xf]
        %v2686 = vld [vmem:[%s1851 + $0x7b0] sm:$0xff]
        %v2687 = vld [vmem:[%s1851 + $0x7b8] sm:$0xf]
        %v2688 = vld [vmem:[%s1851 + $0x7bc] sm:$0xff]
        %v2689 = vld [vmem:[%s1851 + $0x7c4] sm:$0xf]
        %v2690 = vld [vmem:[%s1851 + $0x7c8] sm:$0xff]
        %v2691 = vld [vmem:[%s1851 + $0x7d0] sm:$0xf]
        %v2692 = vld [vmem:[%s1851 + $0x7d4] sm:$0xff]
        %v2693 = vld [vmem:[%s1851 + $0x7dc] sm:$0xf]
        %v2694 = vld [vmem:[%s1851 + $0x7e0] sm:$0xff]
        %v2695 = vld [vmem:[%s1851 + $0x7e8] sm:$0xf]
        %v2696 = vld [vmem:[%s1851 + $0x7ec] sm:$0xff]
        %v2697 = vld [vmem:[%s1851 + $0x7f4] sm:$0xf]
        %v2698 = vld [vmem:[%s1851 + $0x7f8] sm:$0xff]
        %v2699 = vld [vmem:[%s1851 + $0x800] sm:$0xf]
        %v2700 = vld [vmem:[%s1851 + $0x804] sm:$0xff]
        %v2701 = vld [vmem:[%s1851 + $0x80c] sm:$0xf]
        %v2702 = vld [vmem:[%s1851 + $0x810] sm:$0xff]
        %v2703 = vld [vmem:[%s1851 + $0x818] sm:$0xf]
        %v2704 = vld [vmem:[%s1851 + $0x81c] sm:$0xff]
        %v2705 = vld [vmem:[%s1851 + $0x824] sm:$0xf]
        %v2706 = vld [vmem:[%s1851 + $0x828] sm:$0xff]
        %v2707 = vld [vmem:[%s1851 + $0x830] sm:$0xf]
        %v2708 = vld [vmem:[%s1851 + $0x834] sm:$0xff]
        %v2709 = vld [vmem:[%s1851 + $0x83c] sm:$0xf]
        %v2710 = vld [vmem:[%s1851 + $0x840] sm:$0xff]
        %v2711 = vld [vmem:[%s1851 + $0x848] sm:$0xf]
        %v2712 = vld [vmem:[%s1851 + $0x84c] sm:$0xff]
        %v2713 = vld [vmem:[%s1851 + $0x854] sm:$0xf]
        %v2714 = vld [vmem:[%s1851 + $0x858] sm:$0xff]
        %v2715 = vld [vmem:[%s1851 + $0x860] sm:$0xf]
        %v2716 = vld [vmem:[%s1851 + $0x864] sm:$0xff]
        %v2717 = vld [vmem:[%s1851 + $0x86c] sm:$0xf]
        %v2718 = vld [vmem:[%s1851 + $0x870] sm:$0xff]
        %v2719 = vld [vmem:[%s1851 + $0x878] sm:$0xf]
        %v2720 = vld [vmem:[%s1851 + $0x87c] sm:$0xff]
        %v2721 = vld [vmem:[%s1851 + $0x884] sm:$0xf]
        %v2722 = vld [vmem:[%s1851 + $0x888] sm:$0xff]
        %v2723 = vld [vmem:[%s1851 + $0x890] sm:$0xf]
        %v2724 = vld [vmem:[%s1851 + $0x894] sm:$0xff]
        %v2725 = vld [vmem:[%s1851 + $0x89c] sm:$0xf]
        %v2726 = vld [vmem:[%s1851 + $0x8a0] sm:$0xff]
        %v2727 = vld [vmem:[%s1851 + $0x8a8] sm:$0xf]
        %v2728 = vld [vmem:[%s1851 + $0x8ac] sm:$0xff]
        %v2729 = vld [vmem:[%s1851 + $0x8b4] sm:$0xf]
        %v2730 = vld [vmem:[%s1851 + $0x8b8] sm:$0xff]
        %v2731 = vld [vmem:[%s1851 + $0x8c0] sm:$0xf]
        %v2732 = vld [vmem:[%s1851 + $0x8c4] sm:$0xff]
        %v2733 = vld [vmem:[%s1851 + $0x8cc] sm:$0xf]
        %v2734 = vld [vmem:[%s1851 + $0x8d0] sm:$0xff]
        %v2735 = vld [vmem:[%s1851 + $0x8d8] sm:$0xf]
        %v2736 = vld [vmem:[%s1851 + $0x8dc] sm:$0xff]
        %v2737 = vld [vmem:[%s1851 + $0x8e4] sm:$0xf]
        %v2738 = vld [vmem:[%s1851 + $0x8e8] sm:$0xff]
        %v2739 = vld [vmem:[%s1851 + $0x8f0] sm:$0xf]
        %v2740 = vld [vmem:[%s1851 + $0x8f4] sm:$0xff]
        %v2741 = vld [vmem:[%s1851 + $0x8fc] sm:$0xf]
        %v2742 = vld [vmem:[%s1851 + $0x900] sm:$0xff]
        %v2743 = vld [vmem:[%s1851 + $0x908] sm:$0xf]
        %v2744 = vld [vmem:[%s1851 + $0x90c] sm:$0xff]
        %v2745 = vld [vmem:[%s1851 + $0x914] sm:$0xf]
        %v2746 = vld [vmem:[%s1851 + $0x918] sm:$0xff]
        %v2747 = vld [vmem:[%s1851 + $0x920] sm:$0xf]
        %v2748 = vld [vmem:[%s1851 + $0x924] sm:$0xff]
        %v2749 = vld [vmem:[%s1851 + $0x92c] sm:$0xf]
        %v2750 = vld [vmem:[%s1851 + $0x930] sm:$0xff]
        %v2751 = vld [vmem:[%s1851 + $0x938] sm:$0xf]
        %v2752 = vld [vmem:[%s1851 + $0x93c] sm:$0xff]
        %v2753 = vld [vmem:[%s1851 + $0x944] sm:$0xf]
        %v2754 = vld [vmem:[%s1851 + $0x948] sm:$0xff]
        %v2755 = vld [vmem:[%s1851 + $0x950] sm:$0xf]
        %v2756 = vld [vmem:[%s1851 + $0x954] sm:$0xff]
        %v2757 = vld [vmem:[%s1851 + $0x95c] sm:$0xf]
        %v2758 = vld [vmem:[%s1851 + $0x960] sm:$0xff]
        %v2759 = vld [vmem:[%s1851 + $0x968] sm:$0xf]
        %v2760 = vld [vmem:[%s1851 + $0x96c] sm:$0xff]
        %v2761 = vld [vmem:[%s1851 + $0x974] sm:$0xf]
        %v2762 = vld [vmem:[%s1851 + $0x978] sm:$0xff]
        %v2763 = vld [vmem:[%s1851 + $0x980] sm:$0xf]
        %v2764 = vld [vmem:[%s1851 + $0x984] sm:$0xff]
        %v2765 = vld [vmem:[%s1851 + $0x98c] sm:$0xf]
        %v2766 = vld [vmem:[%s1851 + $0x990] sm:$0xff]
        %v2767 = vld [vmem:[%s1851 + $0x998] sm:$0xf]
        %v2768 = vld [vmem:[%s1851 + $0x99c] sm:$0xff]
        %v2769 = vld [vmem:[%s1851 + $0x9a4] sm:$0xf]
        %v2770 = vld [vmem:[%s1851 + $0x9a8] sm:$0xff]
        %v2771 = vld [vmem:[%s1851 + $0x9b0] sm:$0xf]
        %v2772 = vld [vmem:[%s1851 + $0x9b4] sm:$0xff]
        %v2773 = vld [vmem:[%s1851 + $0x9bc] sm:$0xf]
        %v2774 = vld [vmem:[%s1851 + $0x9c0] sm:$0xff]
        %v2775 = vld [vmem:[%s1851 + $0x9c8] sm:$0xf]
        %v2776 = vld [vmem:[%s1851 + $0x9cc] sm:$0xff]
        %v2777 = vld [vmem:[%s1851 + $0x9d4] sm:$0xf]
        %v2778 = vld [vmem:[%s1851 + $0x9d8] sm:$0xff]
        %v2779 = vld [vmem:[%s1851 + $0x9e0] sm:$0xf]
        %v2780 = vld [vmem:[%s1851 + $0x9e4] sm:$0xff]
        %v2781 = vld [vmem:[%s1851 + $0x9ec] sm:$0xf]
        %v2782 = vld [vmem:[%s1851 + $0x9f0] sm:$0xff]
        %v2783 = vld [vmem:[%s1851 + $0x9f8] sm:$0xf]
        %v2784 = vld [vmem:[%s1851 + $0x9fc] sm:$0xff]
        %v2785 = vld [vmem:[%s1851 + $0xa04] sm:$0xf]
        %v2786 = vld [vmem:[%s1851 + $0xa08] sm:$0xff]
        %v2787 = vld [vmem:[%s1851 + $0xa10] sm:$0xf]
        %v2788 = vld [vmem:[%s1851 + $0xa14] sm:$0xff]
        %v2789 = vld [vmem:[%s1851 + $0xa1c] sm:$0xf]
        %v2790 = vld [vmem:[%s1851 + $0xa20] sm:$0xff]
        %v2791 = vld [vmem:[%s1851 + $0xa28] sm:$0xf]
        %v2792 = vld [vmem:[%s1851 + $0xa2c] sm:$0xff]
        %v2793 = vld [vmem:[%s1851 + $0xa34] sm:$0xf]
        %v2794 = vld [vmem:[%s1851 + $0xa38] sm:$0xff]
        %v2795 = vld [vmem:[%s1851 + $0xa40] sm:$0xf]
        %v2796 = vld [vmem:[%s1851 + $0xa44] sm:$0xff]
        %v2797 = vld [vmem:[%s1851 + $0xa4c] sm:$0xf]
        %v2798 = vld [vmem:[%s1851 + $0xa50] sm:$0xff]
        %v2799 = vld [vmem:[%s1851 + $0xa58] sm:$0xf]
        %v2800 = vld [vmem:[%s1851 + $0xa5c] sm:$0xff]
        %v2801 = vld [vmem:[%s1851 + $0xa64] sm:$0xf]
        %v2802 = vld [vmem:[%s1851 + $0xa68] sm:$0xff]
        %v2803 = vld [vmem:[%s1851 + $0xa70] sm:$0xf]
        %v2804 = vld [vmem:[%s1851 + $0xa74] sm:$0xff]
        %v2805 = vld [vmem:[%s1851 + $0xa7c] sm:$0xf]
        %v2806 = vld [vmem:[%s1851 + $0xa80] sm:$0xff]
        %v2807 = vld [vmem:[%s1851 + $0xa88] sm:$0xf]
        %v2808 = vld [vmem:[%s1851 + $0xa8c] sm:$0xff]
        %v2809 = vld [vmem:[%s1851 + $0xa94] sm:$0xf]
        %v2810 = vld [vmem:[%s1851 + $0xa98] sm:$0xff]
        %v2811 = vld [vmem:[%s1851 + $0xaa0] sm:$0xf]
        %v2812 = vld [vmem:[%s1851 + $0xaa4] sm:$0xff]
        %v2813 = vld [vmem:[%s1851 + $0xaac] sm:$0xf]
        %v2814 = vld [vmem:[%s1851 + $0xab0] sm:$0xff]
        %v2815 = vld [vmem:[%s1851 + $0xab8] sm:$0xf]
        %v2816 = vld [vmem:[%s1851 + $0xabc] sm:$0xff]
        %v2817 = vld [vmem:[%s1851 + $0xac4] sm:$0xf]
        %v2818 = vld [vmem:[%s1851 + $0xac8] sm:$0xff]
        %v2819 = vld [vmem:[%s1851 + $0xad0] sm:$0xf]
        %v2820 = vld [vmem:[%s1851 + $0xad4] sm:$0xff]
        %v2821 = vld [vmem:[%s1851 + $0xadc] sm:$0xf]
        %v2822 = vld [vmem:[%s1851 + $0xae0] sm:$0xff]
        %v2823 = vld [vmem:[%s1851 + $0xae8] sm:$0xf]
        %v2824 = vld [vmem:[%s1851 + $0xaec] sm:$0xff]
        %v2825 = vld [vmem:[%s1851 + $0xaf4] sm:$0xf]
        %v2826 = vld [vmem:[%s1851 + $0xaf8] sm:$0xff]
        %v2827 = vld [vmem:[%s1851 + $0xb00] sm:$0xf]
        %v2828 = vld [vmem:[%s1851 + $0xb04] sm:$0xff]
        %v2829 = vld [vmem:[%s1851 + $0xb0c] sm:$0xf]
        %v2830 = vld [vmem:[%s1851 + $0xb10] sm:$0xff]
        %v2831 = vld [vmem:[%s1851 + $0xb18] sm:$0xf]
        %v2832 = vld [vmem:[%s1851 + $0xb1c] sm:$0xff]
        %v2833 = vld [vmem:[%s1851 + $0xb24] sm:$0xf]
        %v2834 = vld [vmem:[%s1851 + $0xb28] sm:$0xff]
        %v2835 = vld [vmem:[%s1851 + $0xb30] sm:$0xf]
        %v2836 = vld [vmem:[%s1851 + $0xb34] sm:$0xff]
        %v2837 = vld [vmem:[%s1851 + $0xb3c] sm:$0xf]
        %v2838 = vld [vmem:[%s1851 + $0xb40] sm:$0xff]
        %v2839 = vld [vmem:[%s1851 + $0xb48] sm:$0xf]
        %v2840 = vld [vmem:[%s1851 + $0xb4c] sm:$0xff]
        %v2841 = vld [vmem:[%s1851 + $0xb54] sm:$0xf]
        %v2842 = vld [vmem:[%s1851 + $0xb58] sm:$0xff]
        %v2843 = vld [vmem:[%s1851 + $0xb60] sm:$0xf]
        %v2844 = vld [vmem:[%s1851 + $0xb64] sm:$0xff]
        %v2845 = vld [vmem:[%s1851 + $0xb6c] sm:$0xf]
        %v2846 = vld [vmem:[%s1851 + $0xb70] sm:$0xff]
        %v2847 = vld [vmem:[%s1851 + $0xb78] sm:$0xf]
        %v2848 = vld [vmem:[%s1851 + $0xb7c] sm:$0xff]
        %v2849 = vld [vmem:[%s1851 + $0xb84] sm:$0xf]
        %v2850 = vld [vmem:[%s1851 + $0xb88] sm:$0xff]
        %v2851 = vld [vmem:[%s1851 + $0xb90] sm:$0xf]
        %v2852 = vld [vmem:[%s1851 + $0xb94] sm:$0xff]
        %v2853 = vld [vmem:[%s1851 + $0xb9c] sm:$0xf]
        %v2854 = vld [vmem:[%s1851 + $0xba0] sm:$0xff]
        %v2855 = vld [vmem:[%s1851 + $0xba8] sm:$0xf]
        %v2856 = vld [vmem:[%s1851 + $0xbac] sm:$0xff]
        %v2857 = vld [vmem:[%s1851 + $0xbb4] sm:$0xf]
        %v2858 = vld [vmem:[%s1851 + $0xbb8] sm:$0xff]
        %v2859 = vld [vmem:[%s1851 + $0xbc0] sm:$0xf]
        %v2860 = vld [vmem:[%s1851 + $0xbc4] sm:$0xff]
        %v2861 = vld [vmem:[%s1851 + $0xbcc] sm:$0xf]
        %v2862 = vld [vmem:[%s1851 + $0xbd0] sm:$0xff]
        %v2863 = vld [vmem:[%s1851 + $0xbd8] sm:$0xf]
        %v2864 = vld [vmem:[%s1851 + $0xbdc] sm:$0xff]
        %v2865 = vld [vmem:[%s1851 + $0xbe4] sm:$0xf]
        %v2866 = vld [vmem:[%s1851 + $0xbe8] sm:$0xff]
        %v2867 = vld [vmem:[%s1851 + $0xbf0] sm:$0xf]
        %v2868 = vld [vmem:[%s1851 + $0xbf4] sm:$0xff]
        %v2869 = vld [vmem:[%s1851 + $0xbfc] sm:$0xf]
        %v2870 = vld [vmem:[%s1851 + $0xc00] sm:$0xff]
        %v2871 = vld [vmem:[%s1851 + $0xc08] sm:$0xf]
        %v2872 = vld [vmem:[%s1851 + $0xc0c] sm:$0xff]
        %v2873 = vld [vmem:[%s1851 + $0xc14] sm:$0xf]
        %v2874 = vld [vmem:[%s1851 + $0xc18] sm:$0xff]
        %v2875 = vld [vmem:[%s1851 + $0xc20] sm:$0xf]
        %v2876 = vld [vmem:[%s1851 + $0xc24] sm:$0xff]
        %v2877 = vld [vmem:[%s1851 + $0xc2c] sm:$0xf]
        %v2878 = vld [vmem:[%s1851 + $0xc30] sm:$0xff]
        %v2879 = vld [vmem:[%s1851 + $0xc38] sm:$0xf]
        %v2880 = vld [vmem:[%s1851 + $0xc3c] sm:$0xff]
        %v2881 = vld [vmem:[%s1851 + $0xc44] sm:$0xf]
        %v2882 = vld [vmem:[%s1851 + $0xc48] sm:$0xff]
        %v2883 = vld [vmem:[%s1851 + $0xc50] sm:$0xf]
        %v2884 = vld [vmem:[%s1851 + $0xc54] sm:$0xff]
        %v2885 = vld [vmem:[%s1851 + $0xc5c] sm:$0xf]
        %v2886 = vld [vmem:[%s1851 + $0xc60] sm:$0xff]
        %v2887 = vld [vmem:[%s1851 + $0xc68] sm:$0xf]
        %v2888 = vld [vmem:[%s1851 + $0xc6c] sm:$0xff]
        %v2889 = vld [vmem:[%s1851 + $0xc74] sm:$0xf]
        %v2890 = vld [vmem:[%s1851 + $0xc78] sm:$0xff]
        %v2891 = vld [vmem:[%s1851 + $0xc80] sm:$0xf]
        %v2892 = vld [vmem:[%s1851 + $0xc84] sm:$0xff]
        %v2893 = vld [vmem:[%s1851 + $0xc8c] sm:$0xf]
        %v2894 = vld [vmem:[%s1851 + $0xc90] sm:$0xff]
        %v2895 = vld [vmem:[%s1851 + $0xc98] sm:$0xf]
        %v2896 = vld [vmem:[%s1851 + $0xc9c] sm:$0xff]
        %v2897 = vld [vmem:[%s1851 + $0xca4] sm:$0xf]
        %v2898 = vld [vmem:[%s1851 + $0xca8] sm:$0xff]
        %v2899 = vld [vmem:[%s1851 + $0xcb0] sm:$0xf]
        %v2900 = vld [vmem:[%s1851 + $0xcb4] sm:$0xff]
        %v2901 = vld [vmem:[%s1851 + $0xcbc] sm:$0xf]
        %v2902 = vld [vmem:[%s1851 + $0xcc0] sm:$0xff]
        %v2903 = vld [vmem:[%s1851 + $0xcc8] sm:$0xf]
        %v2904 = vld [vmem:[%s1851 + $0xccc] sm:$0xff]
        %v2905 = vld [vmem:[%s1851 + $0xcd4] sm:$0xf]
        %v2906 = vld [vmem:[%s1851 + $0xcd8] sm:$0xff]
        %v2907 = vld [vmem:[%s1851 + $0xce0] sm:$0xf]
        %v2908 = vld [vmem:[%s1851 + $0xce4] sm:$0xff]
        %v2909 = vld [vmem:[%s1851 + $0xcec] sm:$0xf]
        %v2910 = vld [vmem:[%s1851 + $0xcf0] sm:$0xff]
        %v2911 = vld [vmem:[%s1851 + $0xcf8] sm:$0xf]
        %v2912 = vld [vmem:[%s1851 + $0xcfc] sm:$0xff]
        %v2913 = vld [vmem:[%s1851 + $0xd04] sm:$0xf]
        %v2914 = vld [vmem:[%s1851 + $0xd08] sm:$0xff]
        %v2915 = vld [vmem:[%s1851 + $0xd10] sm:$0xf]
        %v2916 = vld [vmem:[%s1851 + $0xd14] sm:$0xff]
        %v2917 = vld [vmem:[%s1851 + $0xd1c] sm:$0xf]
        %v2918 = vld [vmem:[%s1851 + $0xd20] sm:$0xff]
        %v2919 = vld [vmem:[%s1851 + $0xd28] sm:$0xf]
        %v2920 = vld [vmem:[%s1851 + $0xd2c] sm:$0xff]
        %v2921 = vld [vmem:[%s1851 + $0xd34] sm:$0xf]
        %v2922 = vld [vmem:[%s1851 + $0xd38] sm:$0xff]
        %v2923 = vld [vmem:[%s1851 + $0xd40] sm:$0xf]
        %v2924 = vld [vmem:[%s1851 + $0xd44] sm:$0xff]
        %v2925 = vld [vmem:[%s1851 + $0xd4c] sm:$0xf]
        %v2926 = vld [vmem:[%s1851 + $0xd50] sm:$0xff]
        %v2927 = vld [vmem:[%s1851 + $0xd58] sm:$0xf]
        %v2928 = vld [vmem:[%s1851 + $0xd5c] sm:$0xff]
        %v2929 = vld [vmem:[%s1851 + $0xd64] sm:$0xf]
        %v2930 = vld [vmem:[%s1851 + $0xd68] sm:$0xff]
        %v2931 = vld [vmem:[%s1851 + $0xd70] sm:$0xf]
        %v2932 = vld [vmem:[%s1851 + $0xd74] sm:$0xff]
        %v2933 = vld [vmem:[%s1851 + $0xd7c] sm:$0xf]
        %v2934 = vld [vmem:[%s1851 + $0xd80] sm:$0xff]
        %v2935 = vld [vmem:[%s1851 + $0xd88] sm:$0xf]
        %v2936 = vld [vmem:[%s1851 + $0xd8c] sm:$0xff]
        %v2937 = vld [vmem:[%s1851 + $0xd94] sm:$0xf]
        %v2938 = vld [vmem:[%s1851 + $0xd98] sm:$0xff]
        %v2939 = vld [vmem:[%s1851 + $0xda0] sm:$0xf]
        %v2940 = vld [vmem:[%s1851 + $0xda4] sm:$0xff]
        %v2941 = vld [vmem:[%s1851 + $0xdac] sm:$0xf]
        %v2942 = vld [vmem:[%s1851 + $0xdb0] sm:$0xff]
        %v2943 = vld [vmem:[%s1851 + $0xdb8] sm:$0xf]
        %v2944 = vld [vmem:[%s1851 + $0xdbc] sm:$0xff]
        %v2945 = vld [vmem:[%s1851 + $0xdc4] sm:$0xf]
        %v2946 = vld [vmem:[%s1851 + $0xdc8] sm:$0xff]
        %v2947 = vld [vmem:[%s1851 + $0xdd0] sm:$0xf]
        %v2948 = vld [vmem:[%s1851 + $0xdd4] sm:$0xff]
        %v2949 = vld [vmem:[%s1851 + $0xddc] sm:$0xf]
        %v2950 = vld [vmem:[%s1851 + $0xde0] sm:$0xff]
        %v2951 = vld [vmem:[%s1851 + $0xde8] sm:$0xf]
        %v2952 = vld [vmem:[%s1851 + $0xdec] sm:$0xff]
        %v2953 = vld [vmem:[%s1851 + $0xdf4] sm:$0xf]
        %v2954 = vld [vmem:[%s1851 + $0xdf8] sm:$0xff]
        %v2955 = vld [vmem:[%s1851 + $0xe00] sm:$0xf]
        %v2956 = vld [vmem:[%s1851 + $0xe04] sm:$0xff]
        %v2957 = vld [vmem:[%s1851 + $0xe0c] sm:$0xf]
        %v2958 = vld [vmem:[%s1851 + $0xe10] sm:$0xff]
        %v2959 = vld [vmem:[%s1851 + $0xe18] sm:$0xf]
        %v2960 = vld [vmem:[%s1851 + $0xe1c] sm:$0xff]
        %v2961 = vld [vmem:[%s1851 + $0xe24] sm:$0xf]
        %v2962 = vld [vmem:[%s1851 + $0xe28] sm:$0xff]
        %v2963 = vld [vmem:[%s1851 + $0xe30] sm:$0xf]
        %v2964 = vld [vmem:[%s1851 + $0xe34] sm:$0xff]
        %v2965 = vld [vmem:[%s1851 + $0xe3c] sm:$0xf]
        %v2966 = vld [vmem:[%s1851 + $0xe40] sm:$0xff]
        %v2967 = vld [vmem:[%s1851 + $0xe48] sm:$0xf]
        %v2968 = vld [vmem:[%s1851 + $0xe4c] sm:$0xff]
        %v2969 = vld [vmem:[%s1851 + $0xe54] sm:$0xf]
        %v2970 = vld [vmem:[%s1851 + $0xe58] sm:$0xff]
        %v2971 = vld [vmem:[%s1851 + $0xe60] sm:$0xf]
        %v2972 = vld [vmem:[%s1851 + $0xe64] sm:$0xff]
        %v2973 = vld [vmem:[%s1851 + $0xe6c] sm:$0xf]
        %v2974 = vld [vmem:[%s1851 + $0xe70] sm:$0xff]
        %v2975 = vld [vmem:[%s1851 + $0xe78] sm:$0xf]
        %v2976 = vld [vmem:[%s1851 + $0xe7c] sm:$0xff]
        %v2977 = vld [vmem:[%s1851 + $0xe84] sm:$0xf]
        %v2978 = vld [vmem:[%s1851 + $0xe88] sm:$0xff]
        %v2979 = vld [vmem:[%s1851 + $0xe90] sm:$0xf]
        %v2980 = vld [vmem:[%s1851 + $0xe94] sm:$0xff]
        %v2981 = vld [vmem:[%s1851 + $0xe9c] sm:$0xf]
        %v2982 = vld [vmem:[%s1851 + $0xea0] sm:$0xff]
        %v2983 = vld [vmem:[%s1851 + $0xea8] sm:$0xf]
        %v2984 = vld [vmem:[%s1851 + $0xeac] sm:$0xff]
        %v2985 = vld [vmem:[%s1851 + $0xeb4] sm:$0xf]
        %v2986 = vld [vmem:[%s1851 + $0xeb8] sm:$0xff]
        %v2987 = vld [vmem:[%s1851 + $0xec0] sm:$0xf]
        %v2988 = vld [vmem:[%s1851 + $0xec4] sm:$0xff]
        %v2989 = vld [vmem:[%s1851 + $0xecc] sm:$0xf]
        %v2990 = vld [vmem:[%s1851 + $0xed0] sm:$0xff]
        %v2991 = vld [vmem:[%s1851 + $0xed8] sm:$0xf]
        %v2992 = vld [vmem:[%s1851 + $0xedc] sm:$0xff]
        %v2993 = vld [vmem:[%s1851 + $0xee4] sm:$0xf]
        %v2994 = vld [vmem:[%s1851 + $0xee8] sm:$0xff]
        %v2995 = vld [vmem:[%s1851 + $0xef0] sm:$0xf]
        %v2996 = vld [vmem:[%s1851 + $0xef4] sm:$0xff]
        %v2997 = vld [vmem:[%s1851 + $0xefc] sm:$0xf]
        %v2998 = vld [vmem:[%s1851 + $0xf00] sm:$0xff]
        %v2999 = vld [vmem:[%s1851 + $0xf08] sm:$0xf]
        %v3000 = vld [vmem:[%s1851 + $0xf0c] sm:$0xff]
        %v3001 = vld [vmem:[%s1851 + $0xf14] sm:$0xf]
        %v3002 = vld [vmem:[%s1851 + $0xf18] sm:$0xff]
        %v3003 = vld [vmem:[%s1851 + $0xf20] sm:$0xf]
        %v3004 = vld [vmem:[%s1851 + $0xf24] sm:$0xff]
        %v3005 = vld [vmem:[%s1851 + $0xf2c] sm:$0xf]
        %v3006 = vld [vmem:[%s1851 + $0xf30] sm:$0xff]
        %v3007 = vld [vmem:[%s1851 + $0xf38] sm:$0xf]
        %v3008 = vld [vmem:[%s1851 + $0xf3c] sm:$0xff]
        %v3009 = vld [vmem:[%s1851 + $0xf44] sm:$0xf]
        %v3010 = vld [vmem:[%s1851 + $0xf48] sm:$0xff]
        %v3011 = vld [vmem:[%s1851 + $0xf50] sm:$0xf]
        %v3012 = vld [vmem:[%s1851 + $0xf54] sm:$0xff]
        %v3013 = vld [vmem:[%s1851 + $0xf5c] sm:$0xf]
        %v3014 = vld [vmem:[%s1851 + $0xf60] sm:$0xff]
        %v3015 = vld [vmem:[%s1851 + $0xf68] sm:$0xf]
        %v3016 = vld [vmem:[%s1851 + $0xf6c] sm:$0xff]
        %v3017 = vld [vmem:[%s1851 + $0xf74] sm:$0xf]
        %v3018 = vld [vmem:[%s1851 + $0xf78] sm:$0xff]
        %v3019 = vld [vmem:[%s1851 + $0xf80] sm:$0xf]
        %v3020 = vld [vmem:[%s1851 + $0xf84] sm:$0xff]
        %v3021 = vld [vmem:[%s1851 + $0xf8c] sm:$0xf]
        %v3022 = vld [vmem:[%s1851 + $0xf90] sm:$0xff]
        %v3023 = vld [vmem:[%s1851 + $0xf98] sm:$0xf]
        %v3024 = vld [vmem:[%s1851 + $0xf9c] sm:$0xff]
        %v3025 = vld [vmem:[%s1851 + $0xfa4] sm:$0xf]
        %v3026 = vld [vmem:[%s1851 + $0xfa8] sm:$0xff]
        %v3027 = vld [vmem:[%s1851 + $0xfb0] sm:$0xf]
        %v3028 = vld [vmem:[%s1851 + $0xfb4] sm:$0xff]
        %v3029 = vld [vmem:[%s1851 + $0xfbc] sm:$0xf]
        %v3030 = vld [vmem:[%s1851 + $0xfc0] sm:$0xff]
        %v3031 = vld [vmem:[%s1851 + $0xfc8] sm:$0xf]
        %v3032 = vld [vmem:[%s1851 + $0xfcc] sm:$0xff]
        %v3033 = vld [vmem:[%s1851 + $0xfd4] sm:$0xf]
        %v3034 = vld [vmem:[%s1851 + $0xfd8] sm:$0xff]
        %v3035 = vld [vmem:[%s1851 + $0xfe0] sm:$0xf]
        %v3036 = vld [vmem:[%s1851 + $0xfe4] sm:$0xff]
        %v3037 = vld [vmem:[%s1851 + $0xfec] sm:$0xf]
        %v3038 = vld [vmem:[%s1851 + $0xff0] sm:$0xff]
        %v3039 = vld [vmem:[%s1851 + $0xff8] sm:$0xf]
        %v3040 = vld [vmem:[%s1851 + $0xffc] sm:$0xff]
        %v3041 = vld [vmem:[%s1851 + $0x1004] sm:$0xf]
        %v3042 = vld [vmem:[%s1851 + $0x1008] sm:$0xff]
        %v3043 = vld [vmem:[%s1851 + $0x1010] sm:$0xf]
        %v3044 = vld [vmem:[%s1851 + $0x1014] sm:$0xff]
        %v3045 = vld [vmem:[%s1851 + $0x101c] sm:$0xf]
        %v3046 = vld [vmem:[%s1851 + $0x1020] sm:$0xff]
        %v3047 = vld [vmem:[%s1851 + $0x1028] sm:$0xf]
        %v3048 = vld [vmem:[%s1851 + $0x102c] sm:$0xff]
        %v3049 = vld [vmem:[%s1851 + $0x1034] sm:$0xf]
        %v3050 = vld [vmem:[%s1851 + $0x1038] sm:$0xff]
        %v3051 = vld [vmem:[%s1851 + $0x1040] sm:$0xf]
        %v3052 = vld [vmem:[%s1851 + $0x1044] sm:$0xff]
        %v3053 = vld [vmem:[%s1851 + $0x104c] sm:$0xf]
        %v3054 = vld [vmem:[%s1851 + $0x1050] sm:$0xff]
        %v3055 = vld [vmem:[%s1851 + $0x1058] sm:$0xf]
        %v3056 = vld [vmem:[%s1851 + $0x105c] sm:$0xff]
        %v3057 = vld [vmem:[%s1851 + $0x1064] sm:$0xf]
        %v3058 = vld [vmem:[%s1851 + $0x1068] sm:$0xff]
        %v3059 = vld [vmem:[%s1851 + $0x1070] sm:$0xf]
        %v3060 = vld [vmem:[%s1851 + $0x1074] sm:$0xff]
        %v3061 = vld [vmem:[%s1851 + $0x107c] sm:$0xf]
        %v3062 = vld [vmem:[%s1851 + $0x1080] sm:$0xff]
        %v3063 = vld [vmem:[%s1851 + $0x1088] sm:$0xf]
        %v3064 = vld [vmem:[%s1851 + $0x108c] sm:$0xff]
        %v3065 = vld [vmem:[%s1851 + $0x1094] sm:$0xf]
        %v3066 = vld [vmem:[%s1851 + $0x1098] sm:$0xff]
        %v3067 = vld [vmem:[%s1851 + $0x10a0] sm:$0xf]
        %v3068 = vld [vmem:[%s1851 + $0x10a4] sm:$0xff]
        %v3069 = vld [vmem:[%s1851 + $0x10ac] sm:$0xf]
        %v3070 = vld [vmem:[%s1851 + $0x10b0] sm:$0xff]
        %v3071 = vld [vmem:[%s1851 + $0x10b8] sm:$0xf]
        %v3072 = vld [vmem:[%s1851 + $0x10bc] sm:$0xff]
        %v3073 = vld [vmem:[%s1851 + $0x10c4] sm:$0xf]
        %v3074 = vld [vmem:[%s1851 + $0x10c8] sm:$0xff]
        %v3075 = vld [vmem:[%s1851 + $0x10d0] sm:$0xf]
        %v3076 = vld [vmem:[%s1851 + $0x10d4] sm:$0xff]
        %v3077 = vld [vmem:[%s1851 + $0x10dc] sm:$0xf]
        %v3078 = vld [vmem:[%s1851 + $0x10e0] sm:$0xff]
        %v3079 = vld [vmem:[%s1851 + $0x10e8] sm:$0xf]
        %v3080 = vld [vmem:[%s1851 + $0x10ec] sm:$0xff]
        %v3081 = vld [vmem:[%s1851 + $0x10f4] sm:$0xf]
        %v3082 = vld [vmem:[%s1851 + $0x10f8] sm:$0xff]
        %v3083 = vld [vmem:[%s1851 + $0x1100] sm:$0xf]
        %v3084 = vld [vmem:[%s1851 + $0x1104] sm:$0xff]
        %v3085 = vld [vmem:[%s1851 + $0x110c] sm:$0xf]
        %v3086 = vld [vmem:[%s1851 + $0x1110] sm:$0xff]
        %v3087 = vld [vmem:[%s1851 + $0x1118] sm:$0xf]
        %v3088 = vld [vmem:[%s1851 + $0x111c] sm:$0xff]
        %v3089 = vld [vmem:[%s1851 + $0x1124] sm:$0xf]
        %v3090 = vld [vmem:[%s1851 + $0x1128] sm:$0xff]
        %v3091 = vld [vmem:[%s1851 + $0x1130] sm:$0xf]
        %v3092 = vld [vmem:[%s1851 + $0x1134] sm:$0xff]
        %v3093 = vld [vmem:[%s1851 + $0x113c] sm:$0xf]
        %v3094 = vld [vmem:[%s1851 + $0x1140] sm:$0xff]
        %v3095 = vld [vmem:[%s1851 + $0x1148] sm:$0xf]
        %v3096 = vld [vmem:[%s1851 + $0x114c] sm:$0xff]
        %v3097 = vld [vmem:[%s1851 + $0x1154] sm:$0xf]
        %v3098 = vld [vmem:[%s1851 + $0x1158] sm:$0xff]
        %v3099 = vld [vmem:[%s1851 + $0x1160] sm:$0xf]
        %v3100 = vld [vmem:[%s1851 + $0x1164] sm:$0xff]
        %v3101 = vld [vmem:[%s1851 + $0x116c] sm:$0xf]
        %v3102 = vld [vmem:[%s1851 + $0x1170] sm:$0xff]
        %v3103 = vld [vmem:[%s1851 + $0x1178] sm:$0xf]
        %v3104 = vld [vmem:[%s1851 + $0x117c] sm:$0xff]
        %v3105 = vld [vmem:[%s1851 + $0x1184] sm:$0xf]
        %v3106 = vld [vmem:[%s1851 + $0x1188] sm:$0xff]
        %v3107 = vld [vmem:[%s1851 + $0x1190] sm:$0xf]
        %v3108 = vld [vmem:[%s1851 + $0x1194] sm:$0xff]
        %v3109 = vld [vmem:[%s1851 + $0x119c] sm:$0xf]
        %v3110 = vld [vmem:[%s1851 + $0x11a0] sm:$0xff]
        %v3111 = vld [vmem:[%s1851 + $0x11a8] sm:$0xf]
        %v3112 = vld [vmem:[%s1851 + $0x11ac] sm:$0xff]
        %v3113 = vld [vmem:[%s1851 + $0x11b4] sm:$0xf]
        %v3114 = vld [vmem:[%s1851 + $0x11b8] sm:$0xff]
        %v3115 = vld [vmem:[%s1851 + $0x11c0] sm:$0xf]
        %v3116 = vld [vmem:[%s1851 + $0x11c4] sm:$0xff]
        %v3117 = vld [vmem:[%s1851 + $0x11cc] sm:$0xf]
        %v3118 = vld [vmem:[%s1851 + $0x11d0] sm:$0xff]
        %v3119 = vld [vmem:[%s1851 + $0x11d8] sm:$0xf]
        %v3120 = vld [vmem:[%s1851 + $0x11dc] sm:$0xff]
        %v3121 = vld [vmem:[%s1851 + $0x11e4] sm:$0xf]
        %v3122 = vld [vmem:[%s1851 + $0x11e8] sm:$0xff]
        %v3123 = vld [vmem:[%s1851 + $0x11f0] sm:$0xf]
        %v3124 = vld [vmem:[%s1851 + $0x11f4] sm:$0xff]
        %v3125 = vld [vmem:[%s1851 + $0x11fc] sm:$0xf]
        %v3126 = vld [vmem:[%s1851 + $0x1200] sm:$0xff]
        %v3127 = vld [vmem:[%s1851 + $0x1208] sm:$0xf]
        %v3128 = vld [vmem:[%s1851 + $0x120c] sm:$0xff]
        %v3129 = vld [vmem:[%s1851 + $0x1214] sm:$0xf]
        %v3130 = vld [vmem:[%s1851 + $0x1218] sm:$0xff]
        %v3131 = vld [vmem:[%s1851 + $0x1220] sm:$0xf]
        %v3132 = vld [vmem:[%s1851 + $0x1224] sm:$0xff]
        %v3133 = vld [vmem:[%s1851 + $0x122c] sm:$0xf]
        %v3134 = vld [vmem:[%s1851 + $0x1230] sm:$0xff]
        %v3135 = vld [vmem:[%s1851 + $0x1238] sm:$0xf]
        %v3136 = vld [vmem:[%s1851 + $0x123c] sm:$0xff]
        %v3137 = vld [vmem:[%s1851 + $0x1244] sm:$0xf]
        %v3138 = vld [vmem:[%s1851 + $0x1248] sm:$0xff]
        %v3139 = vld [vmem:[%s1851 + $0x1250] sm:$0xf]
        %v3140 = vld [vmem:[%s1851 + $0x1254] sm:$0xff]
        %v3141 = vld [vmem:[%s1851 + $0x125c] sm:$0xf]
        %v3142 = vld [vmem:[%s1851 + $0x1260] sm:$0xff]
        %v3143 = vld [vmem:[%s1851 + $0x1268] sm:$0xf]
        %v3144 = vld [vmem:[%s1851 + $0x126c] sm:$0xff]
        %v3145 = vld [vmem:[%s1851 + $0x1274] sm:$0xf]
        %v3146 = vld [vmem:[%s1851 + $0x1278] sm:$0xff]
        %v3147 = vld [vmem:[%s1851 + $0x1280] sm:$0xf]
        %v3148 = vld [vmem:[%s1851 + $0x1284] sm:$0xff]
        %v3149 = vld [vmem:[%s1851 + $0x128c] sm:$0xf]
        %v3150 = vld [vmem:[%s1851 + $0x1290] sm:$0xff]
        %v3151 = vld [vmem:[%s1851 + $0x1298] sm:$0xf]
        %v3152 = vld [vmem:[%s1851 + $0x129c] sm:$0xff]
        %v3153 = vld [vmem:[%s1851 + $0x12a4] sm:$0xf]
        %v3154 = vld [vmem:[%s1851 + $0x12a8] sm:$0xff]
        %v3155 = vld [vmem:[%s1851 + $0x12b0] sm:$0xf]
        %v3156 = vld [vmem:[%s1851 + $0x12b4] sm:$0xff]
        %v3157 = vld [vmem:[%s1851 + $0x12bc] sm:$0xf]
        %v3958 = vunpack.c.l.b16 %v2358
        %v3959 = vunpack.c.h.b16 %v2358
        %v3960 = vunpack.c.l.b16 %v2359
        %v3961 = vunpack.c.l.b16 %v2360
        %v3962 = vunpack.c.h.b16 %v2360
        %v3963 = vunpack.c.l.b16 %v2361
        %v3964 = vunpack.c.l.b16 %v2362
        %v3965 = vunpack.c.h.b16 %v2362
        %v3966 = vunpack.c.l.b16 %v2363
        %v3967 = vunpack.c.l.b16 %v2364
        %v3968 = vunpack.c.h.b16 %v2364
        %v3969 = vunpack.c.l.b16 %v2365
        %v3970 = vunpack.c.l.b16 %v2366
        %v3971 = vunpack.c.h.b16 %v2366
        %v3972 = vunpack.c.l.b16 %v2367
        %v3973 = vunpack.c.l.b16 %v2368
        %v3974 = vunpack.c.h.b16 %v2368
        %v3975 = vunpack.c.l.b16 %v2369
        %v3976 = vunpack.c.l.b16 %v2370
        %v3977 = vunpack.c.h.b16 %v2370
        %v3978 = vunpack.c.l.b16 %v2371
        %v3979 = vunpack.c.l.b16 %v2372
        %v3980 = vunpack.c.h.b16 %v2372
        %v3981 = vunpack.c.l.b16 %v2373
        %v3982 = vunpack.c.l.b16 %v2374
        %v3983 = vunpack.c.h.b16 %v2374
        %v3984 = vunpack.c.l.b16 %v2375
        %v3985 = vunpack.c.l.b16 %v2376
        %v3986 = vunpack.c.h.b16 %v2376
        %v3987 = vunpack.c.l.b16 %v2377
        %v3988 = vunpack.c.l.b16 %v2378
        %v3989 = vunpack.c.h.b16 %v2378
        %v3990 = vunpack.c.l.b16 %v2379
        %v3991 = vunpack.c.l.b16 %v2380
        %v3992 = vunpack.c.h.b16 %v2380
        %v3993 = vunpack.c.l.b16 %v2381
        %v3994 = vunpack.c.l.b16 %v2382
        %v3995 = vunpack.c.h.b16 %v2382
        %v3996 = vunpack.c.l.b16 %v2383
        %v3997 = vunpack.c.l.b16 %v2384
        %v3998 = vunpack.c.h.b16 %v2384
        %v3999 = vunpack.c.l.b16 %v2385
        %v4000 = vunpack.c.l.b16 %v2386
        %v4001 = vunpack.c.h.b16 %v2386
        %v4002 = vunpack.c.l.b16 %v2387
        %v4003 = vunpack.c.l.b16 %v2388
        %v4004 = vunpack.c.h.b16 %v2388
        %v4005 = vunpack.c.l.b16 %v2389
        %v4006 = vunpack.c.l.b16 %v2390
        %v4007 = vunpack.c.h.b16 %v2390
        %v4008 = vunpack.c.l.b16 %v2391
        %v4009 = vunpack.c.l.b16 %v2392
        %v4010 = vunpack.c.h.b16 %v2392
        %v4011 = vunpack.c.l.b16 %v2393
        %v4012 = vunpack.c.l.b16 %v2394
        %v4013 = vunpack.c.h.b16 %v2394
        %v4014 = vunpack.c.l.b16 %v2395
        %v4015 = vunpack.c.l.b16 %v2396
        %v4016 = vunpack.c.h.b16 %v2396
        %v4017 = vunpack.c.l.b16 %v2397
        %v4018 = vunpack.c.l.b16 %v2398
        %v4019 = vunpack.c.h.b16 %v2398
        %v4020 = vunpack.c.l.b16 %v2399
        %v4021 = vunpack.c.l.b16 %v2400
        %v4022 = vunpack.c.h.b16 %v2400
        %v4023 = vunpack.c.l.b16 %v2401
        %v4024 = vunpack.c.l.b16 %v2402
        %v4025 = vunpack.c.h.b16 %v2402
        %v4026 = vunpack.c.l.b16 %v2403
        %v4027 = vunpack.c.l.b16 %v2404
        %v4028 = vunpack.c.h.b16 %v2404
        %v4029 = vunpack.c.l.b16 %v2405
        %v4030 = vunpack.c.l.b16 %v2406
        %v4031 = vunpack.c.h.b16 %v2406
        %v4032 = vunpack.c.l.b16 %v2407
        %v4033 = vunpack.c.l.b16 %v2408
        %v4034 = vunpack.c.h.b16 %v2408
        %v4035 = vunpack.c.l.b16 %v2409
        %v4036 = vunpack.c.l.b16 %v2410
        %v4037 = vunpack.c.h.b16 %v2410
        %v4038 = vunpack.c.l.b16 %v2411
        %v4039 = vunpack.c.l.b16 %v2412
        %v4040 = vunpack.c.h.b16 %v2412
        %v4041 = vunpack.c.l.b16 %v2413
        %v4042 = vunpack.c.l.b16 %v2414
        %v4043 = vunpack.c.h.b16 %v2414
        %v4044 = vunpack.c.l.b16 %v2415
        %v4045 = vunpack.c.l.b16 %v2416
        %v4046 = vunpack.c.h.b16 %v2416
        %v4047 = vunpack.c.l.b16 %v2417
        %v4048 = vunpack.c.l.b16 %v2418
        %v4049 = vunpack.c.h.b16 %v2418
        %v4050 = vunpack.c.l.b16 %v2419
        %v4051 = vunpack.c.l.b16 %v2420
        %v4052 = vunpack.c.h.b16 %v2420
        %v4053 = vunpack.c.l.b16 %v2421
        %v4054 = vunpack.c.l.b16 %v2422
        %v4055 = vunpack.c.h.b16 %v2422
        %v4056 = vunpack.c.l.b16 %v2423
        %v4057 = vunpack.c.l.b16 %v2424
        %v4058 = vunpack.c.h.b16 %v2424
        %v4059 = vunpack.c.l.b16 %v2425
        %v4060 = vunpack.c.l.b16 %v2426
        %v4061 = vunpack.c.h.b16 %v2426
        %v4062 = vunpack.c.l.b16 %v2427
        %v4063 = vunpack.c.l.b16 %v2428
        %v4064 = vunpack.c.h.b16 %v2428
        %v4065 = vunpack.c.l.b16 %v2429
        %v4066 = vunpack.c.l.b16 %v2430
        %v4067 = vunpack.c.h.b16 %v2430
        %v4068 = vunpack.c.l.b16 %v2431
        %v4069 = vunpack.c.l.b16 %v2432
        %v4070 = vunpack.c.h.b16 %v2432
        %v4071 = vunpack.c.l.b16 %v2433
        %v4072 = vunpack.c.l.b16 %v2434
        %v4073 = vunpack.c.h.b16 %v2434
        %v4074 = vunpack.c.l.b16 %v2435
        %v4075 = vunpack.c.l.b16 %v2436
        %v4076 = vunpack.c.h.b16 %v2436
        %v4077 = vunpack.c.l.b16 %v2437
        %v4078 = vunpack.c.l.b16 %v2438
        %v4079 = vunpack.c.h.b16 %v2438
        %v4080 = vunpack.c.l.b16 %v2439
        %v4081 = vunpack.c.l.b16 %v2440
        %v4082 = vunpack.c.h.b16 %v2440
        %v4083 = vunpack.c.l.b16 %v2441
        %v4084 = vunpack.c.l.b16 %v2442
        %v4085 = vunpack.c.h.b16 %v2442
        %v4086 = vunpack.c.l.b16 %v2443
        %v4087 = vunpack.c.l.b16 %v2444
        %v4088 = vunpack.c.h.b16 %v2444
        %v4089 = vunpack.c.l.b16 %v2445
        %v4090 = vunpack.c.l.b16 %v2446
        %v4091 = vunpack.c.h.b16 %v2446
        %v4092 = vunpack.c.l.b16 %v2447
        %v4093 = vunpack.c.l.b16 %v2448
        %v4094 = vunpack.c.h.b16 %v2448
        %v4095 = vunpack.c.l.b16 %v2449
        %v4096 = vunpack.c.l.b16 %v2450
        %v4097 = vunpack.c.h.b16 %v2450
        %v4098 = vunpack.c.l.b16 %v2451
        %v4099 = vunpack.c.l.b16 %v2452
        %v4100 = vunpack.c.h.b16 %v2452
        %v4101 = vunpack.c.l.b16 %v2453
        %v4102 = vunpack.c.l.b16 %v2454
        %v4103 = vunpack.c.h.b16 %v2454
        %v4104 = vunpack.c.l.b16 %v2455
        %v4105 = vunpack.c.l.b16 %v2456
        %v4106 = vunpack.c.h.b16 %v2456
        %v4107 = vunpack.c.l.b16 %v2457
        %v4108 = vunpack.c.l.b16 %v2458
        %v4109 = vunpack.c.h.b16 %v2458
        %v4110 = vunpack.c.l.b16 %v2459
        %v4111 = vunpack.c.l.b16 %v2460
        %v4112 = vunpack.c.h.b16 %v2460
        %v4113 = vunpack.c.l.b16 %v2461
        %v4114 = vunpack.c.l.b16 %v2462
        %v4115 = vunpack.c.h.b16 %v2462
        %v4116 = vunpack.c.l.b16 %v2463
        %v4117 = vunpack.c.l.b16 %v2464
        %v4118 = vunpack.c.h.b16 %v2464
        %v4119 = vunpack.c.l.b16 %v2465
        %v4120 = vunpack.c.l.b16 %v2466
        %v4121 = vunpack.c.h.b16 %v2466
        %v4122 = vunpack.c.l.b16 %v2467
        %v4123 = vunpack.c.l.b16 %v2468
        %v4124 = vunpack.c.h.b16 %v2468
        %v4125 = vunpack.c.l.b16 %v2469
        %v4126 = vunpack.c.l.b16 %v2470
        %v4127 = vunpack.c.h.b16 %v2470
        %v4128 = vunpack.c.l.b16 %v2471
        %v4129 = vunpack.c.l.b16 %v2472
        %v4130 = vunpack.c.h.b16 %v2472
        %v4131 = vunpack.c.l.b16 %v2473
        %v4132 = vunpack.c.l.b16 %v2474
        %v4133 = vunpack.c.h.b16 %v2474
        %v4134 = vunpack.c.l.b16 %v2475
        %v4135 = vunpack.c.l.b16 %v2476
        %v4136 = vunpack.c.h.b16 %v2476
        %v4137 = vunpack.c.l.b16 %v2477
        %v4138 = vunpack.c.l.b16 %v2478
        %v4139 = vunpack.c.h.b16 %v2478
        %v4140 = vunpack.c.l.b16 %v2479
        %v4141 = vunpack.c.l.b16 %v2480
        %v4142 = vunpack.c.h.b16 %v2480
        %v4143 = vunpack.c.l.b16 %v2481
        %v4144 = vunpack.c.l.b16 %v2482
        %v4145 = vunpack.c.h.b16 %v2482
        %v4146 = vunpack.c.l.b16 %v2483
        %v4147 = vunpack.c.l.b16 %v2484
        %v4148 = vunpack.c.h.b16 %v2484
        %v4149 = vunpack.c.l.b16 %v2485
        %v4150 = vunpack.c.l.b16 %v2486
        %v4151 = vunpack.c.h.b16 %v2486
        %v4152 = vunpack.c.l.b16 %v2487
        %v4153 = vunpack.c.l.b16 %v2488
        %v4154 = vunpack.c.h.b16 %v2488
        %v4155 = vunpack.c.l.b16 %v2489
        %v4156 = vunpack.c.l.b16 %v2490
        %v4157 = vunpack.c.h.b16 %v2490
        %v4158 = vunpack.c.l.b16 %v2491
        %v4159 = vunpack.c.l.b16 %v2492
        %v4160 = vunpack.c.h.b16 %v2492
        %v4161 = vunpack.c.l.b16 %v2493
        %v4162 = vunpack.c.l.b16 %v2494
        %v4163 = vunpack.c.h.b16 %v2494
        %v4164 = vunpack.c.l.b16 %v2495
        %v4165 = vunpack.c.l.b16 %v2496
        %v4166 = vunpack.c.h.b16 %v2496
        %v4167 = vunpack.c.l.b16 %v2497
        %v4168 = vunpack.c.l.b16 %v2498
        %v4169 = vunpack.c.h.b16 %v2498
        %v4170 = vunpack.c.l.b16 %v2499
        %v4171 = vunpack.c.l.b16 %v2500
        %v4172 = vunpack.c.h.b16 %v2500
        %v4173 = vunpack.c.l.b16 %v2501
        %v4174 = vunpack.c.l.b16 %v2502
        %v4175 = vunpack.c.h.b16 %v2502
        %v4176 = vunpack.c.l.b16 %v2503
        %v4177 = vunpack.c.l.b16 %v2504
        %v4178 = vunpack.c.h.b16 %v2504
        %v4179 = vunpack.c.l.b16 %v2505
        %v4180 = vunpack.c.l.b16 %v2506
        %v4181 = vunpack.c.h.b16 %v2506
        %v4182 = vunpack.c.l.b16 %v2507
        %v4183 = vunpack.c.l.b16 %v2508
        %v4184 = vunpack.c.h.b16 %v2508
        %v4185 = vunpack.c.l.b16 %v2509
        %v4186 = vunpack.c.l.b16 %v2510
        %v4187 = vunpack.c.h.b16 %v2510
        %v4188 = vunpack.c.l.b16 %v2511
        %v4189 = vunpack.c.l.b16 %v2512
        %v4190 = vunpack.c.h.b16 %v2512
        %v4191 = vunpack.c.l.b16 %v2513
        %v4192 = vunpack.c.l.b16 %v2514
        %v4193 = vunpack.c.h.b16 %v2514
        %v4194 = vunpack.c.l.b16 %v2515
        %v4195 = vunpack.c.l.b16 %v2516
        %v4196 = vunpack.c.h.b16 %v2516
        %v4197 = vunpack.c.l.b16 %v2517
        %v4198 = vunpack.c.l.b16 %v2518
        %v4199 = vunpack.c.h.b16 %v2518
        %v4200 = vunpack.c.l.b16 %v2519
        %v4201 = vunpack.c.l.b16 %v2520
        %v4202 = vunpack.c.h.b16 %v2520
        %v4203 = vunpack.c.l.b16 %v2521
        %v4204 = vunpack.c.l.b16 %v2522
        %v4205 = vunpack.c.h.b16 %v2522
        %v4206 = vunpack.c.l.b16 %v2523
        %v4207 = vunpack.c.l.b16 %v2524
        %v4208 = vunpack.c.h.b16 %v2524
        %v4209 = vunpack.c.l.b16 %v2525
        %v4210 = vunpack.c.l.b16 %v2526
        %v4211 = vunpack.c.h.b16 %v2526
        %v4212 = vunpack.c.l.b16 %v2527
        %v4213 = vunpack.c.l.b16 %v2528
        %v4214 = vunpack.c.h.b16 %v2528
        %v4215 = vunpack.c.l.b16 %v2529
        %v4216 = vunpack.c.l.b16 %v2530
        %v4217 = vunpack.c.h.b16 %v2530
        %v4218 = vunpack.c.l.b16 %v2531
        %v4219 = vunpack.c.l.b16 %v2532
        %v4220 = vunpack.c.h.b16 %v2532
        %v4221 = vunpack.c.l.b16 %v2533
        %v4222 = vunpack.c.l.b16 %v2534
        %v4223 = vunpack.c.h.b16 %v2534
        %v4224 = vunpack.c.l.b16 %v2535
        %v4225 = vunpack.c.l.b16 %v2536
        %v4226 = vunpack.c.h.b16 %v2536
        %v4227 = vunpack.c.l.b16 %v2537
        %v4228 = vunpack.c.l.b16 %v2538
        %v4229 = vunpack.c.h.b16 %v2538
        %v4230 = vunpack.c.l.b16 %v2539
        %v4231 = vunpack.c.l.b16 %v2540
        %v4232 = vunpack.c.h.b16 %v2540
        %v4233 = vunpack.c.l.b16 %v2541
        %v4234 = vunpack.c.l.b16 %v2542
        %v4235 = vunpack.c.h.b16 %v2542
        %v4236 = vunpack.c.l.b16 %v2543
        %v4237 = vunpack.c.l.b16 %v2544
        %v4238 = vunpack.c.h.b16 %v2544
        %v4239 = vunpack.c.l.b16 %v2545
        %v4240 = vunpack.c.l.b16 %v2546
        %v4241 = vunpack.c.h.b16 %v2546
        %v4242 = vunpack.c.l.b16 %v2547
        %v4243 = vunpack.c.l.b16 %v2548
        %v4244 = vunpack.c.h.b16 %v2548
        %v4245 = vunpack.c.l.b16 %v2549
        %v4246 = vunpack.c.l.b16 %v2550
        %v4247 = vunpack.c.h.b16 %v2550
        %v4248 = vunpack.c.l.b16 %v2551
        %v4249 = vunpack.c.l.b16 %v2552
        %v4250 = vunpack.c.h.b16 %v2552
        %v4251 = vunpack.c.l.b16 %v2553
        %v4252 = vunpack.c.l.b16 %v2554
        %v4253 = vunpack.c.h.b16 %v2554
        %v4254 = vunpack.c.l.b16 %v2555
        %v4255 = vunpack.c.l.b16 %v2556
        %v4256 = vunpack.c.h.b16 %v2556
        %v4257 = vunpack.c.l.b16 %v2557
        %v4258 = vunpack.c.l.b16 %v2558
        %v4259 = vunpack.c.h.b16 %v2558
        %v4260 = vunpack.c.l.b16 %v2559
        %v4261 = vunpack.c.l.b16 %v2560
        %v4262 = vunpack.c.h.b16 %v2560
        %v4263 = vunpack.c.l.b16 %v2561
        %v4264 = vunpack.c.l.b16 %v2562
        %v4265 = vunpack.c.h.b16 %v2562
        %v4266 = vunpack.c.l.b16 %v2563
        %v4267 = vunpack.c.l.b16 %v2564
        %v4268 = vunpack.c.h.b16 %v2564
        %v4269 = vunpack.c.l.b16 %v2565
        %v4270 = vunpack.c.l.b16 %v2566
        %v4271 = vunpack.c.h.b16 %v2566
        %v4272 = vunpack.c.l.b16 %v2567
        %v4273 = vunpack.c.l.b16 %v2568
        %v4274 = vunpack.c.h.b16 %v2568
        %v4275 = vunpack.c.l.b16 %v2569
        %v4276 = vunpack.c.l.b16 %v2570
        %v4277 = vunpack.c.h.b16 %v2570
        %v4278 = vunpack.c.l.b16 %v2571
        %v4279 = vunpack.c.l.b16 %v2572
        %v4280 = vunpack.c.h.b16 %v2572
        %v4281 = vunpack.c.l.b16 %v2573
        %v4282 = vunpack.c.l.b16 %v2574
        %v4283 = vunpack.c.h.b16 %v2574
        %v4284 = vunpack.c.l.b16 %v2575
        %v4285 = vunpack.c.l.b16 %v2576
        %v4286 = vunpack.c.h.b16 %v2576
        %v4287 = vunpack.c.l.b16 %v2577
        %v4288 = vunpack.c.l.b16 %v2578
        %v4289 = vunpack.c.h.b16 %v2578
        %v4290 = vunpack.c.l.b16 %v2579
        %v4291 = vunpack.c.l.b16 %v2580
        %v4292 = vunpack.c.h.b16 %v2580
        %v4293 = vunpack.c.l.b16 %v2581
        %v4294 = vunpack.c.l.b16 %v2582
        %v4295 = vunpack.c.h.b16 %v2582
        %v4296 = vunpack.c.l.b16 %v2583
        %v4297 = vunpack.c.l.b16 %v2584
        %v4298 = vunpack.c.h.b16 %v2584
        %v4299 = vunpack.c.l.b16 %v2585
        %v4300 = vunpack.c.l.b16 %v2586
        %v4301 = vunpack.c.h.b16 %v2586
        %v4302 = vunpack.c.l.b16 %v2587
        %v4303 = vunpack.c.l.b16 %v2588
        %v4304 = vunpack.c.h.b16 %v2588
        %v4305 = vunpack.c.l.b16 %v2589
        %v4306 = vunpack.c.l.b16 %v2590
        %v4307 = vunpack.c.h.b16 %v2590
        %v4308 = vunpack.c.l.b16 %v2591
        %v4309 = vunpack.c.l.b16 %v2592
        %v4310 = vunpack.c.h.b16 %v2592
        %v4311 = vunpack.c.l.b16 %v2593
        %v4312 = vunpack.c.l.b16 %v2594
        %v4313 = vunpack.c.h.b16 %v2594
        %v4314 = vunpack.c.l.b16 %v2595
        %v4315 = vunpack.c.l.b16 %v2596
        %v4316 = vunpack.c.h.b16 %v2596
        %v4317 = vunpack.c.l.b16 %v2597
        %v4318 = vunpack.c.l.b16 %v2598
        %v4319 = vunpack.c.h.b16 %v2598
        %v4320 = vunpack.c.l.b16 %v2599
        %v4321 = vunpack.c.l.b16 %v2600
        %v4322 = vunpack.c.h.b16 %v2600
        %v4323 = vunpack.c.l.b16 %v2601
        %v4324 = vunpack.c.l.b16 %v2602
        %v4325 = vunpack.c.h.b16 %v2602
        %v4326 = vunpack.c.l.b16 %v2603
        %v4327 = vunpack.c.l.b16 %v2604
        %v4328 = vunpack.c.h.b16 %v2604
        %v4329 = vunpack.c.l.b16 %v2605
        %v4330 = vunpack.c.l.b16 %v2606
        %v4331 = vunpack.c.h.b16 %v2606
        %v4332 = vunpack.c.l.b16 %v2607
        %v4333 = vunpack.c.l.b16 %v2608
        %v4334 = vunpack.c.h.b16 %v2608
        %v4335 = vunpack.c.l.b16 %v2609
        %v4336 = vunpack.c.l.b16 %v2610
        %v4337 = vunpack.c.h.b16 %v2610
        %v4338 = vunpack.c.l.b16 %v2611
        %v4339 = vunpack.c.l.b16 %v2612
        %v4340 = vunpack.c.h.b16 %v2612
        %v4341 = vunpack.c.l.b16 %v2613
        %v4342 = vunpack.c.l.b16 %v2614
        %v4343 = vunpack.c.h.b16 %v2614
        %v4344 = vunpack.c.l.b16 %v2615
        %v4345 = vunpack.c.l.b16 %v2616
        %v4346 = vunpack.c.h.b16 %v2616
        %v4347 = vunpack.c.l.b16 %v2617
        %v4348 = vunpack.c.l.b16 %v2618
        %v4349 = vunpack.c.h.b16 %v2618
        %v4350 = vunpack.c.l.b16 %v2619
        %v4351 = vunpack.c.l.b16 %v2620
        %v4352 = vunpack.c.h.b16 %v2620
        %v4353 = vunpack.c.l.b16 %v2621
        %v4354 = vunpack.c.l.b16 %v2622
        %v4355 = vunpack.c.h.b16 %v2622
        %v4356 = vunpack.c.l.b16 %v2623
        %v4357 = vunpack.c.l.b16 %v2624
        %v4358 = vunpack.c.h.b16 %v2624
        %v4359 = vunpack.c.l.b16 %v2625
        %v4360 = vunpack.c.l.b16 %v2626
        %v4361 = vunpack.c.h.b16 %v2626
        %v4362 = vunpack.c.l.b16 %v2627
        %v4363 = vunpack.c.l.b16 %v2628
        %v4364 = vunpack.c.h.b16 %v2628
        %v4365 = vunpack.c.l.b16 %v2629
        %v4366 = vunpack.c.l.b16 %v2630
        %v4367 = vunpack.c.h.b16 %v2630
        %v4368 = vunpack.c.l.b16 %v2631
        %v4369 = vunpack.c.l.b16 %v2632
        %v4370 = vunpack.c.h.b16 %v2632
        %v4371 = vunpack.c.l.b16 %v2633
        %v4372 = vunpack.c.l.b16 %v2634
        %v4373 = vunpack.c.h.b16 %v2634
        %v4374 = vunpack.c.l.b16 %v2635
        %v4375 = vunpack.c.l.b16 %v2636
        %v4376 = vunpack.c.h.b16 %v2636
        %v4377 = vunpack.c.l.b16 %v2637
        %v4378 = vunpack.c.l.b16 %v2638
        %v4379 = vunpack.c.h.b16 %v2638
        %v4380 = vunpack.c.l.b16 %v2639
        %v4381 = vunpack.c.l.b16 %v2640
        %v4382 = vunpack.c.h.b16 %v2640
        %v4383 = vunpack.c.l.b16 %v2641
        %v4384 = vunpack.c.l.b16 %v2642
        %v4385 = vunpack.c.h.b16 %v2642
        %v4386 = vunpack.c.l.b16 %v2643
        %v4387 = vunpack.c.l.b16 %v2644
        %v4388 = vunpack.c.h.b16 %v2644
        %v4389 = vunpack.c.l.b16 %v2645
        %v4390 = vunpack.c.l.b16 %v2646
        %v4391 = vunpack.c.h.b16 %v2646
        %v4392 = vunpack.c.l.b16 %v2647
        %v4393 = vunpack.c.l.b16 %v2648
        %v4394 = vunpack.c.h.b16 %v2648
        %v4395 = vunpack.c.l.b16 %v2649
        %v4396 = vunpack.c.l.b16 %v2650
        %v4397 = vunpack.c.h.b16 %v2650
        %v4398 = vunpack.c.l.b16 %v2651
        %v4399 = vunpack.c.l.b16 %v2652
        %v4400 = vunpack.c.h.b16 %v2652
        %v4401 = vunpack.c.l.b16 %v2653
        %v4402 = vunpack.c.l.b16 %v2654
        %v4403 = vunpack.c.h.b16 %v2654
        %v4404 = vunpack.c.l.b16 %v2655
        %v4405 = vunpack.c.l.b16 %v2656
        %v4406 = vunpack.c.h.b16 %v2656
        %v4407 = vunpack.c.l.b16 %v2657
        %v4408 = vunpack.c.l.b16 %v2658
        %v4409 = vunpack.c.h.b16 %v2658
        %v4410 = vunpack.c.l.b16 %v2659
        %v4411 = vunpack.c.l.b16 %v2660
        %v4412 = vunpack.c.h.b16 %v2660
        %v4413 = vunpack.c.l.b16 %v2661
        %v4414 = vunpack.c.l.b16 %v2662
        %v4415 = vunpack.c.h.b16 %v2662
        %v4416 = vunpack.c.l.b16 %v2663
        %v4417 = vunpack.c.l.b16 %v2664
        %v4418 = vunpack.c.h.b16 %v2664
        %v4419 = vunpack.c.l.b16 %v2665
        %v4420 = vunpack.c.l.b16 %v2666
        %v4421 = vunpack.c.h.b16 %v2666
        %v4422 = vunpack.c.l.b16 %v2667
        %v4423 = vunpack.c.l.b16 %v2668
        %v4424 = vunpack.c.h.b16 %v2668
        %v4425 = vunpack.c.l.b16 %v2669
        %v4426 = vunpack.c.l.b16 %v2670
        %v4427 = vunpack.c.h.b16 %v2670
        %v4428 = vunpack.c.l.b16 %v2671
        %v4429 = vunpack.c.l.b16 %v2672
        %v4430 = vunpack.c.h.b16 %v2672
        %v4431 = vunpack.c.l.b16 %v2673
        %v4432 = vunpack.c.l.b16 %v2674
        %v4433 = vunpack.c.h.b16 %v2674
        %v4434 = vunpack.c.l.b16 %v2675
        %v4435 = vunpack.c.l.b16 %v2676
        %v4436 = vunpack.c.h.b16 %v2676
        %v4437 = vunpack.c.l.b16 %v2677
        %v4438 = vunpack.c.l.b16 %v2678
        %v4439 = vunpack.c.h.b16 %v2678
        %v4440 = vunpack.c.l.b16 %v2679
        %v4441 = vunpack.c.l.b16 %v2680
        %v4442 = vunpack.c.h.b16 %v2680
        %v4443 = vunpack.c.l.b16 %v2681
        %v4444 = vunpack.c.l.b16 %v2682
        %v4445 = vunpack.c.h.b16 %v2682
        %v4446 = vunpack.c.l.b16 %v2683
        %v4447 = vunpack.c.l.b16 %v2684
        %v4448 = vunpack.c.h.b16 %v2684
        %v4449 = vunpack.c.l.b16 %v2685
        %v4450 = vunpack.c.l.b16 %v2686
        %v4451 = vunpack.c.h.b16 %v2686
        %v4452 = vunpack.c.l.b16 %v2687
        %v4453 = vunpack.c.l.b16 %v2688
        %v4454 = vunpack.c.h.b16 %v2688
        %v4455 = vunpack.c.l.b16 %v2689
        %v4456 = vunpack.c.l.b16 %v2690
        %v4457 = vunpack.c.h.b16 %v2690
        %v4458 = vunpack.c.l.b16 %v2691
        %v4459 = vunpack.c.l.b16 %v2692
        %v4460 = vunpack.c.h.b16 %v2692
        %v4461 = vunpack.c.l.b16 %v2693
        %v4462 = vunpack.c.l.b16 %v2694
        %v4463 = vunpack.c.h.b16 %v2694
        %v4464 = vunpack.c.l.b16 %v2695
        %v4465 = vunpack.c.l.b16 %v2696
        %v4466 = vunpack.c.h.b16 %v2696
        %v4467 = vunpack.c.l.b16 %v2697
        %v4468 = vunpack.c.l.b16 %v2698
        %v4469 = vunpack.c.h.b16 %v2698
        %v4470 = vunpack.c.l.b16 %v2699
        %v4471 = vunpack.c.l.b16 %v2700
        %v4472 = vunpack.c.h.b16 %v2700
        %v4473 = vunpack.c.l.b16 %v2701
        %v4474 = vunpack.c.l.b16 %v2702
        %v4475 = vunpack.c.h.b16 %v2702
        %v4476 = vunpack.c.l.b16 %v2703
        %v4477 = vunpack.c.l.b16 %v2704
        %v4478 = vunpack.c.h.b16 %v2704
        %v4479 = vunpack.c.l.b16 %v2705
        %v4480 = vunpack.c.l.b16 %v2706
        %v4481 = vunpack.c.h.b16 %v2706
        %v4482 = vunpack.c.l.b16 %v2707
        %v4483 = vunpack.c.l.b16 %v2708
        %v4484 = vunpack.c.h.b16 %v2708
        %v4485 = vunpack.c.l.b16 %v2709
        %v4486 = vunpack.c.l.b16 %v2710
        %v4487 = vunpack.c.h.b16 %v2710
        %v4488 = vunpack.c.l.b16 %v2711
        %v4489 = vunpack.c.l.b16 %v2712
        %v4490 = vunpack.c.h.b16 %v2712
        %v4491 = vunpack.c.l.b16 %v2713
        %v4492 = vunpack.c.l.b16 %v2714
        %v4493 = vunpack.c.h.b16 %v2714
        %v4494 = vunpack.c.l.b16 %v2715
        %v4495 = vunpack.c.l.b16 %v2716
        %v4496 = vunpack.c.h.b16 %v2716
        %v4497 = vunpack.c.l.b16 %v2717
        %v4498 = vunpack.c.l.b16 %v2718
        %v4499 = vunpack.c.h.b16 %v2718
        %v4500 = vunpack.c.l.b16 %v2719
        %v4501 = vunpack.c.l.b16 %v2720
        %v4502 = vunpack.c.h.b16 %v2720
        %v4503 = vunpack.c.l.b16 %v2721
        %v4504 = vunpack.c.l.b16 %v2722
        %v4505 = vunpack.c.h.b16 %v2722
        %v4506 = vunpack.c.l.b16 %v2723
        %v4507 = vunpack.c.l.b16 %v2724
        %v4508 = vunpack.c.h.b16 %v2724
        %v4509 = vunpack.c.l.b16 %v2725
        %v4510 = vunpack.c.l.b16 %v2726
        %v4511 = vunpack.c.h.b16 %v2726
        %v4512 = vunpack.c.l.b16 %v2727
        %v4513 = vunpack.c.l.b16 %v2728
        %v4514 = vunpack.c.h.b16 %v2728
        %v4515 = vunpack.c.l.b16 %v2729
        %v4516 = vunpack.c.l.b16 %v2730
        %v4517 = vunpack.c.h.b16 %v2730
        %v4518 = vunpack.c.l.b16 %v2731
        %v4519 = vunpack.c.l.b16 %v2732
        %v4520 = vunpack.c.h.b16 %v2732
        %v4521 = vunpack.c.l.b16 %v2733
        %v4522 = vunpack.c.l.b16 %v2734
        %v4523 = vunpack.c.h.b16 %v2734
        %v4524 = vunpack.c.l.b16 %v2735
        %v4525 = vunpack.c.l.b16 %v2736
        %v4526 = vunpack.c.h.b16 %v2736
        %v4527 = vunpack.c.l.b16 %v2737
        %v4528 = vunpack.c.l.b16 %v2738
        %v4529 = vunpack.c.h.b16 %v2738
        %v4530 = vunpack.c.l.b16 %v2739
        %v4531 = vunpack.c.l.b16 %v2740
        %v4532 = vunpack.c.h.b16 %v2740
        %v4533 = vunpack.c.l.b16 %v2741
        %v4534 = vunpack.c.l.b16 %v2742
        %v4535 = vunpack.c.h.b16 %v2742
        %v4536 = vunpack.c.l.b16 %v2743
        %v4537 = vunpack.c.l.b16 %v2744
        %v4538 = vunpack.c.h.b16 %v2744
        %v4539 = vunpack.c.l.b16 %v2745
        %v4540 = vunpack.c.l.b16 %v2746
        %v4541 = vunpack.c.h.b16 %v2746
        %v4542 = vunpack.c.l.b16 %v2747
        %v4543 = vunpack.c.l.b16 %v2748
        %v4544 = vunpack.c.h.b16 %v2748
        %v4545 = vunpack.c.l.b16 %v2749
        %v4546 = vunpack.c.l.b16 %v2750
        %v4547 = vunpack.c.h.b16 %v2750
        %v4548 = vunpack.c.l.b16 %v2751
        %v4549 = vunpack.c.l.b16 %v2752
        %v4550 = vunpack.c.h.b16 %v2752
        %v4551 = vunpack.c.l.b16 %v2753
        %v4552 = vunpack.c.l.b16 %v2754
        %v4553 = vunpack.c.h.b16 %v2754
        %v4554 = vunpack.c.l.b16 %v2755
        %v4555 = vunpack.c.l.b16 %v2756
        %v4556 = vunpack.c.h.b16 %v2756
        %v4557 = vunpack.c.l.b16 %v2757
        %v4558 = vunpack.c.l.b16 %v2758
        %v4559 = vunpack.c.h.b16 %v2758
        %v4560 = vunpack.c.l.b16 %v2759
        %v4561 = vunpack.c.l.b16 %v2760
        %v4562 = vunpack.c.h.b16 %v2760
        %v4563 = vunpack.c.l.b16 %v2761
        %v4564 = vunpack.c.l.b16 %v2762
        %v4565 = vunpack.c.h.b16 %v2762
        %v4566 = vunpack.c.l.b16 %v2763
        %v4567 = vunpack.c.l.b16 %v2764
        %v4568 = vunpack.c.h.b16 %v2764
        %v4569 = vunpack.c.l.b16 %v2765
        %v4570 = vunpack.c.l.b16 %v2766
        %v4571 = vunpack.c.h.b16 %v2766
        %v4572 = vunpack.c.l.b16 %v2767
        %v4573 = vunpack.c.l.b16 %v2768
        %v4574 = vunpack.c.h.b16 %v2768
        %v4575 = vunpack.c.l.b16 %v2769
        %v4576 = vunpack.c.l.b16 %v2770
        %v4577 = vunpack.c.h.b16 %v2770
        %v4578 = vunpack.c.l.b16 %v2771
        %v4579 = vunpack.c.l.b16 %v2772
        %v4580 = vunpack.c.h.b16 %v2772
        %v4581 = vunpack.c.l.b16 %v2773
        %v4582 = vunpack.c.l.b16 %v2774
        %v4583 = vunpack.c.h.b16 %v2774
        %v4584 = vunpack.c.l.b16 %v2775
        %v4585 = vunpack.c.l.b16 %v2776
        %v4586 = vunpack.c.h.b16 %v2776
        %v4587 = vunpack.c.l.b16 %v2777
        %v4588 = vunpack.c.l.b16 %v2778
        %v4589 = vunpack.c.h.b16 %v2778
        %v4590 = vunpack.c.l.b16 %v2779
        %v4591 = vunpack.c.l.b16 %v2780
        %v4592 = vunpack.c.h.b16 %v2780
        %v4593 = vunpack.c.l.b16 %v2781
        %v4594 = vunpack.c.l.b16 %v2782
        %v4595 = vunpack.c.h.b16 %v2782
        %v4596 = vunpack.c.l.b16 %v2783
        %v4597 = vunpack.c.l.b16 %v2784
        %v4598 = vunpack.c.h.b16 %v2784
        %v4599 = vunpack.c.l.b16 %v2785
        %v4600 = vunpack.c.l.b16 %v2786
        %v4601 = vunpack.c.h.b16 %v2786
        %v4602 = vunpack.c.l.b16 %v2787
        %v4603 = vunpack.c.l.b16 %v2788
        %v4604 = vunpack.c.h.b16 %v2788
        %v4605 = vunpack.c.l.b16 %v2789
        %v4606 = vunpack.c.l.b16 %v2790
        %v4607 = vunpack.c.h.b16 %v2790
        %v4608 = vunpack.c.l.b16 %v2791
        %v4609 = vunpack.c.l.b16 %v2792
        %v4610 = vunpack.c.h.b16 %v2792
        %v4611 = vunpack.c.l.b16 %v2793
        %v4612 = vunpack.c.l.b16 %v2794
        %v4613 = vunpack.c.h.b16 %v2794
        %v4614 = vunpack.c.l.b16 %v2795
        %v4615 = vunpack.c.l.b16 %v2796
        %v4616 = vunpack.c.h.b16 %v2796
        %v4617 = vunpack.c.l.b16 %v2797
        %v4618 = vunpack.c.l.b16 %v2798
        %v4619 = vunpack.c.h.b16 %v2798
        %v4620 = vunpack.c.l.b16 %v2799
        %v4621 = vunpack.c.l.b16 %v2800
        %v4622 = vunpack.c.h.b16 %v2800
        %v4623 = vunpack.c.l.b16 %v2801
        %v4624 = vunpack.c.l.b16 %v2802
        %v4625 = vunpack.c.h.b16 %v2802
        %v4626 = vunpack.c.l.b16 %v2803
        %v4627 = vunpack.c.l.b16 %v2804
        %v4628 = vunpack.c.h.b16 %v2804
        %v4629 = vunpack.c.l.b16 %v2805
        %v4630 = vunpack.c.l.b16 %v2806
        %v4631 = vunpack.c.h.b16 %v2806
        %v4632 = vunpack.c.l.b16 %v2807
        %v4633 = vunpack.c.l.b16 %v2808
        %v4634 = vunpack.c.h.b16 %v2808
        %v4635 = vunpack.c.l.b16 %v2809
        %v4636 = vunpack.c.l.b16 %v2810
        %v4637 = vunpack.c.h.b16 %v2810
        %v4638 = vunpack.c.l.b16 %v2811
        %v4639 = vunpack.c.l.b16 %v2812
        %v4640 = vunpack.c.h.b16 %v2812
        %v4641 = vunpack.c.l.b16 %v2813
        %v4642 = vunpack.c.l.b16 %v2814
        %v4643 = vunpack.c.h.b16 %v2814
        %v4644 = vunpack.c.l.b16 %v2815
        %v4645 = vunpack.c.l.b16 %v2816
        %v4646 = vunpack.c.h.b16 %v2816
        %v4647 = vunpack.c.l.b16 %v2817
        %v4648 = vunpack.c.l.b16 %v2818
        %v4649 = vunpack.c.h.b16 %v2818
        %v4650 = vunpack.c.l.b16 %v2819
        %v4651 = vunpack.c.l.b16 %v2820
        %v4652 = vunpack.c.h.b16 %v2820
        %v4653 = vunpack.c.l.b16 %v2821
        %v4654 = vunpack.c.l.b16 %v2822
        %v4655 = vunpack.c.h.b16 %v2822
        %v4656 = vunpack.c.l.b16 %v2823
        %v4657 = vunpack.c.l.b16 %v2824
        %v4658 = vunpack.c.h.b16 %v2824
        %v4659 = vunpack.c.l.b16 %v2825
        %v4660 = vunpack.c.l.b16 %v2826
        %v4661 = vunpack.c.h.b16 %v2826
        %v4662 = vunpack.c.l.b16 %v2827
        %v4663 = vunpack.c.l.b16 %v2828
        %v4664 = vunpack.c.h.b16 %v2828
        %v4665 = vunpack.c.l.b16 %v2829
        %v4666 = vunpack.c.l.b16 %v2830
        %v4667 = vunpack.c.h.b16 %v2830
        %v4668 = vunpack.c.l.b16 %v2831
        %v4669 = vunpack.c.l.b16 %v2832
        %v4670 = vunpack.c.h.b16 %v2832
        %v4671 = vunpack.c.l.b16 %v2833
        %v4672 = vunpack.c.l.b16 %v2834
        %v4673 = vunpack.c.h.b16 %v2834
        %v4674 = vunpack.c.l.b16 %v2835
        %v4675 = vunpack.c.l.b16 %v2836
        %v4676 = vunpack.c.h.b16 %v2836
        %v4677 = vunpack.c.l.b16 %v2837
        %v4678 = vunpack.c.l.b16 %v2838
        %v4679 = vunpack.c.h.b16 %v2838
        %v4680 = vunpack.c.l.b16 %v2839
        %v4681 = vunpack.c.l.b16 %v2840
        %v4682 = vunpack.c.h.b16 %v2840
        %v4683 = vunpack.c.l.b16 %v2841
        %v4684 = vunpack.c.l.b16 %v2842
        %v4685 = vunpack.c.h.b16 %v2842
        %v4686 = vunpack.c.l.b16 %v2843
        %v4687 = vunpack.c.l.b16 %v2844
        %v4688 = vunpack.c.h.b16 %v2844
        %v4689 = vunpack.c.l.b16 %v2845
        %v4690 = vunpack.c.l.b16 %v2846
        %v4691 = vunpack.c.h.b16 %v2846
        %v4692 = vunpack.c.l.b16 %v2847
        %v4693 = vunpack.c.l.b16 %v2848
        %v4694 = vunpack.c.h.b16 %v2848
        %v4695 = vunpack.c.l.b16 %v2849
        %v4696 = vunpack.c.l.b16 %v2850
        %v4697 = vunpack.c.h.b16 %v2850
        %v4698 = vunpack.c.l.b16 %v2851
        %v4699 = vunpack.c.l.b16 %v2852
        %v4700 = vunpack.c.h.b16 %v2852
        %v4701 = vunpack.c.l.b16 %v2853
        %v4702 = vunpack.c.l.b16 %v2854
        %v4703 = vunpack.c.h.b16 %v2854
        %v4704 = vunpack.c.l.b16 %v2855
        %v4705 = vunpack.c.l.b16 %v2856
        %v4706 = vunpack.c.h.b16 %v2856
        %v4707 = vunpack.c.l.b16 %v2857
        %v4708 = vunpack.c.l.b16 %v2858
        %v4709 = vunpack.c.h.b16 %v2858
        %v4710 = vunpack.c.l.b16 %v2859
        %v4711 = vunpack.c.l.b16 %v2860
        %v4712 = vunpack.c.h.b16 %v2860
        %v4713 = vunpack.c.l.b16 %v2861
        %v4714 = vunpack.c.l.b16 %v2862
        %v4715 = vunpack.c.h.b16 %v2862
        %v4716 = vunpack.c.l.b16 %v2863
        %v4717 = vunpack.c.l.b16 %v2864
        %v4718 = vunpack.c.h.b16 %v2864
        %v4719 = vunpack.c.l.b16 %v2865
        %v4720 = vunpack.c.l.b16 %v2866
        %v4721 = vunpack.c.h.b16 %v2866
        %v4722 = vunpack.c.l.b16 %v2867
        %v4723 = vunpack.c.l.b16 %v2868
        %v4724 = vunpack.c.h.b16 %v2868
        %v4725 = vunpack.c.l.b16 %v2869
        %v4726 = vunpack.c.l.b16 %v2870
        %v4727 = vunpack.c.h.b16 %v2870
        %v4728 = vunpack.c.l.b16 %v2871
        %v4729 = vunpack.c.l.b16 %v2872
        %v4730 = vunpack.c.h.b16 %v2872
        %v4731 = vunpack.c.l.b16 %v2873
        %v4732 = vunpack.c.l.b16 %v2874
        %v4733 = vunpack.c.h.b16 %v2874
        %v4734 = vunpack.c.l.b16 %v2875
        %v4735 = vunpack.c.l.b16 %v2876
        %v4736 = vunpack.c.h.b16 %v2876
        %v4737 = vunpack.c.l.b16 %v2877
        %v4738 = vunpack.c.l.b16 %v2878
        %v4739 = vunpack.c.h.b16 %v2878
        %v4740 = vunpack.c.l.b16 %v2879
        %v4741 = vunpack.c.l.b16 %v2880
        %v4742 = vunpack.c.h.b16 %v2880
        %v4743 = vunpack.c.l.b16 %v2881
        %v4744 = vunpack.c.l.b16 %v2882
        %v4745 = vunpack.c.h.b16 %v2882
        %v4746 = vunpack.c.l.b16 %v2883
        %v4747 = vunpack.c.l.b16 %v2884
        %v4748 = vunpack.c.h.b16 %v2884
        %v4749 = vunpack.c.l.b16 %v2885
        %v4750 = vunpack.c.l.b16 %v2886
        %v4751 = vunpack.c.h.b16 %v2886
        %v4752 = vunpack.c.l.b16 %v2887
        %v4753 = vunpack.c.l.b16 %v2888
        %v4754 = vunpack.c.h.b16 %v2888
        %v4755 = vunpack.c.l.b16 %v2889
        %v4756 = vunpack.c.l.b16 %v2890
        %v4757 = vunpack.c.h.b16 %v2890
        %v4758 = vunpack.c.l.b16 %v2891
        %v4759 = vunpack.c.l.b16 %v2892
        %v4760 = vunpack.c.h.b16 %v2892
        %v4761 = vunpack.c.l.b16 %v2893
        %v4762 = vunpack.c.l.b16 %v2894
        %v4763 = vunpack.c.h.b16 %v2894
        %v4764 = vunpack.c.l.b16 %v2895
        %v4765 = vunpack.c.l.b16 %v2896
        %v4766 = vunpack.c.h.b16 %v2896
        %v4767 = vunpack.c.l.b16 %v2897
        %v4768 = vunpack.c.l.b16 %v2898
        %v4769 = vunpack.c.h.b16 %v2898
        %v4770 = vunpack.c.l.b16 %v2899
        %v4771 = vunpack.c.l.b16 %v2900
        %v4772 = vunpack.c.h.b16 %v2900
        %v4773 = vunpack.c.l.b16 %v2901
        %v4774 = vunpack.c.l.b16 %v2902
        %v4775 = vunpack.c.h.b16 %v2902
        %v4776 = vunpack.c.l.b16 %v2903
        %v4777 = vunpack.c.l.b16 %v2904
        %v4778 = vunpack.c.h.b16 %v2904
        %v4779 = vunpack.c.l.b16 %v2905
        %v4780 = vunpack.c.l.b16 %v2906
        %v4781 = vunpack.c.h.b16 %v2906
        %v4782 = vunpack.c.l.b16 %v2907
        %v4783 = vunpack.c.l.b16 %v2908
        %v4784 = vunpack.c.h.b16 %v2908
        %v4785 = vunpack.c.l.b16 %v2909
        %v4786 = vunpack.c.l.b16 %v2910
        %v4787 = vunpack.c.h.b16 %v2910
        %v4788 = vunpack.c.l.b16 %v2911
        %v4789 = vunpack.c.l.b16 %v2912
        %v4790 = vunpack.c.h.b16 %v2912
        %v4791 = vunpack.c.l.b16 %v2913
        %v4792 = vunpack.c.l.b16 %v2914
        %v4793 = vunpack.c.h.b16 %v2914
        %v4794 = vunpack.c.l.b16 %v2915
        %v4795 = vunpack.c.l.b16 %v2916
        %v4796 = vunpack.c.h.b16 %v2916
        %v4797 = vunpack.c.l.b16 %v2917
        %v4798 = vunpack.c.l.b16 %v2918
        %v4799 = vunpack.c.h.b16 %v2918
        %v4800 = vunpack.c.l.b16 %v2919
        %v4801 = vunpack.c.l.b16 %v2920
        %v4802 = vunpack.c.h.b16 %v2920
        %v4803 = vunpack.c.l.b16 %v2921
        %v4804 = vunpack.c.l.b16 %v2922
        %v4805 = vunpack.c.h.b16 %v2922
        %v4806 = vunpack.c.l.b16 %v2923
        %v4807 = vunpack.c.l.b16 %v2924
        %v4808 = vunpack.c.h.b16 %v2924
        %v4809 = vunpack.c.l.b16 %v2925
        %v4810 = vunpack.c.l.b16 %v2926
        %v4811 = vunpack.c.h.b16 %v2926
        %v4812 = vunpack.c.l.b16 %v2927
        %v4813 = vunpack.c.l.b16 %v2928
        %v4814 = vunpack.c.h.b16 %v2928
        %v4815 = vunpack.c.l.b16 %v2929
        %v4816 = vunpack.c.l.b16 %v2930
        %v4817 = vunpack.c.h.b16 %v2930
        %v4818 = vunpack.c.l.b16 %v2931
        %v4819 = vunpack.c.l.b16 %v2932
        %v4820 = vunpack.c.h.b16 %v2932
        %v4821 = vunpack.c.l.b16 %v2933
        %v4822 = vunpack.c.l.b16 %v2934
        %v4823 = vunpack.c.h.b16 %v2934
        %v4824 = vunpack.c.l.b16 %v2935
        %v4825 = vunpack.c.l.b16 %v2936
        %v4826 = vunpack.c.h.b16 %v2936
        %v4827 = vunpack.c.l.b16 %v2937
        %v4828 = vunpack.c.l.b16 %v2938
        %v4829 = vunpack.c.h.b16 %v2938
        %v4830 = vunpack.c.l.b16 %v2939
        %v4831 = vunpack.c.l.b16 %v2940
        %v4832 = vunpack.c.h.b16 %v2940
        %v4833 = vunpack.c.l.b16 %v2941
        %v4834 = vunpack.c.l.b16 %v2942
        %v4835 = vunpack.c.h.b16 %v2942
        %v4836 = vunpack.c.l.b16 %v2943
        %v4837 = vunpack.c.l.b16 %v2944
        %v4838 = vunpack.c.h.b16 %v2944
        %v4839 = vunpack.c.l.b16 %v2945
        %v4840 = vunpack.c.l.b16 %v2946
        %v4841 = vunpack.c.h.b16 %v2946
        %v4842 = vunpack.c.l.b16 %v2947
        %v4843 = vunpack.c.l.b16 %v2948
        %v4844 = vunpack.c.h.b16 %v2948
        %v4845 = vunpack.c.l.b16 %v2949
        %v4846 = vunpack.c.l.b16 %v2950
        %v4847 = vunpack.c.h.b16 %v2950
        %v4848 = vunpack.c.l.b16 %v2951
        %v4849 = vunpack.c.l.b16 %v2952
        %v4850 = vunpack.c.h.b16 %v2952
        %v4851 = vunpack.c.l.b16 %v2953
        %v4852 = vunpack.c.l.b16 %v2954
        %v4853 = vunpack.c.h.b16 %v2954
        %v4854 = vunpack.c.l.b16 %v2955
        %v4855 = vunpack.c.l.b16 %v2956
        %v4856 = vunpack.c.h.b16 %v2956
        %v4857 = vunpack.c.l.b16 %v2957
        %v4858 = vunpack.c.l.b16 %v2958
        %v4859 = vunpack.c.h.b16 %v2958
        %v4860 = vunpack.c.l.b16 %v2959
        %v4861 = vunpack.c.l.b16 %v2960
        %v4862 = vunpack.c.h.b16 %v2960
        %v4863 = vunpack.c.l.b16 %v2961
        %v4864 = vunpack.c.l.b16 %v2962
        %v4865 = vunpack.c.h.b16 %v2962
        %v4866 = vunpack.c.l.b16 %v2963
        %v4867 = vunpack.c.l.b16 %v2964
        %v4868 = vunpack.c.h.b16 %v2964
        %v4869 = vunpack.c.l.b16 %v2965
        %v4870 = vunpack.c.l.b16 %v2966
        %v4871 = vunpack.c.h.b16 %v2966
        %v4872 = vunpack.c.l.b16 %v2967
        %v4873 = vunpack.c.l.b16 %v2968
        %v4874 = vunpack.c.h.b16 %v2968
        %v4875 = vunpack.c.l.b16 %v2969
        %v4876 = vunpack.c.l.b16 %v2970
        %v4877 = vunpack.c.h.b16 %v2970
        %v4878 = vunpack.c.l.b16 %v2971
        %v4879 = vunpack.c.l.b16 %v2972
        %v4880 = vunpack.c.h.b16 %v2972
        %v4881 = vunpack.c.l.b16 %v2973
        %v4882 = vunpack.c.l.b16 %v2974
        %v4883 = vunpack.c.h.b16 %v2974
        %v4884 = vunpack.c.l.b16 %v2975
        %v4885 = vunpack.c.l.b16 %v2976
        %v4886 = vunpack.c.h.b16 %v2976
        %v4887 = vunpack.c.l.b16 %v2977
        %v4888 = vunpack.c.l.b16 %v2978
        %v4889 = vunpack.c.h.b16 %v2978
        %v4890 = vunpack.c.l.b16 %v2979
        %v4891 = vunpack.c.l.b16 %v2980
        %v4892 = vunpack.c.h.b16 %v2980
        %v4893 = vunpack.c.l.b16 %v2981
        %v4894 = vunpack.c.l.b16 %v2982
        %v4895 = vunpack.c.h.b16 %v2982
        %v4896 = vunpack.c.l.b16 %v2983
        %v4897 = vunpack.c.l.b16 %v2984
        %v4898 = vunpack.c.h.b16 %v2984
        %v4899 = vunpack.c.l.b16 %v2985
        %v4900 = vunpack.c.l.b16 %v2986
        %v4901 = vunpack.c.h.b16 %v2986
        %v4902 = vunpack.c.l.b16 %v2987
        %v4903 = vunpack.c.l.b16 %v2988
        %v4904 = vunpack.c.h.b16 %v2988
        %v4905 = vunpack.c.l.b16 %v2989
        %v4906 = vunpack.c.l.b16 %v2990
        %v4907 = vunpack.c.h.b16 %v2990
        %v4908 = vunpack.c.l.b16 %v2991
        %v4909 = vunpack.c.l.b16 %v2992
        %v4910 = vunpack.c.h.b16 %v2992
        %v4911 = vunpack.c.l.b16 %v2993
        %v4912 = vunpack.c.l.b16 %v2994
        %v4913 = vunpack.c.h.b16 %v2994
        %v4914 = vunpack.c.l.b16 %v2995
        %v4915 = vunpack.c.l.b16 %v2996
        %v4916 = vunpack.c.h.b16 %v2996
        %v4917 = vunpack.c.l.b16 %v2997
        %v4918 = vunpack.c.l.b16 %v2998
        %v4919 = vunpack.c.h.b16 %v2998
        %v4920 = vunpack.c.l.b16 %v2999
        %v4921 = vunpack.c.l.b16 %v3000
        %v4922 = vunpack.c.h.b16 %v3000
        %v4923 = vunpack.c.l.b16 %v3001
        %v4924 = vunpack.c.l.b16 %v3002
        %v4925 = vunpack.c.h.b16 %v3002
        %v4926 = vunpack.c.l.b16 %v3003
        %v4927 = vunpack.c.l.b16 %v3004
        %v4928 = vunpack.c.h.b16 %v3004
        %v4929 = vunpack.c.l.b16 %v3005
        %v4930 = vunpack.c.l.b16 %v3006
        %v4931 = vunpack.c.h.b16 %v3006
        %v4932 = vunpack.c.l.b16 %v3007
        %v4933 = vunpack.c.l.b16 %v3008
        %v4934 = vunpack.c.h.b16 %v3008
        %v4935 = vunpack.c.l.b16 %v3009
        %v4936 = vunpack.c.l.b16 %v3010
        %v4937 = vunpack.c.h.b16 %v3010
        %v4938 = vunpack.c.l.b16 %v3011
        %v4939 = vunpack.c.l.b16 %v3012
        %v4940 = vunpack.c.h.b16 %v3012
        %v4941 = vunpack.c.l.b16 %v3013
        %v4942 = vunpack.c.l.b16 %v3014
        %v4943 = vunpack.c.h.b16 %v3014
        %v4944 = vunpack.c.l.b16 %v3015
        %v4945 = vunpack.c.l.b16 %v3016
        %v4946 = vunpack.c.h.b16 %v3016
        %v4947 = vunpack.c.l.b16 %v3017
        %v4948 = vunpack.c.l.b16 %v3018
        %v4949 = vunpack.c.h.b16 %v3018
        %v4950 = vunpack.c.l.b16 %v3019
        %v4951 = vunpack.c.l.b16 %v3020
        %v4952 = vunpack.c.h.b16 %v3020
        %v4953 = vunpack.c.l.b16 %v3021
        %v4954 = vunpack.c.l.b16 %v3022
        %v4955 = vunpack.c.h.b16 %v3022
        %v4956 = vunpack.c.l.b16 %v3023
        %v4957 = vunpack.c.l.b16 %v3024
        %v4958 = vunpack.c.h.b16 %v3024
        %v4959 = vunpack.c.l.b16 %v3025
        %v4960 = vunpack.c.l.b16 %v3026
        %v4961 = vunpack.c.h.b16 %v3026
        %v4962 = vunpack.c.l.b16 %v3027
        %v4963 = vunpack.c.l.b16 %v3028
        %v4964 = vunpack.c.h.b16 %v3028
        %v4965 = vunpack.c.l.b16 %v3029
        %v4966 = vunpack.c.l.b16 %v3030
        %v4967 = vunpack.c.h.b16 %v3030
        %v4968 = vunpack.c.l.b16 %v3031
        %v4969 = vunpack.c.l.b16 %v3032
        %v4970 = vunpack.c.h.b16 %v3032
        %v4971 = vunpack.c.l.b16 %v3033
        %v4972 = vunpack.c.l.b16 %v3034
        %v4973 = vunpack.c.h.b16 %v3034
        %v4974 = vunpack.c.l.b16 %v3035
        %v4975 = vunpack.c.l.b16 %v3036
        %v4976 = vunpack.c.h.b16 %v3036
        %v4977 = vunpack.c.l.b16 %v3037
        %v4978 = vunpack.c.l.b16 %v3038
        %v4979 = vunpack.c.h.b16 %v3038
        %v4980 = vunpack.c.l.b16 %v3039
        %v4981 = vunpack.c.l.b16 %v3040
        %v4982 = vunpack.c.h.b16 %v3040
        %v4983 = vunpack.c.l.b16 %v3041
        %v4984 = vunpack.c.l.b16 %v3042
        %v4985 = vunpack.c.h.b16 %v3042
        %v4986 = vunpack.c.l.b16 %v3043
        %v4987 = vunpack.c.l.b16 %v3044
        %v4988 = vunpack.c.h.b16 %v3044
        %v4989 = vunpack.c.l.b16 %v3045
        %v4990 = vunpack.c.l.b16 %v3046
        %v4991 = vunpack.c.h.b16 %v3046
        %v4992 = vunpack.c.l.b16 %v3047
        %v4993 = vunpack.c.l.b16 %v3048
        %v4994 = vunpack.c.h.b16 %v3048
        %v4995 = vunpack.c.l.b16 %v3049
        %v4996 = vunpack.c.l.b16 %v3050
        %v4997 = vunpack.c.h.b16 %v3050
        %v4998 = vunpack.c.l.b16 %v3051
        %v4999 = vunpack.c.l.b16 %v3052
        %v5000 = vunpack.c.h.b16 %v3052
        %v5001 = vunpack.c.l.b16 %v3053
        %v5002 = vunpack.c.l.b16 %v3054
        %v5003 = vunpack.c.h.b16 %v3054
        %v5004 = vunpack.c.l.b16 %v3055
        %v5005 = vunpack.c.l.b16 %v3056
        %v5006 = vunpack.c.h.b16 %v3056
        %v5007 = vunpack.c.l.b16 %v3057
        %v5008 = vunpack.c.l.b16 %v3058
        %v5009 = vunpack.c.h.b16 %v3058
        %v5010 = vunpack.c.l.b16 %v3059
        %v5011 = vunpack.c.l.b16 %v3060
        %v5012 = vunpack.c.h.b16 %v3060
        %v5013 = vunpack.c.l.b16 %v3061
        %v5014 = vunpack.c.l.b16 %v3062
        %v5015 = vunpack.c.h.b16 %v3062
        %v5016 = vunpack.c.l.b16 %v3063
        %v5017 = vunpack.c.l.b16 %v3064
        %v5018 = vunpack.c.h.b16 %v3064
        %v5019 = vunpack.c.l.b16 %v3065
        %v5020 = vunpack.c.l.b16 %v3066
        %v5021 = vunpack.c.h.b16 %v3066
        %v5022 = vunpack.c.l.b16 %v3067
        %v5023 = vunpack.c.l.b16 %v3068
        %v5024 = vunpack.c.h.b16 %v3068
        %v5025 = vunpack.c.l.b16 %v3069
        %v5026 = vunpack.c.l.b16 %v3070
        %v5027 = vunpack.c.h.b16 %v3070
        %v5028 = vunpack.c.l.b16 %v3071
        %v5029 = vunpack.c.l.b16 %v3072
        %v5030 = vunpack.c.h.b16 %v3072
        %v5031 = vunpack.c.l.b16 %v3073
        %v5032 = vunpack.c.l.b16 %v3074
        %v5033 = vunpack.c.h.b16 %v3074
        %v5034 = vunpack.c.l.b16 %v3075
        %v5035 = vunpack.c.l.b16 %v3076
        %v5036 = vunpack.c.h.b16 %v3076
        %v5037 = vunpack.c.l.b16 %v3077
        %v5038 = vunpack.c.l.b16 %v3078
        %v5039 = vunpack.c.h.b16 %v3078
        %v5040 = vunpack.c.l.b16 %v3079
        %v5041 = vunpack.c.l.b16 %v3080
        %v5042 = vunpack.c.h.b16 %v3080
        %v5043 = vunpack.c.l.b16 %v3081
        %v5044 = vunpack.c.l.b16 %v3082
        %v5045 = vunpack.c.h.b16 %v3082
        %v5046 = vunpack.c.l.b16 %v3083
        %v5047 = vunpack.c.l.b16 %v3084
        %v5048 = vunpack.c.h.b16 %v3084
        %v5049 = vunpack.c.l.b16 %v3085
        %v5050 = vunpack.c.l.b16 %v3086
        %v5051 = vunpack.c.h.b16 %v3086
        %v5052 = vunpack.c.l.b16 %v3087
        %v5053 = vunpack.c.l.b16 %v3088
        %v5054 = vunpack.c.h.b16 %v3088
        %v5055 = vunpack.c.l.b16 %v3089
        %v5056 = vunpack.c.l.b16 %v3090
        %v5057 = vunpack.c.h.b16 %v3090
        %v5058 = vunpack.c.l.b16 %v3091
        %v5059 = vunpack.c.l.b16 %v3092
        %v5060 = vunpack.c.h.b16 %v3092
        %v5061 = vunpack.c.l.b16 %v3093
        %v5062 = vunpack.c.l.b16 %v3094
        %v5063 = vunpack.c.h.b16 %v3094
        %v5064 = vunpack.c.l.b16 %v3095
        %v5065 = vunpack.c.l.b16 %v3096
        %v5066 = vunpack.c.h.b16 %v3096
        %v5067 = vunpack.c.l.b16 %v3097
        %v5068 = vunpack.c.l.b16 %v3098
        %v5069 = vunpack.c.h.b16 %v3098
        %v5070 = vunpack.c.l.b16 %v3099
        %v5071 = vunpack.c.l.b16 %v3100
        %v5072 = vunpack.c.h.b16 %v3100
        %v5073 = vunpack.c.l.b16 %v3101
        %v5074 = vunpack.c.l.b16 %v3102
        %v5075 = vunpack.c.h.b16 %v3102
        %v5076 = vunpack.c.l.b16 %v3103
        %v5077 = vunpack.c.l.b16 %v3104
        %v5078 = vunpack.c.h.b16 %v3104
        %v5079 = vunpack.c.l.b16 %v3105
        %v5080 = vunpack.c.l.b16 %v3106
        %v5081 = vunpack.c.h.b16 %v3106
        %v5082 = vunpack.c.l.b16 %v3107
        %v5083 = vunpack.c.l.b16 %v3108
        %v5084 = vunpack.c.h.b16 %v3108
        %v5085 = vunpack.c.l.b16 %v3109
        %v5086 = vunpack.c.l.b16 %v3110
        %v5087 = vunpack.c.h.b16 %v3110
        %v5088 = vunpack.c.l.b16 %v3111
        %v5089 = vunpack.c.l.b16 %v3112
        %v5090 = vunpack.c.h.b16 %v3112
        %v5091 = vunpack.c.l.b16 %v3113
        %v5092 = vunpack.c.l.b16 %v3114
        %v5093 = vunpack.c.h.b16 %v3114
        %v5094 = vunpack.c.l.b16 %v3115
        %v5095 = vunpack.c.l.b16 %v3116
        %v5096 = vunpack.c.h.b16 %v3116
        %v5097 = vunpack.c.l.b16 %v3117
        %v5098 = vunpack.c.l.b16 %v3118
        %v5099 = vunpack.c.h.b16 %v3118
        %v5100 = vunpack.c.l.b16 %v3119
        %v5101 = vunpack.c.l.b16 %v3120
        %v5102 = vunpack.c.h.b16 %v3120
        %v5103 = vunpack.c.l.b16 %v3121
        %v5104 = vunpack.c.l.b16 %v3122
        %v5105 = vunpack.c.h.b16 %v3122
        %v5106 = vunpack.c.l.b16 %v3123
        %v5107 = vunpack.c.l.b16 %v3124
        %v5108 = vunpack.c.h.b16 %v3124
        %v5109 = vunpack.c.l.b16 %v3125
        %v5110 = vunpack.c.l.b16 %v3126
        %v5111 = vunpack.c.h.b16 %v3126
        %v5112 = vunpack.c.l.b16 %v3127
        %v5113 = vunpack.c.l.b16 %v3128
        %v5114 = vunpack.c.h.b16 %v3128
        %v5115 = vunpack.c.l.b16 %v3129
        %v5116 = vunpack.c.l.b16 %v3130
        %v5117 = vunpack.c.h.b16 %v3130
        %v5118 = vunpack.c.l.b16 %v3131
        %v5119 = vunpack.c.l.b16 %v3132
        %v5120 = vunpack.c.h.b16 %v3132
        %v5121 = vunpack.c.l.b16 %v3133
        %v5122 = vunpack.c.l.b16 %v3134
        %v5123 = vunpack.c.h.b16 %v3134
        %v5124 = vunpack.c.l.b16 %v3135
        %v5125 = vunpack.c.l.b16 %v3136
        %v5126 = vunpack.c.h.b16 %v3136
        %v5127 = vunpack.c.l.b16 %v3137
        %v5128 = vunpack.c.l.b16 %v3138
        %v5129 = vunpack.c.h.b16 %v3138
        %v5130 = vunpack.c.l.b16 %v3139
        %v5131 = vunpack.c.l.b16 %v3140
        %v5132 = vunpack.c.h.b16 %v3140
        %v5133 = vunpack.c.l.b16 %v3141
        %v5134 = vunpack.c.l.b16 %v3142
        %v5135 = vunpack.c.h.b16 %v3142
        %v5136 = vunpack.c.l.b16 %v3143
        %v5137 = vunpack.c.l.b16 %v3144
        %v5138 = vunpack.c.h.b16 %v3144
        %v5139 = vunpack.c.l.b16 %v3145
        %v5140 = vunpack.c.l.b16 %v3146
        %v5141 = vunpack.c.h.b16 %v3146
        %v5142 = vunpack.c.l.b16 %v3147
        %v5143 = vunpack.c.l.b16 %v3148
        %v5144 = vunpack.c.h.b16 %v3148
        %v5145 = vunpack.c.l.b16 %v3149
        %v5146 = vunpack.c.l.b16 %v3150
        %v5147 = vunpack.c.h.b16 %v3150
        %v5148 = vunpack.c.l.b16 %v3151
        %v5149 = vunpack.c.l.b16 %v3152
        %v5150 = vunpack.c.h.b16 %v3152
        %v5151 = vunpack.c.l.b16 %v3153
        %v5152 = vunpack.c.l.b16 %v3154
        %v5153 = vunpack.c.h.b16 %v3154
        %v5154 = vunpack.c.l.b16 %v3155
        %v5155 = vunpack.c.l.b16 %v3156
        %v5156 = vunpack.c.h.b16 %v3156
        %v5157 = vunpack.c.l.b16 %v3157
        %v5158 = vpack.c.b16 %v3961, %v3958
        %v5159 = vpack.c.b16 %v3962, %v3959
        %v5160 = vpack.c.b16 %v3963, %v3960
        %v5161 = vpack.c.b16 %v3967, %v3964
        %v5162 = vpack.c.b16 %v3968, %v3965
        %v5163 = vpack.c.b16 %v3969, %v3966
        %v5164 = vpack.c.b16 %v3973, %v3970
        %v5165 = vpack.c.b16 %v3974, %v3971
        %v5166 = vpack.c.b16 %v3975, %v3972
        %v5167 = vpack.c.b16 %v3979, %v3976
        %v5168 = vpack.c.b16 %v3980, %v3977
        %v5169 = vpack.c.b16 %v3981, %v3978
        %v5170 = vpack.c.b16 %v3985, %v3982
        %v5171 = vpack.c.b16 %v3986, %v3983
        %v5172 = vpack.c.b16 %v3987, %v3984
        %v5173 = vpack.c.b16 %v3991, %v3988
        %v5174 = vpack.c.b16 %v3992, %v3989
        %v5175 = vpack.c.b16 %v3993, %v3990
        %v5176 = vpack.c.b16 %v3997, %v3994
        %v5177 = vpack.c.b16 %v3998, %v3995
        %v5178 = vpack.c.b16 %v3999, %v3996
        %v5179 = vpack.c.b16 %v4003, %v4000
        %v5180 = vpack.c.b16 %v4004, %v4001
        %v5181 = vpack.c.b16 %v4005, %v4002
        %v5182 = vpack.c.b16 %v4009, %v4006
        %v5183 = vpack.c.b16 %v4010, %v4007
        %v5184 = vpack.c.b16 %v4011, %v4008
        %v5185 = vpack.c.b16 %v4015, %v4012
        %v5186 = vpack.c.b16 %v4016, %v4013
        %v5187 = vpack.c.b16 %v4017, %v4014
        %v5188 = vpack.c.b16 %v4021, %v4018
        %v5189 = vpack.c.b16 %v4022, %v4019
        %v5190 = vpack.c.b16 %v4023, %v4020
        %v5191 = vpack.c.b16 %v4027, %v4024
        %v5192 = vpack.c.b16 %v4028, %v4025
        %v5193 = vpack.c.b16 %v4029, %v4026
        %v5194 = vpack.c.b16 %v4033, %v4030
        %v5195 = vpack.c.b16 %v4034, %v4031
        %v5196 = vpack.c.b16 %v4035, %v4032
        %v5197 = vpack.c.b16 %v4039, %v4036
        %v5198 = vpack.c.b16 %v4040, %v4037
        %v5199 = vpack.c.b16 %v4041, %v4038
        %v5200 = vpack.c.b16 %v4045, %v4042
        %v5201 = vpack.c.b16 %v4046, %v4043
        %v5202 = vpack.c.b16 %v4047, %v4044
        %v5203 = vpack.c.b16 %v4051, %v4048
        %v5204 = vpack.c.b16 %v4052, %v4049
        %v5205 = vpack.c.b16 %v4053, %v4050
        %v5206 = vpack.c.b16 %v4057, %v4054
        %v5207 = vpack.c.b16 %v4058, %v4055
        %v5208 = vpack.c.b16 %v4059, %v4056
        %v5209 = vpack.c.b16 %v4063, %v4060
        %v5210 = vpack.c.b16 %v4064, %v4061
        %v5211 = vpack.c.b16 %v4065, %v4062
        %v5212 = vpack.c.b16 %v4069, %v4066
        %v5213 = vpack.c.b16 %v4070, %v4067
        %v5214 = vpack.c.b16 %v4071, %v4068
        %v5215 = vpack.c.b16 %v4075, %v4072
        %v5216 = vpack.c.b16 %v4076, %v4073
        %v5217 = vpack.c.b16 %v4077, %v4074
        %v5218 = vpack.c.b16 %v4081, %v4078
        %v5219 = vpack.c.b16 %v4082, %v4079
        %v5220 = vpack.c.b16 %v4083, %v4080
        %v5221 = vpack.c.b16 %v4087, %v4084
        %v5222 = vpack.c.b16 %v4088, %v4085
        %v5223 = vpack.c.b16 %v4089, %v4086
        %v5224 = vpack.c.b16 %v4093, %v4090
        %v5225 = vpack.c.b16 %v4094, %v4091
        %v5226 = vpack.c.b16 %v4095, %v4092
        %v5227 = vpack.c.b16 %v4099, %v4096
        %v5228 = vpack.c.b16 %v4100, %v4097
        %v5229 = vpack.c.b16 %v4101, %v4098
        %v5230 = vpack.c.b16 %v4105, %v4102
        %v5231 = vpack.c.b16 %v4106, %v4103
        %v5232 = vpack.c.b16 %v4107, %v4104
        %v5233 = vpack.c.b16 %v4111, %v4108
        %v5234 = vpack.c.b16 %v4112, %v4109
        %v5235 = vpack.c.b16 %v4113, %v4110
        %v5236 = vpack.c.b16 %v4117, %v4114
        %v5237 = vpack.c.b16 %v4118, %v4115
        %v5238 = vpack.c.b16 %v4119, %v4116
        %v5239 = vpack.c.b16 %v4123, %v4120
        %v5240 = vpack.c.b16 %v4124, %v4121
        %v5241 = vpack.c.b16 %v4125, %v4122
        %v5242 = vpack.c.b16 %v4129, %v4126
        %v5243 = vpack.c.b16 %v4130, %v4127
        %v5244 = vpack.c.b16 %v4131, %v4128
        %v5245 = vpack.c.b16 %v4135, %v4132
        %v5246 = vpack.c.b16 %v4136, %v4133
        %v5247 = vpack.c.b16 %v4137, %v4134
        %v5248 = vpack.c.b16 %v4141, %v4138
        %v5249 = vpack.c.b16 %v4142, %v4139
        %v5250 = vpack.c.b16 %v4143, %v4140
        %v5251 = vpack.c.b16 %v4147, %v4144
        %v5252 = vpack.c.b16 %v4148, %v4145
        %v5253 = vpack.c.b16 %v4149, %v4146
        %v5254 = vpack.c.b16 %v4153, %v4150
        %v5255 = vpack.c.b16 %v4154, %v4151
        %v5256 = vpack.c.b16 %v4155, %v4152
        %v5257 = vpack.c.b16 %v4159, %v4156
        %v5258 = vpack.c.b16 %v4160, %v4157
        %v5259 = vpack.c.b16 %v4161, %v4158
        %v5260 = vpack.c.b16 %v4165, %v4162
        %v5261 = vpack.c.b16 %v4166, %v4163
        %v5262 = vpack.c.b16 %v4167, %v4164
        %v5263 = vpack.c.b16 %v4171, %v4168
        %v5264 = vpack.c.b16 %v4172, %v4169
        %v5265 = vpack.c.b16 %v4173, %v4170
        %v5266 = vpack.c.b16 %v4177, %v4174
        %v5267 = vpack.c.b16 %v4178, %v4175
        %v5268 = vpack.c.b16 %v4179, %v4176
        %v5269 = vpack.c.b16 %v4183, %v4180
        %v5270 = vpack.c.b16 %v4184, %v4181
        %v5271 = vpack.c.b16 %v4185, %v4182
        %v5272 = vpack.c.b16 %v4189, %v4186
        %v5273 = vpack.c.b16 %v4190, %v4187
        %v5274 = vpack.c.b16 %v4191, %v4188
        %v5275 = vpack.c.b16 %v4195, %v4192
        %v5276 = vpack.c.b16 %v4196, %v4193
        %v5277 = vpack.c.b16 %v4197, %v4194
        %v5278 = vpack.c.b16 %v4201, %v4198
        %v5279 = vpack.c.b16 %v4202, %v4199
        %v5280 = vpack.c.b16 %v4203, %v4200
        %v5281 = vpack.c.b16 %v4207, %v4204
        %v5282 = vpack.c.b16 %v4208, %v4205
        %v5283 = vpack.c.b16 %v4209, %v4206
        %v5284 = vpack.c.b16 %v4213, %v4210
        %v5285 = vpack.c.b16 %v4214, %v4211
        %v5286 = vpack.c.b16 %v4215, %v4212
        %v5287 = vpack.c.b16 %v4219, %v4216
        %v5288 = vpack.c.b16 %v4220, %v4217
        %v5289 = vpack.c.b16 %v4221, %v4218
        %v5290 = vpack.c.b16 %v4225, %v4222
        %v5291 = vpack.c.b16 %v4226, %v4223
        %v5292 = vpack.c.b16 %v4227, %v4224
        %v5293 = vpack.c.b16 %v4231, %v4228
        %v5294 = vpack.c.b16 %v4232, %v4229
        %v5295 = vpack.c.b16 %v4233, %v4230
        %v5296 = vpack.c.b16 %v4237, %v4234
        %v5297 = vpack.c.b16 %v4238, %v4235
        %v5298 = vpack.c.b16 %v4239, %v4236
        %v5299 = vpack.c.b16 %v4243, %v4240
        %v5300 = vpack.c.b16 %v4244, %v4241
        %v5301 = vpack.c.b16 %v4245, %v4242
        %v5302 = vpack.c.b16 %v4249, %v4246
        %v5303 = vpack.c.b16 %v4250, %v4247
        %v5304 = vpack.c.b16 %v4251, %v4248
        %v5305 = vpack.c.b16 %v4255, %v4252
        %v5306 = vpack.c.b16 %v4256, %v4253
        %v5307 = vpack.c.b16 %v4257, %v4254
        %v5308 = vpack.c.b16 %v4261, %v4258
        %v5309 = vpack.c.b16 %v4262, %v4259
        %v5310 = vpack.c.b16 %v4263, %v4260
        %v5311 = vpack.c.b16 %v4267, %v4264
        %v5312 = vpack.c.b16 %v4268, %v4265
        %v5313 = vpack.c.b16 %v4269, %v4266
        %v5314 = vpack.c.b16 %v4273, %v4270
        %v5315 = vpack.c.b16 %v4274, %v4271
        %v5316 = vpack.c.b16 %v4275, %v4272
        %v5317 = vpack.c.b16 %v4279, %v4276
        %v5318 = vpack.c.b16 %v4280, %v4277
        %v5319 = vpack.c.b16 %v4281, %v4278
        %v5320 = vpack.c.b16 %v4285, %v4282
        %v5321 = vpack.c.b16 %v4286, %v4283
        %v5322 = vpack.c.b16 %v4287, %v4284
        %v5323 = vpack.c.b16 %v4291, %v4288
        %v5324 = vpack.c.b16 %v4292, %v4289
        %v5325 = vpack.c.b16 %v4293, %v4290
        %v5326 = vpack.c.b16 %v4297, %v4294
        %v5327 = vpack.c.b16 %v4298, %v4295
        %v5328 = vpack.c.b16 %v4299, %v4296
        %v5329 = vpack.c.b16 %v4303, %v4300
        %v5330 = vpack.c.b16 %v4304, %v4301
        %v5331 = vpack.c.b16 %v4305, %v4302
        %v5332 = vpack.c.b16 %v4309, %v4306
        %v5333 = vpack.c.b16 %v4310, %v4307
        %v5334 = vpack.c.b16 %v4311, %v4308
        %v5335 = vpack.c.b16 %v4315, %v4312
        %v5336 = vpack.c.b16 %v4316, %v4313
        %v5337 = vpack.c.b16 %v4317, %v4314
        %v5338 = vpack.c.b16 %v4321, %v4318
        %v5339 = vpack.c.b16 %v4322, %v4319
        %v5340 = vpack.c.b16 %v4323, %v4320
        %v5341 = vpack.c.b16 %v4327, %v4324
        %v5342 = vpack.c.b16 %v4328, %v4325
        %v5343 = vpack.c.b16 %v4329, %v4326
        %v5344 = vpack.c.b16 %v4333, %v4330
        %v5345 = vpack.c.b16 %v4334, %v4331
        %v5346 = vpack.c.b16 %v4335, %v4332
        %v5347 = vpack.c.b16 %v4339, %v4336
        %v5348 = vpack.c.b16 %v4340, %v4337
        %v5349 = vpack.c.b16 %v4341, %v4338
        %v5350 = vpack.c.b16 %v4345, %v4342
        %v5351 = vpack.c.b16 %v4346, %v4343
        %v5352 = vpack.c.b16 %v4347, %v4344
        %v5353 = vpack.c.b16 %v4351, %v4348
        %v5354 = vpack.c.b16 %v4352, %v4349
        %v5355 = vpack.c.b16 %v4353, %v4350
        %v5356 = vpack.c.b16 %v4357, %v4354
        %v5357 = vpack.c.b16 %v4358, %v4355
        %v5358 = vpack.c.b16 %v4359, %v4356
        %v5359 = vpack.c.b16 %v4363, %v4360
        %v5360 = vpack.c.b16 %v4364, %v4361
        %v5361 = vpack.c.b16 %v4365, %v4362
        %v5362 = vpack.c.b16 %v4369, %v4366
        %v5363 = vpack.c.b16 %v4370, %v4367
        %v5364 = vpack.c.b16 %v4371, %v4368
        %v5365 = vpack.c.b16 %v4375, %v4372
        %v5366 = vpack.c.b16 %v4376, %v4373
        %v5367 = vpack.c.b16 %v4377, %v4374
        %v5368 = vpack.c.b16 %v4381, %v4378
        %v5369 = vpack.c.b16 %v4382, %v4379
        %v5370 = vpack.c.b16 %v4383, %v4380
        %v5371 = vpack.c.b16 %v4387, %v4384
        %v5372 = vpack.c.b16 %v4388, %v4385
        %v5373 = vpack.c.b16 %v4389, %v4386
        %v5374 = vpack.c.b16 %v4393, %v4390
        %v5375 = vpack.c.b16 %v4394, %v4391
        %v5376 = vpack.c.b16 %v4395, %v4392
        %v5377 = vpack.c.b16 %v4399, %v4396
        %v5378 = vpack.c.b16 %v4400, %v4397
        %v5379 = vpack.c.b16 %v4401, %v4398
        %v5380 = vpack.c.b16 %v4405, %v4402
        %v5381 = vpack.c.b16 %v4406, %v4403
        %v5382 = vpack.c.b16 %v4407, %v4404
        %v5383 = vpack.c.b16 %v4411, %v4408
        %v5384 = vpack.c.b16 %v4412, %v4409
        %v5385 = vpack.c.b16 %v4413, %v4410
        %v5386 = vpack.c.b16 %v4417, %v4414
        %v5387 = vpack.c.b16 %v4418, %v4415
        %v5388 = vpack.c.b16 %v4419, %v4416
        %v5389 = vpack.c.b16 %v4423, %v4420
        %v5390 = vpack.c.b16 %v4424, %v4421
        %v5391 = vpack.c.b16 %v4425, %v4422
        %v5392 = vpack.c.b16 %v4429, %v4426
        %v5393 = vpack.c.b16 %v4430, %v4427
        %v5394 = vpack.c.b16 %v4431, %v4428
        %v5395 = vpack.c.b16 %v4435, %v4432
        %v5396 = vpack.c.b16 %v4436, %v4433
        %v5397 = vpack.c.b16 %v4437, %v4434
        %v5398 = vpack.c.b16 %v4441, %v4438
        %v5399 = vpack.c.b16 %v4442, %v4439
        %v5400 = vpack.c.b16 %v4443, %v4440
        %v5401 = vpack.c.b16 %v4447, %v4444
        %v5402 = vpack.c.b16 %v4448, %v4445
        %v5403 = vpack.c.b16 %v4449, %v4446
        %v5404 = vpack.c.b16 %v4453, %v4450
        %v5405 = vpack.c.b16 %v4454, %v4451
        %v5406 = vpack.c.b16 %v4455, %v4452
        %v5407 = vpack.c.b16 %v4459, %v4456
        %v5408 = vpack.c.b16 %v4460, %v4457
        %v5409 = vpack.c.b16 %v4461, %v4458
        %v5410 = vpack.c.b16 %v4465, %v4462
        %v5411 = vpack.c.b16 %v4466, %v4463
        %v5412 = vpack.c.b16 %v4467, %v4464
        %v5413 = vpack.c.b16 %v4471, %v4468
        %v5414 = vpack.c.b16 %v4472, %v4469
        %v5415 = vpack.c.b16 %v4473, %v4470
        %v5416 = vpack.c.b16 %v4477, %v4474
        %v5417 = vpack.c.b16 %v4478, %v4475
        %v5418 = vpack.c.b16 %v4479, %v4476
        %v5419 = vpack.c.b16 %v4483, %v4480
        %v5420 = vpack.c.b16 %v4484, %v4481
        %v5421 = vpack.c.b16 %v4485, %v4482
        %v5422 = vpack.c.b16 %v4489, %v4486
        %v5423 = vpack.c.b16 %v4490, %v4487
        %v5424 = vpack.c.b16 %v4491, %v4488
        %v5425 = vpack.c.b16 %v4495, %v4492
        %v5426 = vpack.c.b16 %v4496, %v4493
        %v5427 = vpack.c.b16 %v4497, %v4494
        %v5428 = vpack.c.b16 %v4501, %v4498
        %v5429 = vpack.c.b16 %v4502, %v4499
        %v5430 = vpack.c.b16 %v4503, %v4500
        %v5431 = vpack.c.b16 %v4507, %v4504
        %v5432 = vpack.c.b16 %v4508, %v4505
        %v5433 = vpack.c.b16 %v4509, %v4506
        %v5434 = vpack.c.b16 %v4513, %v4510
        %v5435 = vpack.c.b16 %v4514, %v4511
        %v5436 = vpack.c.b16 %v4515, %v4512
        %v5437 = vpack.c.b16 %v4519, %v4516
        %v5438 = vpack.c.b16 %v4520, %v4517
        %v5439 = vpack.c.b16 %v4521, %v4518
        %v5440 = vpack.c.b16 %v4525, %v4522
        %v5441 = vpack.c.b16 %v4526, %v4523
        %v5442 = vpack.c.b16 %v4527, %v4524
        %v5443 = vpack.c.b16 %v4531, %v4528
        %v5444 = vpack.c.b16 %v4532, %v4529
        %v5445 = vpack.c.b16 %v4533, %v4530
        %v5446 = vpack.c.b16 %v4537, %v4534
        %v5447 = vpack.c.b16 %v4538, %v4535
        %v5448 = vpack.c.b16 %v4539, %v4536
        %v5449 = vpack.c.b16 %v4543, %v4540
        %v5450 = vpack.c.b16 %v4544, %v4541
        %v5451 = vpack.c.b16 %v4545, %v4542
        %v5452 = vpack.c.b16 %v4549, %v4546
        %v5453 = vpack.c.b16 %v4550, %v4547
        %v5454 = vpack.c.b16 %v4551, %v4548
        %v5455 = vpack.c.b16 %v4555, %v4552
        %v5456 = vpack.c.b16 %v4556, %v4553
        %v5457 = vpack.c.b16 %v4557, %v4554
        %v5458 = vpack.c.b16 %v4561, %v4558
        %v5459 = vpack.c.b16 %v4562, %v4559
        %v5460 = vpack.c.b16 %v4563, %v4560
        %v5461 = vpack.c.b16 %v4567, %v4564
        %v5462 = vpack.c.b16 %v4568, %v4565
        %v5463 = vpack.c.b16 %v4569, %v4566
        %v5464 = vpack.c.b16 %v4573, %v4570
        %v5465 = vpack.c.b16 %v4574, %v4571
        %v5466 = vpack.c.b16 %v4575, %v4572
        %v5467 = vpack.c.b16 %v4579, %v4576
        %v5468 = vpack.c.b16 %v4580, %v4577
        %v5469 = vpack.c.b16 %v4581, %v4578
        %v5470 = vpack.c.b16 %v4585, %v4582
        %v5471 = vpack.c.b16 %v4586, %v4583
        %v5472 = vpack.c.b16 %v4587, %v4584
        %v5473 = vpack.c.b16 %v4591, %v4588
        %v5474 = vpack.c.b16 %v4592, %v4589
        %v5475 = vpack.c.b16 %v4593, %v4590
        %v5476 = vpack.c.b16 %v4597, %v4594
        %v5477 = vpack.c.b16 %v4598, %v4595
        %v5478 = vpack.c.b16 %v4599, %v4596
        %v5479 = vpack.c.b16 %v4603, %v4600
        %v5480 = vpack.c.b16 %v4604, %v4601
        %v5481 = vpack.c.b16 %v4605, %v4602
        %v5482 = vpack.c.b16 %v4609, %v4606
        %v5483 = vpack.c.b16 %v4610, %v4607
        %v5484 = vpack.c.b16 %v4611, %v4608
        %v5485 = vpack.c.b16 %v4615, %v4612
        %v5486 = vpack.c.b16 %v4616, %v4613
        %v5487 = vpack.c.b16 %v4617, %v4614
        %v5488 = vpack.c.b16 %v4621, %v4618
        %v5489 = vpack.c.b16 %v4622, %v4619
        %v5490 = vpack.c.b16 %v4623, %v4620
        %v5491 = vpack.c.b16 %v4627, %v4624
        %v5492 = vpack.c.b16 %v4628, %v4625
        %v5493 = vpack.c.b16 %v4629, %v4626
        %v5494 = vpack.c.b16 %v4633, %v4630
        %v5495 = vpack.c.b16 %v4634, %v4631
        %v5496 = vpack.c.b16 %v4635, %v4632
        %v5497 = vpack.c.b16 %v4639, %v4636
        %v5498 = vpack.c.b16 %v4640, %v4637
        %v5499 = vpack.c.b16 %v4641, %v4638
        %v5500 = vpack.c.b16 %v4645, %v4642
        %v5501 = vpack.c.b16 %v4646, %v4643
        %v5502 = vpack.c.b16 %v4647, %v4644
        %v5503 = vpack.c.b16 %v4651, %v4648
        %v5504 = vpack.c.b16 %v4652, %v4649
        %v5505 = vpack.c.b16 %v4653, %v4650
        %v5506 = vpack.c.b16 %v4657, %v4654
        %v5507 = vpack.c.b16 %v4658, %v4655
        %v5508 = vpack.c.b16 %v4659, %v4656
        %v5509 = vpack.c.b16 %v4663, %v4660
        %v5510 = vpack.c.b16 %v4664, %v4661
        %v5511 = vpack.c.b16 %v4665, %v4662
        %v5512 = vpack.c.b16 %v4669, %v4666
        %v5513 = vpack.c.b16 %v4670, %v4667
        %v5514 = vpack.c.b16 %v4671, %v4668
        %v5515 = vpack.c.b16 %v4675, %v4672
        %v5516 = vpack.c.b16 %v4676, %v4673
        %v5517 = vpack.c.b16 %v4677, %v4674
        %v5518 = vpack.c.b16 %v4681, %v4678
        %v5519 = vpack.c.b16 %v4682, %v4679
        %v5520 = vpack.c.b16 %v4683, %v4680
        %v5521 = vpack.c.b16 %v4687, %v4684
        %v5522 = vpack.c.b16 %v4688, %v4685
        %v5523 = vpack.c.b16 %v4689, %v4686
        %v5524 = vpack.c.b16 %v4693, %v4690
        %v5525 = vpack.c.b16 %v4694, %v4691
        %v5526 = vpack.c.b16 %v4695, %v4692
        %v5527 = vpack.c.b16 %v4699, %v4696
        %v5528 = vpack.c.b16 %v4700, %v4697
        %v5529 = vpack.c.b16 %v4701, %v4698
        %v5530 = vpack.c.b16 %v4705, %v4702
        %v5531 = vpack.c.b16 %v4706, %v4703
        %v5532 = vpack.c.b16 %v4707, %v4704
        %v5533 = vpack.c.b16 %v4711, %v4708
        %v5534 = vpack.c.b16 %v4712, %v4709
        %v5535 = vpack.c.b16 %v4713, %v4710
        %v5536 = vpack.c.b16 %v4717, %v4714
        %v5537 = vpack.c.b16 %v4718, %v4715
        %v5538 = vpack.c.b16 %v4719, %v4716
        %v5539 = vpack.c.b16 %v4723, %v4720
        %v5540 = vpack.c.b16 %v4724, %v4721
        %v5541 = vpack.c.b16 %v4725, %v4722
        %v5542 = vpack.c.b16 %v4729, %v4726
        %v5543 = vpack.c.b16 %v4730, %v4727
        %v5544 = vpack.c.b16 %v4731, %v4728
        %v5545 = vpack.c.b16 %v4735, %v4732
        %v5546 = vpack.c.b16 %v4736, %v4733
        %v5547 = vpack.c.b16 %v4737, %v4734
        %v5548 = vpack.c.b16 %v4741, %v4738
        %v5549 = vpack.c.b16 %v4742, %v4739
        %v5550 = vpack.c.b16 %v4743, %v4740
        %v5551 = vpack.c.b16 %v4747, %v4744
        %v5552 = vpack.c.b16 %v4748, %v4745
        %v5553 = vpack.c.b16 %v4749, %v4746
        %v5554 = vpack.c.b16 %v4753, %v4750
        %v5555 = vpack.c.b16 %v4754, %v4751
        %v5556 = vpack.c.b16 %v4755, %v4752
        %v5557 = vpack.c.b16 %v4759, %v4756
        %v5558 = vpack.c.b16 %v4760, %v4757
        %v5559 = vpack.c.b16 %v4761, %v4758
        %v5560 = vpack.c.b16 %v4765, %v4762
        %v5561 = vpack.c.b16 %v4766, %v4763
        %v5562 = vpack.c.b16 %v4767, %v4764
        %v5563 = vpack.c.b16 %v4771, %v4768
        %v5564 = vpack.c.b16 %v4772, %v4769
        %v5565 = vpack.c.b16 %v4773, %v4770
        %v5566 = vpack.c.b16 %v4777, %v4774
        %v5567 = vpack.c.b16 %v4778, %v4775
        %v5568 = vpack.c.b16 %v4779, %v4776
        %v5569 = vpack.c.b16 %v4783, %v4780
        %v5570 = vpack.c.b16 %v4784, %v4781
        %v5571 = vpack.c.b16 %v4785, %v4782
        %v5572 = vpack.c.b16 %v4789, %v4786
        %v5573 = vpack.c.b16 %v4790, %v4787
        %v5574 = vpack.c.b16 %v4791, %v4788
        %v5575 = vpack.c.b16 %v4795, %v4792
        %v5576 = vpack.c.b16 %v4796, %v4793
        %v5577 = vpack.c.b16 %v4797, %v4794
        %v5578 = vpack.c.b16 %v4801, %v4798
        %v5579 = vpack.c.b16 %v4802, %v4799
        %v5580 = vpack.c.b16 %v4803, %v4800
        %v5581 = vpack.c.b16 %v4807, %v4804
        %v5582 = vpack.c.b16 %v4808, %v4805
        %v5583 = vpack.c.b16 %v4809, %v4806
        %v5584 = vpack.c.b16 %v4813, %v4810
        %v5585 = vpack.c.b16 %v4814, %v4811
        %v5586 = vpack.c.b16 %v4815, %v4812
        %v5587 = vpack.c.b16 %v4819, %v4816
        %v5588 = vpack.c.b16 %v4820, %v4817
        %v5589 = vpack.c.b16 %v4821, %v4818
        %v5590 = vpack.c.b16 %v4825, %v4822
        %v5591 = vpack.c.b16 %v4826, %v4823
        %v5592 = vpack.c.b16 %v4827, %v4824
        %v5593 = vpack.c.b16 %v4831, %v4828
        %v5594 = vpack.c.b16 %v4832, %v4829
        %v5595 = vpack.c.b16 %v4833, %v4830
        %v5596 = vpack.c.b16 %v4837, %v4834
        %v5597 = vpack.c.b16 %v4838, %v4835
        %v5598 = vpack.c.b16 %v4839, %v4836
        %v5599 = vpack.c.b16 %v4843, %v4840
        %v5600 = vpack.c.b16 %v4844, %v4841
        %v5601 = vpack.c.b16 %v4845, %v4842
        %v5602 = vpack.c.b16 %v4849, %v4846
        %v5603 = vpack.c.b16 %v4850, %v4847
        %v5604 = vpack.c.b16 %v4851, %v4848
        %v5605 = vpack.c.b16 %v4855, %v4852
        %v5606 = vpack.c.b16 %v4856, %v4853
        %v5607 = vpack.c.b16 %v4857, %v4854
        %v5608 = vpack.c.b16 %v4861, %v4858
        %v5609 = vpack.c.b16 %v4862, %v4859
        %v5610 = vpack.c.b16 %v4863, %v4860
        %v5611 = vpack.c.b16 %v4867, %v4864
        %v5612 = vpack.c.b16 %v4868, %v4865
        %v5613 = vpack.c.b16 %v4869, %v4866
        %v5614 = vpack.c.b16 %v4873, %v4870
        %v5615 = vpack.c.b16 %v4874, %v4871
        %v5616 = vpack.c.b16 %v4875, %v4872
        %v5617 = vpack.c.b16 %v4879, %v4876
        %v5618 = vpack.c.b16 %v4880, %v4877
        %v5619 = vpack.c.b16 %v4881, %v4878
        %v5620 = vpack.c.b16 %v4885, %v4882
        %v5621 = vpack.c.b16 %v4886, %v4883
        %v5622 = vpack.c.b16 %v4887, %v4884
        %v5623 = vpack.c.b16 %v4891, %v4888
        %v5624 = vpack.c.b16 %v4892, %v4889
        %v5625 = vpack.c.b16 %v4893, %v4890
        %v5626 = vpack.c.b16 %v4897, %v4894
        %v5627 = vpack.c.b16 %v4898, %v4895
        %v5628 = vpack.c.b16 %v4899, %v4896
        %v5629 = vpack.c.b16 %v4903, %v4900
        %v5630 = vpack.c.b16 %v4904, %v4901
        %v5631 = vpack.c.b16 %v4905, %v4902
        %v5632 = vpack.c.b16 %v4909, %v4906
        %v5633 = vpack.c.b16 %v4910, %v4907
        %v5634 = vpack.c.b16 %v4911, %v4908
        %v5635 = vpack.c.b16 %v4915, %v4912
        %v5636 = vpack.c.b16 %v4916, %v4913
        %v5637 = vpack.c.b16 %v4917, %v4914
        %v5638 = vpack.c.b16 %v4921, %v4918
        %v5639 = vpack.c.b16 %v4922, %v4919
        %v5640 = vpack.c.b16 %v4923, %v4920
        %v5641 = vpack.c.b16 %v4927, %v4924
        %v5642 = vpack.c.b16 %v4928, %v4925
        %v5643 = vpack.c.b16 %v4929, %v4926
        %v5644 = vpack.c.b16 %v4933, %v4930
        %v5645 = vpack.c.b16 %v4934, %v4931
        %v5646 = vpack.c.b16 %v4935, %v4932
        %v5647 = vpack.c.b16 %v4939, %v4936
        %v5648 = vpack.c.b16 %v4940, %v4937
        %v5649 = vpack.c.b16 %v4941, %v4938
        %v5650 = vpack.c.b16 %v4945, %v4942
        %v5651 = vpack.c.b16 %v4946, %v4943
        %v5652 = vpack.c.b16 %v4947, %v4944
        %v5653 = vpack.c.b16 %v4951, %v4948
        %v5654 = vpack.c.b16 %v4952, %v4949
        %v5655 = vpack.c.b16 %v4953, %v4950
        %v5656 = vpack.c.b16 %v4957, %v4954
        %v5657 = vpack.c.b16 %v4958, %v4955
        %v5658 = vpack.c.b16 %v4959, %v4956
        %v5659 = vpack.c.b16 %v4963, %v4960
        %v5660 = vpack.c.b16 %v4964, %v4961
        %v5661 = vpack.c.b16 %v4965, %v4962
        %v5662 = vpack.c.b16 %v4969, %v4966
        %v5663 = vpack.c.b16 %v4970, %v4967
        %v5664 = vpack.c.b16 %v4971, %v4968
        %v5665 = vpack.c.b16 %v4975, %v4972
        %v5666 = vpack.c.b16 %v4976, %v4973
        %v5667 = vpack.c.b16 %v4977, %v4974
        %v5668 = vpack.c.b16 %v4981, %v4978
        %v5669 = vpack.c.b16 %v4982, %v4979
        %v5670 = vpack.c.b16 %v4983, %v4980
        %v5671 = vpack.c.b16 %v4987, %v4984
        %v5672 = vpack.c.b16 %v4988, %v4985
        %v5673 = vpack.c.b16 %v4989, %v4986
        %v5674 = vpack.c.b16 %v4993, %v4990
        %v5675 = vpack.c.b16 %v4994, %v4991
        %v5676 = vpack.c.b16 %v4995, %v4992
        %v5677 = vpack.c.b16 %v4999, %v4996
        %v5678 = vpack.c.b16 %v5000, %v4997
        %v5679 = vpack.c.b16 %v5001, %v4998
        %v5680 = vpack.c.b16 %v5005, %v5002
        %v5681 = vpack.c.b16 %v5006, %v5003
        %v5682 = vpack.c.b16 %v5007, %v5004
        %v5683 = vpack.c.b16 %v5011, %v5008
        %v5684 = vpack.c.b16 %v5012, %v5009
        %v5685 = vpack.c.b16 %v5013, %v5010
        %v5686 = vpack.c.b16 %v5017, %v5014
        %v5687 = vpack.c.b16 %v5018, %v5015
        %v5688 = vpack.c.b16 %v5019, %v5016
        %v5689 = vpack.c.b16 %v5023, %v5020
        %v5690 = vpack.c.b16 %v5024, %v5021
        %v5691 = vpack.c.b16 %v5025, %v5022
        %v5692 = vpack.c.b16 %v5029, %v5026
        %v5693 = vpack.c.b16 %v5030, %v5027
        %v5694 = vpack.c.b16 %v5031, %v5028
        %v5695 = vpack.c.b16 %v5035, %v5032
        %v5696 = vpack.c.b16 %v5036, %v5033
        %v5697 = vpack.c.b16 %v5037, %v5034
        %v5698 = vpack.c.b16 %v5041, %v5038
        %v5699 = vpack.c.b16 %v5042, %v5039
        %v5700 = vpack.c.b16 %v5043, %v5040
        %v5701 = vpack.c.b16 %v5047, %v5044
        %v5702 = vpack.c.b16 %v5048, %v5045
        %v5703 = vpack.c.b16 %v5049, %v5046
        %v5704 = vpack.c.b16 %v5053, %v5050
        %v5705 = vpack.c.b16 %v5054, %v5051
        %v5706 = vpack.c.b16 %v5055, %v5052
        %v5707 = vpack.c.b16 %v5059, %v5056
        %v5708 = vpack.c.b16 %v5060, %v5057
        %v5709 = vpack.c.b16 %v5061, %v5058
        %v5710 = vpack.c.b16 %v5065, %v5062
        %v5711 = vpack.c.b16 %v5066, %v5063
        %v5712 = vpack.c.b16 %v5067, %v5064
        %v5713 = vpack.c.b16 %v5071, %v5068
        %v5714 = vpack.c.b16 %v5072, %v5069
        %v5715 = vpack.c.b16 %v5073, %v5070
        %v5716 = vpack.c.b16 %v5077, %v5074
        %v5717 = vpack.c.b16 %v5078, %v5075
        %v5718 = vpack.c.b16 %v5079, %v5076
        %v5719 = vpack.c.b16 %v5083, %v5080
        %v5720 = vpack.c.b16 %v5084, %v5081
        %v5721 = vpack.c.b16 %v5085, %v5082
        %v5722 = vpack.c.b16 %v5089, %v5086
        %v5723 = vpack.c.b16 %v5090, %v5087
        %v5724 = vpack.c.b16 %v5091, %v5088
        %v5725 = vpack.c.b16 %v5095, %v5092
        %v5726 = vpack.c.b16 %v5096, %v5093
        %v5727 = vpack.c.b16 %v5097, %v5094
        %v5728 = vpack.c.b16 %v5101, %v5098
        %v5729 = vpack.c.b16 %v5102, %v5099
        %v5730 = vpack.c.b16 %v5103, %v5100
        %v5731 = vpack.c.b16 %v5107, %v5104
        %v5732 = vpack.c.b16 %v5108, %v5105
        %v5733 = vpack.c.b16 %v5109, %v5106
        %v5734 = vpack.c.b16 %v5113, %v5110
        %v5735 = vpack.c.b16 %v5114, %v5111
        %v5736 = vpack.c.b16 %v5115, %v5112
        %v5737 = vpack.c.b16 %v5119, %v5116
        %v5738 = vpack.c.b16 %v5120, %v5117
        %v5739 = vpack.c.b16 %v5121, %v5118
        %v5740 = vpack.c.b16 %v5125, %v5122
        %v5741 = vpack.c.b16 %v5126, %v5123
        %v5742 = vpack.c.b16 %v5127, %v5124
        %v5743 = vpack.c.b16 %v5131, %v5128
        %v5744 = vpack.c.b16 %v5132, %v5129
        %v5745 = vpack.c.b16 %v5133, %v5130
        %v5746 = vpack.c.b16 %v5137, %v5134
        %v5747 = vpack.c.b16 %v5138, %v5135
        %v5748 = vpack.c.b16 %v5139, %v5136
        %v5749 = vpack.c.b16 %v5143, %v5140
        %v5750 = vpack.c.b16 %v5144, %v5141
        %v5751 = vpack.c.b16 %v5145, %v5142
        %v5752 = vpack.c.b16 %v5149, %v5146
        %v5753 = vpack.c.b16 %v5150, %v5147
        %v5754 = vpack.c.b16 %v5151, %v5148
        %v5755 = vpack.c.b16 %v5155, %v5152
        %v5756 = vpack.c.b16 %v5156, %v5153
        %v5757 = vpack.c.b16 %v5157, %v5154
        %6358 = vmatprep.subr.bf16.mxu0 %v5159
        %6359 = vmatpush1.bf16.msra.mxu0 %v5158
        %6360 = vmatprep.subr.bf16.mxu0 %v5162
        %6361 = vmatpush1.bf16.msra.mxu0 %v5161
        %6362 = vmatprep.subr.bf16.mxu0 %v5165
        %6363 = vmatpush1.bf16.msra.mxu0 %v5164
        %6364 = vmatprep.subr.bf16.mxu0 %v5168
        %6365 = vmatpush1.bf16.msra.mxu0 %v5167
        %6366 = vmatprep.subr.bf16.mxu0 %v5171
        %6367 = vmatpush1.bf16.msra.mxu0 %v5170
        %6368 = vmatprep.subr.bf16.mxu0 %v5174
        %6369 = vmatpush1.bf16.msra.mxu0 %v5173
        %6370 = vmatprep.subr.bf16.mxu0 %v5177
        %6371 = vmatpush1.bf16.msra.mxu0 %v5176
        %6372 = vmatprep.subr.bf16.mxu0 %v5180
        %6373 = vmatpush1.bf16.msra.mxu0 %v5179
        %6374 = vmatprep.subr.bf16.mxu0 %v5183
        %6375 = vmatpush1.bf16.msra.mxu0 %v5182
        %6376 = vmatprep.subr.bf16.mxu0 %v5186
        %6377 = vmatpush1.bf16.msra.mxu0 %v5185
        %6378 = vmatprep.subr.bf16.mxu0 %v5189
        %6379 = vmatpush1.bf16.msra.mxu0 %v5188
        %6380 = vmatprep.subr.bf16.mxu0 %v5192
        %6381 = vmatpush1.bf16.msra.mxu0 %v5191
        %6382 = vmatprep.subr.bf16.mxu0 %v5195
        %6383 = vmatpush1.bf16.msra.mxu0 %v5194
        %6384 = vmatprep.subr.bf16.mxu0 %v5198
        %6385 = vmatpush1.bf16.msra.mxu0 %v5197
        %6386 = vmatprep.subr.bf16.mxu0 %v5201
        %6387 = vmatpush1.bf16.msra.mxu0 %v5200
        %6388 = vmatprep.subr.bf16.mxu0 %v5204
        %6389 = vmatpush1.bf16.msra.mxu0 %v5203
        %6390 = vmatprep.mubr.bf16.mxu0 %v2334
        %6391 = vmatmul.mubr.bf16.gmra.mrb[0].mxu0 %v2333
        %v6392 = vpop.f32.mrb[0].mxu0
        %v6393 = vadd.f32 0.0, %v6392
        %v6394 = vpop.f32.mrb[0].mxu0
        %v6395 = vadd.f32 0.0, %v6394
        %v6396 = vpop.f32.mrb[0].mxu0
        %v6397 = vpop.f32.mrb[0].mxu0
        %6398 = vdwg.mxu0
        %6399 = vmatprep.subr.bf16.mxu0 %v5207
        %6400 = vmatpush1.bf16.msra.mxu0 %v5206
        %6401 = vmatprep.subr.bf16.mxu0 %v5210
        %6402 = vmatpush1.bf16.msra.mxu0 %v5209
        %6403 = vmatprep.subr.bf16.mxu0 %v5213
        %6404 = vmatpush1.bf16.msra.mxu0 %v5212
        %6405 = vmatprep.subr.bf16.mxu0 %v5216
        %6406 = vmatpush1.bf16.msra.mxu0 %v5215
        %6407 = vmatprep.subr.bf16.mxu0 %v5219
        %6408 = vmatpush1.bf16.msra.mxu0 %v5218
        %6409 = vmatprep.subr.bf16.mxu0 %v5222
        %6410 = vmatpush1.bf16.msra.mxu0 %v5221
        %6411 = vmatprep.subr.bf16.mxu0 %v5225
        %6412 = vmatpush1.bf16.msra.mxu0 %v5224
        %6413 = vmatprep.subr.bf16.mxu0 %v5228
        %6414 = vmatpush1.bf16.msra.mxu0 %v5227
        %6415 = vmatprep.subr.bf16.mxu0 %v5231
        %6416 = vmatpush1.bf16.msra.mxu0 %v5230
        %6417 = vmatprep.subr.bf16.mxu0 %v5234
        %6418 = vmatpush1.bf16.msra.mxu0 %v5233
        %6419 = vmatprep.subr.bf16.mxu0 %v5237
        %6420 = vmatpush1.bf16.msra.mxu0 %v5236
        %6421 = vmatprep.subr.bf16.mxu0 %v5240
        %6422 = vmatpush1.bf16.msra.mxu0 %v5239
        %6423 = vmatprep.subr.bf16.mxu0 %v5243
        %6424 = vmatpush1.bf16.msra.mxu0 %v5242
        %6425 = vmatprep.subr.bf16.mxu0 %v5246
        %6426 = vmatpush1.bf16.msra.mxu0 %v5245
        %6427 = vmatprep.subr.bf16.mxu0 %v5249
        %6428 = vmatpush1.bf16.msra.mxu0 %v5248
        %6429 = vmatprep.subr.bf16.mxu0 %v5252
        %6430 = vmatpush1.bf16.msra.mxu0 %v5251
        %6431 = vmatprep.mubr.bf16.mxu0 %v2336
        %6432 = vmatmul.mubr.bf16.gmra.mrb[0].mxu0 %v2335
        %v6433 = vpop.f32.mrb[0].mxu0
        %v6434 = vadd.f32 %v6393, %v6433
        %v6435 = vpop.f32.mrb[0].mxu0
        %v6436 = vadd.f32 %v6395, %v6435
        %v6437 = vpop.f32.mrb[0].mxu0
        %v6438 = vpop.f32.mrb[0].mxu0
        %6439 = vdwg.mxu0
        %6440 = vmatprep.subr.bf16.mxu0 %v5255
        %6441 = vmatpush1.bf16.msra.mxu0 %v5254
        %6442 = vmatprep.subr.bf16.mxu0 %v5258
        %6443 = vmatpush1.bf16.msra.mxu0 %v5257
        %6444 = vmatprep.subr.bf16.mxu0 %v5261
        %6445 = vmatpush1.bf16.msra.mxu0 %v5260
        %6446 = vmatprep.subr.bf16.mxu0 %v5264
        %6447 = vmatpush1.bf16.msra.mxu0 %v5263
        %6448 = vmatprep.subr.bf16.mxu0 %v5267
        %6449 = vmatpush1.bf16.msra.mxu0 %v5266
        %6450 = vmatprep.subr.bf16.mxu0 %v5270
        %6451 = vmatpush1.bf16.msra.mxu0 %v5269
        %6452 = vmatprep.subr.bf16.mxu0 %v5273
        %6453 = vmatpush1.bf16.msra.mxu0 %v5272
        %6454 = vmatprep.subr.bf16.mxu0 %v5276
        %6455 = vmatpush1.bf16.msra.mxu0 %v5275
        %6456 = vmatprep.subr.bf16.mxu0 %v5279
        %6457 = vmatpush1.bf16.msra.mxu0 %v5278
        %6458 = vmatprep.subr.bf16.mxu0 %v5282
        %6459 = vmatpush1.bf16.msra.mxu0 %v5281
        %6460 = vmatprep.subr.bf16.mxu0 %v5285
        %6461 = vmatpush1.bf16.msra.mxu0 %v5284
        %6462 = vmatprep.subr.bf16.mxu0 %v5288
        %6463 = vmatpush1.bf16.msra.mxu0 %v5287
        %6464 = vmatprep.subr.bf16.mxu0 %v5291
        %6465 = vmatpush1.bf16.msra.mxu0 %v5290
        %6466 = vmatprep.subr.bf16.mxu0 %v5294
        %6467 = vmatpush1.bf16.msra.mxu0 %v5293
        %6468 = vmatprep.subr.bf16.mxu0 %v5297
        %6469 = vmatpush1.bf16.msra.mxu0 %v5296
        %6470 = vmatprep.subr.bf16.mxu0 %v5300
        %6471 = vmatpush1.bf16.msra.mxu0 %v5299
        %6472 = vmatprep.mubr.bf16.mxu0 %v2338
        %6473 = vmatmul.mubr.bf16.gmra.mrb[0].mxu0 %v2337
        %v6474 = vpop.f32.mrb[0].mxu0
        %v6475 = vadd.f32 %v6434, %v6474
        %v6476 = vpop.f32.mrb[0].mxu0
        %v6477 = vadd.f32 %v6436, %v6476
        %v6478 = vpop.f32.mrb[0].mxu0
        %v6479 = vpop.f32.mrb[0].mxu0
        %6480 = vdwg.mxu0
        %6481 = vmatprep.subr.bf16.mxu0 %v5303
        %6482 = vmatpush1.bf16.msra.mxu0 %v5302
        %6483 = vmatprep.subr.bf16.mxu0 %v5306
        %6484 = vmatpush1.bf16.msra.mxu0 %v5305
        %6485 = vmatprep.subr.bf16.mxu0 %v5309
        %6486 = vmatpush1.bf16.msra.mxu0 %v5308
        %6487 = vmatprep.subr.bf16.mxu0 %v5312
        %6488 = vmatpush1.bf16.msra.mxu0 %v5311
        %6489 = vmatprep.subr.bf16.mxu0 %v5315
        %6490 = vmatpush1.bf16.msra.mxu0 %v5314
        %6491 = vmatprep.subr.bf16.mxu0 %v5318
        %6492 = vmatpush1.bf16.msra.mxu0 %v5317
        %6493 = vmatprep.subr.bf16.mxu0 %v5321
        %6494 = vmatpush1.bf16.msra.mxu0 %v5320
        %6495 = vmatprep.subr.bf16.mxu0 %v5324
        %6496 = vmatpush1.bf16.msra.mxu0 %v5323
        %6497 = vmatprep.subr.bf16.mxu0 %v5327
        %6498 = vmatpush1.bf16.msra.mxu0 %v5326
        %6499 = vmatprep.subr.bf16.mxu0 %v5330
        %6500 = vmatpush1.bf16.msra.mxu0 %v5329
        %6501 = vmatprep.subr.bf16.mxu0 %v5333
        %6502 = vmatpush1.bf16.msra.mxu0 %v5332
        %6503 = vmatprep.subr.bf16.mxu0 %v5336
        %6504 = vmatpush1.bf16.msra.mxu0 %v5335
        %6505 = vmatprep.subr.bf16.mxu0 %v5339
        %6506 = vmatpush1.bf16.msra.mxu0 %v5338
        %6507 = vmatprep.subr.bf16.mxu0 %v5342
        %6508 = vmatpush1.bf16.msra.mxu0 %v5341
        %6509 = vmatprep.subr.bf16.mxu0 %v5345
        %6510 = vmatpush1.bf16.msra.mxu0 %v5344
        %6511 = vmatprep.subr.bf16.mxu0 %v5348
        %6512 = vmatpush1.bf16.msra.mxu0 %v5347
        %6513 = vmatprep.mubr.bf16.mxu0 %v2340
        %6514 = vmatmul.mubr.bf16.gmra.mrb[0].mxu0 %v2339
        %v6515 = vpop.f32.mrb[0].mxu0
        %v6516 = vadd.f32 %v6475, %v6515
        %v6517 = vpop.f32.mrb[0].mxu0
        %v6518 = vadd.f32 %v6477, %v6517
        %v6519 = vpop.f32.mrb[0].mxu0
        %v6520 = vpop.f32.mrb[0].mxu0
        %6521 = vdwg.mxu0
        %6522 = vmatprep.subr.bf16.mxu0 %v5351
        %6523 = vmatpush1.bf16.msra.mxu0 %v5350
        %6524 = vmatprep.subr.bf16.mxu0 %v5354
        %6525 = vmatpush1.bf16.msra.mxu0 %v5353
        %6526 = vmatprep.subr.bf16.mxu0 %v5357
        %6527 = vmatpush1.bf16.msra.mxu0 %v5356
        %6528 = vmatprep.subr.bf16.mxu0 %v5360
        %6529 = vmatpush1.bf16.msra.mxu0 %v5359
        %6530 = vmatprep.subr.bf16.mxu0 %v5363
        %6531 = vmatpush1.bf16.msra.mxu0 %v5362
        %6532 = vmatprep.subr.bf16.mxu0 %v5366
        %6533 = vmatpush1.bf16.msra.mxu0 %v5365
        %6534 = vmatprep.subr.bf16.mxu0 %v5369
        %6535 = vmatpush1.bf16.msra.mxu0 %v5368
        %6536 = vmatprep.subr.bf16.mxu0 %v5372
        %6537 = vmatpush1.bf16.msra.mxu0 %v5371
        %6538 = vmatprep.subr.bf16.mxu0 %v5375
        %6539 = vmatpush1.bf16.msra.mxu0 %v5374
        %6540 = vmatprep.subr.bf16.mxu0 %v5378
        %6541 = vmatpush1.bf16.msra.mxu0 %v5377
        %6542 = vmatprep.subr.bf16.mxu0 %v5381
        %6543 = vmatpush1.bf16.msra.mxu0 %v5380
        %6544 = vmatprep.subr.bf16.mxu0 %v5384
        %6545 = vmatpush1.bf16.msra.mxu0 %v5383
        %6546 = vmatprep.subr.bf16.mxu0 %v5387
        %6547 = vmatpush1.bf16.msra.mxu0 %v5386
        %6548 = vmatprep.subr.bf16.mxu0 %v5390
        %6549 = vmatpush1.bf16.msra.mxu0 %v5389
        %6550 = vmatprep.subr.bf16.mxu0 %v5393
        %6551 = vmatpush1.bf16.msra.mxu0 %v5392
        %6552 = vmatprep.subr.bf16.mxu0 %v5396
        %6553 = vmatpush1.bf16.msra.mxu0 %v5395
        %6554 = vmatprep.mubr.bf16.mxu0 %v2342
        %6555 = vmatmul.mubr.bf16.gmra.mrb[0].mxu0 %v2341
        %v6556 = vpop.f32.mrb[0].mxu0
        %v6557 = vadd.f32 %v6516, %v6556
        %v6558 = vpop.f32.mrb[0].mxu0
        %v6559 = vadd.f32 %v6518, %v6558
        %v6560 = vpop.f32.mrb[0].mxu0
        %v6561 = vpop.f32.mrb[0].mxu0
        %6562 = vdwg.mxu0
        %6563 = vmatprep.subr.bf16.mxu0 %v5399
        %6564 = vmatpush1.bf16.msra.mxu0 %v5398
        %6565 = vmatprep.subr.bf16.mxu0 %v5402
        %6566 = vmatpush1.bf16.msra.mxu0 %v5401
        %6567 = vmatprep.subr.bf16.mxu0 %v5405
        %6568 = vmatpush1.bf16.msra.mxu0 %v5404
        %6569 = vmatprep.subr.bf16.mxu0 %v5408
        %6570 = vmatpush1.bf16.msra.mxu0 %v5407
        %6571 = vmatprep.subr.bf16.mxu0 %v5411
        %6572 = vmatpush1.bf16.msra.mxu0 %v5410
        %6573 = vmatprep.subr.bf16.mxu0 %v5414
        %6574 = vmatpush1.bf16.msra.mxu0 %v5413
        %6575 = vmatprep.subr.bf16.mxu0 %v5417
        %6576 = vmatpush1.bf16.msra.mxu0 %v5416
        %6577 = vmatprep.subr.bf16.mxu0 %v5420
        %6578 = vmatpush1.bf16.msra.mxu0 %v5419
        %6579 = vmatprep.subr.bf16.mxu0 %v5423
        %6580 = vmatpush1.bf16.msra.mxu0 %v5422
        %6581 = vmatprep.subr.bf16.mxu0 %v5426
        %6582 = vmatpush1.bf16.msra.mxu0 %v5425
        %6583 = vmatprep.subr.bf16.mxu0 %v5429
        %6584 = vmatpush1.bf16.msra.mxu0 %v5428
        %6585 = vmatprep.subr.bf16.mxu0 %v5432
        %6586 = vmatpush1.bf16.msra.mxu0 %v5431
        %6587 = vmatprep.subr.bf16.mxu0 %v5435
        %6588 = vmatpush1.bf16.msra.mxu0 %v5434
        %6589 = vmatprep.subr.bf16.mxu0 %v5438
        %6590 = vmatpush1.bf16.msra.mxu0 %v5437
        %6591 = vmatprep.subr.bf16.mxu0 %v5441
        %6592 = vmatpush1.bf16.msra.mxu0 %v5440
        %6593 = vmatprep.subr.bf16.mxu0 %v5444
        %6594 = vmatpush1.bf16.msra.mxu0 %v5443
        %6595 = vmatprep.mubr.bf16.mxu0 %v2344
        %6596 = vmatmul.mubr.bf16.gmra.mrb[0].mxu0 %v2343
        %v6597 = vpop.f32.mrb[0].mxu0
        %v6598 = vadd.f32 %v6557, %v6597
        %v6599 = vpop.f32.mrb[0].mxu0
        %v6600 = vadd.f32 %v6559, %v6599
        %v6601 = vpop.f32.mrb[0].mxu0
        %v6602 = vpop.f32.mrb[0].mxu0
        %6603 = vdwg.mxu0
        %6604 = vmatprep.subr.bf16.mxu0 %v5447
        %6605 = vmatpush1.bf16.msra.mxu0 %v5446
        %6606 = vmatprep.subr.bf16.mxu0 %v5450
        %6607 = vmatpush1.bf16.msra.mxu0 %v5449
        %6608 = vmatprep.subr.bf16.mxu0 %v5453
        %6609 = vmatpush1.bf16.msra.mxu0 %v5452
        %6610 = vmatprep.subr.bf16.mxu0 %v5456
        %6611 = vmatpush1.bf16.msra.mxu0 %v5455
        %6612 = vmatprep.subr.bf16.mxu0 %v5459
        %6613 = vmatpush1.bf16.msra.mxu0 %v5458
        %6614 = vmatprep.subr.bf16.mxu0 %v5462
        %6615 = vmatpush1.bf16.msra.mxu0 %v5461
        %6616 = vmatprep.subr.bf16.mxu0 %v5465
        %6617 = vmatpush1.bf16.msra.mxu0 %v5464
        %6618 = vmatprep.subr.bf16.mxu0 %v5468
        %6619 = vmatpush1.bf16.msra.mxu0 %v5467
        %6620 = vmatprep.subr.bf16.mxu0 %v5471
        %6621 = vmatpush1.bf16.msra.mxu0 %v5470
        %6622 = vmatprep.subr.bf16.mxu0 %v5474
        %6623 = vmatpush1.bf16.msra.mxu0 %v5473
        %6624 = vmatprep.subr.bf16.mxu0 %v5477
        %6625 = vmatpush1.bf16.msra.mxu0 %v5476
        %6626 = vmatprep.subr.bf16.mxu0 %v5480
        %6627 = vmatpush1.bf16.msra.mxu0 %v5479
        %6628 = vmatprep.subr.bf16.mxu0 %v5483
        %6629 = vmatpush1.bf16.msra.mxu0 %v5482
        %6630 = vmatprep.subr.bf16.mxu0 %v5486
        %6631 = vmatpush1.bf16.msra.mxu0 %v5485
        %6632 = vmatprep.subr.bf16.mxu0 %v5489
        %6633 = vmatpush1.bf16.msra.mxu0 %v5488
        %6634 = vmatprep.subr.bf16.mxu0 %v5492
        %6635 = vmatpush1.bf16.msra.mxu0 %v5491
        %6636 = vmatprep.mubr.bf16.mxu0 %v2346
        %6637 = vmatmul.mubr.bf16.gmra.mrb[0].mxu0 %v2345
        %v6638 = vpop.f32.mrb[0].mxu0
        %v6639 = vadd.f32 %v6598, %v6638
        %v6640 = vpop.f32.mrb[0].mxu0
        %v6641 = vadd.f32 %v6600, %v6640
        %v6642 = vpop.f32.mrb[0].mxu0
        %v6643 = vpop.f32.mrb[0].mxu0
        %6644 = vdwg.mxu0
        %6645 = vmatprep.subr.bf16.mxu0 %v5495
        %6646 = vmatpush1.bf16.msra.mxu0 %v5494
        %6647 = vmatprep.subr.bf16.mxu0 %v5498
        %6648 = vmatpush1.bf16.msra.mxu0 %v5497
        %6649 = vmatprep.subr.bf16.mxu0 %v5501
        %6650 = vmatpush1.bf16.msra.mxu0 %v5500
        %6651 = vmatprep.subr.bf16.mxu0 %v5504
        %6652 = vmatpush1.bf16.msra.mxu0 %v5503
        %6653 = vmatprep.subr.bf16.mxu0 %v5507
        %6654 = vmatpush1.bf16.msra.mxu0 %v5506
        %6655 = vmatprep.subr.bf16.mxu0 %v5510
        %6656 = vmatpush1.bf16.msra.mxu0 %v5509
        %6657 = vmatprep.subr.bf16.mxu0 %v5513
        %6658 = vmatpush1.bf16.msra.mxu0 %v5512
        %6659 = vmatprep.subr.bf16.mxu0 %v5516
        %6660 = vmatpush1.bf16.msra.mxu0 %v5515
        %6661 = vmatprep.subr.bf16.mxu0 %v5519
        %6662 = vmatpush1.bf16.msra.mxu0 %v5518
        %6663 = vmatprep.subr.bf16.mxu0 %v5522
        %6664 = vmatpush1.bf16.msra.mxu0 %v5521
        %6665 = vmatprep.subr.bf16.mxu0 %v5525
        %6666 = vmatpush1.bf16.msra.mxu0 %v5524
        %6667 = vmatprep.subr.bf16.mxu0 %v5528
        %6668 = vmatpush1.bf16.msra.mxu0 %v5527
        %6669 = vmatprep.subr.bf16.mxu0 %v5531
        %6670 = vmatpush1.bf16.msra.mxu0 %v5530
        %6671 = vmatprep.subr.bf16.mxu0 %v5534
        %6672 = vmatpush1.bf16.msra.mxu0 %v5533
        %6673 = vmatprep.subr.bf16.mxu0 %v5537
        %6674 = vmatpush1.bf16.msra.mxu0 %v5536
        %6675 = vmatprep.subr.bf16.mxu0 %v5540
        %6676 = vmatpush1.bf16.msra.mxu0 %v5539
        %6677 = vmatprep.mubr.bf16.mxu0 %v2348
        %6678 = vmatmul.mubr.bf16.gmra.mrb[0].mxu0 %v2347
        %v6679 = vpop.f32.mrb[0].mxu0
        %v6680 = vadd.f32 %v6639, %v6679
        %v6681 = vpop.f32.mrb[0].mxu0
        %v6682 = vadd.f32 %v6641, %v6681
        %v6683 = vpop.f32.mrb[0].mxu0
        %v6684 = vpop.f32.mrb[0].mxu0
        %6685 = vdwg.mxu0
        %6686 = vmatprep.subr.bf16.mxu0 %v5543
        %6687 = vmatpush1.bf16.msra.mxu0 %v5542
        %6688 = vmatprep.subr.bf16.mxu0 %v5546
        %6689 = vmatpush1.bf16.msra.mxu0 %v5545
        %6690 = vmatprep.subr.bf16.mxu0 %v5549
        %6691 = vmatpush1.bf16.msra.mxu0 %v5548
        %6692 = vmatprep.subr.bf16.mxu0 %v5552
        %6693 = vmatpush1.bf16.msra.mxu0 %v5551
        %6694 = vmatprep.subr.bf16.mxu0 %v5555
        %6695 = vmatpush1.bf16.msra.mxu0 %v5554
        %6696 = vmatprep.subr.bf16.mxu0 %v5558
        %6697 = vmatpush1.bf16.msra.mxu0 %v5557
        %6698 = vmatprep.subr.bf16.mxu0 %v5561
        %6699 = vmatpush1.bf16.msra.mxu0 %v5560
        %6700 = vmatprep.subr.bf16.mxu0 %v5564
        %6701 = vmatpush1.bf16.msra.mxu0 %v5563
        %6702 = vmatprep.subr.bf16.mxu0 %v5567
        %6703 = vmatpush1.bf16.msra.mxu0 %v5566
        %6704 = vmatprep.subr.bf16.mxu0 %v5570
        %6705 = vmatpush1.bf16.msra.mxu0 %v5569
        %6706 = vmatprep.subr.bf16.mxu0 %v5573
        %6707 = vmatpush1.bf16.msra.mxu0 %v5572
        %6708 = vmatprep.subr.bf16.mxu0 %v5576
        %6709 = vmatpush1.bf16.msra.mxu0 %v5575
        %6710 = vmatprep.subr.bf16.mxu0 %v5579
        %6711 = vmatpush1.bf16.msra.mxu0 %v5578
        %6712 = vmatprep.subr.bf16.mxu0 %v5582
        %6713 = vmatpush1.bf16.msra.mxu0 %v5581
        %6714 = vmatprep.subr.bf16.mxu0 %v5585
        %6715 = vmatpush1.bf16.msra.mxu0 %v5584
        %6716 = vmatprep.subr.bf16.mxu0 %v5588
        %6717 = vmatpush1.bf16.msra.mxu0 %v5587
        %6718 = vmatprep.mubr.bf16.mxu0 %v2350
        %6719 = vmatmul.mubr.bf16.gmra.mrb[0].mxu0 %v2349
        %v6720 = vpop.f32.mrb[0].mxu0
        %v6721 = vadd.f32 %v6680, %v6720
        %v6722 = vpop.f32.mrb[0].mxu0
        %v6723 = vadd.f32 %v6682, %v6722
        %v6724 = vpop.f32.mrb[0].mxu0
        %v6725 = vpop.f32.mrb[0].mxu0
        %6726 = vdwg.mxu0
        %6727 = vmatprep.subr.bf16.mxu0 %v5591
        %6728 = vmatpush1.bf16.msra.mxu0 %v5590
        %6729 = vmatprep.subr.bf16.mxu0 %v5594
        %6730 = vmatpush1.bf16.msra.mxu0 %v5593
        %6731 = vmatprep.subr.bf16.mxu0 %v5597
        %6732 = vmatpush1.bf16.msra.mxu0 %v5596
        %6733 = vmatprep.subr.bf16.mxu0 %v5600
        %6734 = vmatpush1.bf16.msra.mxu0 %v5599
        %6735 = vmatprep.subr.bf16.mxu0 %v5603
        %6736 = vmatpush1.bf16.msra.mxu0 %v5602
        %6737 = vmatprep.subr.bf16.mxu0 %v5606
        %6738 = vmatpush1.bf16.msra.mxu0 %v5605
        %6739 = vmatprep.subr.bf16.mxu0 %v5609
        %6740 = vmatpush1.bf16.msra.mxu0 %v5608
        %6741 = vmatprep.subr.bf16.mxu0 %v5612
        %6742 = vmatpush1.bf16.msra.mxu0 %v5611
        %6743 = vmatprep.subr.bf16.mxu0 %v5615
        %6744 = vmatpush1.bf16.msra.mxu0 %v5614
        %6745 = vmatprep.subr.bf16.mxu0 %v5618
        %6746 = vmatpush1.bf16.msra.mxu0 %v5617
        %6747 = vmatprep.subr.bf16.mxu0 %v5621
        %6748 = vmatpush1.bf16.msra.mxu0 %v5620
        %6749 = vmatprep.subr.bf16.mxu0 %v5624
        %6750 = vmatpush1.bf16.msra.mxu0 %v5623
        %6751 = vmatprep.subr.bf16.mxu0 %v5627
        %6752 = vmatpush1.bf16.msra.mxu0 %v5626
        %6753 = vmatprep.subr.bf16.mxu0 %v5630
        %6754 = vmatpush1.bf16.msra.mxu0 %v5629
        %6755 = vmatprep.subr.bf16.mxu0 %v5633
        %6756 = vmatpush1.bf16.msra.mxu0 %v5632
        %6757 = vmatprep.subr.bf16.mxu0 %v5636
        %6758 = vmatpush1.bf16.msra.mxu0 %v5635
        %6759 = vmatprep.mubr.bf16.mxu0 %v2352
        %6760 = vmatmul.mubr.bf16.gmra.mrb[0].mxu0 %v2351
        %v6761 = vpop.f32.mrb[0].mxu0
        %v6762 = vadd.f32 %v6721, %v6761
        %v6763 = vpop.f32.mrb[0].mxu0
        %v6764 = vadd.f32 %v6723, %v6763
        %v6765 = vpop.f32.mrb[0].mxu0
        %v6766 = vpop.f32.mrb[0].mxu0
        %6767 = vdwg.mxu0
        %6768 = vmatprep.subr.bf16.mxu0 %v5639
        %6769 = vmatpush1.bf16.msra.mxu0 %v5638
        %6770 = vmatprep.subr.bf16.mxu0 %v5642
        %6771 = vmatpush1.bf16.msra.mxu0 %v5641
        %6772 = vmatprep.subr.bf16.mxu0 %v5645
        %6773 = vmatpush1.bf16.msra.mxu0 %v5644
        %6774 = vmatprep.subr.bf16.mxu0 %v5648
        %6775 = vmatpush1.bf16.msra.mxu0 %v5647
        %6776 = vmatprep.subr.bf16.mxu0 %v5651
        %6777 = vmatpush1.bf16.msra.mxu0 %v5650
        %6778 = vmatprep.subr.bf16.mxu0 %v5654
        %6779 = vmatpush1.bf16.msra.mxu0 %v5653
        %6780 = vmatprep.subr.bf16.mxu0 %v5657
        %6781 = vmatpush1.bf16.msra.mxu0 %v5656
        %6782 = vmatprep.subr.bf16.mxu0 %v5660
        %6783 = vmatpush1.bf16.msra.mxu0 %v5659
        %6784 = vmatprep.subr.bf16.mxu0 %v5663
        %6785 = vmatpush1.bf16.msra.mxu0 %v5662
        %6786 = vmatprep.subr.bf16.mxu0 %v5666
        %6787 = vmatpush1.bf16.msra.mxu0 %v5665
        %6788 = vmatprep.subr.bf16.mxu0 %v5669
        %6789 = vmatpush1.bf16.msra.mxu0 %v5668
        %6790 = vmatprep.subr.bf16.mxu0 %v5672
        %6791 = vmatpush1.bf16.msra.mxu0 %v5671
        %6792 = vmatprep.subr.bf16.mxu0 %v5675
        %6793 = vmatpush1.bf16.msra.mxu0 %v5674
        %6794 = vmatprep.subr.bf16.mxu0 %v5678
        %6795 = vmatpush1.bf16.msra.mxu0 %v5677
        %6796 = vmatprep.subr.bf16.mxu0 %v5681
        %6797 = vmatpush1.bf16.msra.mxu0 %v5680
        %6798 = vmatprep.subr.bf16.mxu0 %v5684
        %6799 = vmatpush1.bf16.msra.mxu0 %v5683
        %6800 = vmatprep.mubr.bf16.mxu0 %v2354
        %6801 = vmatmul.mubr.bf16.gmra.mrb[0].mxu0 %v2353
        %v6802 = vpop.f32.mrb[0].mxu0
        %v6803 = vadd.f32 %v6762, %v6802
        %v6804 = vpop.f32.mrb[0].mxu0
        %v6805 = vadd.f32 %v6764, %v6804
        %v6806 = vpop.f32.mrb[0].mxu0
        %v6807 = vpop.f32.mrb[0].mxu0
        %6808 = vdwg.mxu0
        %6809 = vmatprep.subr.bf16.mxu0 %v5687
        %6810 = vmatpush1.bf16.msra.mxu0 %v5686
        %6811 = vmatprep.subr.bf16.mxu0 %v5690
        %6812 = vmatpush1.bf16.msra.mxu0 %v5689
        %6813 = vmatprep.subr.bf16.mxu0 %v5693
        %6814 = vmatpush1.bf16.msra.mxu0 %v5692
        %6815 = vmatprep.subr.bf16.mxu0 %v5696
        %6816 = vmatpush1.bf16.msra.mxu0 %v5695
        %6817 = vmatprep.subr.bf16.mxu0 %v5699
        %6818 = vmatpush1.bf16.msra.mxu0 %v5698
        %6819 = vmatprep.subr.bf16.mxu0 %v5702
        %6820 = vmatpush1.bf16.msra.mxu0 %v5701
        %6821 = vmatprep.subr.bf16.mxu0 %v5705
        %6822 = vmatpush1.bf16.msra.mxu0 %v5704
        %6823 = vmatprep.subr.bf16.mxu0 %v5708
        %6824 = vmatpush1.bf16.msra.mxu0 %v5707
        %6825 = vmatprep.subr.bf16.mxu0 %v5711
        %6826 = vmatpush1.bf16.msra.mxu0 %v5710
        %6827 = vmatprep.subr.bf16.mxu0 %v5714
        %6828 = vmatpush1.bf16.msra.mxu0 %v5713
        %6829 = vmatprep.subr.bf16.mxu0 %v5717
        %6830 = vmatpush1.bf16.msra.mxu0 %v5716
        %6831 = vmatprep.subr.bf16.mxu0 %v5720
        %6832 = vmatpush1.bf16.msra.mxu0 %v5719
        %6833 = vmatprep.subr.bf16.mxu0 %v5723
        %6834 = vmatpush1.bf16.msra.mxu0 %v5722
        %6835 = vmatprep.subr.bf16.mxu0 %v5726
        %6836 = vmatpush1.bf16.msra.mxu0 %v5725
        %6837 = vmatprep.subr.bf16.mxu0 %v5729
        %6838 = vmatpush1.bf16.msra.mxu0 %v5728
        %6839 = vmatprep.subr.bf16.mxu0 %v5732
        %6840 = vmatpush1.bf16.msra.mxu0 %v5731
        %6841 = vmatprep.mubr.bf16.mxu0 %v2356
        %6842 = vmatmul.mubr.bf16.gmra.mrb[0].mxu0 %v2355
        %v6843 = vpop.f32.mrb[0].mxu0
        %v6844 = vadd.f32 %v6803, %v6843
        %v6845 = vpop.f32.mrb[0].mxu0
        %v6846 = vadd.f32 %v6805, %v6845
        %v6847 = vpop.f32.mrb[0].mxu0
        %v6848 = vpop.f32.mrb[0].mxu0
        %6849 = vdwg.mxu0
        %6850 = vmatprep.subr.bf16.mxu0 %v5735
        %6851 = vmatpush1.bf16.msra.mxu0 %v5734
        %6852 = vmatprep.subr.bf16.mxu0 %v5738
        %6853 = vmatpush1.bf16.msra.mxu0 %v5737
        %6854 = vmatprep.subr.bf16.mxu0 %v5741
        %6855 = vmatpush1.bf16.msra.mxu0 %v5740
        %6856 = vmatprep.subr.bf16.mxu0 %v5744
        %6857 = vmatpush1.bf16.msra.mxu0 %v5743
        %6858 = vmatprep.subr.bf16.mxu0 %v5747
        %6859 = vmatpush1.bf16.msra.mxu0 %v5746
        %6860 = vmatprep.subr.bf16.mxu0 %v5750
        %6861 = vmatpush1.bf16.msra.mxu0 %v5749
        %6862 = vmatprep.subr.bf16.mxu0 %v5753
        %6863 = vmatpush1.bf16.msra.mxu0 %v5752
        %6864 = vmatprep.subr.bf16.mxu0 %v5756
        %6865 = vmatpush1.bf16.msra.mxu0 %v5755
        %6866 = vmatprep.subr.bf16.mxu0 0
        %6867 = vmatpush1.bf16.msra.mxu0 0
        %6868 = vmatprep.subr.bf16.mxu0 0
        %6869 = vmatpush1.bf16.msra.mxu0 0
        %6870 = vmatprep.subr.bf16.mxu0 0
        %6871 = vmatpush1.bf16.msra.mxu0 0
        %6872 = vmatprep.subr.bf16.mxu0 0
        %6873 = vmatpush1.bf16.msra.mxu0 0
        %6874 = vmatprep.subr.bf16.mxu0 0
        %6875 = vmatpush1.bf16.msra.mxu0 0
        %6876 = vmatprep.subr.bf16.mxu0 0
        %6877 = vmatpush1.bf16.msra.mxu0 0
        %6878 = vmatprep.subr.bf16.mxu0 0
        %6879 = vmatpush1.bf16.msra.mxu0 0
        %6880 = vmatprep.subr.bf16.mxu0 0
        %6881 = vmatpush1.bf16.msra.mxu0 0
        %6882 = vmatprep.mubr.bf16.mxu0 0
        %6883 = vmatmul.mubr.bf16.gmra.mrb[0].mxu0 %v2357
        %v6884 = vpop.f32.mrb[0].mxu0
        %v6885 = vadd.f32 %v6844, %v6884
        %v6886 = vpop.f32.mrb[0].mxu0
        %v6887 = vadd.f32 %v6846, %v6886
        %v6888 = vpop.f32.mrb[0].mxu0
        %v6889 = vpop.f32.mrb[0].mxu0
        %6890 = vdwg.mxu0
        %6891 = vmatprep.subr.bf16.mxu0 0
        %6892 = vmatpush1.bf16.msra.mxu0 %v5160
        %6893 = vmatprep.subr.bf16.mxu0 0
        %6894 = vmatpush1.bf16.msra.mxu0 %v5163
        %6895 = vmatprep.subr.bf16.mxu0 0
        %6896 = vmatpush1.bf16.msra.mxu0 %v5166
        %6897 = vmatprep.subr.bf16.mxu0 0
        %6898 = vmatpush1.bf16.msra.mxu0 %v5169
        %6899 = vmatprep.subr.bf16.mxu0 0
        %6900 = vmatpush1.bf16.msra.mxu0 %v5172
        %6901 = vmatprep.subr.bf16.mxu0 0
        %6902 = vmatpush1.bf16.msra.mxu0 %v5175
        %6903 = vmatprep.subr.bf16.mxu0 0
        %6904 = vmatpush1.bf16.msra.mxu0 %v5178
        %6905 = vmatprep.subr.bf16.mxu0 0
        %6906 = vmatpush1.bf16.msra.mxu0 %v5181
        %6907 = vmatprep.subr.bf16.mxu0 0
        %6908 = vmatpush1.bf16.msra.mxu0 %v5184
        %6909 = vmatprep.subr.bf16.mxu0 0
        %6910 = vmatpush1.bf16.msra.mxu0 %v5187
        %6911 = vmatprep.subr.bf16.mxu0 0
        %6912 = vmatpush1.bf16.msra.mxu0 %v5190
        %6913 = vmatprep.subr.bf16.mxu0 0
        %6914 = vmatpush1.bf16.msra.mxu0 %v5193
        %6915 = vmatprep.subr.bf16.mxu0 0
        %6916 = vmatpush1.bf16.msra.mxu0 %v5196
        %6917 = vmatprep.subr.bf16.mxu0 0
        %6918 = vmatpush1.bf16.msra.mxu0 %v5199
        %6919 = vmatprep.subr.bf16.mxu0 0
        %6920 = vmatpush1.bf16.msra.mxu0 %v5202
        %6921 = vmatprep.subr.bf16.mxu0 0
        %6922 = vmatpush1.bf16.msra.mxu0 %v5205
        %6923 = vmatprep.mubr.bf16.mxu0 %v2334
        %6924 = vmatmul.mubr.bf16.gmra.mrb[0].mxu0 %v2333
        %v6925 = vpop.f32.mrb[0].mxu0
        %v6926 = vadd.f32 0.0, %v6925
        %v6927 = vpop.f32.mrb[0].mxu0
        %v6928 = vpop.f32.mrb[0].mxu0
        %v6929 = vpop.f32.mrb[0].mxu0
        %6930 = vdwg.mxu0
        %6931 = vmatprep.subr.bf16.mxu0 0
        %6932 = vmatpush1.bf16.msra.mxu0 %v5208
        %6933 = vmatprep.subr.bf16.mxu0 0
        %6934 = vmatpush1.bf16.msra.mxu0 %v5211
        %6935 = vmatprep.subr.bf16.mxu0 0
        %6936 = vmatpush1.bf16.msra.mxu0 %v5214
        %6937 = vmatprep.subr.bf16.mxu0 0
        %6938 = vmatpush1.bf16.msra.mxu0 %v5217
        %6939 = vmatprep.subr.bf16.mxu0 0
        %6940 = vmatpush1.bf16.msra.mxu0 %v5220
        %6941 = vmatprep.subr.bf16.mxu0 0
        %6942 = vmatpush1.bf16.msra.mxu0 %v5223
        %6943 = vmatprep.subr.bf16.mxu0 0
        %6944 = vmatpush1.bf16.msra.mxu0 %v5226
        %6945 = vmatprep.subr.bf16.mxu0 0
        %6946 = vmatpush1.bf16.msra.mxu0 %v5229
        %6947 = vmatprep.subr.bf16.mxu0 0
        %6948 = vmatpush1.bf16.msra.mxu0 %v5232
        %6949 = vmatprep.subr.bf16.mxu0 0
        %6950 = vmatpush1.bf16.msra.mxu0 %v5235
        %6951 = vmatprep.subr.bf16.mxu0 0
        %6952 = vmatpush1.bf16.msra.mxu0 %v5238
        %6953 = vmatprep.subr.bf16.mxu0 0
        %6954 = vmatpush1.bf16.msra.mxu0 %v5241
        %6955 = vmatprep.subr.bf16.mxu0 0
        %6956 = vmatpush1.bf16.msra.mxu0 %v5244
        %6957 = vmatprep.subr.bf16.mxu0 0
        %6958 = vmatpush1.bf16.msra.mxu0 %v5247
        %6959 = vmatprep.subr.bf16.mxu0 0
        %6960 = vmatpush1.bf16.msra.mxu0 %v5250
        %6961 = vmatprep.subr.bf16.mxu0 0
        %6962 = vmatpush1.bf16.msra.mxu0 %v5253
        %6963 = vmatprep.mubr.bf16.mxu0 %v2336
        %6964 = vmatmul.mubr.bf16.gmra.mrb[0].mxu0 %v2335
        %v6965 = vpop.f32.mrb[0].mxu0
        %v6966 = vadd.f32 %v6926, %v6965
        %v6967 = vpop.f32.mrb[0].mxu0
        %v6968 = vpop.f32.mrb[0].mxu0
        %v6969 = vpop.f32.mrb[0].mxu0
        %6970 = vdwg.mxu0
        %6971 = vmatprep.subr.bf16.mxu0 0
        %6972 = vmatpush1.bf16.msra.mxu0 %v5256
        %6973 = vmatprep.subr.bf16.mxu0 0
        %6974 = vmatpush1.bf16.msra.mxu0 %v5259
        %6975 = vmatprep.subr.bf16.mxu0 0
        %6976 = vmatpush1.bf16.msra.mxu0 %v5262
        %6977 = vmatprep.subr.bf16.mxu0 0
        %6978 = vmatpush1.bf16.msra.mxu0 %v5265
        %6979 = vmatprep.subr.bf16.mxu0 0
        %6980 = vmatpush1.bf16.msra.mxu0 %v5268
        %6981 = vmatprep.subr.bf16.mxu0 0
        %6982 = vmatpush1.bf16.msra.mxu0 %v5271
        %6983 = vmatprep.subr.bf16.mxu0 0
        %6984 = vmatpush1.bf16.msra.mxu0 %v5274
        %6985 = vmatprep.subr.bf16.mxu0 0
        %6986 = vmatpush1.bf16.msra.mxu0 %v5277
        %6987 = vmatprep.subr.bf16.mxu0 0
        %6988 = vmatpush1.bf16.msra.mxu0 %v5280
        %6989 = vmatprep.subr.bf16.mxu0 0
        %6990 = vmatpush1.bf16.msra.mxu0 %v5283
        %6991 = vmatprep.subr.bf16.mxu0 0
        %6992 = vmatpush1.bf16.msra.mxu0 %v5286
        %6993 = vmatprep.subr.bf16.mxu0 0
        %6994 = vmatpush1.bf16.msra.mxu0 %v5289
        %6995 = vmatprep.subr.bf16.mxu0 0
        %6996 = vmatpush1.bf16.msra.mxu0 %v5292
        %6997 = vmatprep.subr.bf16.mxu0 0
        %6998 = vmatpush1.bf16.msra.mxu0 %v5295
        %6999 = vmatprep.subr.bf16.mxu0 0
        %7000 = vmatpush1.bf16.msra.mxu0 %v5298
        %7001 = vmatprep.subr.bf16.mxu0 0
        %7002 = vmatpush1.bf16.msra.mxu0 %v5301
        %7003 = vmatprep.mubr.bf16.mxu0 %v2338
        %7004 = vmatmul.mubr.bf16.gmra.mrb[0].mxu0 %v2337
        %v7005 = vpop.f32.mrb[0].mxu0
        %v7006 = vadd.f32 %v6966, %v7005
        %v7007 = vpop.f32.mrb[0].mxu0
        %v7008 = vpop.f32.mrb[0].mxu0
        %v7009 = vpop.f32.mrb[0].mxu0
        %7010 = vdwg.mxu0
        %7011 = vmatprep.subr.bf16.mxu0 0
        %7012 = vmatpush1.bf16.msra.mxu0 %v5304
        %7013 = vmatprep.subr.bf16.mxu0 0
        %7014 = vmatpush1.bf16.msra.mxu0 %v5307
        %7015 = vmatprep.subr.bf16.mxu0 0
        %7016 = vmatpush1.bf16.msra.mxu0 %v5310
        %7017 = vmatprep.subr.bf16.mxu0 0
        %7018 = vmatpush1.bf16.msra.mxu0 %v5313
        %7019 = vmatprep.subr.bf16.mxu0 0
        %7020 = vmatpush1.bf16.msra.mxu0 %v5316
        %7021 = vmatprep.subr.bf16.mxu0 0
        %7022 = vmatpush1.bf16.msra.mxu0 %v5319
        %7023 = vmatprep.subr.bf16.mxu0 0
        %7024 = vmatpush1.bf16.msra.mxu0 %v5322
        %7025 = vmatprep.subr.bf16.mxu0 0
        %7026 = vmatpush1.bf16.msra.mxu0 %v5325
        %7027 = vmatprep.subr.bf16.mxu0 0
        %7028 = vmatpush1.bf16.msra.mxu0 %v5328
        %7029 = vmatprep.subr.bf16.mxu0 0
        %7030 = vmatpush1.bf16.msra.mxu0 %v5331
        %7031 = vmatprep.subr.bf16.mxu0 0
        %7032 = vmatpush1.bf16.msra.mxu0 %v5334
        %7033 = vmatprep.subr.bf16.mxu0 0
        %7034 = vmatpush1.bf16.msra.mxu0 %v5337
        %7035 = vmatprep.subr.bf16.mxu0 0
        %7036 = vmatpush1.bf16.msra.mxu0 %v5340
        %7037 = vmatprep.subr.bf16.mxu0 0
        %7038 = vmatpush1.bf16.msra.mxu0 %v5343
        %7039 = vmatprep.subr.bf16.mxu0 0
        %7040 = vmatpush1.bf16.msra.mxu0 %v5346
        %7041 = vmatprep.subr.bf16.mxu0 0
        %7042 = vmatpush1.bf16.msra.mxu0 %v5349
        %7043 = vmatprep.mubr.bf16.mxu0 %v2340
        %7044 = vmatmul.mubr.bf16.gmra.mrb[0].mxu0 %v2339
        %v7045 = vpop.f32.mrb[0].mxu0
        %v7046 = vadd.f32 %v7006, %v7045
        %v7047 = vpop.f32.mrb[0].mxu0
        %v7048 = vpop.f32.mrb[0].mxu0
        %v7049 = vpop.f32.mrb[0].mxu0
        %7050 = vdwg.mxu0
        %7051 = vmatprep.subr.bf16.mxu0 0
        %7052 = vmatpush1.bf16.msra.mxu0 %v5352
        %7053 = vmatprep.subr.bf16.mxu0 0
        %7054 = vmatpush1.bf16.msra.mxu0 %v5355
        %7055 = vmatprep.subr.bf16.mxu0 0
        %7056 = vmatpush1.bf16.msra.mxu0 %v5358
        %7057 = vmatprep.subr.bf16.mxu0 0
        %7058 = vmatpush1.bf16.msra.mxu0 %v5361
        %7059 = vmatprep.subr.bf16.mxu0 0
        %7060 = vmatpush1.bf16.msra.mxu0 %v5364
        %7061 = vmatprep.subr.bf16.mxu0 0
        %7062 = vmatpush1.bf16.msra.mxu0 %v5367
        %7063 = vmatprep.subr.bf16.mxu0 0
        %7064 = vmatpush1.bf16.msra.mxu0 %v5370
        %7065 = vmatprep.subr.bf16.mxu0 0
        %7066 = vmatpush1.bf16.msra.mxu0 %v5373
        %7067 = vmatprep.subr.bf16.mxu0 0
        %7068 = vmatpush1.bf16.msra.mxu0 %v5376
        %7069 = vmatprep.subr.bf16.mxu0 0
        %7070 = vmatpush1.bf16.msra.mxu0 %v5379
        %7071 = vmatprep.subr.bf16.mxu0 0
        %7072 = vmatpush1.bf16.msra.mxu0 %v5382
        %7073 = vmatprep.subr.bf16.mxu0 0
        %7074 = vmatpush1.bf16.msra.mxu0 %v5385
        %7075 = vmatprep.subr.bf16.mxu0 0
        %7076 = vmatpush1.bf16.msra.mxu0 %v5388
        %7077 = vmatprep.subr.bf16.mxu0 0
        %7078 = vmatpush1.bf16.msra.mxu0 %v5391
        %7079 = vmatprep.subr.bf16.mxu0 0
        %7080 = vmatpush1.bf16.msra.mxu0 %v5394
        %7081 = vmatprep.subr.bf16.mxu0 0
        %7082 = vmatpush1.bf16.msra.mxu0 %v5397
        %7083 = vmatprep.mubr.bf16.mxu0 %v2342
        %7084 = vmatmul.mubr.bf16.gmra.mrb[0].mxu0 %v2341
        %v7085 = vpop.f32.mrb[0].mxu0
        %v7086 = vadd.f32 %v7046, %v7085
        %v7087 = vpop.f32.mrb[0].mxu0
        %v7088 = vpop.f32.mrb[0].mxu0
        %v7089 = vpop.f32.mrb[0].mxu0
        %7090 = vdwg.mxu0
        %7091 = vmatprep.subr.bf16.mxu0 0
        %7092 = vmatpush1.bf16.msra.mxu0 %v5400
        %7093 = vmatprep.subr.bf16.mxu0 0
        %7094 = vmatpush1.bf16.msra.mxu0 %v5403
        %7095 = vmatprep.subr.bf16.mxu0 0
        %7096 = vmatpush1.bf16.msra.mxu0 %v5406
        %7097 = vmatprep.subr.bf16.mxu0 0
        %7098 = vmatpush1.bf16.msra.mxu0 %v5409
        %7099 = vmatprep.subr.bf16.mxu0 0
        %7100 = vmatpush1.bf16.msra.mxu0 %v5412
        %7101 = vmatprep.subr.bf16.mxu0 0
        %7102 = vmatpush1.bf16.msra.mxu0 %v5415
        %7103 = vmatprep.subr.bf16.mxu0 0
        %7104 = vmatpush1.bf16.msra.mxu0 %v5418
        %7105 = vmatprep.subr.bf16.mxu0 0
        %7106 = vmatpush1.bf16.msra.mxu0 %v5421
        %7107 = vmatprep.subr.bf16.mxu0 0
        %7108 = vmatpush1.bf16.msra.mxu0 %v5424
        %7109 = vmatprep.subr.bf16.mxu0 0
        %7110 = vmatpush1.bf16.msra.mxu0 %v5427
        %7111 = vmatprep.subr.bf16.mxu0 0
        %7112 = vmatpush1.bf16.msra.mxu0 %v5430
        %7113 = vmatprep.subr.bf16.mxu0 0
        %7114 = vmatpush1.bf16.msra.mxu0 %v5433
        %7115 = vmatprep.subr.bf16.mxu0 0
        %7116 = vmatpush1.bf16.msra.mxu0 %v5436
        %7117 = vmatprep.subr.bf16.mxu0 0
        %7118 = vmatpush1.bf16.msra.mxu0 %v5439
        %7119 = vmatprep.subr.bf16.mxu0 0
        %7120 = vmatpush1.bf16.msra.mxu0 %v5442
        %7121 = vmatprep.subr.bf16.mxu0 0
        %7122 = vmatpush1.bf16.msra.mxu0 %v5445
        %7123 = vmatprep.mubr.bf16.mxu0 %v2344
        %7124 = vmatmul.mubr.bf16.gmra.mrb[0].mxu0 %v2343
        %v7125 = vpop.f32.mrb[0].mxu0
        %v7126 = vadd.f32 %v7086, %v7125
        %v7127 = vpop.f32.mrb[0].mxu0
        %v7128 = vpop.f32.mrb[0].mxu0
        %v7129 = vpop.f32.mrb[0].mxu0
        %7130 = vdwg.mxu0
        %7131 = vmatprep.subr.bf16.mxu0 0
        %7132 = vmatpush1.bf16.msra.mxu0 %v5448
        %7133 = vmatprep.subr.bf16.mxu0 0
        %7134 = vmatpush1.bf16.msra.mxu0 %v5451
        %7135 = vmatprep.subr.bf16.mxu0 0
        %7136 = vmatpush1.bf16.msra.mxu0 %v5454
        %7137 = vmatprep.subr.bf16.mxu0 0
        %7138 = vmatpush1.bf16.msra.mxu0 %v5457
        %7139 = vmatprep.subr.bf16.mxu0 0
        %7140 = vmatpush1.bf16.msra.mxu0 %v5460
        %7141 = vmatprep.subr.bf16.mxu0 0
        %7142 = vmatpush1.bf16.msra.mxu0 %v5463
        %7143 = vmatprep.subr.bf16.mxu0 0
        %7144 = vmatpush1.bf16.msra.mxu0 %v5466
        %7145 = vmatprep.subr.bf16.mxu0 0
        %7146 = vmatpush1.bf16.msra.mxu0 %v5469
        %7147 = vmatprep.subr.bf16.mxu0 0
        %7148 = vmatpush1.bf16.msra.mxu0 %v5472
        %7149 = vmatprep.subr.bf16.mxu0 0
        %7150 = vmatpush1.bf16.msra.mxu0 %v5475
        %7151 = vmatprep.subr.bf16.mxu0 0
        %7152 = vmatpush1.bf16.msra.mxu0 %v5478
        %7153 = vmatprep.subr.bf16.mxu0 0
        %7154 = vmatpush1.bf16.msra.mxu0 %v5481
        %7155 = vmatprep.subr.bf16.mxu0 0
        %7156 = vmatpush1.bf16.msra.mxu0 %v5484
        %7157 = vmatprep.subr.bf16.mxu0 0
        %7158 = vmatpush1.bf16.msra.mxu0 %v5487
        %7159 = vmatprep.subr.bf16.mxu0 0
        %7160 = vmatpush1.bf16.msra.mxu0 %v5490
        %7161 = vmatprep.subr.bf16.mxu0 0
        %7162 = vmatpush1.bf16.msra.mxu0 %v5493
        %7163 = vmatprep.mubr.bf16.mxu0 %v2346
        %7164 = vmatmul.mubr.bf16.gmra.mrb[0].mxu0 %v2345
        %v7165 = vpop.f32.mrb[0].mxu0
        %v7166 = vadd.f32 %v7126, %v7165
        %v7167 = vpop.f32.mrb[0].mxu0
        %v7168 = vpop.f32.mrb[0].mxu0
        %v7169 = vpop.f32.mrb[0].mxu0
        %7170 = vdwg.mxu0
        %7171 = vmatprep.subr.bf16.mxu0 0
        %7172 = vmatpush1.bf16.msra.mxu0 %v5496
        %7173 = vmatprep.subr.bf16.mxu0 0
        %7174 = vmatpush1.bf16.msra.mxu0 %v5499
        %7175 = vmatprep.subr.bf16.mxu0 0
        %7176 = vmatpush1.bf16.msra.mxu0 %v5502
        %7177 = vmatprep.subr.bf16.mxu0 0
        %7178 = vmatpush1.bf16.msra.mxu0 %v5505
        %7179 = vmatprep.subr.bf16.mxu0 0
        %7180 = vmatpush1.bf16.msra.mxu0 %v5508
        %7181 = vmatprep.subr.bf16.mxu0 0
        %7182 = vmatpush1.bf16.msra.mxu0 %v5511
        %7183 = vmatprep.subr.bf16.mxu0 0
        %7184 = vmatpush1.bf16.msra.mxu0 %v5514
        %7185 = vmatprep.subr.bf16.mxu0 0
        %7186 = vmatpush1.bf16.msra.mxu0 %v5517
        %7187 = vmatprep.subr.bf16.mxu0 0
        %7188 = vmatpush1.bf16.msra.mxu0 %v5520
        %7189 = vmatprep.subr.bf16.mxu0 0
        %7190 = vmatpush1.bf16.msra.mxu0 %v5523
        %7191 = vmatprep.subr.bf16.mxu0 0
        %7192 = vmatpush1.bf16.msra.mxu0 %v5526
        %7193 = vmatprep.subr.bf16.mxu0 0
        %7194 = vmatpush1.bf16.msra.mxu0 %v5529
        %7195 = vmatprep.subr.bf16.mxu0 0
        %7196 = vmatpush1.bf16.msra.mxu0 %v5532
        %7197 = vmatprep.subr.bf16.mxu0 0
        %7198 = vmatpush1.bf16.msra.mxu0 %v5535
        %7199 = vmatprep.subr.bf16.mxu0 0
        %7200 = vmatpush1.bf16.msra.mxu0 %v5538
        %7201 = vmatprep.subr.bf16.mxu0 0
        %7202 = vmatpush1.bf16.msra.mxu0 %v5541
        %7203 = vmatprep.mubr.bf16.mxu0 %v2348
        %7204 = vmatmul.mubr.bf16.gmra.mrb[0].mxu0 %v2347
        %v7205 = vpop.f32.mrb[0].mxu0
        %v7206 = vadd.f32 %v7166, %v7205
        %v7207 = vpop.f32.mrb[0].mxu0
        %v7208 = vpop.f32.mrb[0].mxu0
        %v7209 = vpop.f32.mrb[0].mxu0
        %7210 = vdwg.mxu0
        %7211 = vmatprep.subr.bf16.mxu0 0
        %7212 = vmatpush1.bf16.msra.mxu0 %v5544
        %7213 = vmatprep.subr.bf16.mxu0 0
        %7214 = vmatpush1.bf16.msra.mxu0 %v5547
        %7215 = vmatprep.subr.bf16.mxu0 0
        %7216 = vmatpush1.bf16.msra.mxu0 %v5550
        %7217 = vmatprep.subr.bf16.mxu0 0
        %7218 = vmatpush1.bf16.msra.mxu0 %v5553
        %7219 = vmatprep.subr.bf16.mxu0 0
        %7220 = vmatpush1.bf16.msra.mxu0 %v5556
        %7221 = vmatprep.subr.bf16.mxu0 0
        %7222 = vmatpush1.bf16.msra.mxu0 %v5559
        %7223 = vmatprep.subr.bf16.mxu0 0
        %7224 = vmatpush1.bf16.msra.mxu0 %v5562
        %7225 = vmatprep.subr.bf16.mxu0 0
        %7226 = vmatpush1.bf16.msra.mxu0 %v5565
        %7227 = vmatprep.subr.bf16.mxu0 0
        %7228 = vmatpush1.bf16.msra.mxu0 %v5568
        %7229 = vmatprep.subr.bf16.mxu0 0
        %7230 = vmatpush1.bf16.msra.mxu0 %v5571
        %7231 = vmatprep.subr.bf16.mxu0 0
        %7232 = vmatpush1.bf16.msra.mxu0 %v5574
        %7233 = vmatprep.subr.bf16.mxu0 0
        %7234 = vmatpush1.bf16.msra.mxu0 %v5577
        %7235 = vmatprep.subr.bf16.mxu0 0
        %7236 = vmatpush1.bf16.msra.mxu0 %v5580
        %7237 = vmatprep.subr.bf16.mxu0 0
        %7238 = vmatpush1.bf16.msra.mxu0 %v5583
        %7239 = vmatprep.subr.bf16.mxu0 0
        %7240 = vmatpush1.bf16.msra.mxu0 %v5586
        %7241 = vmatprep.subr.bf16.mxu0 0
        %7242 = vmatpush1.bf16.msra.mxu0 %v5589
        %7243 = vmatprep.mubr.bf16.mxu0 %v2350
        %7244 = vmatmul.mubr.bf16.gmra.mrb[0].mxu0 %v2349
        %v7245 = vpop.f32.mrb[0].mxu0
        %v7246 = vadd.f32 %v7206, %v7245
        %v7247 = vpop.f32.mrb[0].mxu0
        %v7248 = vpop.f32.mrb[0].mxu0
        %v7249 = vpop.f32.mrb[0].mxu0
        %7250 = vdwg.mxu0
        %7251 = vmatprep.subr.bf16.mxu0 0
        %7252 = vmatpush1.bf16.msra.mxu0 %v5592
        %7253 = vmatprep.subr.bf16.mxu0 0
        %7254 = vmatpush1.bf16.msra.mxu0 %v5595
        %7255 = vmatprep.subr.bf16.mxu0 0
        %7256 = vmatpush1.bf16.msra.mxu0 %v5598
        %7257 = vmatprep.subr.bf16.mxu0 0
        %7258 = vmatpush1.bf16.msra.mxu0 %v5601
        %7259 = vmatprep.subr.bf16.mxu0 0
        %7260 = vmatpush1.bf16.msra.mxu0 %v5604
        %7261 = vmatprep.subr.bf16.mxu0 0
        %7262 = vmatpush1.bf16.msra.mxu0 %v5607
        %7263 = vmatprep.subr.bf16.mxu0 0
        %7264 = vmatpush1.bf16.msra.mxu0 %v5610
        %7265 = vmatprep.subr.bf16.mxu0 0
        %7266 = vmatpush1.bf16.msra.mxu0 %v5613
        %7267 = vmatprep.subr.bf16.mxu0 0
        %7268 = vmatpush1.bf16.msra.mxu0 %v5616
        %7269 = vmatprep.subr.bf16.mxu0 0
        %7270 = vmatpush1.bf16.msra.mxu0 %v5619
        %7271 = vmatprep.subr.bf16.mxu0 0
        %7272 = vmatpush1.bf16.msra.mxu0 %v5622
        %7273 = vmatprep.subr.bf16.mxu0 0
        %7274 = vmatpush1.bf16.msra.mxu0 %v5625
        %7275 = vmatprep.subr.bf16.mxu0 0
        %7276 = vmatpush1.bf16.msra.mxu0 %v5628
        %7277 = vmatprep.subr.bf16.mxu0 0
        %7278 = vmatpush1.bf16.msra.mxu0 %v5631
        %7279 = vmatprep.subr.bf16.mxu0 0
        %7280 = vmatpush1.bf16.msra.mxu0 %v5634
        %7281 = vmatprep.subr.bf16.mxu0 0
        %7282 = vmatpush1.bf16.msra.mxu0 %v5637
        %7283 = vmatprep.mubr.bf16.mxu0 %v2352
        %7284 = vmatmul.mubr.bf16.gmra.mrb[0].mxu0 %v2351
        %v7285 = vpop.f32.mrb[0].mxu0
        %v7286 = vadd.f32 %v7246, %v7285
        %v7287 = vpop.f32.mrb[0].mxu0
        %v7288 = vpop.f32.mrb[0].mxu0
        %v7289 = vpop.f32.mrb[0].mxu0
        %7290 = vdwg.mxu0
        %7291 = vmatprep.subr.bf16.mxu0 0
        %7292 = vmatpush1.bf16.msra.mxu0 %v5640
        %7293 = vmatprep.subr.bf16.mxu0 0
        %7294 = vmatpush1.bf16.msra.mxu0 %v5643
        %7295 = vmatprep.subr.bf16.mxu0 0
        %7296 = vmatpush1.bf16.msra.mxu0 %v5646
        %7297 = vmatprep.subr.bf16.mxu0 0
        %7298 = vmatpush1.bf16.msra.mxu0 %v5649
        %7299 = vmatprep.subr.bf16.mxu0 0
        %7300 = vmatpush1.bf16.msra.mxu0 %v5652
        %7301 = vmatprep.subr.bf16.mxu0 0
        %7302 = vmatpush1.bf16.msra.mxu0 %v5655
        %7303 = vmatprep.subr.bf16.mxu0 0
        %7304 = vmatpush1.bf16.msra.mxu0 %v5658
        %7305 = vmatprep.subr.bf16.mxu0 0
        %7306 = vmatpush1.bf16.msra.mxu0 %v5661
        %7307 = vmatprep.subr.bf16.mxu0 0
        %7308 = vmatpush1.bf16.msra.mxu0 %v5664
        %7309 = vmatprep.subr.bf16.mxu0 0
        %7310 = vmatpush1.bf16.msra.mxu0 %v5667
        %7311 = vmatprep.subr.bf16.mxu0 0
        %7312 = vmatpush1.bf16.msra.mxu0 %v5670
        %7313 = vmatprep.subr.bf16.mxu0 0
        %7314 = vmatpush1.bf16.msra.mxu0 %v5673
        %7315 = vmatprep.subr.bf16.mxu0 0
        %7316 = vmatpush1.bf16.msra.mxu0 %v5676
        %7317 = vmatprep.subr.bf16.mxu0 0
        %7318 = vmatpush1.bf16.msra.mxu0 %v5679
        %7319 = vmatprep.subr.bf16.mxu0 0
        %7320 = vmatpush1.bf16.msra.mxu0 %v5682
        %7321 = vmatprep.subr.bf16.mxu0 0
        %7322 = vmatpush1.bf16.msra.mxu0 %v5685
        %7323 = vmatprep.mubr.bf16.mxu0 %v2354
        %7324 = vmatmul.mubr.bf16.gmra.mrb[0].mxu0 %v2353
        %v7325 = vpop.f32.mrb[0].mxu0
        %v7326 = vadd.f32 %v7286, %v7325
        %v7327 = vpop.f32.mrb[0].mxu0
        %v7328 = vpop.f32.mrb[0].mxu0
        %v7329 = vpop.f32.mrb[0].mxu0
        %7330 = vdwg.mxu0
        %7331 = vmatprep.subr.bf16.mxu0 0
        %7332 = vmatpush1.bf16.msra.mxu0 %v5688
        %7333 = vmatprep.subr.bf16.mxu0 0
        %7334 = vmatpush1.bf16.msra.mxu0 %v5691
        %7335 = vmatprep.subr.bf16.mxu0 0
        %7336 = vmatpush1.bf16.msra.mxu0 %v5694
        %7337 = vmatprep.subr.bf16.mxu0 0
        %7338 = vmatpush1.bf16.msra.mxu0 %v5697
        %7339 = vmatprep.subr.bf16.mxu0 0
        %7340 = vmatpush1.bf16.msra.mxu0 %v5700
        %7341 = vmatprep.subr.bf16.mxu0 0
        %7342 = vmatpush1.bf16.msra.mxu0 %v5703
        %7343 = vmatprep.subr.bf16.mxu0 0
        %7344 = vmatpush1.bf16.msra.mxu0 %v5706
        %7345 = vmatprep.subr.bf16.mxu0 0
        %7346 = vmatpush1.bf16.msra.mxu0 %v5709
        %7347 = vmatprep.subr.bf16.mxu0 0
        %7348 = vmatpush1.bf16.msra.mxu0 %v5712
        %7349 = vmatprep.subr.bf16.mxu0 0
        %7350 = vmatpush1.bf16.msra.mxu0 %v5715
        %7351 = vmatprep.subr.bf16.mxu0 0
        %7352 = vmatpush1.bf16.msra.mxu0 %v5718
        %7353 = vmatprep.subr.bf16.mxu0 0
        %7354 = vmatpush1.bf16.msra.mxu0 %v5721
        %7355 = vmatprep.subr.bf16.mxu0 0
        %7356 = vmatpush1.bf16.msra.mxu0 %v5724
        %7357 = vmatprep.subr.bf16.mxu0 0
        %7358 = vmatpush1.bf16.msra.mxu0 %v5727
        %7359 = vmatprep.subr.bf16.mxu0 0
        %7360 = vmatpush1.bf16.msra.mxu0 %v5730
        %7361 = vmatprep.subr.bf16.mxu0 0
        %7362 = vmatpush1.bf16.msra.mxu0 %v5733
        %7363 = vmatprep.mubr.bf16.mxu0 %v2356
        %7364 = vmatmul.mubr.bf16.gmra.mrb[0].mxu0 %v2355
        %v7365 = vpop.f32.mrb[0].mxu0
        %v7366 = vadd.f32 %v7326, %v7365
        %v7367 = vpop.f32.mrb[0].mxu0
        %v7368 = vpop.f32.mrb[0].mxu0
        %v7369 = vpop.f32.mrb[0].mxu0
        %7370 = vdwg.mxu0
        %7371 = vmatprep.subr.bf16.mxu0 0
        %7372 = vmatpush1.bf16.msra.mxu0 %v5736
        %7373 = vmatprep.subr.bf16.mxu0 0
        %7374 = vmatpush1.bf16.msra.mxu0 %v5739
        %7375 = vmatprep.subr.bf16.mxu0 0
        %7376 = vmatpush1.bf16.msra.mxu0 %v5742
        %7377 = vmatprep.subr.bf16.mxu0 0
        %7378 = vmatpush1.bf16.msra.mxu0 %v5745
        %7379 = vmatprep.subr.bf16.mxu0 0
        %7380 = vmatpush1.bf16.msra.mxu0 %v5748
        %7381 = vmatprep.subr.bf16.mxu0 0
        %7382 = vmatpush1.bf16.msra.mxu0 %v5751
        %7383 = vmatprep.subr.bf16.mxu0 0
        %7384 = vmatpush1.bf16.msra.mxu0 %v5754
        %7385 = vmatprep.subr.bf16.mxu0 0
        %7386 = vmatpush1.bf16.msra.mxu0 %v5757
        %7387 = vmatprep.subr.bf16.mxu0 0
        %7388 = vmatpush1.bf16.msra.mxu0 0
        %7389 = vmatprep.subr.bf16.mxu0 0
        %7390 = vmatpush1.bf16.msra.mxu0 0
        %7391 = vmatprep.subr.bf16.mxu0 0
        %7392 = vmatpush1.bf16.msra.mxu0 0
        %7393 = vmatprep.subr.bf16.mxu0 0
        %7394 = vmatpush1.bf16.msra.mxu0 0
        %7395 = vmatprep.subr.bf16.mxu0 0
        %7396 = vmatpush1.bf16.msra.mxu0 0
        %7397 = vmatprep.subr.bf16.mxu0 0
        %7398 = vmatpush1.bf16.msra.mxu0 0
        %7399 = vmatprep.subr.bf16.mxu0 0
        %7400 = vmatpush1.bf16.msra.mxu0 0
        %7401 = vmatprep.subr.bf16.mxu0 0
        %7402 = vmatpush1.bf16.msra.mxu0 0
        %7403 = vmatprep.mubr.bf16.mxu0 0
        %7404 = vmatmul.mubr.bf16.gmra.mrb[0].mxu0 %v2357
        %v7405 = vpop.f32.mrb[0].mxu0
        %v7406 = vadd.f32 %v7366, %v7405
        %v7407 = vpop.f32.mrb[0].mxu0
        %v7408 = vpop.f32.mrb[0].mxu0
        %v7409 = vpop.f32.mrb[0].mxu0
        %7410 = vdwg.mxu0
        %v7411 = vpack.c.bf16 %v6885, %v6885
        %v7412 = vpack.c.bf16 %v6887, %v6887
        %v7413 = vpack.c.bf16 %v7406, %v7406
        %v7417 = vunpack.c.l.b16 %v7411
        %v7418 = vunpack.c.l.b16 %v7412
        %v7419 = vunpack.c.l.b16 %v7413
        %v7420 = vpack.c.b16 %v7418, %v7417
        %v7421 = vpack.c.b16 %v7419, %v7419
        %7424 = vst [vmem:[%s1908] sm:$0xff] %v7420
        %7425 = vst [vmem:[%s1908 + $0x8] sm:$0xf] %v7421
        %v7426 = vrot.slane %v6885, 4
        %v7427 = vadd.f32 %v6885, %v7426
        %v7428 = vrot.slane %v7427, 2
        %v7429 = vadd.f32 %v7427, %v7428
        %v7430 = vrot.slane %v7429, 1
        %v7431 = vadd.f32 %v7429, %v7430
        %v7432 = vrot.slane %v6887, 4
        %v7433 = vadd.f32 %v6887, %v7432
        %v7434 = vrot.slane %v7433, 2
        %v7435 = vadd.f32 %v7433, %v7434
        %v7436 = vrot.slane %v7435, 1
        %v7437 = vadd.f32 %v7435, %v7436
        %v7438 = vrot.slane %v7406, 4
        %v7439 = vadd.f32 %v7406, %v7438
        %v7440 = vrot.slane %v7439, 2
        %v7441 = vadd.f32 %v7439, %v7440
        %v7442 = vrot.slane %v7441, 1
        %v7443 = vadd.f32 %v7441, %v7442
        %v7444 = vmul.f32 %v6885, %v6885
        %v7445 = vmul.f32 %v6887, %v6887
        %v7446 = vmul.f32 %v7406, %v7406
        %v7447 = vrot.slane %v7444, 4
        %v7448 = vadd.f32 %v7444, %v7447
        %v7449 = vrot.slane %v7448, 2
        %v7450 = vadd.f32 %v7448, %v7449
        %v7451 = vrot.slane %v7450, 1
        %v7452 = vadd.f32 %v7450, %v7451
        %v7453 = vrot.slane %v7445, 4
        %v7454 = vadd.f32 %v7445, %v7453
        %v7455 = vrot.slane %v7454, 2
        %v7456 = vadd.f32 %v7454, %v7455
        %v7457 = vrot.slane %v7456, 1
        %v7458 = vadd.f32 %v7456, %v7457
        %v7459 = vrot.slane %v7446, 4
        %v7460 = vadd.f32 %v7446, %v7459
        %v7461 = vrot.slane %v7460, 2
        %v7462 = vadd.f32 %v7460, %v7461
        %v7463 = vrot.slane %v7462, 1
        %v7464 = vadd.f32 %v7462, %v7463
        %vm7465 = vcmask 1040384
        %v7466 = vsel %vm7465, %v7431, %v7452
        %v7467 = vsel %vm7465, %v7437, %v7458
        %v7468 = vsel %vm7465, %v7443, %v7464
        %vm7469 = vcmask 1041408
        %v7470 = vsel %vm7469, %v7466, 0.0
        %v7471 = vsel %vm7469, %v7467, 0.0
        %v7472 = vsel %vm7469, %v7468, 0.0
        %7473 = vst [vmem:[%s1918] sm:$0xff] %v7470
        %7474 = vst [vmem:[%s1918 + $0x8] sm:$0xff] %v7471
        %7475 = vst [vmem:[%s1918 + $0x10] sm:$0xff] %v7472
        %s7476 = smul.u32 3, %s22
        %p7477 = scmp.lt.s32.totalorder %s21, 0
        %s7478 = scalar_select %p7477, %s21, 0
        %p7479 = scmp.lt.s32.totalorder %s7476, 5
        %s7480 = scalar_select %p7479, %s7476, 5
        %s7481 = smul.addr %s7478, 6
        %s7482 = sadd.s32 %s7480, %s7481
        %s7483 = smul.addr %s7482, 4
        %s7484 = scalar_lea.vmem %s4, %s7483
        %s7485 = smul.u32 3, %s22
        %p7486 = scmp.lt.s32.totalorder %s21, 0
        %s7487 = scalar_select %p7486, %s21, 0
        %p7488 = scmp.lt.s32.totalorder %s7485, 5
        %s7489 = scalar_select %p7488, %s7485, 5
        %s7490 = smul.addr %s7487, 6
        %s7491 = sadd.s32 %s7489, %s7490
        %s7492 = smul.addr %s7491, 8
        %s7493 = scalar_lea.vmem %s5, %s7492
        // Predicated region
        $region63: #{inception_aux.6} parent=57 // pred_check
          %p7494 = pneg %p143
        $region64: #{inception_aux.6} parent=57 // pred_check_branch
          %7496 = sbr.rel (%p7494) target = $region66
        $region65: #{inception_aux.6} parent=57 // pred_region
          %s7497 = smul.u32 3, %s22
        $region66: #{inception_aux.6} parent=57 // pred_fallthru
          _
        // Predicated region
        $region67: #{inception_aux.6} parent=57 // pred_check
          %p7498 = pneg %p171
        $region68: #{inception_aux.6} parent=57 // pred_check_branch
          %7500 = sbr.rel (%p7498) target = $region70
        $region69: #{inception_aux.6} parent=57 // pred_region
          %s7501 = smul.u32 3, %s22
        $region70: #{inception_aux.6} parent=57 // pred_fallthru
          _
      $region58: #{inception_aux.6} parent=5 // pred_fallthru
        _
      %p7502 = scmp.le.s32.totalorder 2, %s12
      // Predicated region
      $region71: #{inception_aux.6} parent=5 // pred_check
        %p7503 = pneg %p7502
      $region72: #{inception_aux.6} parent=5 // pred_check_branch
        %7505 = sbr.rel (%p7503) target = $region74
      $region73: #{inception_aux.6} parent=5 // pred_region
        %s7506 = ssub.s32 %s12, 2
        // Predicated region
        $region75: #{inception_aux.6} parent=73 // pred_check
          %p7507 = pneg %p149
        $region76: #{inception_aux.6} parent=73 // pred_check_branch
          %7509 = sbr.rel (%p7507) target = $region78
        $region77: #{inception_aux.6} parent=73 // pred_region
          %s7510 = smul.u32 3, %s24
          %p7511 = scmp.lt.s32.totalorder %s23, 0
          %s7512 = scalar_select %p7511, %s23, 0
          %p7513 = scmp.lt.s32.totalorder %s7510, 5
          %s7514 = scalar_select %p7513, %s7510, 5
          %s7515 = smul.addr %s7512, 6
          %s7516 = sadd.s32 %s7514, %s7515
          %s7517 = smul.addr %s7516, 4
          %s7518 = scalar_lea.vmem %s4, %s7517
        $region78: #{inception_aux.6} parent=73 // pred_fallthru
          _
        // Predicated region
        $region79: #{inception_aux.6} parent=73 // pred_check
          %p7519 = pneg %p177
        $region80: #{inception_aux.6} parent=73 // pred_check_branch
          %7521 = sbr.rel (%p7519) target = $region82
        $region81: #{inception_aux.6} parent=73 // pred_region
          %s7522 = smul.u32 3, %s24
          %p7523 = scmp.lt.s32.totalorder %s23, 0
          %s7524 = scalar_select %p7523, %s23, 0
          %p7525 = scmp.lt.s32.totalorder %s7522, 5
          %s7526 = scalar_select %p7525, %s7522, 5
          %s7527 = smul.addr %s7524, 6
          %s7528 = sadd.s32 %s7526, %s7527
          %s7529 = smul.addr %s7528, 8
          %s7530 = scalar_lea.vmem %s5, %s7529
        $region82: #{inception_aux.6} parent=73 // pred_fallthru
          _
      $region74: #{inception_aux.6} parent=5 // pred_fallthru
        _
    $region6: #{inception_aux.6} parent=1 // loop_footer
      %s16 = sadd.s32 1, %s12
    $region7: #{inception_aux.6} parent=1 // loop_footer_branch
      %11 = sbr.rel target = $region3
    $region8: #{inception_aux.6} parent=1 // loop_exit
      _

</llo_original>
